<compile_context>
chip_gen: v7x
topology: tpu7x:2x2x1
jax: 0.10.0
libtpu: 0.0.40
codegen_flags: <defaults>
</compile_context>

<pallas_src>
import jax
import jax.numpy as jnp
from jax.experimental import pallas as pl
from jax.experimental.pallas import tpu as pltpu


# ----------------------------- Pallas kernel ------------------------------ #
def sca_att_kernel(
    # inputs
    patches_ref,        # (T, B*HW, P)  bf16  im2col of all frames
    h0_ref,             # (B, H)        f32   initial hidden
    seg_sum_ref,        # (B, B*HW)     f32   per-batch spatial sum matrix
    seg_bcast_ref,      # (B*HW, B)     f32   per-batch broadcast matrix
    w1_ref, b1_ref,     # (P, 512) bf16, (1, 512) f32      pre_conv1
    w2_ref, b2_ref,     # (512, 256) bf16, (1, 256) f32    pre_conv2
    wxc_ref, bxc_ref,   # (K, 1) f32, (K, 1) f32           fc_xc (Linear(1,K))
    whc_ref,            # (H, K) bf16                      fc_hc (no bias)
    wb_ref, bb_ref,     # (K, 1) f32, (1, 1) f32           fc_b
    ws_ref, bs_ref,     # (256, K) bf16, (1, K) f32        conv_s (1x1)
    whs_ref,            # (H, K) bf16                      fc_hs (no bias)
    wa_ref, ba_ref,     # (K, 1) f32, (1, 1) f32           fc_a
    wih_ref, bih_ref,   # (256, 3H) bf16, (1, 3H) f32      GRU input weights
    whh_ref, bhh_ref,   # (H, 3H) bf16, (1, 3H) f32        GRU hidden weights
    # outputs
    s_att_ref,          # (T, B*HW, 1)  f32  spatial attention (single store)
    h_out_ref,          # (B, H)        f32  final hidden state
):
    T = patches_ref.shape[0]
    B = seg_sum_ref.shape[0]
    BHW = seg_sum_ref.shape[1]
    H = h0_ref.shape[-1]
    inv_hw = 1.0 / float(BHW // B)          # AvgPool2d(7) == sum * 1/49

    f32 = jnp.float32
    bf16 = jnp.bfloat16

    # Hoisted loads (weights stay VMEM-resident, loaded once for the whole
    # unrolled frame loop).
    seg_sum = seg_sum_ref[...]
    seg_bcast = seg_bcast_ref[...]
    w1 = w1_ref[...]; b1 = b1_ref[...]
    w2 = w2_ref[...]; b2 = b2_ref[...]
    wxc = wxc_ref[...]; bxc = bxc_ref[...]
    whc = whc_ref[...]
    wb = wb_ref[...]; bb = bb_ref[...]
    ws = ws_ref[...]; bs = bs_ref[...]
    whs = whs_ref[...]
    wa = wa_ref[...]; ba = ba_ref[...]
    wih = wih_ref[...]; bih = bih_ref[...]
    whh = whh_ref[...]; bhh = bhh_ref[...]

    h = h0_ref[...]                         # (B, H) f32, carried across frames
    alphas = []

    for t in range(T):                      # small static T -> fully unrolled
        patches = patches_ref[t]            # (B*HW, P) bf16

        # ---- pre_conv1 (2x2 / stride-2 conv == im2col matmul) + ReLU -------
        x1 = jnp.dot(patches, w1, preferred_element_type=f32) + b1
        x1 = jnp.maximum(x1, 0.0)           # (B*HW, 512) f32

        # ---- pre_conv2 (1x1 conv == channel matmul) ------------------------
        X = jnp.dot(x1.astype(bf16), w2, preferred_element_type=f32) + b2
        # X: (B*HW, 256) f32

        # ---- channel attention (beta) --------------------------------------
        # AvgPool2d(7): per-batch spatial mean via segment matmul.
        x_avg = jnp.dot(seg_sum, X, preferred_element_type=f32) * inv_hw   # (B,256)
        hc = jnp.dot(h.astype(bf16), whc, preferred_element_type=f32)      # (B,K)
        # Lane-dense (B, K, 256): 256 channels on lanes, K on sublanes.
        bmat = jnp.tanh(x_avg[:, None, :] * wxc[None]
                        + bxc[None] + hc[:, :, None])                      # (B,K,256)
        beta = jax.nn.sigmoid(jnp.sum(bmat * wb[None], axis=1) + bb)       # (B,256)
        beta_exp = jnp.dot(seg_bcast, beta, preferred_element_type=f32)    # (B*HW,256)
        Xc = X * beta_exp

        # ---- spatial attention (alpha, softmax over HW per batch) ----------
        ax = jnp.dot(Xc.astype(bf16), ws, preferred_element_type=f32) + bs  # (B*HW,K)
        ah = jnp.dot(h.astype(bf16), whs, preferred_element_type=f32)       # (B,K)
        ah_exp = jnp.dot(seg_bcast, ah, preferred_element_type=f32)         # (B*HW,K)
        a_act = jnp.tanh(ax + ah_exp)                                       # (B*HW,K)
        logits = jnp.dot(a_act, wa, preferred_element_type=f32) + ba        # (B*HW,1)
        # Global max is a valid shift for every per-batch softmax (shift inv.)
        m = jnp.max(logits, axis=0, keepdims=True)                          # (1,1)
        e = jnp.exp(logits - m)                                             # (B*HW,1)
        denom = jnp.dot(seg_sum, e, preferred_element_type=f32)             # (B,1)
        inv = pl.reciprocal(denom, approx=True)                             # EUP
        alpha = e * jnp.dot(seg_bcast, inv, preferred_element_type=f32)     # (B*HW,1)
        Xs = Xc * alpha                                                     # (B*HW,256)

        # ---- GRU cell -------------------------------------------------------
        rnn_in = jnp.dot(seg_sum, Xs, preferred_element_type=f32)           # (B,256)
        gi = jnp.dot(rnn_in.astype(bf16), wih, preferred_element_type=f32) + bih
        gh = jnp.dot(h.astype(bf16), whh, preferred_element_type=f32) + bhh
        r = jax.nn.sigmoid(gi[:, 0:H] + gh[:, 0:H])
        z = jax.nn.sigmoid(gi[:, H:2 * H] + gh[:, H:2 * H])
        n = jnp.tanh(gi[:, 2 * H:3 * H] + r * gh[:, 2 * H:3 * H])
        h = (1.0 - z) * n + z * h                                           # (B,H)

        alphas.append(alpha)

    # Single write-back at the very end (total output is ~1 KB, so the final
    # store is negligible regardless of lane width).
    s_att_ref[...] = jnp.stack(alphas, axis=0)      # (T, B*HW, 1)
    h_out_ref[...] = h


# ------------------------------ host wrapper ------------------------------ #
def im2col_video(video):
    """(B, T, C, H, W) -> (T, B*(H//2)*(W//2), C*4) for a 2x2/stride-2 conv."""
    B, T, C, H, W = video.shape
    Ho, Wo = H // 2, W // 2
    v = video.reshape(B, T, C, Ho, 2, Wo, 2)
    v = jnp.transpose(v, (1, 0, 3, 5, 2, 4, 6))     # (T, B, Ho, Wo, C, 2, 2)
    return v.reshape(T, B * Ho * Wo, C * 4)


def sca_att_forward(video, params, h0):
    """video: (B, T, 2*f_size, 14, 14) -> (final_score (B,), soft_att (B,T,1,7,7))"""
    B, T, C, Himg, Wimg = video.shape
    Ho, Wo = Himg // 2, Wimg // 2
    HW = Ho * Wo
    BHW = B * HW
    H_SIZE = h0.shape[-1]
    K = params['wxc'].shape[-1]

    patches = im2col_video(video.astype(jnp.float32)).astype(jnp.bfloat16)

    # Segment matrices: per-batch spatial sum and per-batch broadcast.
    seg_sum = jnp.repeat(jnp.eye(B, dtype=jnp.float32), HW, axis=1)   # (B, B*HW)
    seg_bcast = seg_sum.T                                             # (B*HW, B)

    to_bf16 = lambda x: x.astype(jnp.bfloat16)
    to_f32 = lambda x: x.astype(jnp.float32)
    col = lambda x: to_f32(x).reshape(K, 1)        # (1,K) -> (K,1) column form

    kernel_args = [
        patches, to_f32(h0), seg_sum, seg_bcast,
        to_bf16(params['w1']), to_f32(params['b1']),
        to_bf16(params['w2']), to_f32(params['b2']),
        col(params['wxc']), col(params['bxc']),
        to_bf16(params['whc']),
        col(params['wb']), to_f32(params['bb']),
        to_bf16(params['ws']), to_f32(params['bs']),
        to_bf16(params['whs']),
        col(params['wa']), to_f32(params['ba']),
        to_bf16(params['wih']), to_f32(params['bih']),
        to_bf16(params['whh']), to_f32(params['bhh']),
    ]

    vmem = pl.BlockSpec(memory_space=pltpu.MemorySpace.VMEM)
    s_att_flat, h_final = pl.pallas_call(
        sca_att_kernel,
        out_shape=(jax.ShapeDtypeStruct((T, BHW, 1), jnp.float32),
                   jax.ShapeDtypeStruct((B, H_SIZE), jnp.float32)),
        in_specs=[vmem] * len(kernel_args),
        out_specs=(vmem, vmem),
    )(*kernel_args)

    final_score = (h_final @ params['w_score'] + params['b_score'])[:, 0]   # (B,)
    att = s_att_flat[..., 0].reshape(T, B, HW)          # rows were b*HW + s
    video_soft_att = jnp.transpose(att, (1, 0, 2)).reshape(B, T, 1, Ho, Wo)
    return final_score, video_soft_att


# ----------------------------- parameter init ------------------------------ #
def init_params(key, feature_size):
    c_in = 2 * feature_size
    P = c_in * 4
    X_SIZE, H_SIZE, K = 256, 128, 64

    def nrm(k, shape, scale=0.05):
        return scale * jax.random.normal(k, shape, dtype=jnp.float32)

    keys = jax.random.split(key, 21)
    p = {
        'w1': nrm(keys[0], (P, 512)),       'b1': nrm(keys[1], (1, 512)),
        'w2': nrm(keys[2], (512, X_SIZE)),  'b2': nrm(keys[3], (1, X_SIZE)),
        'wxc': nrm(keys[4], (1, K)),        'bxc': nrm(keys[5], (1, K)),
        'whc': nrm(keys[6], (H_SIZE, K)),
        'wb': nrm(keys[7], (1, K)),         'bb': nrm(keys[8], (1, 1)),
        'ws': nrm(keys[9], (X_SIZE, K)),    'bs': nrm(keys[10], (1, K)),
        'whs': nrm(keys[11], (H_SIZE, K)),
        'wa': nrm(keys[12], (1, K)),        'ba': nrm(keys[13], (1, 1)),
        'wih': nrm(keys[14], (X_SIZE, 3 * H_SIZE)),
        'bih': nrm(keys[15], (1, 3 * H_SIZE)),
        # TODO(synk): PyTorch uses orthogonal init for the GRU weight matrices;
        # plain Gaussian init is used here (forward semantics are unaffected).
        'whh': nrm(keys[16], (H_SIZE, 3 * H_SIZE)),
        'bhh': nrm(keys[17], (1, 3 * H_SIZE)),
        'w_score': nrm(keys[18], (H_SIZE, 1)),
        'b_score': nrm(keys[19], (1,)),
    }
    return p, keys[20]


# ---------------------------------- main ----------------------------------- #
if __name__ == "__main__":
    feature_size = 4          # -> conv1 input channels = 8
    num_seg = 3               # seq_len
    B = 2
    H_IMG = W_IMG = 14        # 14 -> conv(2,2,s2) -> 7 -> AvgPool2d(7) -> 1

    key = jax.random.PRNGKey(0)
    params, key = init_params(key, feature_size)

    k_vid, k_h0 = jax.random.split(key)
    video = jax.random.normal(
        k_vid, (B, num_seg, 2 * feature_size, H_IMG, W_IMG), dtype=jnp.float32)
    # TODO(synk): PyTorch draws h_top = randn(B, 128) inside every forward;
    # here it is a fixed deterministic input for reproducibility.
    h0 = jax.random.normal(k_h0, (B, 128), dtype=jnp.float32)

    fwd = jax.jit(sca_att_forward)
    final_score, video_soft_att = fwd(video, params, h0)
    final_score = jax.block_until_ready(final_score)
    video_soft_att = jax.block_until_ready(video_soft_att)

    assert final_score.shape == (B,)
    assert video_soft_att.shape == (B, num_seg, 1, 7, 7)
    assert bool(jnp.isfinite(final_score).all())
    assert bool(jnp.isfinite(video_soft_att).all())
    print("KERNEL_OK")
</pallas_src>

<mosaic_0001>
module attributes {stable_mosaic.version = 11 : i64} {
  func.func @sca_att_kernel(%arg0: memref<3x98x32xbf16, #tpu.memory_space<vmem>>, %arg1: memref<2x128xf32, #tpu.memory_space<vmem>>, %arg2: memref<2x98xf32, #tpu.memory_space<vmem>>, %arg3: memref<98x2xf32, #tpu.memory_space<vmem>>, %arg4: memref<32x512xbf16, #tpu.memory_space<vmem>>, %arg5: memref<1x512xf32, #tpu.memory_space<vmem>>, %arg6: memref<512x256xbf16, #tpu.memory_space<vmem>>, %arg7: memref<1x256xf32, #tpu.memory_space<vmem>>, %arg8: memref<64x1xf32, #tpu.memory_space<vmem>>, %arg9: memref<64x1xf32, #tpu.memory_space<vmem>>, %arg10: memref<128x64xbf16, #tpu.memory_space<vmem>>, %arg11: memref<64x1xf32, #tpu.memory_space<vmem>>, %arg12: memref<1x1xf32, #tpu.memory_space<vmem>>, %arg13: memref<256x64xbf16, #tpu.memory_space<vmem>>, %arg14: memref<1x64xf32, #tpu.memory_space<vmem>>, %arg15: memref<128x64xbf16, #tpu.memory_space<vmem>>, %arg16: memref<64x1xf32, #tpu.memory_space<vmem>>, %arg17: memref<1x1xf32, #tpu.memory_space<vmem>>, %arg18: memref<256x384xbf16, #tpu.memory_space<vmem>>, %arg19: memref<1x384xf32, #tpu.memory_space<vmem>>, %arg20: memref<128x384xbf16, #tpu.memory_space<vmem>>, %arg21: memref<1x384xf32, #tpu.memory_space<vmem>>, %arg22: memref<3x98x1xf32, #tpu.memory_space<vmem>>, %arg23: memref<2x128xf32, #tpu.memory_space<vmem>>) attributes {dimension_semantics = [], scalar_prefetch = 0 : i64, scratch_operands = 0 : i64, tpu.core_type = #tpu.core_type<tc>} {
    %c0 = arith.constant 0 : index
    %c0_0 = arith.constant 0 : index
    %0 = vector.load %arg2[%c0, %c0_0] : memref<2x98xf32, #tpu.memory_space<vmem>>, vector<2x98xf32>
    %c0_1 = arith.constant 0 : index
    %c0_2 = arith.constant 0 : index
    %1 = vector.load %arg3[%c0_1, %c0_2] : memref<98x2xf32, #tpu.memory_space<vmem>>, vector<98x2xf32>
    %c0_3 = arith.constant 0 : index
    %c0_4 = arith.constant 0 : index
    %2 = vector.load %arg4[%c0_3, %c0_4] : memref<32x512xbf16, #tpu.memory_space<vmem>>, vector<32x512xbf16>
    %c0_5 = arith.constant 0 : index
    %c0_6 = arith.constant 0 : index
    %3 = vector.load %arg5[%c0_5, %c0_6] : memref<1x512xf32, #tpu.memory_space<vmem>>, vector<1x512xf32>
    %c0_7 = arith.constant 0 : index
    %c0_8 = arith.constant 0 : index
    %4 = vector.load %arg6[%c0_7, %c0_8] : memref<512x256xbf16, #tpu.memory_space<vmem>>, vector<512x256xbf16>
    %c0_9 = arith.constant 0 : index
    %c0_10 = arith.constant 0 : index
    %5 = vector.load %arg7[%c0_9, %c0_10] : memref<1x256xf32, #tpu.memory_space<vmem>>, vector<1x256xf32>
    %c0_11 = arith.constant 0 : index
    %c0_12 = arith.constant 0 : index
    %6 = vector.load %arg8[%c0_11, %c0_12] : memref<64x1xf32, #tpu.memory_space<vmem>>, vector<64x1xf32>
    %c0_13 = arith.constant 0 : index
    %c0_14 = arith.constant 0 : index
    %7 = vector.load %arg9[%c0_13, %c0_14] : memref<64x1xf32, #tpu.memory_space<vmem>>, vector<64x1xf32>
    %c0_15 = arith.constant 0 : index
    %c0_16 = arith.constant 0 : index
    %8 = vector.load %arg10[%c0_15, %c0_16] : memref<128x64xbf16, #tpu.memory_space<vmem>>, vector<128x64xbf16>
    %c0_17 = arith.constant 0 : index
    %c0_18 = arith.constant 0 : index
    %9 = vector.load %arg11[%c0_17, %c0_18] : memref<64x1xf32, #tpu.memory_space<vmem>>, vector<64x1xf32>
    %c0_19 = arith.constant 0 : index
    %c0_20 = arith.constant 0 : index
    %10 = vector.load %arg12[%c0_19, %c0_20] : memref<1x1xf32, #tpu.memory_space<vmem>>, vector<1x1xf32>
    %c0_21 = arith.constant 0 : index
    %c0_22 = arith.constant 0 : index
    %11 = vector.load %arg13[%c0_21, %c0_22] : memref<256x64xbf16, #tpu.memory_space<vmem>>, vector<256x64xbf16>
    %c0_23 = arith.constant 0 : index
    %c0_24 = arith.constant 0 : index
    %12 = vector.load %arg14[%c0_23, %c0_24] : memref<1x64xf32, #tpu.memory_space<vmem>>, vector<1x64xf32>
    %c0_25 = arith.constant 0 : index
    %c0_26 = arith.constant 0 : index
    %13 = vector.load %arg15[%c0_25, %c0_26] : memref<128x64xbf16, #tpu.memory_space<vmem>>, vector<128x64xbf16>
    %c0_27 = arith.constant 0 : index
    %c0_28 = arith.constant 0 : index
    %14 = vector.load %arg16[%c0_27, %c0_28] : memref<64x1xf32, #tpu.memory_space<vmem>>, vector<64x1xf32>
    %c0_29 = arith.constant 0 : index
    %c0_30 = arith.constant 0 : index
    %15 = vector.load %arg17[%c0_29, %c0_30] : memref<1x1xf32, #tpu.memory_space<vmem>>, vector<1x1xf32>
    %c0_31 = arith.constant 0 : index
    %c0_32 = arith.constant 0 : index
    %16 = vector.load %arg18[%c0_31, %c0_32] : memref<256x384xbf16, #tpu.memory_space<vmem>>, vector<256x384xbf16>
    %c0_33 = arith.constant 0 : index
    %c0_34 = arith.constant 0 : index
    %17 = vector.load %arg19[%c0_33, %c0_34] : memref<1x384xf32, #tpu.memory_space<vmem>>, vector<1x384xf32>
    %c0_35 = arith.constant 0 : index
    %c0_36 = arith.constant 0 : index
    %18 = vector.load %arg20[%c0_35, %c0_36] : memref<128x384xbf16, #tpu.memory_space<vmem>>, vector<128x384xbf16>
    %c0_37 = arith.constant 0 : index
    %c0_38 = arith.constant 0 : index
    %19 = vector.load %arg21[%c0_37, %c0_38] : memref<1x384xf32, #tpu.memory_space<vmem>>, vector<1x384xf32>
    %c0_39 = arith.constant 0 : index
    %c0_40 = arith.constant 0 : index
    %20 = vector.load %arg1[%c0_39, %c0_40] : memref<2x128xf32, #tpu.memory_space<vmem>>, vector<2x128xf32>
    %c0_41 = arith.constant 0 : index
    %c0_42 = arith.constant 0 : index
    %c0_43 = arith.constant 0 : index
    %21 = vector.load %arg0[%c0_41, %c0_42, %c0_43] : memref<3x98x32xbf16, #tpu.memory_space<vmem>>, vector<1x98x32xbf16>
    %22 = vector.shape_cast %21 : vector<1x98x32xbf16> to vector<98x32xbf16>
    %cst = arith.constant dense<0.000000e+00> : vector<98x512xf32>
    %23 = tpu.matmul %22, %2, %cst {dimension_numbers = #tpu.dot_dimension_numbers<[1], [0], [0], [1], [0, 0, 1, 1], [], []>} : vector<98x32xbf16>, vector<32x512xbf16>, vector<98x512xf32> -> vector<98x512xf32>
    %24 = vector.broadcast %3 : vector<1x512xf32> to vector<98x512xf32>
    %25 = arith.addf %23, %24 : vector<98x512xf32>
    %cst_44 = arith.constant 0.000000e+00 : f32
    %26 = vector.broadcast %cst_44 : f32 to vector<98x512xf32>
    %27 = arith.maximumf %25, %26 : vector<98x512xf32>
    %28 = arith.truncf %27 : vector<98x512xf32> to vector<98x512xbf16>
    %cst_45 = arith.constant dense<0.000000e+00> : vector<98x256xf32>
    %29 = tpu.matmul %28, %4, %cst_45 {dimension_numbers = #tpu.dot_dimension_numbers<[1], [0], [0], [1], [0, 0, 1, 1], [], []>} : vector<98x512xbf16>, vector<512x256xbf16>, vector<98x256xf32> -> vector<98x256xf32>
    %30 = vector.broadcast %5 : vector<1x256xf32> to vector<98x256xf32>
    %31 = arith.addf %29, %30 : vector<98x256xf32>
    %cst_46 = arith.constant dense<0.000000e+00> : vector<2x256xf32>
    %32 = tpu.matmul %0, %31, %cst_46 {dimension_numbers = #tpu.dot_dimension_numbers<[1], [0], [0], [1], [0, 0, 1, 1], [], []>} : vector<2x98xf32>, vector<98x256xf32>, vector<2x256xf32> -> vector<2x256xf32>
    %cst_47 = arith.constant 0.0204081628 : f32
    %33 = vector.broadcast %cst_47 : f32 to vector<2x256xf32>
    %34 = arith.mulf %32, %33 : vector<2x256xf32>
    %35 = arith.truncf %20 : vector<2x128xf32> to vector<2x128xbf16>
    %cst_48 = arith.constant dense<0.000000e+00> : vector<2x64xf32>
    %36 = tpu.matmul %35, %8, %cst_48 {dimension_numbers = #tpu.dot_dimension_numbers<[1], [0], [0], [1], [0, 0, 1, 1], [], []>} : vector<2x128xbf16>, vector<128x64xbf16>, vector<2x64xf32> -> vector<2x64xf32>
    %37 = vector.shape_cast %34 : vector<2x256xf32> to vector<2x1x256xf32>
    %38 = vector.shape_cast %6 : vector<64x1xf32> to vector<1x64x1xf32>
    %39 = vector.broadcast %37 : vector<2x1x256xf32> to vector<2x64x256xf32>
    %40 = vector.broadcast %38 : vector<1x64x1xf32> to vector<2x64x256xf32>
    %41 = arith.mulf %39, %40 : vector<2x64x256xf32>
    %42 = vector.shape_cast %7 : vector<64x1xf32> to vector<1x64x1xf32>
    %43 = vector.broadcast %42 : vector<1x64x1xf32> to vector<2x64x256xf32>
    %44 = arith.addf %41, %43 : vector<2x64x256xf32>
    %45 = vector.shape_cast %36 : vector<2x64xf32> to vector<2x64x1xf32>
    %46 = vector.broadcast %45 : vector<2x64x1xf32> to vector<2x64x256xf32>
    %47 = arith.addf %44, %46 : vector<2x64x256xf32>
    %48 = math.tanh %47 : vector<2x64x256xf32>
    %49 = vector.shape_cast %9 : vector<64x1xf32> to vector<1x64x1xf32>
    %50 = vector.broadcast %49 : vector<1x64x1xf32> to vector<2x64x256xf32>
    %51 = arith.mulf %48, %50 : vector<2x64x256xf32>
    %cst_49 = arith.constant dense<0.000000e+00> : vector<2x256xf32>
    %52 = vector.multi_reduction <add>, %51, %cst_49 [1] : vector<2x64x256xf32> to vector<2x256xf32>
    %53 = vector.broadcast %10 : vector<1x1xf32> to vector<2x256xf32>
    %54 = arith.addf %52, %53 : vector<2x256xf32>
    %55 = arith.negf %54 : vector<2x256xf32>
    %56 = math.exp %55 : vector<2x256xf32>
    %cst_50 = arith.constant 1.000000e+00 : f32
    %57 = vector.broadcast %cst_50 : f32 to vector<2x256xf32>
    %58 = arith.addf %57, %56 : vector<2x256xf32>
    %59 = arith.divf %57, %58 : vector<2x256xf32>
    %cst_51 = arith.constant dense<0.000000e+00> : vector<98x256xf32>
    %60 = tpu.matmul %1, %59, %cst_51 {dimension_numbers = #tpu.dot_dimension_numbers<[1], [0], [0], [1], [0, 0, 1, 1], [], []>} : vector<98x2xf32>, vector<2x256xf32>, vector<98x256xf32> -> vector<98x256xf32>
    %61 = arith.mulf %31, %60 : vector<98x256xf32>
    %62 = arith.truncf %61 : vector<98x256xf32> to vector<98x256xbf16>
    %cst_52 = arith.constant dense<0.000000e+00> : vector<98x64xf32>
    %63 = tpu.matmul %62, %11, %cst_52 {dimension_numbers = #tpu.dot_dimension_numbers<[1], [0], [0], [1], [0, 0, 1, 1], [], []>} : vector<98x256xbf16>, vector<256x64xbf16>, vector<98x64xf32> -> vector<98x64xf32>
    %64 = vector.broadcast %12 : vector<1x64xf32> to vector<98x64xf32>
    %65 = arith.addf %63, %64 : vector<98x64xf32>
    %66 = arith.truncf %20 : vector<2x128xf32> to vector<2x128xbf16>
    %cst_53 = arith.constant dense<0.000000e+00> : vector<2x64xf32>
    %67 = tpu.matmul %66, %13, %cst_53 {dimension_numbers = #tpu.dot_dimension_numbers<[1], [0], [0], [1], [0, 0, 1, 1], [], []>} : vector<2x128xbf16>, vector<128x64xbf16>, vector<2x64xf32> -> vector<2x64xf32>
    %cst_54 = arith.constant dense<0.000000e+00> : vector<98x64xf32>
    %68 = tpu.matmul %1, %67, %cst_54 {dimension_numbers = #tpu.dot_dimension_numbers<[1], [0], [0], [1], [0, 0, 1, 1], [], []>} : vector<98x2xf32>, vector<2x64xf32>, vector<98x64xf32> -> vector<98x64xf32>
    %69 = arith.addf %65, %68 : vector<98x64xf32>
    %70 = math.tanh %69 : vector<98x64xf32>
    %cst_55 = arith.constant dense<0.000000e+00> : vector<98x1xf32>
    %71 = tpu.matmul %70, %14, %cst_55 {dimension_numbers = #tpu.dot_dimension_numbers<[1], [0], [0], [1], [0, 0, 1, 1], [], []>} : vector<98x64xf32>, vector<64x1xf32>, vector<98x1xf32> -> vector<98x1xf32>
    %72 = vector.broadcast %15 : vector<1x1xf32> to vector<98x1xf32>
    %73 = arith.addf %71, %72 : vector<98x1xf32>
    %cst_56 = arith.constant dense<0xFF800000> : vector<1xf32>
    %74 = vector.multi_reduction <maximumf>, %73, %cst_56 [0] : vector<98x1xf32> to vector<1xf32>
    %75 = vector.shape_cast %74 : vector<1xf32> to vector<1x1xf32>
    %76 = vector.broadcast %75 : vector<1x1xf32> to vector<98x1xf32>
    %77 = arith.subf %73, %76 : vector<98x1xf32>
    %78 = math.exp %77 : vector<98x1xf32>
    %cst_57 = arith.constant dense<0.000000e+00> : vector<2x1xf32>
    %79 = tpu.matmul %0, %78, %cst_57 {dimension_numbers = #tpu.dot_dimension_numbers<[1], [0], [0], [1], [0, 0, 1, 1], [], []>} : vector<2x98xf32>, vector<98x1xf32>, vector<2x1xf32> -> vector<2x1xf32>
    %80 = tpu.reciprocal %79 {approx = true} : vector<2x1xf32> -> vector<2x1xf32>
    %cst_58 = arith.constant dense<0.000000e+00> : vector<98x1xf32>
    %81 = tpu.matmul %1, %80, %cst_58 {dimension_numbers = #tpu.dot_dimension_numbers<[1], [0], [0], [1], [0, 0, 1, 1], [], []>} : vector<98x2xf32>, vector<2x1xf32>, vector<98x1xf32> -> vector<98x1xf32>
    %82 = arith.mulf %78, %81 : vector<98x1xf32>
    %83 = vector.broadcast %82 : vector<98x1xf32> to vector<98x256xf32>
    %84 = arith.mulf %61, %83 : vector<98x256xf32>
    %cst_59 = arith.constant dense<0.000000e+00> : vector<2x256xf32>
    %85 = tpu.matmul %0, %84, %cst_59 {dimension_numbers = #tpu.dot_dimension_numbers<[1], [0], [0], [1], [0, 0, 1, 1], [], []>} : vector<2x98xf32>, vector<98x256xf32>, vector<2x256xf32> -> vector<2x256xf32>
    %86 = arith.truncf %85 : vector<2x256xf32> to vector<2x256xbf16>
    %cst_60 = arith.constant dense<0.000000e+00> : vector<2x384xf32>
    %87 = tpu.matmul %86, %16, %cst_60 {dimension_numbers = #tpu.dot_dimension_numbers<[1], [0], [0], [1], [0, 0, 1, 1], [], []>} : vector<2x256xbf16>, vector<256x384xbf16>, vector<2x384xf32> -> vector<2x384xf32>
    %88 = vector.broadcast %17 : vector<1x384xf32> to vector<2x384xf32>
    %89 = arith.addf %87, %88 : vector<2x384xf32>
    %90 = arith.truncf %20 : vector<2x128xf32> to vector<2x128xbf16>
    %cst_61 = arith.constant dense<0.000000e+00> : vector<2x384xf32>
    %91 = tpu.matmul %90, %18, %cst_61 {dimension_numbers = #tpu.dot_dimension_numbers<[1], [0], [0], [1], [0, 0, 1, 1], [], []>} : vector<2x128xbf16>, vector<128x384xbf16>, vector<2x384xf32> -> vector<2x384xf32>
    %92 = vector.broadcast %19 : vector<1x384xf32> to vector<2x384xf32>
    %93 = arith.addf %91, %92 : vector<2x384xf32>
    %94 = vector.extract_strided_slice %89 {offsets = [0, 0], sizes = [2, 128], strides = [1, 1]} : vector<2x384xf32> to vector<2x128xf32>
    %95 = vector.extract_strided_slice %93 {offsets = [0, 0], sizes = [2, 128], strides = [1, 1]} : vector<2x384xf32> to vector<2x128xf32>
    %96 = arith.addf %94, %95 : vector<2x128xf32>
    %97 = arith.negf %96 : vector<2x128xf32>
    %98 = math.exp %97 : vector<2x128xf32>
    %cst_62 = arith.constant 1.000000e+00 : f32
    %99 = vector.broadcast %cst_62 : f32 to vector<2x128xf32>
    %100 = arith.addf %99, %98 : vector<2x128xf32>
    %101 = arith.divf %99, %100 : vector<2x128xf32>
    %102 = vector.extract_strided_slice %89 {offsets = [0, 128], sizes = [2, 128], strides = [1, 1]} : vector<2x384xf32> to vector<2x128xf32>
    %103 = vector.extract_strided_slice %93 {offsets = [0, 128], sizes = [2, 128], strides = [1, 1]} : vector<2x384xf32> to vector<2x128xf32>
    %104 = arith.addf %102, %103 : vector<2x128xf32>
    %105 = arith.negf %104 : vector<2x128xf32>
    %106 = math.exp %105 : vector<2x128xf32>
    %cst_63 = arith.constant 1.000000e+00 : f32
    %107 = vector.broadcast %cst_63 : f32 to vector<2x128xf32>
    %108 = arith.addf %107, %106 : vector<2x128xf32>
    %109 = arith.divf %107, %108 : vector<2x128xf32>
    %110 = vector.extract_strided_slice %89 {offsets = [0, 256], sizes = [2, 128], strides = [1, 1]} : vector<2x384xf32> to vector<2x128xf32>
    %111 = vector.extract_strided_slice %93 {offsets = [0, 256], sizes = [2, 128], strides = [1, 1]} : vector<2x384xf32> to vector<2x128xf32>
    %112 = arith.mulf %101, %111 : vector<2x128xf32>
    %113 = arith.addf %110, %112 : vector<2x128xf32>
    %114 = math.tanh %113 : vector<2x128xf32>
    %cst_64 = arith.constant 1.000000e+00 : f32
    %115 = vector.broadcast %cst_64 : f32 to vector<2x128xf32>
    %116 = arith.subf %115, %109 : vector<2x128xf32>
    %117 = arith.mulf %116, %114 : vector<2x128xf32>
    %118 = arith.mulf %109, %20 : vector<2x128xf32>
    %119 = arith.addf %117, %118 : vector<2x128xf32>
    %c1 = arith.constant 1 : index
    %c0_65 = arith.constant 0 : index
    %c0_66 = arith.constant 0 : index
    %120 = vector.load %arg0[%c1, %c0_65, %c0_66] : memref<3x98x32xbf16, #tpu.memory_space<vmem>>, vector<1x98x32xbf16>
    %121 = vector.shape_cast %120 : vector<1x98x32xbf16> to vector<98x32xbf16>
    %cst_67 = arith.constant dense<0.000000e+00> : vector<98x512xf32>
    %122 = tpu.matmul %121, %2, %cst_67 {dimension_numbers = #tpu.dot_dimension_numbers<[1], [0], [0], [1], [0, 0, 1, 1], [], []>} : vector<98x32xbf16>, vector<32x512xbf16>, vector<98x512xf32> -> vector<98x512xf32>
    %123 = vector.broadcast %3 : vector<1x512xf32> to vector<98x512xf32>
    %124 = arith.addf %122, %123 : vector<98x512xf32>
    %cst_68 = arith.constant 0.000000e+00 : f32
    %125 = vector.broadcast %cst_68 : f32 to vector<98x512xf32>
    %126 = arith.maximumf %124, %125 : vector<98x512xf32>
    %127 = arith.truncf %126 : vector<98x512xf32> to vector<98x512xbf16>
    %cst_69 = arith.constant dense<0.000000e+00> : vector<98x256xf32>
    %128 = tpu.matmul %127, %4, %cst_69 {dimension_numbers = #tpu.dot_dimension_numbers<[1], [0], [0], [1], [0, 0, 1, 1], [], []>} : vector<98x512xbf16>, vector<512x256xbf16>, vector<98x256xf32> -> vector<98x256xf32>
    %129 = vector.broadcast %5 : vector<1x256xf32> to vector<98x256xf32>
    %130 = arith.addf %128, %129 : vector<98x256xf32>
    %cst_70 = arith.constant dense<0.000000e+00> : vector<2x256xf32>
    %131 = tpu.matmul %0, %130, %cst_70 {dimension_numbers = #tpu.dot_dimension_numbers<[1], [0], [0], [1], [0, 0, 1, 1], [], []>} : vector<2x98xf32>, vector<98x256xf32>, vector<2x256xf32> -> vector<2x256xf32>
    %cst_71 = arith.constant 0.0204081628 : f32
    %132 = vector.broadcast %cst_71 : f32 to vector<2x256xf32>
    %133 = arith.mulf %131, %132 : vector<2x256xf32>
    %134 = arith.truncf %119 : vector<2x128xf32> to vector<2x128xbf16>
    %cst_72 = arith.constant dense<0.000000e+00> : vector<2x64xf32>
    %135 = tpu.matmul %134, %8, %cst_72 {dimension_numbers = #tpu.dot_dimension_numbers<[1], [0], [0], [1], [0, 0, 1, 1], [], []>} : vector<2x128xbf16>, vector<128x64xbf16>, vector<2x64xf32> -> vector<2x64xf32>
    %136 = vector.shape_cast %133 : vector<2x256xf32> to vector<2x1x256xf32>
    %137 = vector.shape_cast %6 : vector<64x1xf32> to vector<1x64x1xf32>
    %138 = vector.broadcast %136 : vector<2x1x256xf32> to vector<2x64x256xf32>
    %139 = vector.broadcast %137 : vector<1x64x1xf32> to vector<2x64x256xf32>
    %140 = arith.mulf %138, %139 : vector<2x64x256xf32>
    %141 = vector.shape_cast %7 : vector<64x1xf32> to vector<1x64x1xf32>
    %142 = vector.broadcast %141 : vector<1x64x1xf32> to vector<2x64x256xf32>
    %143 = arith.addf %140, %142 : vector<2x64x256xf32>
    %144 = vector.shape_cast %135 : vector<2x64xf32> to vector<2x64x1xf32>
    %145 = vector.broadcast %144 : vector<2x64x1xf32> to vector<2x64x256xf32>
    %146 = arith.addf %143, %145 : vector<2x64x256xf32>
    %147 = math.tanh %146 : vector<2x64x256xf32>
    %148 = vector.shape_cast %9 : vector<64x1xf32> to vector<1x64x1xf32>
    %149 = vector.broadcast %148 : vector<1x64x1xf32> to vector<2x64x256xf32>
    %150 = arith.mulf %147, %149 : vector<2x64x256xf32>
    %cst_73 = arith.constant dense<0.000000e+00> : vector<2x256xf32>
    %151 = vector.multi_reduction <add>, %150, %cst_73 [1] : vector<2x64x256xf32> to vector<2x256xf32>
    %152 = vector.broadcast %10 : vector<1x1xf32> to vector<2x256xf32>
    %153 = arith.addf %151, %152 : vector<2x256xf32>
    %154 = arith.negf %153 : vector<2x256xf32>
    %155 = math.exp %154 : vector<2x256xf32>
    %cst_74 = arith.constant 1.000000e+00 : f32
    %156 = vector.broadcast %cst_74 : f32 to vector<2x256xf32>
    %157 = arith.addf %156, %155 : vector<2x256xf32>
    %158 = arith.divf %156, %157 : vector<2x256xf32>
    %cst_75 = arith.constant dense<0.000000e+00> : vector<98x256xf32>
    %159 = tpu.matmul %1, %158, %cst_75 {dimension_numbers = #tpu.dot_dimension_numbers<[1], [0], [0], [1], [0, 0, 1, 1], [], []>} : vector<98x2xf32>, vector<2x256xf32>, vector<98x256xf32> -> vector<98x256xf32>
    %160 = arith.mulf %130, %159 : vector<98x256xf32>
    %161 = arith.truncf %160 : vector<98x256xf32> to vector<98x256xbf16>
    %cst_76 = arith.constant dense<0.000000e+00> : vector<98x64xf32>
    %162 = tpu.matmul %161, %11, %cst_76 {dimension_numbers = #tpu.dot_dimension_numbers<[1], [0], [0], [1], [0, 0, 1, 1], [], []>} : vector<98x256xbf16>, vector<256x64xbf16>, vector<98x64xf32> -> vector<98x64xf32>
    %163 = vector.broadcast %12 : vector<1x64xf32> to vector<98x64xf32>
    %164 = arith.addf %162, %163 : vector<98x64xf32>
    %165 = arith.truncf %119 : vector<2x128xf32> to vector<2x128xbf16>
    %cst_77 = arith.constant dense<0.000000e+00> : vector<2x64xf32>
    %166 = tpu.matmul %165, %13, %cst_77 {dimension_numbers = #tpu.dot_dimension_numbers<[1], [0], [0], [1], [0, 0, 1, 1], [], []>} : vector<2x128xbf16>, vector<128x64xbf16>, vector<2x64xf32> -> vector<2x64xf32>
    %cst_78 = arith.constant dense<0.000000e+00> : vector<98x64xf32>
    %167 = tpu.matmul %1, %166, %cst_78 {dimension_numbers = #tpu.dot_dimension_numbers<[1], [0], [0], [1], [0, 0, 1, 1], [], []>} : vector<98x2xf32>, vector<2x64xf32>, vector<98x64xf32> -> vector<98x64xf32>
    %168 = arith.addf %164, %167 : vector<98x64xf32>
    %169 = math.tanh %168 : vector<98x64xf32>
    %cst_79 = arith.constant dense<0.000000e+00> : vector<98x1xf32>
    %170 = tpu.matmul %169, %14, %cst_79 {dimension_numbers = #tpu.dot_dimension_numbers<[1], [0], [0], [1], [0, 0, 1, 1], [], []>} : vector<98x64xf32>, vector<64x1xf32>, vector<98x1xf32> -> vector<98x1xf32>
    %171 = vector.broadcast %15 : vector<1x1xf32> to vector<98x1xf32>
    %172 = arith.addf %170, %171 : vector<98x1xf32>
    %cst_80 = arith.constant dense<0xFF800000> : vector<1xf32>
    %173 = vector.multi_reduction <maximumf>, %172, %cst_80 [0] : vector<98x1xf32> to vector<1xf32>
    %174 = vector.shape_cast %173 : vector<1xf32> to vector<1x1xf32>
    %175 = vector.broadcast %174 : vector<1x1xf32> to vector<98x1xf32>
    %176 = arith.subf %172, %175 : vector<98x1xf32>
    %177 = math.exp %176 : vector<98x1xf32>
    %cst_81 = arith.constant dense<0.000000e+00> : vector<2x1xf32>
    %178 = tpu.matmul %0, %177, %cst_81 {dimension_numbers = #tpu.dot_dimension_numbers<[1], [0], [0], [1], [0, 0, 1, 1], [], []>} : vector<2x98xf32>, vector<98x1xf32>, vector<2x1xf32> -> vector<2x1xf32>
    %179 = tpu.reciprocal %178 {approx = true} : vector<2x1xf32> -> vector<2x1xf32>
    %cst_82 = arith.constant dense<0.000000e+00> : vector<98x1xf32>
    %180 = tpu.matmul %1, %179, %cst_82 {dimension_numbers = #tpu.dot_dimension_numbers<[1], [0], [0], [1], [0, 0, 1, 1], [], []>} : vector<98x2xf32>, vector<2x1xf32>, vector<98x1xf32> -> vector<98x1xf32>
    %181 = arith.mulf %177, %180 : vector<98x1xf32>
    %182 = vector.broadcast %181 : vector<98x1xf32> to vector<98x256xf32>
    %183 = arith.mulf %160, %182 : vector<98x256xf32>
    %cst_83 = arith.constant dense<0.000000e+00> : vector<2x256xf32>
    %184 = tpu.matmul %0, %183, %cst_83 {dimension_numbers = #tpu.dot_dimension_numbers<[1], [0], [0], [1], [0, 0, 1, 1], [], []>} : vector<2x98xf32>, vector<98x256xf32>, vector<2x256xf32> -> vector<2x256xf32>
    %185 = arith.truncf %184 : vector<2x256xf32> to vector<2x256xbf16>
    %cst_84 = arith.constant dense<0.000000e+00> : vector<2x384xf32>
    %186 = tpu.matmul %185, %16, %cst_84 {dimension_numbers = #tpu.dot_dimension_numbers<[1], [0], [0], [1], [0, 0, 1, 1], [], []>} : vector<2x256xbf16>, vector<256x384xbf16>, vector<2x384xf32> -> vector<2x384xf32>
    %187 = vector.broadcast %17 : vector<1x384xf32> to vector<2x384xf32>
    %188 = arith.addf %186, %187 : vector<2x384xf32>
    %189 = arith.truncf %119 : vector<2x128xf32> to vector<2x128xbf16>
    %cst_85 = arith.constant dense<0.000000e+00> : vector<2x384xf32>
    %190 = tpu.matmul %189, %18, %cst_85 {dimension_numbers = #tpu.dot_dimension_numbers<[1], [0], [0], [1], [0, 0, 1, 1], [], []>} : vector<2x128xbf16>, vector<128x384xbf16>, vector<2x384xf32> -> vector<2x384xf32>
    %191 = vector.broadcast %19 : vector<1x384xf32> to vector<2x384xf32>
    %192 = arith.addf %190, %191 : vector<2x384xf32>
    %193 = vector.extract_strided_slice %188 {offsets = [0, 0], sizes = [2, 128], strides = [1, 1]} : vector<2x384xf32> to vector<2x128xf32>
    %194 = vector.extract_strided_slice %192 {offsets = [0, 0], sizes = [2, 128], strides = [1, 1]} : vector<2x384xf32> to vector<2x128xf32>
    %195 = arith.addf %193, %194 : vector<2x128xf32>
    %196 = arith.negf %195 : vector<2x128xf32>
    %197 = math.exp %196 : vector<2x128xf32>
    %cst_86 = arith.constant 1.000000e+00 : f32
    %198 = vector.broadcast %cst_86 : f32 to vector<2x128xf32>
    %199 = arith.addf %198, %197 : vector<2x128xf32>
    %200 = arith.divf %198, %199 : vector<2x128xf32>
    %201 = vector.extract_strided_slice %188 {offsets = [0, 128], sizes = [2, 128], strides = [1, 1]} : vector<2x384xf32> to vector<2x128xf32>
    %202 = vector.extract_strided_slice %192 {offsets = [0, 128], sizes = [2, 128], strides = [1, 1]} : vector<2x384xf32> to vector<2x128xf32>
    %203 = arith.addf %201, %202 : vector<2x128xf32>
    %204 = arith.negf %203 : vector<2x128xf32>
    %205 = math.exp %204 : vector<2x128xf32>
    %cst_87 = arith.constant 1.000000e+00 : f32
    %206 = vector.broadcast %cst_87 : f32 to vector<2x128xf32>
    %207 = arith.addf %206, %205 : vector<2x128xf32>
    %208 = arith.divf %206, %207 : vector<2x128xf32>
    %209 = vector.extract_strided_slice %188 {offsets = [0, 256], sizes = [2, 128], strides = [1, 1]} : vector<2x384xf32> to vector<2x128xf32>
    %210 = vector.extract_strided_slice %192 {offsets = [0, 256], sizes = [2, 128], strides = [1, 1]} : vector<2x384xf32> to vector<2x128xf32>
    %211 = arith.mulf %200, %210 : vector<2x128xf32>
    %212 = arith.addf %209, %211 : vector<2x128xf32>
    %213 = math.tanh %212 : vector<2x128xf32>
    %cst_88 = arith.constant 1.000000e+00 : f32
    %214 = vector.broadcast %cst_88 : f32 to vector<2x128xf32>
    %215 = arith.subf %214, %208 : vector<2x128xf32>
    %216 = arith.mulf %215, %213 : vector<2x128xf32>
    %217 = arith.mulf %208, %119 : vector<2x128xf32>
    %218 = arith.addf %216, %217 : vector<2x128xf32>
    %c2 = arith.constant 2 : index
    %c0_89 = arith.constant 0 : index
    %c0_90 = arith.constant 0 : index
    %219 = vector.load %arg0[%c2, %c0_89, %c0_90] : memref<3x98x32xbf16, #tpu.memory_space<vmem>>, vector<1x98x32xbf16>
    %220 = vector.shape_cast %219 : vector<1x98x32xbf16> to vector<98x32xbf16>
    %cst_91 = arith.constant dense<0.000000e+00> : vector<98x512xf32>
    %221 = tpu.matmul %220, %2, %cst_91 {dimension_numbers = #tpu.dot_dimension_numbers<[1], [0], [0], [1], [0, 0, 1, 1], [], []>} : vector<98x32xbf16>, vector<32x512xbf16>, vector<98x512xf32> -> vector<98x512xf32>
    %222 = vector.broadcast %3 : vector<1x512xf32> to vector<98x512xf32>
    %223 = arith.addf %221, %222 : vector<98x512xf32>
    %cst_92 = arith.constant 0.000000e+00 : f32
    %224 = vector.broadcast %cst_92 : f32 to vector<98x512xf32>
    %225 = arith.maximumf %223, %224 : vector<98x512xf32>
    %226 = arith.truncf %225 : vector<98x512xf32> to vector<98x512xbf16>
    %cst_93 = arith.constant dense<0.000000e+00> : vector<98x256xf32>
    %227 = tpu.matmul %226, %4, %cst_93 {dimension_numbers = #tpu.dot_dimension_numbers<[1], [0], [0], [1], [0, 0, 1, 1], [], []>} : vector<98x512xbf16>, vector<512x256xbf16>, vector<98x256xf32> -> vector<98x256xf32>
    %228 = vector.broadcast %5 : vector<1x256xf32> to vector<98x256xf32>
    %229 = arith.addf %227, %228 : vector<98x256xf32>
    %cst_94 = arith.constant dense<0.000000e+00> : vector<2x256xf32>
    %230 = tpu.matmul %0, %229, %cst_94 {dimension_numbers = #tpu.dot_dimension_numbers<[1], [0], [0], [1], [0, 0, 1, 1], [], []>} : vector<2x98xf32>, vector<98x256xf32>, vector<2x256xf32> -> vector<2x256xf32>
    %cst_95 = arith.constant 0.0204081628 : f32
    %231 = vector.broadcast %cst_95 : f32 to vector<2x256xf32>
    %232 = arith.mulf %230, %231 : vector<2x256xf32>
    %233 = arith.truncf %218 : vector<2x128xf32> to vector<2x128xbf16>
    %cst_96 = arith.constant dense<0.000000e+00> : vector<2x64xf32>
    %234 = tpu.matmul %233, %8, %cst_96 {dimension_numbers = #tpu.dot_dimension_numbers<[1], [0], [0], [1], [0, 0, 1, 1], [], []>} : vector<2x128xbf16>, vector<128x64xbf16>, vector<2x64xf32> -> vector<2x64xf32>
    %235 = vector.shape_cast %232 : vector<2x256xf32> to vector<2x1x256xf32>
    %236 = vector.shape_cast %6 : vector<64x1xf32> to vector<1x64x1xf32>
    %237 = vector.broadcast %235 : vector<2x1x256xf32> to vector<2x64x256xf32>
    %238 = vector.broadcast %236 : vector<1x64x1xf32> to vector<2x64x256xf32>
    %239 = arith.mulf %237, %238 : vector<2x64x256xf32>
    %240 = vector.shape_cast %7 : vector<64x1xf32> to vector<1x64x1xf32>
    %241 = vector.broadcast %240 : vector<1x64x1xf32> to vector<2x64x256xf32>
    %242 = arith.addf %239, %241 : vector<2x64x256xf32>
    %243 = vector.shape_cast %234 : vector<2x64xf32> to vector<2x64x1xf32>
    %244 = vector.broadcast %243 : vector<2x64x1xf32> to vector<2x64x256xf32>
    %245 = arith.addf %242, %244 : vector<2x64x256xf32>
    %246 = math.tanh %245 : vector<2x64x256xf32>
    %247 = vector.shape_cast %9 : vector<64x1xf32> to vector<1x64x1xf32>
    %248 = vector.broadcast %247 : vector<1x64x1xf32> to vector<2x64x256xf32>
    %249 = arith.mulf %246, %248 : vector<2x64x256xf32>
    %cst_97 = arith.constant dense<0.000000e+00> : vector<2x256xf32>
    %250 = vector.multi_reduction <add>, %249, %cst_97 [1] : vector<2x64x256xf32> to vector<2x256xf32>
    %251 = vector.broadcast %10 : vector<1x1xf32> to vector<2x256xf32>
    %252 = arith.addf %250, %251 : vector<2x256xf32>
    %253 = arith.negf %252 : vector<2x256xf32>
    %254 = math.exp %253 : vector<2x256xf32>
    %cst_98 = arith.constant 1.000000e+00 : f32
    %255 = vector.broadcast %cst_98 : f32 to vector<2x256xf32>
    %256 = arith.addf %255, %254 : vector<2x256xf32>
    %257 = arith.divf %255, %256 : vector<2x256xf32>
    %cst_99 = arith.constant dense<0.000000e+00> : vector<98x256xf32>
    %258 = tpu.matmul %1, %257, %cst_99 {dimension_numbers = #tpu.dot_dimension_numbers<[1], [0], [0], [1], [0, 0, 1, 1], [], []>} : vector<98x2xf32>, vector<2x256xf32>, vector<98x256xf32> -> vector<98x256xf32>
    %259 = arith.mulf %229, %258 : vector<98x256xf32>
    %260 = arith.truncf %259 : vector<98x256xf32> to vector<98x256xbf16>
    %cst_100 = arith.constant dense<0.000000e+00> : vector<98x64xf32>
    %261 = tpu.matmul %260, %11, %cst_100 {dimension_numbers = #tpu.dot_dimension_numbers<[1], [0], [0], [1], [0, 0, 1, 1], [], []>} : vector<98x256xbf16>, vector<256x64xbf16>, vector<98x64xf32> -> vector<98x64xf32>
    %262 = vector.broadcast %12 : vector<1x64xf32> to vector<98x64xf32>
    %263 = arith.addf %261, %262 : vector<98x64xf32>
    %264 = arith.truncf %218 : vector<2x128xf32> to vector<2x128xbf16>
    %cst_101 = arith.constant dense<0.000000e+00> : vector<2x64xf32>
    %265 = tpu.matmul %264, %13, %cst_101 {dimension_numbers = #tpu.dot_dimension_numbers<[1], [0], [0], [1], [0, 0, 1, 1], [], []>} : vector<2x128xbf16>, vector<128x64xbf16>, vector<2x64xf32> -> vector<2x64xf32>
    %cst_102 = arith.constant dense<0.000000e+00> : vector<98x64xf32>
    %266 = tpu.matmul %1, %265, %cst_102 {dimension_numbers = #tpu.dot_dimension_numbers<[1], [0], [0], [1], [0, 0, 1, 1], [], []>} : vector<98x2xf32>, vector<2x64xf32>, vector<98x64xf32> -> vector<98x64xf32>
    %267 = arith.addf %263, %266 : vector<98x64xf32>
    %268 = math.tanh %267 : vector<98x64xf32>
    %cst_103 = arith.constant dense<0.000000e+00> : vector<98x1xf32>
    %269 = tpu.matmul %268, %14, %cst_103 {dimension_numbers = #tpu.dot_dimension_numbers<[1], [0], [0], [1], [0, 0, 1, 1], [], []>} : vector<98x64xf32>, vector<64x1xf32>, vector<98x1xf32> -> vector<98x1xf32>
    %270 = vector.broadcast %15 : vector<1x1xf32> to vector<98x1xf32>
    %271 = arith.addf %269, %270 : vector<98x1xf32>
    %cst_104 = arith.constant dense<0xFF800000> : vector<1xf32>
    %272 = vector.multi_reduction <maximumf>, %271, %cst_104 [0] : vector<98x1xf32> to vector<1xf32>
    %273 = vector.shape_cast %272 : vector<1xf32> to vector<1x1xf32>
    %274 = vector.broadcast %273 : vector<1x1xf32> to vector<98x1xf32>
    %275 = arith.subf %271, %274 : vector<98x1xf32>
    %276 = math.exp %275 : vector<98x1xf32>
    %cst_105 = arith.constant dense<0.000000e+00> : vector<2x1xf32>
    %277 = tpu.matmul %0, %276, %cst_105 {dimension_numbers = #tpu.dot_dimension_numbers<[1], [0], [0], [1], [0, 0, 1, 1], [], []>} : vector<2x98xf32>, vector<98x1xf32>, vector<2x1xf32> -> vector<2x1xf32>
    %278 = tpu.reciprocal %277 {approx = true} : vector<2x1xf32> -> vector<2x1xf32>
    %cst_106 = arith.constant dense<0.000000e+00> : vector<98x1xf32>
    %279 = tpu.matmul %1, %278, %cst_106 {dimension_numbers = #tpu.dot_dimension_numbers<[1], [0], [0], [1], [0, 0, 1, 1], [], []>} : vector<98x2xf32>, vector<2x1xf32>, vector<98x1xf32> -> vector<98x1xf32>
    %280 = arith.mulf %276, %279 : vector<98x1xf32>
    %281 = vector.broadcast %280 : vector<98x1xf32> to vector<98x256xf32>
    %282 = arith.mulf %259, %281 : vector<98x256xf32>
    %cst_107 = arith.constant dense<0.000000e+00> : vector<2x256xf32>
    %283 = tpu.matmul %0, %282, %cst_107 {dimension_numbers = #tpu.dot_dimension_numbers<[1], [0], [0], [1], [0, 0, 1, 1], [], []>} : vector<2x98xf32>, vector<98x256xf32>, vector<2x256xf32> -> vector<2x256xf32>
    %284 = arith.truncf %283 : vector<2x256xf32> to vector<2x256xbf16>
    %cst_108 = arith.constant dense<0.000000e+00> : vector<2x384xf32>
    %285 = tpu.matmul %284, %16, %cst_108 {dimension_numbers = #tpu.dot_dimension_numbers<[1], [0], [0], [1], [0, 0, 1, 1], [], []>} : vector<2x256xbf16>, vector<256x384xbf16>, vector<2x384xf32> -> vector<2x384xf32>
    %286 = vector.broadcast %17 : vector<1x384xf32> to vector<2x384xf32>
    %287 = arith.addf %285, %286 : vector<2x384xf32>
    %288 = arith.truncf %218 : vector<2x128xf32> to vector<2x128xbf16>
    %cst_109 = arith.constant dense<0.000000e+00> : vector<2x384xf32>
    %289 = tpu.matmul %288, %18, %cst_109 {dimension_numbers = #tpu.dot_dimension_numbers<[1], [0], [0], [1], [0, 0, 1, 1], [], []>} : vector<2x128xbf16>, vector<128x384xbf16>, vector<2x384xf32> -> vector<2x384xf32>
    %290 = vector.broadcast %19 : vector<1x384xf32> to vector<2x384xf32>
    %291 = arith.addf %289, %290 : vector<2x384xf32>
    %292 = vector.extract_strided_slice %287 {offsets = [0, 0], sizes = [2, 128], strides = [1, 1]} : vector<2x384xf32> to vector<2x128xf32>
    %293 = vector.extract_strided_slice %291 {offsets = [0, 0], sizes = [2, 128], strides = [1, 1]} : vector<2x384xf32> to vector<2x128xf32>
    %294 = arith.addf %292, %293 : vector<2x128xf32>
    %295 = arith.negf %294 : vector<2x128xf32>
    %296 = math.exp %295 : vector<2x128xf32>
    %cst_110 = arith.constant 1.000000e+00 : f32
    %297 = vector.broadcast %cst_110 : f32 to vector<2x128xf32>
    %298 = arith.addf %297, %296 : vector<2x128xf32>
    %299 = arith.divf %297, %298 : vector<2x128xf32>
    %300 = vector.extract_strided_slice %287 {offsets = [0, 128], sizes = [2, 128], strides = [1, 1]} : vector<2x384xf32> to vector<2x128xf32>
    %301 = vector.extract_strided_slice %291 {offsets = [0, 128], sizes = [2, 128], strides = [1, 1]} : vector<2x384xf32> to vector<2x128xf32>
    %302 = arith.addf %300, %301 : vector<2x128xf32>
    %303 = arith.negf %302 : vector<2x128xf32>
    %304 = math.exp %303 : vector<2x128xf32>
    %cst_111 = arith.constant 1.000000e+00 : f32
    %305 = vector.broadcast %cst_111 : f32 to vector<2x128xf32>
    %306 = arith.addf %305, %304 : vector<2x128xf32>
    %307 = arith.divf %305, %306 : vector<2x128xf32>
    %308 = vector.extract_strided_slice %287 {offsets = [0, 256], sizes = [2, 128], strides = [1, 1]} : vector<2x384xf32> to vector<2x128xf32>
    %309 = vector.extract_strided_slice %291 {offsets = [0, 256], sizes = [2, 128], strides = [1, 1]} : vector<2x384xf32> to vector<2x128xf32>
    %310 = arith.mulf %299, %309 : vector<2x128xf32>
    %311 = arith.addf %308, %310 : vector<2x128xf32>
    %312 = math.tanh %311 : vector<2x128xf32>
    %cst_112 = arith.constant 1.000000e+00 : f32
    %313 = vector.broadcast %cst_112 : f32 to vector<2x128xf32>
    %314 = arith.subf %313, %307 : vector<2x128xf32>
    %315 = arith.mulf %314, %312 : vector<2x128xf32>
    %316 = arith.mulf %307, %218 : vector<2x128xf32>
    %317 = arith.addf %315, %316 : vector<2x128xf32>
    %318 = vector.shape_cast %82 : vector<98x1xf32> to vector<1x98x1xf32>
    %319 = vector.shape_cast %181 : vector<98x1xf32> to vector<1x98x1xf32>
    %320 = vector.shape_cast %280 : vector<98x1xf32> to vector<1x98x1xf32>
    %321 = tpu.concatenate %318, %319, %320 in 0 : vector<1x98x1xf32>, vector<1x98x1xf32>, vector<1x98x1xf32> -> vector<3x98x1xf32>
    %c0_113 = arith.constant 0 : index
    %c0_114 = arith.constant 0 : index
    %c0_115 = arith.constant 0 : index
    %322 = vector.load %arg22[%c0_113, %c0_114, %c0_115] : memref<3x98x1xf32, #tpu.memory_space<vmem>>, vector<3x98x1xf32>
    tpu.vector_store %arg22[%c0_113, %c0_114, %c0_115], %321 {strides = array<i32>} : memref<3x98x1xf32, #tpu.memory_space<vmem>>, vector<3x98x1xf32>,
    %c0_116 = arith.constant 0 : index
    %c0_117 = arith.constant 0 : index
    %323 = vector.load %arg23[%c0_116, %c0_117] : memref<2x128xf32, #tpu.memory_space<vmem>>, vector<2x128xf32>
    tpu.vector_store %arg23[%c0_116, %c0_117], %317 {strides = array<i32>} : memref<2x128xf32, #tpu.memory_space<vmem>>, vector<2x128xf32>,
    return
  }
}

</mosaic_0001>

<llo_original>
// kernel: squeeze.3
$region0: #{squeeze.3}
  %s0 = inlined_call_operand.vmem [shape: f32[3,98], index: 0, kind: input, shape index: {}]
  %s1 = inlined_call_operand.vmem [shape: f32[3,2,49], index: 1, kind: output, shape index: {}]
  $region1: #{squeeze.3} parent=0
    #allocation0 [shape = 'u8[12288]{0}', space=vmem, size = 0x3000, scoped, tag = 'scoped mem for output reshape']
    #allocation1 [shape = 'u8[4096]{0}', space=vmem, size = 0x1000, scoped, tag = 'scoped mem for input reshape']
    %s3 = sshllo.u32 0, 4
    %v4 = vld [vmem:[%s0] sm:%s3]
    %5 = vst [vmem:[#allocation1] sm:%s3] %v4
    %v6 = vld [vmem:[#allocation1] sm:$0x7]
    %vm7 = vcmask 400384
    %8 = vst.msk [vmem:[#allocation0] ss:$8 sm:$0x7] %vm7, %v6
    %v9 = vld [vmem:[#allocation1] sm:$0x7]
    %10 = vrot.lane.b32.xlu0 %v9, 79
    %v11 = vpop.permute.xlu0 %10
    %vm12 = vcmask 400384
    %s13 = scalar_lea.vmem [#allocation0], 1
    %14 = vst.msk [vmem:[%s13] ss:$8 sm:$0x7] %vm12, %v11
    %s16 = sshllo.u32 0, 2
    %v18 = vld [vmem:[#allocation0] sm:%s16]
    %s19 = sshllo.u32 0, 2
    %20 = vst [vmem:[%s1] sm:%s19] %v18
    %s21 = scalar_lea.vmem [#allocation0], 8
    %v22 = vld [vmem:[%s21] sm:%s16]
    %s23 = sshllo.u32 0, 2
    %s24 = scalar_lea.vmem %s1, 2
    %25 = vst [vmem:[%s24] sm:%s23] %v22
    %s26 = scalar_lea.vmem [#allocation0], 16
    %v27 = vld [vmem:[%s26] sm:%s16]
    %s28 = sshllo.u32 0, 2
    %s29 = smul.addr 2, 2
    %s30 = scalar_lea.vmem %s1, %s29
    %31 = vst [vmem:[%s30] sm:%s28] %v27

// kernel: sca_att_forward.1
$region0: #{sca_att_forward.1}
  #allocation0 [shape = 'u32[]', space=smem, size = 0x4, offset = 0x4, fixed_abs, tag = 'smem constant byte address 0x4 - core index']
  #allocation1 [shape = 'u32[144,128]{1,0:T(1,128)}', space=vmem, size = 0x12000, scoped, tag = 'internal scratch']
  #allocation2 [shape = 'f32[1,1]{1,0:T(1,128)S(1)}', space=vmem, size = 0x200, scoped, tag = 'scoped memory for sca_att_forward.1']
  #allocation3 [shape = 'f32[1,1]{1,0:T(1,128)S(1)}', space=vmem, size = 0x200, scoped, tag = 'scoped memory for sca_att_forward.1']
  %s0 = inlined_call_operand.vmem [shape: bf16[3,98,32], index: 0, kind: input, shape index: {}]
  %s1 = inlined_call_operand.vmem [shape: f32[2,128], index: 1, kind: input, shape index: {}]
  %s2 = inlined_call_operand.vmem [shape: f32[2,98], index: 2, kind: input, shape index: {}]
  %s3 = inlined_call_operand.vmem [shape: f32[98,2], index: 3, kind: input, shape index: {}]
  %s4 = inlined_call_operand.vmem [shape: bf16[32,512], index: 4, kind: input, shape index: {}]
  %s5 = inlined_call_operand.vmem [shape: f32[1,512], index: 5, kind: input, shape index: {}]
  %s6 = inlined_call_operand.vmem [shape: bf16[512,256], index: 6, kind: input, shape index: {}]
  %s7 = inlined_call_operand.vmem [shape: f32[1,256], index: 7, kind: input, shape index: {}]
  %s8 = inlined_call_operand.vmem [shape: f32[64,1], index: 8, kind: input, shape index: {}]
  %s9 = inlined_call_operand.vmem [shape: f32[64,1], index: 9, kind: input, shape index: {}]
  %s10 = inlined_call_operand.vmem [shape: bf16[128,64], index: 10, kind: input, shape index: {}]
  %s11 = inlined_call_operand.vmem [shape: f32[64,1], index: 11, kind: input, shape index: {}]
  %s12 = inlined_call_operand.<no memory space> [shape: f32[1,1], index: 12, kind: input, shape index: {}]
  %s13 = inlined_call_operand.vmem [shape: bf16[256,64], index: 13, kind: input, shape index: {}]
  %s14 = inlined_call_operand.vmem [shape: f32[1,64], index: 14, kind: input, shape index: {}]
  %s15 = inlined_call_operand.vmem [shape: bf16[128,64], index: 15, kind: input, shape index: {}]
  %s16 = inlined_call_operand.vmem [shape: f32[64,1], index: 16, kind: input, shape index: {}]
  %s17 = inlined_call_operand.<no memory space> [shape: f32[1,1], index: 17, kind: input, shape index: {}]
  %s18 = inlined_call_operand.vmem [shape: bf16[256,384], index: 18, kind: input, shape index: {}]
  %s19 = inlined_call_operand.vmem [shape: f32[1,384], index: 19, kind: input, shape index: {}]
  %s20 = inlined_call_operand.vmem [shape: bf16[128,384], index: 20, kind: input, shape index: {}]
  %s21 = inlined_call_operand.vmem [shape: f32[1,384], index: 21, kind: input, shape index: {}]
  %s22 = inlined_call_operand.vmem [shape: f32[3,98,1], index: 22, kind: output, shape index: {0}]
  %s23 = inlined_call_operand.vmem [shape: f32[2,128], index: 23, kind: output, shape index: {1}]
  %24 = xla_tuple %s22, %s23
  %s25 = sld [smem:[#allocation0]]
  $region106: #{sca_att_forward.1} parent=0
    _
  %s27 = ssub.s32 1, %s25
  %s28 = scalar_select 0, %s27, %s25
  %v29 = vstv %s12
  %30 = vst [vmem:[#allocation2] sm:$0x1] %v29
  %v31 = vstv %s17
  %32 = vst [vmem:[#allocation3] sm:$0x1] %v31
  // Predicated region
  $region2: #{sca_att_forward.1} parent=0 // pred_check
    _
  $region3: #{sca_att_forward.1} parent=0 // pred_check_branch
    %34 = sbr.rel (0) target = $region5
  $region4: #{sca_att_forward.1} parent=0 // pred_region
    _
  $region5: #{sca_att_forward.1} parent=0 // pred_fallthru
    _
  // Predicated region
  $region6: #{sca_att_forward.1} parent=0 // pred_check
    _
  $region7: #{sca_att_forward.1} parent=0 // pred_check_branch
    %36 = sbr.rel (0) target = $region9
  $region8: #{sca_att_forward.1} parent=0 // pred_region
    _
  $region9: #{sca_att_forward.1} parent=0 // pred_fallthru
    _
  // Predicated region
  $region10: #{sca_att_forward.1} parent=0 // pred_check
    _
  $region11: #{sca_att_forward.1} parent=0 // pred_check_branch
    %38 = sbr.rel (0) target = $region13
  $region12: #{sca_att_forward.1} parent=0 // pred_region
    _
  $region13: #{sca_att_forward.1} parent=0 // pred_fallthru
    _
  // Predicated region
  $region14: #{sca_att_forward.1} parent=0 // pred_check
    _
  $region15: #{sca_att_forward.1} parent=0 // pred_check_branch
    %40 = sbr.rel (0) target = $region17
  $region16: #{sca_att_forward.1} parent=0 // pred_region
    _
  $region17: #{sca_att_forward.1} parent=0 // pred_fallthru
    _
  // Predicated region
  $region18: #{sca_att_forward.1} parent=0 // pred_check
    _
  $region19: #{sca_att_forward.1} parent=0 // pred_check_branch
    %42 = sbr.rel (0) target = $region21
  $region20: #{sca_att_forward.1} parent=0 // pred_region
    _
  $region21: #{sca_att_forward.1} parent=0 // pred_fallthru
    _
  // Predicated region
  $region22: #{sca_att_forward.1} parent=0 // pred_check
    _
  $region23: #{sca_att_forward.1} parent=0 // pred_check_branch
    %44 = sbr.rel (0) target = $region25
  $region24: #{sca_att_forward.1} parent=0 // pred_region
    _
  $region25: #{sca_att_forward.1} parent=0 // pred_fallthru
    _
  // Predicated region
  $region26: #{sca_att_forward.1} parent=0 // pred_check
    _
  $region27: #{sca_att_forward.1} parent=0 // pred_check_branch
    %46 = sbr.rel (0) target = $region29
  $region28: #{sca_att_forward.1} parent=0 // pred_region
    _
  $region29: #{sca_att_forward.1} parent=0 // pred_fallthru
    _
  // Predicated region
  $region30: #{sca_att_forward.1} parent=0 // pred_check
    _
  $region31: #{sca_att_forward.1} parent=0 // pred_check_branch
    %48 = sbr.rel (0) target = $region33
  $region32: #{sca_att_forward.1} parent=0 // pred_region
    _
  $region33: #{sca_att_forward.1} parent=0 // pred_fallthru
    _
  // Predicated region
  $region34: #{sca_att_forward.1} parent=0 // pred_check
    _
  $region35: #{sca_att_forward.1} parent=0 // pred_check_branch
    %50 = sbr.rel (0) target = $region37
  $region36: #{sca_att_forward.1} parent=0 // pred_region
    _
  $region37: #{sca_att_forward.1} parent=0 // pred_fallthru
    _
  // Predicated region
  $region38: #{sca_att_forward.1} parent=0 // pred_check
    _
  $region39: #{sca_att_forward.1} parent=0 // pred_check_branch
    %52 = sbr.rel (0) target = $region41
  $region40: #{sca_att_forward.1} parent=0 // pred_region
    _
  $region41: #{sca_att_forward.1} parent=0 // pred_fallthru
    _
  // Predicated region
  $region42: #{sca_att_forward.1} parent=0 // pred_check
    _
  $region43: #{sca_att_forward.1} parent=0 // pred_check_branch
    %54 = sbr.rel (0) target = $region45
  $region44: #{sca_att_forward.1} parent=0 // pred_region
    _
  $region45: #{sca_att_forward.1} parent=0 // pred_fallthru
    _
  // Predicated region
  $region46: #{sca_att_forward.1} parent=0 // pred_check
    _
  $region47: #{sca_att_forward.1} parent=0 // pred_check_branch
    %56 = sbr.rel (0) target = $region49
  $region48: #{sca_att_forward.1} parent=0 // pred_region
    _
  $region49: #{sca_att_forward.1} parent=0 // pred_fallthru
    _
  // Predicated region
  $region50: #{sca_att_forward.1} parent=0 // pred_check
    _
  $region51: #{sca_att_forward.1} parent=0 // pred_check_branch
    %58 = sbr.rel (0) target = $region53
  $region52: #{sca_att_forward.1} parent=0 // pred_region
    _
  $region53: #{sca_att_forward.1} parent=0 // pred_fallthru
    _
  // Predicated region
  $region54: #{sca_att_forward.1} parent=0 // pred_check
    _
  $region55: #{sca_att_forward.1} parent=0 // pred_check_branch
    %60 = sbr.rel (0) target = $region57
  $region56: #{sca_att_forward.1} parent=0 // pred_region
    _
  $region57: #{sca_att_forward.1} parent=0 // pred_fallthru
    _
  // Predicated region
  $region58: #{sca_att_forward.1} parent=0 // pred_check
    _
  $region59: #{sca_att_forward.1} parent=0 // pred_check_branch
    %62 = sbr.rel (0) target = $region61
  $region60: #{sca_att_forward.1} parent=0 // pred_region
    _
  $region61: #{sca_att_forward.1} parent=0 // pred_fallthru
    _
  // Predicated region
  $region62: #{sca_att_forward.1} parent=0 // pred_check
    _
  $region63: #{sca_att_forward.1} parent=0 // pred_check_branch
    %64 = sbr.rel (0) target = $region65
  $region64: #{sca_att_forward.1} parent=0 // pred_region
    _
  $region65: #{sca_att_forward.1} parent=0 // pred_fallthru
    _
  // Predicated region
  $region66: #{sca_att_forward.1} parent=0 // pred_check
    _
  $region67: #{sca_att_forward.1} parent=0 // pred_check_branch
    %66 = sbr.rel (0) target = $region69
  $region68: #{sca_att_forward.1} parent=0 // pred_region
    _
  $region69: #{sca_att_forward.1} parent=0 // pred_fallthru
    _
  // Predicated region
  $region70: #{sca_att_forward.1} parent=0 // pred_check
    _
  $region71: #{sca_att_forward.1} parent=0 // pred_check_branch
    %68 = sbr.rel (0) target = $region73
  $region72: #{sca_att_forward.1} parent=0 // pred_region
    _
  $region73: #{sca_att_forward.1} parent=0 // pred_fallthru
    _
  // Predicated region
  $region74: #{sca_att_forward.1} parent=0 // pred_check
    _
  $region75: #{sca_att_forward.1} parent=0 // pred_check_branch
    %70 = sbr.rel (0) target = $region77
  $region76: #{sca_att_forward.1} parent=0 // pred_region
    _
  $region77: #{sca_att_forward.1} parent=0 // pred_fallthru
    _
  // Predicated region
  $region78: #{sca_att_forward.1} parent=0 // pred_check
    _
  $region79: #{sca_att_forward.1} parent=0 // pred_check_branch
    %72 = sbr.rel (0) target = $region81
  $region80: #{sca_att_forward.1} parent=0 // pred_region
    _
  $region81: #{sca_att_forward.1} parent=0 // pred_fallthru
    _
  // Predicated region
  $region82: #{sca_att_forward.1} parent=0 // pred_check
    _
  $region83: #{sca_att_forward.1} parent=0 // pred_check_branch
    %74 = sbr.rel (0) target = $region85
  $region84: #{sca_att_forward.1} parent=0 // pred_region
    _
  $region85: #{sca_att_forward.1} parent=0 // pred_fallthru
    _
  // Predicated region
  $region86: #{sca_att_forward.1} parent=0 // pred_check
    _
  $region87: #{sca_att_forward.1} parent=0 // pred_check_branch
    %76 = sbr.rel (0) target = $region89
  $region88: #{sca_att_forward.1} parent=0 // pred_region
    _
  $region89: #{sca_att_forward.1} parent=0 // pred_fallthru
    _
  %v78 = vld [vmem:[%s2] sm:$0x3]
  %v79 = vld [vmem:[%s3] sm:$0xff]
  %v80 = vld [vmem:[%s3 + $0x8] sm:$0xff]
  %v81 = vld [vmem:[%s3 + $0x10] sm:$0xff]
  %v82 = vld [vmem:[%s3 + $0x18] sm:$0xff]
  %v83 = vld [vmem:[%s3 + $0x20] sm:$0xff]
  %v84 = vld [vmem:[%s3 + $0x28] sm:$0xff]
  %v85 = vld [vmem:[%s3 + $0x30] sm:$0xff]
  %v86 = vld [vmem:[%s3 + $0x38] sm:$0xff]
  %v87 = vld [vmem:[%s3 + $0x40] sm:$0xff]
  %v88 = vld [vmem:[%s3 + $0x48] sm:$0xff]
  %v89 = vld [vmem:[%s3 + $0x50] sm:$0xff]
  %v90 = vld [vmem:[%s3 + $0x58] sm:$0xff]
  %v91 = vld [vmem:[%s3 + $0x60] sm:$0x3]
  %v92 = vld [vmem:[%s4] sm:$0xff]
  %v93 = vld [vmem:[%s4 + $0x8] sm:$0xff]
  %v94 = vld [vmem:[%s4 + $0x10] sm:$0xff]
  %v95 = vld [vmem:[%s4 + $0x18] sm:$0xff]
  %v96 = vld [vmem:[%s4 + $0x20] sm:$0xff]
  %v97 = vld [vmem:[%s4 + $0x28] sm:$0xff]
  %v98 = vld [vmem:[%s4 + $0x30] sm:$0xff]
  %v99 = vld [vmem:[%s4 + $0x38] sm:$0xff]
  %v100 = vld [vmem:[%s5] sm:$0xf]
  %v101 = vld [vmem:[%s6] sm:$0xff]
  %v102 = vld [vmem:[%s6 + $0x8] sm:$0xff]
  %v103 = vld [vmem:[%s6 + $0x10] sm:$0xff]
  %v104 = vld [vmem:[%s6 + $0x18] sm:$0xff]
  %v105 = vld [vmem:[%s6 + $0x20] sm:$0xff]
  %v106 = vld [vmem:[%s6 + $0x28] sm:$0xff]
  %v107 = vld [vmem:[%s6 + $0x30] sm:$0xff]
  %v108 = vld [vmem:[%s6 + $0x38] sm:$0xff]
  %v109 = vld [vmem:[%s6 + $0x40] sm:$0xff]
  %v110 = vld [vmem:[%s6 + $0x48] sm:$0xff]
  %v111 = vld [vmem:[%s6 + $0x50] sm:$0xff]
  %v112 = vld [vmem:[%s6 + $0x58] sm:$0xff]
  %v113 = vld [vmem:[%s6 + $0x60] sm:$0xff]
  %v114 = vld [vmem:[%s6 + $0x68] sm:$0xff]
  %v115 = vld [vmem:[%s6 + $0x70] sm:$0xff]
  %v116 = vld [vmem:[%s6 + $0x78] sm:$0xff]
  %v117 = vld [vmem:[%s6 + $0x80] sm:$0xff]
  %v118 = vld [vmem:[%s6 + $0x88] sm:$0xff]
  %v119 = vld [vmem:[%s6 + $0x90] sm:$0xff]
  %v120 = vld [vmem:[%s6 + $0x98] sm:$0xff]
  %v121 = vld [vmem:[%s6 + $0xa0] sm:$0xff]
  %v122 = vld [vmem:[%s6 + $0xa8] sm:$0xff]
  %v123 = vld [vmem:[%s6 + $0xb0] sm:$0xff]
  %v124 = vld [vmem:[%s6 + $0xb8] sm:$0xff]
  %v125 = vld [vmem:[%s6 + $0xc0] sm:$0xff]
  %v126 = vld [vmem:[%s6 + $0xc8] sm:$0xff]
  %v127 = vld [vmem:[%s6 + $0xd0] sm:$0xff]
  %v128 = vld [vmem:[%s6 + $0xd8] sm:$0xff]
  %v129 = vld [vmem:[%s6 + $0xe0] sm:$0xff]
  %v130 = vld [vmem:[%s6 + $0xe8] sm:$0xff]
  %v131 = vld [vmem:[%s6 + $0xf0] sm:$0xff]
  %v132 = vld [vmem:[%s6 + $0xf8] sm:$0xff]
  %v133 = vld [vmem:[%s6 + $0x100] sm:$0xff]
  %v134 = vld [vmem:[%s6 + $0x108] sm:$0xff]
  %v135 = vld [vmem:[%s6 + $0x110] sm:$0xff]
  %v136 = vld [vmem:[%s6 + $0x118] sm:$0xff]
  %v137 = vld [vmem:[%s6 + $0x120] sm:$0xff]
  %v138 = vld [vmem:[%s6 + $0x128] sm:$0xff]
  %v139 = vld [vmem:[%s6 + $0x130] sm:$0xff]
  %v140 = vld [vmem:[%s6 + $0x138] sm:$0xff]
  %v141 = vld [vmem:[%s6 + $0x140] sm:$0xff]
  %v142 = vld [vmem:[%s6 + $0x148] sm:$0xff]
  %v143 = vld [vmem:[%s6 + $0x150] sm:$0xff]
  %v144 = vld [vmem:[%s6 + $0x158] sm:$0xff]
  %v145 = vld [vmem:[%s6 + $0x160] sm:$0xff]
  %v146 = vld [vmem:[%s6 + $0x168] sm:$0xff]
  %v147 = vld [vmem:[%s6 + $0x170] sm:$0xff]
  %v148 = vld [vmem:[%s6 + $0x178] sm:$0xff]
  %v149 = vld [vmem:[%s6 + $0x180] sm:$0xff]
  %v150 = vld [vmem:[%s6 + $0x188] sm:$0xff]
  %v151 = vld [vmem:[%s6 + $0x190] sm:$0xff]
  %v152 = vld [vmem:[%s6 + $0x198] sm:$0xff]
  %v153 = vld [vmem:[%s6 + $0x1a0] sm:$0xff]
  %v154 = vld [vmem:[%s6 + $0x1a8] sm:$0xff]
  %v155 = vld [vmem:[%s6 + $0x1b0] sm:$0xff]
  %v156 = vld [vmem:[%s6 + $0x1b8] sm:$0xff]
  %v157 = vld [vmem:[%s6 + $0x1c0] sm:$0xff]
  %v158 = vld [vmem:[%s6 + $0x1c8] sm:$0xff]
  %v159 = vld [vmem:[%s6 + $0x1d0] sm:$0xff]
  %v160 = vld [vmem:[%s6 + $0x1d8] sm:$0xff]
  %v161 = vld [vmem:[%s6 + $0x1e0] sm:$0xff]
  %v162 = vld [vmem:[%s6 + $0x1e8] sm:$0xff]
  %v163 = vld [vmem:[%s6 + $0x1f0] sm:$0xff]
  %v164 = vld [vmem:[%s6 + $0x1f8] sm:$0xff]
  %v165 = vld [vmem:[%s7] sm:$0x3]
  %v166 = vld [vmem:[%s8] sm:$0xff]
  %v167 = vld [vmem:[%s8 + $0x8] sm:$0xff]
  %v168 = vld [vmem:[%s8 + $0x10] sm:$0xff]
  %v169 = vld [vmem:[%s8 + $0x18] sm:$0xff]
  %v170 = vld [vmem:[%s8 + $0x20] sm:$0xff]
  %v171 = vld [vmem:[%s8 + $0x28] sm:$0xff]
  %v172 = vld [vmem:[%s8 + $0x30] sm:$0xff]
  %v173 = vld [vmem:[%s8 + $0x38] sm:$0xff]
  %v174 = vld [vmem:[%s9] sm:$0xff]
  %v175 = vld [vmem:[%s9 + $0x8] sm:$0xff]
  %v176 = vld [vmem:[%s9 + $0x10] sm:$0xff]
  %v177 = vld [vmem:[%s9 + $0x18] sm:$0xff]
  %v178 = vld [vmem:[%s9 + $0x20] sm:$0xff]
  %v179 = vld [vmem:[%s9 + $0x28] sm:$0xff]
  %v180 = vld [vmem:[%s9 + $0x30] sm:$0xff]
  %v181 = vld [vmem:[%s9 + $0x38] sm:$0xff]
  %v182 = vld [vmem:[%s10] sm:$0xf]
  %v183 = vld [vmem:[%s10 + $0x4] sm:$0xf]
  %v184 = vld [vmem:[%s10 + $0x8] sm:$0xf]
  %v185 = vld [vmem:[%s10 + $0xc] sm:$0xf]
  %v186 = vld [vmem:[%s10 + $0x10] sm:$0xf]
  %v187 = vld [vmem:[%s10 + $0x14] sm:$0xf]
  %v188 = vld [vmem:[%s10 + $0x18] sm:$0xf]
  %v189 = vld [vmem:[%s10 + $0x1c] sm:$0xf]
  %v190 = vld [vmem:[%s10 + $0x20] sm:$0xf]
  %v191 = vld [vmem:[%s10 + $0x24] sm:$0xf]
  %v192 = vld [vmem:[%s10 + $0x28] sm:$0xf]
  %v193 = vld [vmem:[%s10 + $0x2c] sm:$0xf]
  %v194 = vld [vmem:[%s10 + $0x30] sm:$0xf]
  %v195 = vld [vmem:[%s10 + $0x34] sm:$0xf]
  %v196 = vld [vmem:[%s10 + $0x38] sm:$0xf]
  %v197 = vld [vmem:[%s10 + $0x3c] sm:$0xf]
  %v198 = vld [vmem:[%s11] sm:$0xff]
  %v199 = vld [vmem:[%s11 + $0x8] sm:$0xff]
  %v200 = vld [vmem:[%s11 + $0x10] sm:$0xff]
  %v201 = vld [vmem:[%s11 + $0x18] sm:$0xff]
  %v202 = vld [vmem:[%s11 + $0x20] sm:$0xff]
  %v203 = vld [vmem:[%s11 + $0x28] sm:$0xff]
  %v204 = vld [vmem:[%s11 + $0x30] sm:$0xff]
  %v205 = vld [vmem:[%s11 + $0x38] sm:$0xff]
  %v206 = vld [vmem:[#allocation2] sm:$0x1]
  %v207 = vld [vmem:[%s13] sm:$0xf]
  %v208 = vld [vmem:[%s13 + $0x4] sm:$0xf]
  %v209 = vld [vmem:[%s13 + $0x8] sm:$0xf]
  %v210 = vld [vmem:[%s13 + $0xc] sm:$0xf]
  %v211 = vld [vmem:[%s13 + $0x10] sm:$0xf]
  %v212 = vld [vmem:[%s13 + $0x14] sm:$0xf]
  %v213 = vld [vmem:[%s13 + $0x18] sm:$0xf]
  %v214 = vld [vmem:[%s13 + $0x1c] sm:$0xf]
  %v215 = vld [vmem:[%s13 + $0x20] sm:$0xf]
  %v216 = vld [vmem:[%s13 + $0x24] sm:$0xf]
  %v217 = vld [vmem:[%s13 + $0x28] sm:$0xf]
  %v218 = vld [vmem:[%s13 + $0x2c] sm:$0xf]
  %v219 = vld [vmem:[%s13 + $0x30] sm:$0xf]
  %v220 = vld [vmem:[%s13 + $0x34] sm:$0xf]
  %v221 = vld [vmem:[%s13 + $0x38] sm:$0xf]
  %v222 = vld [vmem:[%s13 + $0x3c] sm:$0xf]
  %v223 = vld [vmem:[%s13 + $0x40] sm:$0xf]
  %v224 = vld [vmem:[%s13 + $0x44] sm:$0xf]
  %v225 = vld [vmem:[%s13 + $0x48] sm:$0xf]
  %v226 = vld [vmem:[%s13 + $0x4c] sm:$0xf]
  %v227 = vld [vmem:[%s13 + $0x50] sm:$0xf]
  %v228 = vld [vmem:[%s13 + $0x54] sm:$0xf]
  %v229 = vld [vmem:[%s13 + $0x58] sm:$0xf]
  %v230 = vld [vmem:[%s13 + $0x5c] sm:$0xf]
  %v231 = vld [vmem:[%s13 + $0x60] sm:$0xf]
  %v232 = vld [vmem:[%s13 + $0x64] sm:$0xf]
  %v233 = vld [vmem:[%s13 + $0x68] sm:$0xf]
  %v234 = vld [vmem:[%s13 + $0x6c] sm:$0xf]
  %v235 = vld [vmem:[%s13 + $0x70] sm:$0xf]
  %v236 = vld [vmem:[%s13 + $0x74] sm:$0xf]
  %v237 = vld [vmem:[%s13 + $0x78] sm:$0xf]
  %v238 = vld [vmem:[%s13 + $0x7c] sm:$0xf]
  %v239 = vld [vmem:[%s14] sm:$0x1]
  %v240 = vld [vmem:[%s15] sm:$0xf]
  %v241 = vld [vmem:[%s15 + $0x4] sm:$0xf]
  %v242 = vld [vmem:[%s15 + $0x8] sm:$0xf]
  %v243 = vld [vmem:[%s15 + $0xc] sm:$0xf]
  %v244 = vld [vmem:[%s15 + $0x10] sm:$0xf]
  %v245 = vld [vmem:[%s15 + $0x14] sm:$0xf]
  %v246 = vld [vmem:[%s15 + $0x18] sm:$0xf]
  %v247 = vld [vmem:[%s15 + $0x1c] sm:$0xf]
  %v248 = vld [vmem:[%s15 + $0x20] sm:$0xf]
  %v249 = vld [vmem:[%s15 + $0x24] sm:$0xf]
  %v250 = vld [vmem:[%s15 + $0x28] sm:$0xf]
  %v251 = vld [vmem:[%s15 + $0x2c] sm:$0xf]
  %v252 = vld [vmem:[%s15 + $0x30] sm:$0xf]
  %v253 = vld [vmem:[%s15 + $0x34] sm:$0xf]
  %v254 = vld [vmem:[%s15 + $0x38] sm:$0xf]
  %v255 = vld [vmem:[%s15 + $0x3c] sm:$0xf]
  %v256 = vld [vmem:[%s16] sm:$0xff]
  %v257 = vld [vmem:[%s16 + $0x8] sm:$0xff]
  %v258 = vld [vmem:[%s16 + $0x10] sm:$0xff]
  %v259 = vld [vmem:[%s16 + $0x18] sm:$0xff]
  %v260 = vld [vmem:[%s16 + $0x20] sm:$0xff]
  %v261 = vld [vmem:[%s16 + $0x28] sm:$0xff]
  %v262 = vld [vmem:[%s16 + $0x30] sm:$0xff]
  %v263 = vld [vmem:[%s16 + $0x38] sm:$0xff]
  %v264 = vld [vmem:[#allocation3] sm:$0x1]
  %v265 = vld [vmem:[%s18] sm:$0xff]
  %v266 = vld [vmem:[%s18 + $0x8] sm:$0xf]
  %v267 = vld [vmem:[%s18 + $0xc] sm:$0xff]
  %v268 = vld [vmem:[%s18 + $0x14] sm:$0xf]
  %v269 = vld [vmem:[%s18 + $0x18] sm:$0xff]
  %v270 = vld [vmem:[%s18 + $0x20] sm:$0xf]
  %v271 = vld [vmem:[%s18 + $0x24] sm:$0xff]
  %v272 = vld [vmem:[%s18 + $0x2c] sm:$0xf]
  %v273 = vld [vmem:[%s18 + $0x30] sm:$0xff]
  %v274 = vld [vmem:[%s18 + $0x38] sm:$0xf]
  %v275 = vld [vmem:[%s18 + $0x3c] sm:$0xff]
  %v276 = vld [vmem:[%s18 + $0x44] sm:$0xf]
  %v277 = vld [vmem:[%s18 + $0x48] sm:$0xff]
  %v278 = vld [vmem:[%s18 + $0x50] sm:$0xf]
  %v279 = vld [vmem:[%s18 + $0x54] sm:$0xff]
  %v280 = vld [vmem:[%s18 + $0x5c] sm:$0xf]
  %v281 = vld [vmem:[%s18 + $0x60] sm:$0xff]
  %v282 = vld [vmem:[%s18 + $0x68] sm:$0xf]
  %v283 = vld [vmem:[%s18 + $0x6c] sm:$0xff]
  %v284 = vld [vmem:[%s18 + $0x74] sm:$0xf]
  %v285 = vld [vmem:[%s18 + $0x78] sm:$0xff]
  %v286 = vld [vmem:[%s18 + $0x80] sm:$0xf]
  %v287 = vld [vmem:[%s18 + $0x84] sm:$0xff]
  %v288 = vld [vmem:[%s18 + $0x8c] sm:$0xf]
  %v289 = vld [vmem:[%s18 + $0x90] sm:$0xff]
  %v290 = vld [vmem:[%s18 + $0x98] sm:$0xf]
  %v291 = vld [vmem:[%s18 + $0x9c] sm:$0xff]
  %v292 = vld [vmem:[%s18 + $0xa4] sm:$0xf]
  %v293 = vld [vmem:[%s18 + $0xa8] sm:$0xff]
  %v294 = vld [vmem:[%s18 + $0xb0] sm:$0xf]
  %v295 = vld [vmem:[%s18 + $0xb4] sm:$0xff]
  %v296 = vld [vmem:[%s18 + $0xbc] sm:$0xf]
  %v297 = vld [vmem:[%s18 + $0xc0] sm:$0xff]
  %v298 = vld [vmem:[%s18 + $0xc8] sm:$0xf]
  %v299 = vld [vmem:[%s18 + $0xcc] sm:$0xff]
  %v300 = vld [vmem:[%s18 + $0xd4] sm:$0xf]
  %v301 = vld [vmem:[%s18 + $0xd8] sm:$0xff]
  %v302 = vld [vmem:[%s18 + $0xe0] sm:$0xf]
  %v303 = vld [vmem:[%s18 + $0xe4] sm:$0xff]
  %v304 = vld [vmem:[%s18 + $0xec] sm:$0xf]
  %v305 = vld [vmem:[%s18 + $0xf0] sm:$0xff]
  %v306 = vld [vmem:[%s18 + $0xf8] sm:$0xf]
  %v307 = vld [vmem:[%s18 + $0xfc] sm:$0xff]
  %v308 = vld [vmem:[%s18 + $0x104] sm:$0xf]
  %v309 = vld [vmem:[%s18 + $0x108] sm:$0xff]
  %v310 = vld [vmem:[%s18 + $0x110] sm:$0xf]
  %v311 = vld [vmem:[%s18 + $0x114] sm:$0xff]
  %v312 = vld [vmem:[%s18 + $0x11c] sm:$0xf]
  %v313 = vld [vmem:[%s18 + $0x120] sm:$0xff]
  %v314 = vld [vmem:[%s18 + $0x128] sm:$0xf]
  %v315 = vld [vmem:[%s18 + $0x12c] sm:$0xff]
  %v316 = vld [vmem:[%s18 + $0x134] sm:$0xf]
  %v317 = vld [vmem:[%s18 + $0x138] sm:$0xff]
  %v318 = vld [vmem:[%s18 + $0x140] sm:$0xf]
  %v319 = vld [vmem:[%s18 + $0x144] sm:$0xff]
  %v320 = vld [vmem:[%s18 + $0x14c] sm:$0xf]
  %v321 = vld [vmem:[%s18 + $0x150] sm:$0xff]
  %v322 = vld [vmem:[%s18 + $0x158] sm:$0xf]
  %v323 = vld [vmem:[%s18 + $0x15c] sm:$0xff]
  %v324 = vld [vmem:[%s18 + $0x164] sm:$0xf]
  %v325 = vld [vmem:[%s18 + $0x168] sm:$0xff]
  %v326 = vld [vmem:[%s18 + $0x170] sm:$0xf]
  %v327 = vld [vmem:[%s18 + $0x174] sm:$0xff]
  %v328 = vld [vmem:[%s18 + $0x17c] sm:$0xf]
  %v329 = vld [vmem:[%s19] sm:$0x7]
  %v330 = vld [vmem:[%s20] sm:$0xff]
  %v331 = vld [vmem:[%s20 + $0x8] sm:$0xf]
  %v332 = vld [vmem:[%s20 + $0xc] sm:$0xff]
  %v333 = vld [vmem:[%s20 + $0x14] sm:$0xf]
  %v334 = vld [vmem:[%s20 + $0x18] sm:$0xff]
  %v335 = vld [vmem:[%s20 + $0x20] sm:$0xf]
  %v336 = vld [vmem:[%s20 + $0x24] sm:$0xff]
  %v337 = vld [vmem:[%s20 + $0x2c] sm:$0xf]
  %v338 = vld [vmem:[%s20 + $0x30] sm:$0xff]
  %v339 = vld [vmem:[%s20 + $0x38] sm:$0xf]
  %v340 = vld [vmem:[%s20 + $0x3c] sm:$0xff]
  %v341 = vld [vmem:[%s20 + $0x44] sm:$0xf]
  %v342 = vld [vmem:[%s20 + $0x48] sm:$0xff]
  %v343 = vld [vmem:[%s20 + $0x50] sm:$0xf]
  %v344 = vld [vmem:[%s20 + $0x54] sm:$0xff]
  %v345 = vld [vmem:[%s20 + $0x5c] sm:$0xf]
  %v346 = vld [vmem:[%s20 + $0x60] sm:$0xff]
  %v347 = vld [vmem:[%s20 + $0x68] sm:$0xf]
  %v348 = vld [vmem:[%s20 + $0x6c] sm:$0xff]
  %v349 = vld [vmem:[%s20 + $0x74] sm:$0xf]
  %v350 = vld [vmem:[%s20 + $0x78] sm:$0xff]
  %v351 = vld [vmem:[%s20 + $0x80] sm:$0xf]
  %v352 = vld [vmem:[%s20 + $0x84] sm:$0xff]
  %v353 = vld [vmem:[%s20 + $0x8c] sm:$0xf]
  %v354 = vld [vmem:[%s20 + $0x90] sm:$0xff]
  %v355 = vld [vmem:[%s20 + $0x98] sm:$0xf]
  %v356 = vld [vmem:[%s20 + $0x9c] sm:$0xff]
  %v357 = vld [vmem:[%s20 + $0xa4] sm:$0xf]
  %v358 = vld [vmem:[%s20 + $0xa8] sm:$0xff]
  %v359 = vld [vmem:[%s20 + $0xb0] sm:$0xf]
  %v360 = vld [vmem:[%s20 + $0xb4] sm:$0xff]
  %v361 = vld [vmem:[%s20 + $0xbc] sm:$0xf]
  %v362 = vld [vmem:[%s21] sm:$0x7]
  %v363 = vld [vmem:[%s1] sm:$0x3]
  %v364 = vld [vmem:[%s0] sm:$0xf]
  %v365 = vld [vmem:[%s0 + $0x4] sm:$0xf]
  %v366 = vld [vmem:[%s0 + $0x8] sm:$0xf]
  %v367 = vld [vmem:[%s0 + $0xc] sm:$0xf]
  %v368 = vld [vmem:[%s0 + $0x10] sm:$0xf]
  %v369 = vld [vmem:[%s0 + $0x14] sm:$0xf]
  %v370 = vld [vmem:[%s0 + $0x18] sm:$0xf]
  %v371 = vld [vmem:[%s0 + $0x1c] sm:$0xf]
  %v372 = vld [vmem:[%s0 + $0x20] sm:$0xf]
  %v373 = vld [vmem:[%s0 + $0x24] sm:$0xf]
  %v374 = vld [vmem:[%s0 + $0x28] sm:$0xf]
  %v375 = vld [vmem:[%s0 + $0x2c] sm:$0xf]
  %v376 = vld [vmem:[%s0 + $0x30] sm:$0x1]
  %v378 = vlaneseq
  %v379 = vshrl.u32 %v378, 7
  %v380 = vsub.s32 0, %v379
  %v381 = vrot.slane %v100, %v380
  %v382 = vlaneseq
  %v383 = vshrl.u32 %v382, 7
  %v384 = vsub.s32 1, %v383
  %v385 = vrot.slane %v100, %v384
  %v386 = vlaneseq
  %v387 = vshrl.u32 %v386, 7
  %v388 = vsub.s32 2, %v387
  %v389 = vrot.slane %v100, %v388
  %v390 = vlaneseq
  %v391 = vshrl.u32 %v390, 7
  %v392 = vsub.s32 3, %v391
  %v393 = vrot.slane %v100, %v392
  %v411 = vunpack.c.l.b16 %v364
  %v412 = vunpack.c.l.b16 %v365
  %v413 = vunpack.c.l.b16 %v366
  %v414 = vunpack.c.l.b16 %v367
  %v415 = vunpack.c.l.b16 %v368
  %v416 = vunpack.c.l.b16 %v369
  %v417 = vunpack.c.l.b16 %v370
  %v418 = vunpack.c.l.b16 %v371
  %v419 = vunpack.c.l.b16 %v372
  %v420 = vunpack.c.l.b16 %v373
  %v421 = vunpack.c.l.b16 %v374
  %v422 = vunpack.c.l.b16 %v375
  %v423 = vunpack.c.l.b16 %v376
  %v424 = vpack.c.b16 %v412, %v411
  %v425 = vpack.c.b16 %v414, %v413
  %v426 = vpack.c.b16 %v416, %v415
  %v427 = vpack.c.b16 %v418, %v417
  %v428 = vpack.c.b16 %v420, %v419
  %v429 = vpack.c.b16 %v422, %v421
  %v430 = vpack.c.b16 %v423, %v423
  %v439 = vunpack.c.l.b16 %v92
  %v440 = vunpack.c.h.b16 %v92
  %v441 = vunpack.c.l.b16 %v93
  %v442 = vunpack.c.h.b16 %v93
  %v443 = vunpack.c.l.b16 %v94
  %v444 = vunpack.c.h.b16 %v94
  %v445 = vunpack.c.l.b16 %v95
  %v446 = vunpack.c.h.b16 %v95
  %v447 = vunpack.c.l.b16 %v96
  %v448 = vunpack.c.h.b16 %v96
  %v449 = vunpack.c.l.b16 %v97
  %v450 = vunpack.c.h.b16 %v97
  %v451 = vunpack.c.l.b16 %v98
  %v452 = vunpack.c.h.b16 %v98
  %v453 = vunpack.c.l.b16 %v99
  %v454 = vunpack.c.h.b16 %v99
  %v455 = vpack.c.b16 %v443, %v439
  %v456 = vpack.c.b16 %v444, %v440
  %v457 = vpack.c.b16 %v445, %v441
  %v458 = vpack.c.b16 %v446, %v442
  %v459 = vpack.c.b16 %v451, %v447
  %v460 = vpack.c.b16 %v452, %v448
  %v461 = vpack.c.b16 %v453, %v449
  %v462 = vpack.c.b16 %v454, %v450
  %vm471 = vcmask 261120
  %v473 = vsel %vm471, %v424, 0
  %v476 = vsel %vm471, %v425, 0
  %v479 = vsel %vm471, %v426, 0
  %v482 = vsel %vm471, %v427, 0
  %v485 = vsel %vm471, %v428, 0
  %v488 = vsel %vm471, %v429, 0
  %v491 = vsel %vm471, %v430, 0
  %493 = vmatprep.subr.bf16.mxu0 %v456
  %494 = vmatpush1.bf16.msra.mxu0 %v455
  %495 = vmatprep.subr.bf16.mxu0 %v460
  %496 = vmatpush1.bf16.msra.mxu0 %v459
  %497 = vmatprep.subr.bf16.mxu0 0
  %498 = vmatpush1.bf16.msra.mxu0 0
  %499 = vmatprep.subr.bf16.mxu0 0
  %500 = vmatpush1.bf16.msra.mxu0 0
  %501 = vmatprep.subr.bf16.mxu0 0
  %502 = vmatpush1.bf16.msra.mxu0 0
  %503 = vmatprep.subr.bf16.mxu0 0
  %504 = vmatpush1.bf16.msra.mxu0 0
  %505 = vmatprep.subr.bf16.mxu0 0
  %506 = vmatpush1.bf16.msra.mxu0 0
  %507 = vmatprep.subr.bf16.mxu0 0
  %508 = vmatpush1.bf16.msra.mxu0 0
  %509 = vmatprep.subr.bf16.mxu0 0
  %510 = vmatpush1.bf16.msra.mxu0 0
  %511 = vmatprep.subr.bf16.mxu0 0
  %512 = vmatpush1.bf16.msra.mxu0 0
  %513 = vmatprep.subr.bf16.mxu0 0
  %514 = vmatpush1.bf16.msra.mxu0 0
  %515 = vmatprep.subr.bf16.mxu0 0
  %516 = vmatpush1.bf16.msra.mxu0 0
  %517 = vmatprep.subr.bf16.mxu0 0
  %518 = vmatpush1.bf16.msra.mxu0 0
  %519 = vmatprep.subr.bf16.mxu0 0
  %520 = vmatpush1.bf16.msra.mxu0 0
  %521 = vmatprep.subr.bf16.mxu0 0
  %522 = vmatpush1.bf16.msra.mxu0 0
  %523 = vmatprep.subr.bf16.mxu0 0
  %524 = vmatpush1.bf16.msra.mxu0 0
  %525 = vmatprep.mubr.bf16.mxu0 0
  %526 = vmatmul.mubr.bf16.gmra.mrb[0].mxu0 %v473
  %v527 = vpop.f32.mrb[0].mxu0
  %v528 = vadd.f32 %v381, %v527
  %v529 = vpop.f32.mrb[0].mxu0
  %v530 = vadd.f32 %v385, %v529
  %v531 = vpop.f32.mrb[0].mxu0
  %v532 = vadd.f32 %v381, %v531
  %v533 = vpop.f32.mrb[0].mxu0
  %v534 = vadd.f32 %v385, %v533
  %535 = vmatprep.mubr.bf16.mxu0 0
  %536 = vmatmul.mubr.bf16.gmra.mrb[0].mxu0 %v476
  %v537 = vpop.f32.mrb[0].mxu0
  %v538 = vadd.f32 %v381, %v537
  %v539 = vpop.f32.mrb[0].mxu0
  %v540 = vadd.f32 %v385, %v539
  %v541 = vpop.f32.mrb[0].mxu0
  %v542 = vadd.f32 %v381, %v541
  %v543 = vpop.f32.mrb[0].mxu0
  %v544 = vadd.f32 %v385, %v543
  %545 = vmatprep.mubr.bf16.mxu0 0
  %546 = vmatmul.mubr.bf16.gmra.mrb[0].mxu0 %v479
  %v547 = vpop.f32.mrb[0].mxu0
  %v548 = vadd.f32 %v381, %v547
  %v549 = vpop.f32.mrb[0].mxu0
  %v550 = vadd.f32 %v385, %v549
  %v551 = vpop.f32.mrb[0].mxu0
  %v552 = vadd.f32 %v381, %v551
  %v553 = vpop.f32.mrb[0].mxu0
  %v554 = vadd.f32 %v385, %v553
  %555 = vmatprep.mubr.bf16.mxu0 0
  %556 = vmatmul.mubr.bf16.gmra.mrb[0].mxu0 %v482
  %v557 = vpop.f32.mrb[0].mxu0
  %v558 = vadd.f32 %v381, %v557
  %v559 = vpop.f32.mrb[0].mxu0
  %v560 = vadd.f32 %v385, %v559
  %v561 = vpop.f32.mrb[0].mxu0
  %v562 = vadd.f32 %v381, %v561
  %v563 = vpop.f32.mrb[0].mxu0
  %v564 = vadd.f32 %v385, %v563
  %565 = vmatprep.mubr.bf16.mxu0 0
  %566 = vmatmul.mubr.bf16.gmra.mrb[0].mxu0 %v485
  %v567 = vpop.f32.mrb[0].mxu0
  %v568 = vadd.f32 %v381, %v567
  %v569 = vpop.f32.mrb[0].mxu0
  %v570 = vadd.f32 %v385, %v569
  %v571 = vpop.f32.mrb[0].mxu0
  %v572 = vadd.f32 %v381, %v571
  %v573 = vpop.f32.mrb[0].mxu0
  %v574 = vadd.f32 %v385, %v573
  %575 = vmatprep.mubr.bf16.mxu0 0
  %576 = vmatmul.mubr.bf16.gmra.mrb[0].mxu0 %v488
  %v577 = vpop.f32.mrb[0].mxu0
  %v578 = vadd.f32 %v381, %v577
  %v579 = vpop.f32.mrb[0].mxu0
  %v580 = vadd.f32 %v385, %v579
  %v581 = vpop.f32.mrb[0].mxu0
  %v582 = vadd.f32 %v381, %v581
  %v583 = vpop.f32.mrb[0].mxu0
  %v584 = vadd.f32 %v385, %v583
  %585 = vmatprep.mubr.bf16.mxu0 0
  %586 = vmatmul.mubr.bf16.gmra.mrb[0].mxu0 %v491
  %v587 = vpop.f32.mrb[0].mxu0
  %v588 = vadd.f32 %v381, %v587
  %v589 = vpop.f32.mrb[0].mxu0
  %v590 = vadd.f32 %v385, %v589
  %v591 = vpop.f32.mrb[0].mxu0
  %v592 = vpop.f32.mrb[0].mxu0
  %593 = vdwg.mxu0
  %594 = vmatprep.subr.bf16.mxu0 %v458
  %595 = vmatpush1.bf16.msra.mxu0 %v457
  %596 = vmatprep.subr.bf16.mxu0 %v462
  %597 = vmatpush1.bf16.msra.mxu0 %v461
  %598 = vmatprep.subr.bf16.mxu0 0
  %599 = vmatpush1.bf16.msra.mxu0 0
  %600 = vmatprep.subr.bf16.mxu0 0
  %601 = vmatpush1.bf16.msra.mxu0 0
  %602 = vmatprep.subr.bf16.mxu0 0
  %603 = vmatpush1.bf16.msra.mxu0 0
  %604 = vmatprep.subr.bf16.mxu0 0
  %605 = vmatpush1.bf16.msra.mxu0 0
  %606 = vmatprep.subr.bf16.mxu0 0
  %607 = vmatpush1.bf16.msra.mxu0 0
  %608 = vmatprep.subr.bf16.mxu0 0
  %609 = vmatpush1.bf16.msra.mxu0 0
  %610 = vmatprep.subr.bf16.mxu0 0
  %611 = vmatpush1.bf16.msra.mxu0 0
  %612 = vmatprep.subr.bf16.mxu0 0
  %613 = vmatpush1.bf16.msra.mxu0 0
  %614 = vmatprep.subr.bf16.mxu0 0
  %615 = vmatpush1.bf16.msra.mxu0 0
  %616 = vmatprep.subr.bf16.mxu0 0
  %617 = vmatpush1.bf16.msra.mxu0 0
  %618 = vmatprep.subr.bf16.mxu0 0
  %619 = vmatpush1.bf16.msra.mxu0 0
  %620 = vmatprep.subr.bf16.mxu0 0
  %621 = vmatpush1.bf16.msra.mxu0 0
  %622 = vmatprep.subr.bf16.mxu0 0
  %623 = vmatpush1.bf16.msra.mxu0 0
  %624 = vmatprep.subr.bf16.mxu0 0
  %625 = vmatpush1.bf16.msra.mxu0 0
  %626 = vmatprep.mubr.bf16.mxu0 0
  %627 = vmatmul.mubr.bf16.gmra.mrb[0].mxu0 %v473
  %v628 = vpop.f32.mrb[0].mxu0
  %v629 = vadd.f32 %v389, %v628
  %v630 = vpop.f32.mrb[0].mxu0
  %v631 = vadd.f32 %v393, %v630
  %v632 = vpop.f32.mrb[0].mxu0
  %v633 = vadd.f32 %v389, %v632
  %v634 = vpop.f32.mrb[0].mxu0
  %v635 = vadd.f32 %v393, %v634
  %636 = vmatprep.mubr.bf16.mxu0 0
  %637 = vmatmul.mubr.bf16.gmra.mrb[0].mxu0 %v476
  %v638 = vpop.f32.mrb[0].mxu0
  %v639 = vadd.f32 %v389, %v638
  %v640 = vpop.f32.mrb[0].mxu0
  %v641 = vadd.f32 %v393, %v640
  %v642 = vpop.f32.mrb[0].mxu0
  %v643 = vadd.f32 %v389, %v642
  %v644 = vpop.f32.mrb[0].mxu0
  %v645 = vadd.f32 %v393, %v644
  %646 = vmatprep.mubr.bf16.mxu0 0
  %647 = vmatmul.mubr.bf16.gmra.mrb[0].mxu0 %v479
  %v648 = vpop.f32.mrb[0].mxu0
  %v649 = vadd.f32 %v389, %v648
  %v650 = vpop.f32.mrb[0].mxu0
  %v651 = vadd.f32 %v393, %v650
  %v652 = vpop.f32.mrb[0].mxu0
  %v653 = vadd.f32 %v389, %v652
  %v654 = vpop.f32.mrb[0].mxu0
  %v655 = vadd.f32 %v393, %v654
  %656 = vmatprep.mubr.bf16.mxu0 0
  %657 = vmatmul.mubr.bf16.gmra.mrb[0].mxu0 %v482
  %v658 = vpop.f32.mrb[0].mxu0
  %v659 = vadd.f32 %v389, %v658
  %v660 = vpop.f32.mrb[0].mxu0
  %v661 = vadd.f32 %v393, %v660
  %v662 = vpop.f32.mrb[0].mxu0
  %v663 = vadd.f32 %v389, %v662
  %v664 = vpop.f32.mrb[0].mxu0
  %v665 = vadd.f32 %v393, %v664
  %666 = vmatprep.mubr.bf16.mxu0 0
  %667 = vmatmul.mubr.bf16.gmra.mrb[0].mxu0 %v485
  %v668 = vpop.f32.mrb[0].mxu0
  %v669 = vadd.f32 %v389, %v668
  %v670 = vpop.f32.mrb[0].mxu0
  %v671 = vadd.f32 %v393, %v670
  %v672 = vpop.f32.mrb[0].mxu0
  %v673 = vadd.f32 %v389, %v672
  %v674 = vpop.f32.mrb[0].mxu0
  %v675 = vadd.f32 %v393, %v674
  %676 = vmatprep.mubr.bf16.mxu0 0
  %677 = vmatmul.mubr.bf16.gmra.mrb[0].mxu0 %v488
  %v678 = vpop.f32.mrb[0].mxu0
  %v679 = vadd.f32 %v389, %v678
  %v680 = vpop.f32.mrb[0].mxu0
  %v681 = vadd.f32 %v393, %v680
  %v682 = vpop.f32.mrb[0].mxu0
  %v683 = vadd.f32 %v389, %v682
  %v684 = vpop.f32.mrb[0].mxu0
  %v685 = vadd.f32 %v393, %v684
  %686 = vmatprep.mubr.bf16.mxu0 0
  %687 = vmatmul.mubr.bf16.gmra.mrb[0].mxu0 %v491
  %v688 = vpop.f32.mrb[0].mxu0
  %v689 = vadd.f32 %v389, %v688
  %v690 = vpop.f32.mrb[0].mxu0
  %v691 = vadd.f32 %v393, %v690
  %v692 = vpop.f32.mrb[0].mxu0
  %v693 = vpop.f32.mrb[0].mxu0
  %694 = vdwg.mxu0
  %v695 = vmax.f32 %v528, 0.0
  %v696 = vmax.f32 %v530, 0.0
  %v697 = vmax.f32 %v629, 0.0
  %v698 = vmax.f32 %v631, 0.0
  %v699 = vmax.f32 %v532, 0.0
  %v700 = vmax.f32 %v534, 0.0
  %v701 = vmax.f32 %v633, 0.0
  %v702 = vmax.f32 %v635, 0.0
  %v703 = vmax.f32 %v538, 0.0
  %v704 = vmax.f32 %v540, 0.0
  %v705 = vmax.f32 %v639, 0.0
  %v706 = vmax.f32 %v641, 0.0
  %v707 = vmax.f32 %v542, 0.0
  %v708 = vmax.f32 %v544, 0.0
  %v709 = vmax.f32 %v643, 0.0
  %v710 = vmax.f32 %v645, 0.0
  %v711 = vmax.f32 %v548, 0.0
  %v712 = vmax.f32 %v550, 0.0
  %v713 = vmax.f32 %v649, 0.0
  %v714 = vmax.f32 %v651, 0.0
  %v715 = vmax.f32 %v552, 0.0
  %v716 = vmax.f32 %v554, 0.0
  %v717 = vmax.f32 %v653, 0.0
  %v718 = vmax.f32 %v655, 0.0
  %v719 = vmax.f32 %v558, 0.0
  %v720 = vmax.f32 %v560, 0.0
  %v721 = vmax.f32 %v659, 0.0
  %v722 = vmax.f32 %v661, 0.0
  %v723 = vmax.f32 %v562, 0.0
  %v724 = vmax.f32 %v564, 0.0
  %v725 = vmax.f32 %v663, 0.0
  %v726 = vmax.f32 %v665, 0.0
  %v727 = vmax.f32 %v568, 0.0
  %v728 = vmax.f32 %v570, 0.0
  %v729 = vmax.f32 %v669, 0.0
  %v730 = vmax.f32 %v671, 0.0
  %v731 = vmax.f32 %v572, 0.0
  %v732 = vmax.f32 %v574, 0.0
  %v733 = vmax.f32 %v673, 0.0
  %v734 = vmax.f32 %v675, 0.0
  %v735 = vmax.f32 %v578, 0.0
  %v736 = vmax.f32 %v580, 0.0
  %v737 = vmax.f32 %v679, 0.0
  %v738 = vmax.f32 %v681, 0.0
  %v739 = vmax.f32 %v582, 0.0
  %v740 = vmax.f32 %v584, 0.0
  %v741 = vmax.f32 %v683, 0.0
  %v742 = vmax.f32 %v685, 0.0
  %v743 = vmax.f32 %v588, 0.0
  %v744 = vmax.f32 %v590, 0.0
  %v745 = vmax.f32 %v689, 0.0
  %v746 = vmax.f32 %v691, 0.0
  %v747 = vpack.c.bf16 %v699, %v695
  %v748 = vpack.c.bf16 %v700, %v696
  %v749 = vpack.c.bf16 %v701, %v697
  %v750 = vpack.c.bf16 %v702, %v698
  %v751 = vpack.c.bf16 %v707, %v703
  %v752 = vpack.c.bf16 %v708, %v704
  %v753 = vpack.c.bf16 %v709, %v705
  %v754 = vpack.c.bf16 %v710, %v706
  %v755 = vpack.c.bf16 %v715, %v711
  %v756 = vpack.c.bf16 %v716, %v712
  %v757 = vpack.c.bf16 %v717, %v713
  %v758 = vpack.c.bf16 %v718, %v714
  %v759 = vpack.c.bf16 %v723, %v719
  %v760 = vpack.c.bf16 %v724, %v720
  %v761 = vpack.c.bf16 %v725, %v721
  %v762 = vpack.c.bf16 %v726, %v722
  %v763 = vpack.c.bf16 %v731, %v727
  %v764 = vpack.c.bf16 %v732, %v728
  %v765 = vpack.c.bf16 %v733, %v729
  %v766 = vpack.c.bf16 %v734, %v730
  %v767 = vpack.c.bf16 %v739, %v735
  %v768 = vpack.c.bf16 %v740, %v736
  %v769 = vpack.c.bf16 %v741, %v737
  %v770 = vpack.c.bf16 %v742, %v738
  %v771 = vpack.c.bf16 %v743, %v743
  %v772 = vpack.c.bf16 %v744, %v744
  %v773 = vpack.c.bf16 %v745, %v745
  %v774 = vpack.c.bf16 %v746, %v746
  %v776 = vlaneseq
  %v777 = vshrl.u32 %v776, 7
  %v778 = vsub.s32 0, %v777
  %v779 = vrot.slane %v165, %v778
  %v780 = vlaneseq
  %v781 = vshrl.u32 %v780, 7
  %v782 = vsub.s32 1, %v781
  %v783 = vrot.slane %v165, %v782
  %v850 = vunpack.c.l.b16 %v101
  %v851 = vunpack.c.h.b16 %v101
  %v852 = vunpack.c.l.b16 %v102
  %v853 = vunpack.c.h.b16 %v102
  %v854 = vunpack.c.l.b16 %v103
  %v855 = vunpack.c.h.b16 %v103
  %v856 = vunpack.c.l.b16 %v104
  %v857 = vunpack.c.h.b16 %v104
  %v858 = vunpack.c.l.b16 %v105
  %v859 = vunpack.c.h.b16 %v105
  %v860 = vunpack.c.l.b16 %v106
  %v861 = vunpack.c.h.b16 %v106
  %v862 = vunpack.c.l.b16 %v107
  %v863 = vunpack.c.h.b16 %v107
  %v864 = vunpack.c.l.b16 %v108
  %v865 = vunpack.c.h.b16 %v108
  %v866 = vunpack.c.l.b16 %v109
  %v867 = vunpack.c.h.b16 %v109
  %v868 = vunpack.c.l.b16 %v110
  %v869 = vunpack.c.h.b16 %v110
  %v870 = vunpack.c.l.b16 %v111
  %v871 = vunpack.c.h.b16 %v111
  %v872 = vunpack.c.l.b16 %v112
  %v873 = vunpack.c.h.b16 %v112
  %v874 = vunpack.c.l.b16 %v113
  %v875 = vunpack.c.h.b16 %v113
  %v876 = vunpack.c.l.b16 %v114
  %v877 = vunpack.c.h.b16 %v114
  %v878 = vunpack.c.l.b16 %v115
  %v879 = vunpack.c.h.b16 %v115
  %v880 = vunpack.c.l.b16 %v116
  %v881 = vunpack.c.h.b16 %v116
  %v882 = vunpack.c.l.b16 %v117
  %v883 = vunpack.c.h.b16 %v117
  %v884 = vunpack.c.l.b16 %v118
  %v885 = vunpack.c.h.b16 %v118
  %v886 = vunpack.c.l.b16 %v119
  %v887 = vunpack.c.h.b16 %v119
  %v888 = vunpack.c.l.b16 %v120
  %v889 = vunpack.c.h.b16 %v120
  %v890 = vunpack.c.l.b16 %v121
  %v891 = vunpack.c.h.b16 %v121
  %v892 = vunpack.c.l.b16 %v122
  %v893 = vunpack.c.h.b16 %v122
  %v894 = vunpack.c.l.b16 %v123
  %v895 = vunpack.c.h.b16 %v123
  %v896 = vunpack.c.l.b16 %v124
  %v897 = vunpack.c.h.b16 %v124
  %v898 = vunpack.c.l.b16 %v125
  %v899 = vunpack.c.h.b16 %v125
  %v900 = vunpack.c.l.b16 %v126
  %v901 = vunpack.c.h.b16 %v126
  %v902 = vunpack.c.l.b16 %v127
  %v903 = vunpack.c.h.b16 %v127
  %v904 = vunpack.c.l.b16 %v128
  %v905 = vunpack.c.h.b16 %v128
  %v906 = vunpack.c.l.b16 %v129
  %v907 = vunpack.c.h.b16 %v129
  %v908 = vunpack.c.l.b16 %v130
  %v909 = vunpack.c.h.b16 %v130
  %v910 = vunpack.c.l.b16 %v131
  %v911 = vunpack.c.h.b16 %v131
  %v912 = vunpack.c.l.b16 %v132
  %v913 = vunpack.c.h.b16 %v132
  %v914 = vunpack.c.l.b16 %v133
  %v915 = vunpack.c.h.b16 %v133
  %v916 = vunpack.c.l.b16 %v134
  %v917 = vunpack.c.h.b16 %v134
  %v918 = vunpack.c.l.b16 %v135
  %v919 = vunpack.c.h.b16 %v135
  %v920 = vunpack.c.l.b16 %v136
  %v921 = vunpack.c.h.b16 %v136
  %v922 = vunpack.c.l.b16 %v137
  %v923 = vunpack.c.h.b16 %v137
  %v924 = vunpack.c.l.b16 %v138
  %v925 = vunpack.c.h.b16 %v138
  %v926 = vunpack.c.l.b16 %v139
  %v927 = vunpack.c.h.b16 %v139
  %v928 = vunpack.c.l.b16 %v140
  %v929 = vunpack.c.h.b16 %v140
  %v930 = vunpack.c.l.b16 %v141
  %v931 = vunpack.c.h.b16 %v141
  %v932 = vunpack.c.l.b16 %v142
  %v933 = vunpack.c.h.b16 %v142
  %v934 = vunpack.c.l.b16 %v143
  %v935 = vunpack.c.h.b16 %v143
  %v936 = vunpack.c.l.b16 %v144
  %v937 = vunpack.c.h.b16 %v144
  %v938 = vunpack.c.l.b16 %v145
  %v939 = vunpack.c.h.b16 %v145
  %v940 = vunpack.c.l.b16 %v146
  %v941 = vunpack.c.h.b16 %v146
  %v942 = vunpack.c.l.b16 %v147
  %v943 = vunpack.c.h.b16 %v147
  %v944 = vunpack.c.l.b16 %v148
  %v945 = vunpack.c.h.b16 %v148
  %v946 = vunpack.c.l.b16 %v149
  %v947 = vunpack.c.h.b16 %v149
  %v948 = vunpack.c.l.b16 %v150
  %v949 = vunpack.c.h.b16 %v150
  %v950 = vunpack.c.l.b16 %v151
  %v951 = vunpack.c.h.b16 %v151
  %v952 = vunpack.c.l.b16 %v152
  %v953 = vunpack.c.h.b16 %v152
  %v954 = vunpack.c.l.b16 %v153
  %v955 = vunpack.c.h.b16 %v153
  %v956 = vunpack.c.l.b16 %v154
  %v957 = vunpack.c.h.b16 %v154
  %v958 = vunpack.c.l.b16 %v155
  %v959 = vunpack.c.h.b16 %v155
  %v960 = vunpack.c.l.b16 %v156
  %v961 = vunpack.c.h.b16 %v156
  %v962 = vunpack.c.l.b16 %v157
  %v963 = vunpack.c.h.b16 %v157
  %v964 = vunpack.c.l.b16 %v158
  %v965 = vunpack.c.h.b16 %v158
  %v966 = vunpack.c.l.b16 %v159
  %v967 = vunpack.c.h.b16 %v159
  %v968 = vunpack.c.l.b16 %v160
  %v969 = vunpack.c.h.b16 %v160
  %v970 = vunpack.c.l.b16 %v161
  %v971 = vunpack.c.h.b16 %v161
  %v972 = vunpack.c.l.b16 %v162
  %v973 = vunpack.c.h.b16 %v162
  %v974 = vunpack.c.l.b16 %v163
  %v975 = vunpack.c.h.b16 %v163
  %v976 = vunpack.c.l.b16 %v164
  %v977 = vunpack.c.h.b16 %v164
  %v978 = vpack.c.b16 %v852, %v850
  %v979 = vpack.c.b16 %v853, %v851
  %v980 = vpack.c.b16 %v856, %v854
  %v981 = vpack.c.b16 %v857, %v855
  %v982 = vpack.c.b16 %v860, %v858
  %v983 = vpack.c.b16 %v861, %v859
  %v984 = vpack.c.b16 %v864, %v862
  %v985 = vpack.c.b16 %v865, %v863
  %v986 = vpack.c.b16 %v868, %v866
  %v987 = vpack.c.b16 %v869, %v867
  %v988 = vpack.c.b16 %v872, %v870
  %v989 = vpack.c.b16 %v873, %v871
  %v990 = vpack.c.b16 %v876, %v874
  %v991 = vpack.c.b16 %v877, %v875
  %v992 = vpack.c.b16 %v880, %v878
  %v993 = vpack.c.b16 %v881, %v879
  %v994 = vpack.c.b16 %v884, %v882
  %v995 = vpack.c.b16 %v885, %v883
  %v996 = vpack.c.b16 %v888, %v886
  %v997 = vpack.c.b16 %v889, %v887
  %v998 = vpack.c.b16 %v892, %v890
  %v999 = vpack.c.b16 %v893, %v891
  %v1000 = vpack.c.b16 %v896, %v894
  %v1001 = vpack.c.b16 %v897, %v895
  %v1002 = vpack.c.b16 %v900, %v898
  %v1003 = vpack.c.b16 %v901, %v899
  %v1004 = vpack.c.b16 %v904, %v902
  %v1005 = vpack.c.b16 %v905, %v903
  %v1006 = vpack.c.b16 %v908, %v906
  %v1007 = vpack.c.b16 %v909, %v907
  %v1008 = vpack.c.b16 %v912, %v910
  %v1009 = vpack.c.b16 %v913, %v911
  %v1010 = vpack.c.b16 %v916, %v914
  %v1011 = vpack.c.b16 %v917, %v915
  %v1012 = vpack.c.b16 %v920, %v918
  %v1013 = vpack.c.b16 %v921, %v919
  %v1014 = vpack.c.b16 %v924, %v922
  %v1015 = vpack.c.b16 %v925, %v923
  %v1016 = vpack.c.b16 %v928, %v926
  %v1017 = vpack.c.b16 %v929, %v927
  %v1018 = vpack.c.b16 %v932, %v930
  %v1019 = vpack.c.b16 %v933, %v931
  %v1020 = vpack.c.b16 %v936, %v934
  %v1021 = vpack.c.b16 %v937, %v935
  %v1022 = vpack.c.b16 %v940, %v938
  %v1023 = vpack.c.b16 %v941, %v939
  %v1024 = vpack.c.b16 %v944, %v942
  %v1025 = vpack.c.b16 %v945, %v943
  %v1026 = vpack.c.b16 %v948, %v946
  %v1027 = vpack.c.b16 %v949, %v947
  %v1028 = vpack.c.b16 %v952, %v950
  %v1029 = vpack.c.b16 %v953, %v951
  %v1030 = vpack.c.b16 %v956, %v954
  %v1031 = vpack.c.b16 %v957, %v955
  %v1032 = vpack.c.b16 %v960, %v958
  %v1033 = vpack.c.b16 %v961, %v959
  %v1034 = vpack.c.b16 %v964, %v962
  %v1035 = vpack.c.b16 %v965, %v963
  %v1036 = vpack.c.b16 %v968, %v966
  %v1037 = vpack.c.b16 %v969, %v967
  %v1038 = vpack.c.b16 %v972, %v970
  %v1039 = vpack.c.b16 %v973, %v971
  %v1040 = vpack.c.b16 %v976, %v974
  %v1041 = vpack.c.b16 %v977, %v975
  %1106 = vmatprep.subr.bf16.mxu0 %v979
  %1107 = vmatpush1.bf16.msra.mxu0 %v978
  %1108 = vmatprep.subr.bf16.mxu0 %v981
  %1109 = vmatpush1.bf16.msra.mxu0 %v980
  %1110 = vmatprep.subr.bf16.mxu0 %v983
  %1111 = vmatpush1.bf16.msra.mxu0 %v982
  %1112 = vmatprep.subr.bf16.mxu0 %v985
  %1113 = vmatpush1.bf16.msra.mxu0 %v984
  %1114 = vmatprep.subr.bf16.mxu0 %v987
  %1115 = vmatpush1.bf16.msra.mxu0 %v986
  %1116 = vmatprep.subr.bf16.mxu0 %v989
  %1117 = vmatpush1.bf16.msra.mxu0 %v988
  %1118 = vmatprep.subr.bf16.mxu0 %v991
  %1119 = vmatpush1.bf16.msra.mxu0 %v990
  %1120 = vmatprep.subr.bf16.mxu0 %v993
  %1121 = vmatpush1.bf16.msra.mxu0 %v992
  %1122 = vmatprep.subr.bf16.mxu0 %v995
  %1123 = vmatpush1.bf16.msra.mxu0 %v994
  %1124 = vmatprep.subr.bf16.mxu0 %v997
  %1125 = vmatpush1.bf16.msra.mxu0 %v996
  %1126 = vmatprep.subr.bf16.mxu0 %v999
  %1127 = vmatpush1.bf16.msra.mxu0 %v998
  %1128 = vmatprep.subr.bf16.mxu0 %v1001
  %1129 = vmatpush1.bf16.msra.mxu0 %v1000
  %1130 = vmatprep.subr.bf16.mxu0 %v1003
  %1131 = vmatpush1.bf16.msra.mxu0 %v1002
  %1132 = vmatprep.subr.bf16.mxu0 %v1005
  %1133 = vmatpush1.bf16.msra.mxu0 %v1004
  %1134 = vmatprep.subr.bf16.mxu0 %v1007
  %1135 = vmatpush1.bf16.msra.mxu0 %v1006
  %1136 = vmatprep.subr.bf16.mxu0 %v1009
  %1137 = vmatpush1.bf16.msra.mxu0 %v1008
  %1138 = vmatprep.mubr.bf16.mxu0 %v748
  %1139 = vmatmul.mubr.bf16.gmra.mrb[0].mxu0 %v747
  %v1140 = vpop.f32.mrb[0].mxu0
  %v1141 = vadd.f32 %v779, %v1140
  %v1142 = vpop.f32.mrb[0].mxu0
  %v1143 = vadd.f32 %v783, %v1142
  %v1144 = vpop.f32.mrb[0].mxu0
  %v1145 = vadd.f32 %v779, %v1144
  %v1146 = vpop.f32.mrb[0].mxu0
  %v1147 = vadd.f32 %v783, %v1146
  %1148 = vmatprep.mubr.bf16.mxu0 %v752
  %1149 = vmatmul.mubr.bf16.gmra.mrb[0].mxu0 %v751
  %v1150 = vpop.f32.mrb[0].mxu0
  %v1151 = vadd.f32 %v779, %v1150
  %v1152 = vpop.f32.mrb[0].mxu0
  %v1153 = vadd.f32 %v783, %v1152
  %v1154 = vpop.f32.mrb[0].mxu0
  %v1155 = vadd.f32 %v779, %v1154
  %v1156 = vpop.f32.mrb[0].mxu0
  %v1157 = vadd.f32 %v783, %v1156
  %1158 = vmatprep.mubr.bf16.mxu0 %v756
  %1159 = vmatmul.mubr.bf16.gmra.mrb[0].mxu0 %v755
  %v1160 = vpop.f32.mrb[0].mxu0
  %v1161 = vadd.f32 %v779, %v1160
  %v1162 = vpop.f32.mrb[0].mxu0
  %v1163 = vadd.f32 %v783, %v1162
  %v1164 = vpop.f32.mrb[0].mxu0
  %v1165 = vadd.f32 %v779, %v1164
  %v1166 = vpop.f32.mrb[0].mxu0
  %v1167 = vadd.f32 %v783, %v1166
  %1168 = vmatprep.mubr.bf16.mxu0 %v760
  %1169 = vmatmul.mubr.bf16.gmra.mrb[0].mxu0 %v759
  %v1170 = vpop.f32.mrb[0].mxu0
  %v1171 = vadd.f32 %v779, %v1170
  %v1172 = vpop.f32.mrb[0].mxu0
  %v1173 = vadd.f32 %v783, %v1172
  %v1174 = vpop.f32.mrb[0].mxu0
  %v1175 = vadd.f32 %v779, %v1174
  %v1176 = vpop.f32.mrb[0].mxu0
  %v1177 = vadd.f32 %v783, %v1176
  %1178 = vmatprep.mubr.bf16.mxu0 %v764
  %1179 = vmatmul.mubr.bf16.gmra.mrb[0].mxu0 %v763
  %v1180 = vpop.f32.mrb[0].mxu0
  %v1181 = vadd.f32 %v779, %v1180
  %v1182 = vpop.f32.mrb[0].mxu0
  %v1183 = vadd.f32 %v783, %v1182
  %v1184 = vpop.f32.mrb[0].mxu0
  %v1185 = vadd.f32 %v779, %v1184
  %v1186 = vpop.f32.mrb[0].mxu0
  %v1187 = vadd.f32 %v783, %v1186
  %1188 = vmatprep.mubr.bf16.mxu0 %v768
  %1189 = vmatmul.mubr.bf16.gmra.mrb[0].mxu0 %v767
  %v1190 = vpop.f32.mrb[0].mxu0
  %v1191 = vadd.f32 %v779, %v1190
  %v1192 = vpop.f32.mrb[0].mxu0
  %v1193 = vadd.f32 %v783, %v1192
  %v1194 = vpop.f32.mrb[0].mxu0
  %v1195 = vadd.f32 %v779, %v1194
  %v1196 = vpop.f32.mrb[0].mxu0
  %v1197 = vadd.f32 %v783, %v1196
  %1198 = vmatprep.mubr.bf16.mxu0 %v772
  %1199 = vmatmul.mubr.bf16.gmra.mrb[0].mxu0 %v771
  %v1200 = vpop.f32.mrb[0].mxu0
  %v1201 = vadd.f32 %v779, %v1200
  %v1202 = vpop.f32.mrb[0].mxu0
  %v1203 = vadd.f32 %v783, %v1202
  %v1204 = vpop.f32.mrb[0].mxu0
  %v1205 = vpop.f32.mrb[0].mxu0
  %1206 = vdwg.mxu0
  %1207 = vmatprep.subr.bf16.mxu0 %v1011
  %1208 = vmatpush1.bf16.msra.mxu0 %v1010
  %1209 = vmatprep.subr.bf16.mxu0 %v1013
  %1210 = vmatpush1.bf16.msra.mxu0 %v1012
  %1211 = vmatprep.subr.bf16.mxu0 %v1015
  %1212 = vmatpush1.bf16.msra.mxu0 %v1014
  %1213 = vmatprep.subr.bf16.mxu0 %v1017
  %1214 = vmatpush1.bf16.msra.mxu0 %v1016
  %1215 = vmatprep.subr.bf16.mxu0 %v1019
  %1216 = vmatpush1.bf16.msra.mxu0 %v1018
  %1217 = vmatprep.subr.bf16.mxu0 %v1021
  %1218 = vmatpush1.bf16.msra.mxu0 %v1020
  %1219 = vmatprep.subr.bf16.mxu0 %v1023
  %1220 = vmatpush1.bf16.msra.mxu0 %v1022
  %1221 = vmatprep.subr.bf16.mxu0 %v1025
  %1222 = vmatpush1.bf16.msra.mxu0 %v1024
  %1223 = vmatprep.subr.bf16.mxu0 %v1027
  %1224 = vmatpush1.bf16.msra.mxu0 %v1026
  %1225 = vmatprep.subr.bf16.mxu0 %v1029
  %1226 = vmatpush1.bf16.msra.mxu0 %v1028
  %1227 = vmatprep.subr.bf16.mxu0 %v1031
  %1228 = vmatpush1.bf16.msra.mxu0 %v1030
  %1229 = vmatprep.subr.bf16.mxu0 %v1033
  %1230 = vmatpush1.bf16.msra.mxu0 %v1032
  %1231 = vmatprep.subr.bf16.mxu0 %v1035
  %1232 = vmatpush1.bf16.msra.mxu0 %v1034
  %1233 = vmatprep.subr.bf16.mxu0 %v1037
  %1234 = vmatpush1.bf16.msra.mxu0 %v1036
  %1235 = vmatprep.subr.bf16.mxu0 %v1039
  %1236 = vmatpush1.bf16.msra.mxu0 %v1038
  %1237 = vmatprep.subr.bf16.mxu0 %v1041
  %1238 = vmatpush1.bf16.msra.mxu0 %v1040
  %1239 = vmatprep.mubr.bf16.mxu0 %v750
  %1240 = vmatmul.mubr.bf16.gmra.mrb[0].mxu0 %v749
  %v1241 = vpop.f32.mrb[0].mxu0
  %v1242 = vadd.f32 %v1141, %v1241
  %v1243 = vpop.f32.mrb[0].mxu0
  %v1244 = vadd.f32 %v1143, %v1243
  %v1245 = vpop.f32.mrb[0].mxu0
  %v1246 = vadd.f32 %v1145, %v1245
  %v1247 = vpop.f32.mrb[0].mxu0
  %v1248 = vadd.f32 %v1147, %v1247
  %1249 = vmatprep.mubr.bf16.mxu0 %v754
  %1250 = vmatmul.mubr.bf16.gmra.mrb[0].mxu0 %v753
  %v1251 = vpop.f32.mrb[0].mxu0
  %v1252 = vadd.f32 %v1151, %v1251
  %v1253 = vpop.f32.mrb[0].mxu0
  %v1254 = vadd.f32 %v1153, %v1253
  %v1255 = vpop.f32.mrb[0].mxu0
  %v1256 = vadd.f32 %v1155, %v1255
  %v1257 = vpop.f32.mrb[0].mxu0
  %v1258 = vadd.f32 %v1157, %v1257
  %1259 = vmatprep.mubr.bf16.mxu0 %v758
  %1260 = vmatmul.mubr.bf16.gmra.mrb[0].mxu0 %v757
  %v1261 = vpop.f32.mrb[0].mxu0
  %v1262 = vadd.f32 %v1161, %v1261
  %v1263 = vpop.f32.mrb[0].mxu0
  %v1264 = vadd.f32 %v1163, %v1263
  %v1265 = vpop.f32.mrb[0].mxu0
  %v1266 = vadd.f32 %v1165, %v1265
  %v1267 = vpop.f32.mrb[0].mxu0
  %v1268 = vadd.f32 %v1167, %v1267
  %1269 = vmatprep.mubr.bf16.mxu0 %v762
  %1270 = vmatmul.mubr.bf16.gmra.mrb[0].mxu0 %v761
  %v1271 = vpop.f32.mrb[0].mxu0
  %v1272 = vadd.f32 %v1171, %v1271
  %v1273 = vpop.f32.mrb[0].mxu0
  %v1274 = vadd.f32 %v1173, %v1273
  %v1275 = vpop.f32.mrb[0].mxu0
  %v1276 = vadd.f32 %v1175, %v1275
  %v1277 = vpop.f32.mrb[0].mxu0
  %v1278 = vadd.f32 %v1177, %v1277
  %1279 = vmatprep.mubr.bf16.mxu0 %v766
  %1280 = vmatmul.mubr.bf16.gmra.mrb[0].mxu0 %v765
  %v1281 = vpop.f32.mrb[0].mxu0
  %v1282 = vadd.f32 %v1181, %v1281
  %v1283 = vpop.f32.mrb[0].mxu0
  %v1284 = vadd.f32 %v1183, %v1283
  %v1285 = vpop.f32.mrb[0].mxu0
  %v1286 = vadd.f32 %v1185, %v1285
  %v1287 = vpop.f32.mrb[0].mxu0
  %v1288 = vadd.f32 %v1187, %v1287
  %1289 = vmatprep.mubr.bf16.mxu0 %v770
  %1290 = vmatmul.mubr.bf16.gmra.mrb[0].mxu0 %v769
  %v1291 = vpop.f32.mrb[0].mxu0
  %v1292 = vadd.f32 %v1191, %v1291
  %v1293 = vpop.f32.mrb[0].mxu0
  %v1294 = vadd.f32 %v1193, %v1293
  %v1295 = vpop.f32.mrb[0].mxu0
  %v1296 = vadd.f32 %v1195, %v1295
  %v1297 = vpop.f32.mrb[0].mxu0
  %v1298 = vadd.f32 %v1197, %v1297
  %1299 = vmatprep.mubr.bf16.mxu0 %v774
  %1300 = vmatmul.mubr.bf16.gmra.mrb[0].mxu0 %v773
  %v1301 = vpop.f32.mrb[0].mxu0
  %v1302 = vadd.f32 %v1201, %v1301
  %v1303 = vpop.f32.mrb[0].mxu0
  %v1304 = vadd.f32 %v1203, %v1303
  %v1305 = vpop.f32.mrb[0].mxu0
  %v1306 = vpop.f32.mrb[0].mxu0
  %1307 = vdwg.mxu0
  %vm1308 = vcmask 801792
  %v1310 = vsel %vm1308, %v78, 0
  %vm1312 = vcmask 1041408
  %v1314 = vsel %vm1312, %v1302, 0
  %v1317 = vsel %vm1312, %v1304, 0
  %1319 = vmatprep.subr.mxu0 %v1244
  %1320 = vmatpush1.msra.mxu0 %v1242
  %1321 = vmatprep.subr.mxu0 %v1248
  %1322 = vmatpush1.msra.mxu0 %v1246
  %1323 = vmatprep.subr.mxu0 %v1254
  %1324 = vmatpush1.msra.mxu0 %v1252
  %1325 = vmatprep.subr.mxu0 %v1258
  %1326 = vmatpush1.msra.mxu0 %v1256
  %1327 = vmatprep.subr.mxu0 %v1264
  %1328 = vmatpush1.msra.mxu0 %v1262
  %1329 = vmatprep.subr.mxu0 %v1268
  %1330 = vmatpush1.msra.mxu0 %v1266
  %1331 = vmatprep.subr.mxu0 %v1274
  %1332 = vmatpush1.msra.mxu0 %v1272
  %1333 = vmatprep.subr.mxu0 %v1278
  %1334 = vmatpush1.msra.mxu0 %v1276
  %1335 = vmatprep.subr.mxu0 %v1284
  %1336 = vmatpush1.msra.mxu0 %v1282
  %1337 = vmatprep.subr.mxu0 %v1288
  %1338 = vmatpush1.msra.mxu0 %v1286
  %1339 = vmatprep.subr.mxu0 %v1294
  %1340 = vmatpush1.msra.mxu0 %v1292
  %1341 = vmatprep.subr.mxu0 %v1298
  %1342 = vmatpush1.msra.mxu0 %v1296
  %1343 = vmatprep.subr.mxu0 %v1317
  %1344 = vmatpush1.msra.mxu0 %v1314
  %1345 = vmatprep.subr.mxu0 0.0
  %1346 = vmatpush1.msra.mxu0 0.0
  %1347 = vmatprep.subr.mxu0 0.0
  %1348 = vmatpush1.msra.mxu0 0.0
  %1349 = vmatprep.subr.mxu0 0.0
  %1350 = vmatpush1.msra.mxu0 0.0
  %1351 = vmatprep.subr.mxu0 0.0
  %1352 = vmatpush1.msra.mxu0 0.0
  %1353 = vmatprep.subr.mxu0 0.0
  %1354 = vmatpush1.msra.mxu0 0.0
  %1355 = vmatprep.subr.mxu0 0.0
  %1356 = vmatpush1.msra.mxu0 0.0
  %1357 = vmatprep.subr.mxu0 0.0
  %1358 = vmatpush1.msra.mxu0 0.0
  %1359 = vmatprep.subr.mxu0 0.0
  %1360 = vmatpush1.msra.mxu0 0.0
  %1361 = vmatprep.subr.mxu0 0.0
  %1362 = vmatpush1.msra.mxu0 0.0
  %1363 = vmatprep.subr.mxu0 0.0
  %1364 = vmatpush1.msra.mxu0 0.0
  %1365 = vmatprep.subr.mxu0 0.0
  %1366 = vmatpush1.msra.mxu0 0.0
  %1367 = vmatprep.subr.mxu0 0.0
  %1368 = vmatpush1.msra.mxu0 0.0
  %1369 = vmatprep.subr.mxu0 0.0
  %1370 = vmatpush1.msra.mxu0 0.0
  %1371 = vmatprep.subr.mxu0 0.0
  %1372 = vmatpush1.msra.mxu0 0.0
  %1373 = vmatprep.subr.mxu0 0.0
  %1374 = vmatpush1.msra.mxu0 0.0
  %1375 = vmatprep.subr.mxu0 0.0
  %1376 = vmatpush1.msra.mxu0 0.0
  %1377 = vmatprep.subr.mxu0 0.0
  %1378 = vmatpush1.msra.mxu0 0.0
  %1379 = vmatprep.subr.mxu0 0.0
  %1380 = vmatpush1.msra.mxu0 0.0
  %1381 = vmatprep.subr.mxu0 0.0
  %1382 = vmatpush1.msra.mxu0 0.0
  %1383 = vmatprep.mubr.f32.mxu0 0.0
  %1384 = vmatmul.mubr.f32.gmra.mrb[0].mxu0 %v1310
  %v1385 = vpop.f32.mrb[0].mxu0
  %v1386 = vadd.f32 0.0, %v1385
  %v1387 = vpop.f32.mrb[0].mxu0
  %v1388 = vadd.f32 0.0, %v1387
  %1389 = vdwg.mxu0
  %v1390 = vmul.f32 %v1386, 0.020408163
  %v1391 = vmul.f32 %v1388, 0.020408163
  %v1392 = vpack.c.bf16 %v363, %v363
  %v1409 = vunpack.c.l.b16 %v182
  %v1410 = vunpack.c.l.b16 %v183
  %v1411 = vunpack.c.l.b16 %v184
  %v1412 = vunpack.c.l.b16 %v185
  %v1413 = vunpack.c.l.b16 %v186
  %v1414 = vunpack.c.l.b16 %v187
  %v1415 = vunpack.c.l.b16 %v188
  %v1416 = vunpack.c.l.b16 %v189
  %v1417 = vunpack.c.l.b16 %v190
  %v1418 = vunpack.c.l.b16 %v191
  %v1419 = vunpack.c.l.b16 %v192
  %v1420 = vunpack.c.l.b16 %v193
  %v1421 = vunpack.c.l.b16 %v194
  %v1422 = vunpack.c.l.b16 %v195
  %v1423 = vunpack.c.l.b16 %v196
  %v1424 = vunpack.c.l.b16 %v197
  %v1425 = vpack.c.b16 %v1410, %v1409
  %v1426 = vpack.c.b16 %v1412, %v1411
  %v1427 = vpack.c.b16 %v1414, %v1413
  %v1428 = vpack.c.b16 %v1416, %v1415
  %v1429 = vpack.c.b16 %v1418, %v1417
  %v1430 = vpack.c.b16 %v1420, %v1419
  %v1431 = vpack.c.b16 %v1422, %v1421
  %v1432 = vpack.c.b16 %v1424, %v1423
  %1441 = vmatprep.subr.bf16.mxu0 0
  %1442 = vmatpush1.bf16.msra.mxu0 %v1425
  %1443 = vmatprep.subr.bf16.mxu0 0
  %1444 = vmatpush1.bf16.msra.mxu0 %v1426
  %1445 = vmatprep.subr.bf16.mxu0 0
  %1446 = vmatpush1.bf16.msra.mxu0 %v1427
  %1447 = vmatprep.subr.bf16.mxu0 0
  %1448 = vmatpush1.bf16.msra.mxu0 %v1428
  %1449 = vmatprep.subr.bf16.mxu0 0
  %1450 = vmatpush1.bf16.msra.mxu0 %v1429
  %1451 = vmatprep.subr.bf16.mxu0 0
  %1452 = vmatpush1.bf16.msra.mxu0 %v1430
  %1453 = vmatprep.subr.bf16.mxu0 0
  %1454 = vmatpush1.bf16.msra.mxu0 %v1431
  %1455 = vmatprep.subr.bf16.mxu0 0
  %1456 = vmatpush1.bf16.msra.mxu0 %v1432
  %1457 = vmatprep.subr.bf16.mxu0 0
  %1458 = vmatpush1.bf16.msra.mxu0 0
  %1459 = vmatprep.subr.bf16.mxu0 0
  %1460 = vmatpush1.bf16.msra.mxu0 0
  %1461 = vmatprep.subr.bf16.mxu0 0
  %1462 = vmatpush1.bf16.msra.mxu0 0
  %1463 = vmatprep.subr.bf16.mxu0 0
  %1464 = vmatpush1.bf16.msra.mxu0 0
  %1465 = vmatprep.subr.bf16.mxu0 0
  %1466 = vmatpush1.bf16.msra.mxu0 0
  %1467 = vmatprep.subr.bf16.mxu0 0
  %1468 = vmatpush1.bf16.msra.mxu0 0
  %1469 = vmatprep.subr.bf16.mxu0 0
  %1470 = vmatpush1.bf16.msra.mxu0 0
  %1471 = vmatprep.subr.bf16.mxu0 0
  %1472 = vmatpush1.bf16.msra.mxu0 0
  %1473 = vmatprep.mubr.bf16.mxu0 0
  %1474 = vmatmul.mubr.bf16.gmra.mrb[0].mxu0 %v1392
  %v1475 = vpop.f32.mrb[0].mxu0
  %v1476 = vadd.f32 0.0, %v1475
  %v1477 = vpop.f32.mrb[0].mxu0
  %v1478 = vpop.f32.mrb[0].mxu0
  %v1479 = vpop.f32.mrb[0].mxu0
  %1480 = vdwg.mxu0
  %v1483 = vcombine.low %v1390, %v1391
  %v1485 = vunpack.c.l.s4 1966171168
  %v1486 = vunpack.c.0.s8 %v1485
  %v1487 = vlaneseq
  %v1488 = vshrl.u32 %v1487, 7
  %v1489 = vsub.s32 %v1486, %v1488
  %v1490 = vrot.slane %v1483, %v1489
  %v1491 = vcombine.high %v1490, %v1490
  %v1493 = vunpack.c.l.s4 1966171168
  %v1494 = vunpack.c.0.s8 %v1493
  %v1495 = vlaneseq
  %v1496 = vshrl.u32 %v1495, 7
  %v1497 = vsub.s32 %v1494, %v1496
  %v1498 = vrot.slane %v1490, %v1497
  %v1500 = vunpack.c.l.s4 1966171168
  %v1501 = vunpack.c.0.s8 %v1500
  %v1502 = vlaneseq
  %v1503 = vshrl.u32 %v1502, 7
  %v1504 = vsub.s32 %v1501, %v1503
  %v1505 = vrot.slane %v1491, %v1504
  %v1506 = vlaneseq
  %v1507 = vshrl.u32 %v1506, 7
  %v1508 = vsub.s32 0, %v1507
  %v1509 = vrot.slane %v1498, %v1508
  %v1510 = vlaneseq
  %v1511 = vshrl.u32 %v1510, 7
  %v1512 = vsub.s32 1, %v1511
  %v1513 = vrot.slane %v1498, %v1512
  %v1514 = vlaneseq
  %v1515 = vshrl.u32 %v1514, 7
  %v1516 = vsub.s32 0, %v1515
  %v1517 = vrot.slane %v1505, %v1516
  %v1518 = vlaneseq
  %v1519 = vshrl.u32 %v1518, 7
  %v1520 = vsub.s32 1, %v1519
  %v1521 = vrot.slane %v1505, %v1520
  %1527 = vset.pattern.permute.xlu0 0
  %1528 = vperm.xlu0 %1527, %v166
  %v1529 = vpop.permute.xlu0 %1528
  %1532 = vset.pattern.permute.xlu0 0
  %1533 = vperm.xlu0 %1532, %v167
  %v1534 = vpop.permute.xlu0 %1533
  %1537 = vset.pattern.permute.xlu0 0
  %1538 = vperm.xlu0 %1537, %v168
  %v1539 = vpop.permute.xlu0 %1538
  %1542 = vset.pattern.permute.xlu0 0
  %1543 = vperm.xlu0 %1542, %v169
  %v1544 = vpop.permute.xlu0 %1543
  %1547 = vset.pattern.permute.xlu0 0
  %1548 = vperm.xlu0 %1547, %v170
  %v1549 = vpop.permute.xlu0 %1548
  %1552 = vset.pattern.permute.xlu0 0
  %1553 = vperm.xlu0 %1552, %v171
  %v1554 = vpop.permute.xlu0 %1553
  %1557 = vset.pattern.permute.xlu0 0
  %1558 = vperm.xlu0 %1557, %v172
  %v1559 = vpop.permute.xlu0 %1558
  %1562 = vset.pattern.permute.xlu0 0
  %1563 = vperm.xlu0 %1562, %v173
  %v1564 = vpop.permute.xlu0 %1563
  %v1566 = vmul.f32 %v1509, %v1529
  %v1567 = vmul.f32 %v1513, %v1529
  %v1568 = vmul.f32 %v1509, %v1534
  %v1569 = vmul.f32 %v1513, %v1534
  %v1570 = vmul.f32 %v1509, %v1539
  %v1571 = vmul.f32 %v1513, %v1539
  %v1572 = vmul.f32 %v1509, %v1544
  %v1573 = vmul.f32 %v1513, %v1544
  %v1574 = vmul.f32 %v1509, %v1549
  %v1575 = vmul.f32 %v1513, %v1549
  %v1576 = vmul.f32 %v1509, %v1554
  %v1577 = vmul.f32 %v1513, %v1554
  %v1578 = vmul.f32 %v1509, %v1559
  %v1579 = vmul.f32 %v1513, %v1559
  %v1580 = vmul.f32 %v1509, %v1564
  %v1581 = vmul.f32 %v1513, %v1564
  %v1582 = vmul.f32 %v1517, %v1529
  %v1583 = vmul.f32 %v1521, %v1529
  %v1584 = vmul.f32 %v1517, %v1534
  %v1585 = vmul.f32 %v1521, %v1534
  %v1586 = vmul.f32 %v1517, %v1539
  %v1587 = vmul.f32 %v1521, %v1539
  %v1588 = vmul.f32 %v1517, %v1544
  %v1589 = vmul.f32 %v1521, %v1544
  %v1590 = vmul.f32 %v1517, %v1549
  %v1591 = vmul.f32 %v1521, %v1549
  %v1592 = vmul.f32 %v1517, %v1554
  %v1593 = vmul.f32 %v1521, %v1554
  %v1594 = vmul.f32 %v1517, %v1559
  %v1595 = vmul.f32 %v1521, %v1559
  %v1596 = vmul.f32 %v1517, %v1564
  %v1597 = vmul.f32 %v1521, %v1564
  %1599 = vset.pattern.permute.xlu0 0
  %1600 = vperm.xlu0 %1599, %v174
  %v1601 = vpop.permute.xlu0 %1600
  %1604 = vset.pattern.permute.xlu0 0
  %1605 = vperm.xlu0 %1604, %v175
  %v1606 = vpop.permute.xlu0 %1605
  %1609 = vset.pattern.permute.xlu0 0
  %1610 = vperm.xlu0 %1609, %v176
  %v1611 = vpop.permute.xlu0 %1610
  %1614 = vset.pattern.permute.xlu0 0
  %1615 = vperm.xlu0 %1614, %v177
  %v1616 = vpop.permute.xlu0 %1615
  %1619 = vset.pattern.permute.xlu0 0
  %1620 = vperm.xlu0 %1619, %v178
  %v1621 = vpop.permute.xlu0 %1620
  %1624 = vset.pattern.permute.xlu0 0
  %1625 = vperm.xlu0 %1624, %v179
  %v1626 = vpop.permute.xlu0 %1625
  %1629 = vset.pattern.permute.xlu0 0
  %1630 = vperm.xlu0 %1629, %v180
  %v1631 = vpop.permute.xlu0 %1630
  %1634 = vset.pattern.permute.xlu0 0
  %1635 = vperm.xlu0 %1634, %v181
  %v1636 = vpop.permute.xlu0 %1635
  %v1638 = vadd.f32 %v1566, %v1601
  %v1639 = vadd.f32 %v1567, %v1601
  %v1640 = vadd.f32 %v1568, %v1606
  %v1641 = vadd.f32 %v1569, %v1606
  %v1642 = vadd.f32 %v1570, %v1611
  %v1643 = vadd.f32 %v1571, %v1611
  %v1644 = vadd.f32 %v1572, %v1616
  %v1645 = vadd.f32 %v1573, %v1616
  %v1646 = vadd.f32 %v1574, %v1621
  %v1647 = vadd.f32 %v1575, %v1621
  %v1648 = vadd.f32 %v1576, %v1626
  %v1649 = vadd.f32 %v1577, %v1626
  %v1650 = vadd.f32 %v1578, %v1631
  %v1651 = vadd.f32 %v1579, %v1631
  %v1652 = vadd.f32 %v1580, %v1636
  %v1653 = vadd.f32 %v1581, %v1636
  %v1654 = vadd.f32 %v1582, %v1601
  %v1655 = vadd.f32 %v1583, %v1601
  %v1656 = vadd.f32 %v1584, %v1606
  %v1657 = vadd.f32 %v1585, %v1606
  %v1658 = vadd.f32 %v1586, %v1611
  %v1659 = vadd.f32 %v1587, %v1611
  %v1660 = vadd.f32 %v1588, %v1616
  %v1661 = vadd.f32 %v1589, %v1616
  %v1662 = vadd.f32 %v1590, %v1621
  %v1663 = vadd.f32 %v1591, %v1621
  %v1664 = vadd.f32 %v1592, %v1626
  %v1665 = vadd.f32 %v1593, %v1626
  %v1666 = vadd.f32 %v1594, %v1631
  %v1667 = vadd.f32 %v1595, %v1631
  %v1668 = vadd.f32 %v1596, %v1636
  %v1669 = vadd.f32 %v1597, %v1636
  %v1670 = vlaneseq
  %v1671 = vshrl.u32 %v1670, 7
  %v1672 = vsub.s32 0, %v1671
  %v1673 = vrot.slane %v1476, %v1672
  %1675 = vbcast.lane.b32.xlu0 %v1673, 256
  %v1676 = vpop.permute.xlu0 %1675
  %s1678 = sor.u32 256, 8
  %1679 = vbcast.lane.b32.xlu0 %v1673, %s1678
  %v1680 = vpop.permute.xlu0 %1679
  %s1682 = sor.u32 256, 16
  %1683 = vbcast.lane.b32.xlu0 %v1673, %s1682
  %v1684 = vpop.permute.xlu0 %1683
  %s1686 = sor.u32 256, 24
  %1687 = vbcast.lane.b32.xlu0 %v1673, %s1686
  %v1688 = vpop.permute.xlu0 %1687
  %s1690 = sor.u32 256, 32
  %1691 = vbcast.lane.b32.xlu0 %v1673, %s1690
  %v1692 = vpop.permute.xlu0 %1691
  %s1694 = sor.u32 256, 40
  %1695 = vbcast.lane.b32.xlu0 %v1673, %s1694
  %v1696 = vpop.permute.xlu0 %1695
  %s1698 = sor.u32 256, 48
  %1699 = vbcast.lane.b32.xlu0 %v1673, %s1698
  %v1700 = vpop.permute.xlu0 %1699
  %s1702 = sor.u32 256, 56
  %1703 = vbcast.lane.b32.xlu0 %v1673, %s1702
  %v1704 = vpop.permute.xlu0 %1703
  %v1705 = vlaneseq
  %v1706 = vshrl.u32 %v1705, 7
  %v1707 = vsub.s32 1, %v1706
  %v1708 = vrot.slane %v1476, %v1707
  %1710 = vbcast.lane.b32.xlu0 %v1708, 256
  %v1711 = vpop.permute.xlu0 %1710
  %s1713 = sor.u32 256, 8
  %1714 = vbcast.lane.b32.xlu0 %v1708, %s1713
  %v1715 = vpop.permute.xlu0 %1714
  %s1717 = sor.u32 256, 16
  %1718 = vbcast.lane.b32.xlu0 %v1708, %s1717
  %v1719 = vpop.permute.xlu0 %1718
  %s1721 = sor.u32 256, 24
  %1722 = vbcast.lane.b32.xlu0 %v1708, %s1721
  %v1723 = vpop.permute.xlu0 %1722
  %s1725 = sor.u32 256, 32
  %1726 = vbcast.lane.b32.xlu0 %v1708, %s1725
  %v1727 = vpop.permute.xlu0 %1726
  %s1729 = sor.u32 256, 40
  %1730 = vbcast.lane.b32.xlu0 %v1708, %s1729
  %v1731 = vpop.permute.xlu0 %1730
  %s1733 = sor.u32 256, 48
  %1734 = vbcast.lane.b32.xlu0 %v1708, %s1733
  %v1735 = vpop.permute.xlu0 %1734
  %s1737 = sor.u32 256, 56
  %1738 = vbcast.lane.b32.xlu0 %v1708, %s1737
  %v1739 = vpop.permute.xlu0 %1738
  %v1740 = vadd.f32 %v1638, %v1676
  %v1741 = vadd.f32 %v1639, %v1676
  %v1742 = vadd.f32 %v1640, %v1680
  %v1743 = vadd.f32 %v1641, %v1680
  %v1744 = vadd.f32 %v1642, %v1684
  %v1745 = vadd.f32 %v1643, %v1684
  %v1746 = vadd.f32 %v1644, %v1688
  %v1747 = vadd.f32 %v1645, %v1688
  %v1748 = vadd.f32 %v1646, %v1692
  %v1749 = vadd.f32 %v1647, %v1692
  %v1750 = vadd.f32 %v1648, %v1696
  %v1751 = vadd.f32 %v1649, %v1696
  %v1752 = vadd.f32 %v1650, %v1700
  %v1753 = vadd.f32 %v1651, %v1700
  %v1754 = vadd.f32 %v1652, %v1704
  %v1755 = vadd.f32 %v1653, %v1704
  %v1756 = vadd.f32 %v1654, %v1711
  %v1757 = vadd.f32 %v1655, %v1711
  %v1758 = vadd.f32 %v1656, %v1715
  %v1759 = vadd.f32 %v1657, %v1715
  %v1760 = vadd.f32 %v1658, %v1719
  %v1761 = vadd.f32 %v1659, %v1719
  %v1762 = vadd.f32 %v1660, %v1723
  %v1763 = vadd.f32 %v1661, %v1723
  %v1764 = vadd.f32 %v1662, %v1727
  %v1765 = vadd.f32 %v1663, %v1727
  %v1766 = vadd.f32 %v1664, %v1731
  %v1767 = vadd.f32 %v1665, %v1731
  %v1768 = vadd.f32 %v1666, %v1735
  %v1769 = vadd.f32 %v1667, %v1735
  %v1770 = vadd.f32 %v1668, %v1739
  %v1771 = vadd.f32 %v1669, %v1739
  %v1772 = vtanh.pop %v1740
  %v1773 = vtanh.pop %v1741
  %v1774 = vtanh.pop %v1742
  %v1775 = vtanh.pop %v1743
  %v1776 = vtanh.pop %v1744
  %v1777 = vtanh.pop %v1745
  %v1778 = vtanh.pop %v1746
  %v1779 = vtanh.pop %v1747
  %v1780 = vtanh.pop %v1748
  %v1781 = vtanh.pop %v1749
  %v1782 = vtanh.pop %v1750
  %v1783 = vtanh.pop %v1751
  %v1784 = vtanh.pop %v1752
  %v1785 = vtanh.pop %v1753
  %v1786 = vtanh.pop %v1754
  %v1787 = vtanh.pop %v1755
  %v1788 = vtanh.pop %v1756
  %v1789 = vtanh.pop %v1757
  %v1790 = vtanh.pop %v1758
  %v1791 = vtanh.pop %v1759
  %v1792 = vtanh.pop %v1760
  %v1793 = vtanh.pop %v1761
  %v1794 = vtanh.pop %v1762
  %v1795 = vtanh.pop %v1763
  %v1796 = vtanh.pop %v1764
  %v1797 = vtanh.pop %v1765
  %v1798 = vtanh.pop %v1766
  %v1799 = vtanh.pop %v1767
  %v1800 = vtanh.pop %v1768
  %v1801 = vtanh.pop %v1769
  %v1802 = vtanh.pop %v1770
  %v1803 = vtanh.pop %v1771
  %1805 = vset.pattern.permute.xlu0 0
  %1806 = vperm.xlu0 %1805, %v198
  %v1807 = vpop.permute.xlu0 %1806
  %1810 = vset.pattern.permute.xlu0 0
  %1811 = vperm.xlu0 %1810, %v199
  %v1812 = vpop.permute.xlu0 %1811
  %1815 = vset.pattern.permute.xlu0 0
  %1816 = vperm.xlu0 %1815, %v200
  %v1817 = vpop.permute.xlu0 %1816
  %1820 = vset.pattern.permute.xlu0 0
  %1821 = vperm.xlu0 %1820, %v201
  %v1822 = vpop.permute.xlu0 %1821
  %1825 = vset.pattern.permute.xlu0 0
  %1826 = vperm.xlu0 %1825, %v202
  %v1827 = vpop.permute.xlu0 %1826
  %1830 = vset.pattern.permute.xlu0 0
  %1831 = vperm.xlu0 %1830, %v203
  %v1832 = vpop.permute.xlu0 %1831
  %1835 = vset.pattern.permute.xlu0 0
  %1836 = vperm.xlu0 %1835, %v204
  %v1837 = vpop.permute.xlu0 %1836
  %1840 = vset.pattern.permute.xlu0 0
  %1841 = vperm.xlu0 %1840, %v205
  %v1842 = vpop.permute.xlu0 %1841
  %v1844 = vmul.f32 %v1772, %v1807
  %v1845 = vmul.f32 %v1773, %v1807
  %v1846 = vmul.f32 %v1774, %v1812
  %v1847 = vmul.f32 %v1775, %v1812
  %v1848 = vmul.f32 %v1776, %v1817
  %v1849 = vmul.f32 %v1777, %v1817
  %v1850 = vmul.f32 %v1778, %v1822
  %v1851 = vmul.f32 %v1779, %v1822
  %v1852 = vmul.f32 %v1780, %v1827
  %v1853 = vmul.f32 %v1781, %v1827
  %v1854 = vmul.f32 %v1782, %v1832
  %v1855 = vmul.f32 %v1783, %v1832
  %v1856 = vmul.f32 %v1784, %v1837
  %v1857 = vmul.f32 %v1785, %v1837
  %v1858 = vmul.f32 %v1786, %v1842
  %v1859 = vmul.f32 %v1787, %v1842
  %v1860 = vmul.f32 %v1788, %v1807
  %v1861 = vmul.f32 %v1789, %v1807
  %v1862 = vmul.f32 %v1790, %v1812
  %v1863 = vmul.f32 %v1791, %v1812
  %v1864 = vmul.f32 %v1792, %v1817
  %v1865 = vmul.f32 %v1793, %v1817
  %v1866 = vmul.f32 %v1794, %v1822
  %v1867 = vmul.f32 %v1795, %v1822
  %v1868 = vmul.f32 %v1796, %v1827
  %v1869 = vmul.f32 %v1797, %v1827
  %v1870 = vmul.f32 %v1798, %v1832
  %v1871 = vmul.f32 %v1799, %v1832
  %v1872 = vmul.f32 %v1800, %v1837
  %v1873 = vmul.f32 %v1801, %v1837
  %v1874 = vmul.f32 %v1802, %v1842
  %v1875 = vmul.f32 %v1803, %v1842
  %v1876 = vadd.f32 %v1844, %v1846
  %v1877 = vadd.f32 %v1876, %v1848
  %v1878 = vadd.f32 %v1877, %v1850
  %v1879 = vadd.f32 %v1878, %v1852
  %v1880 = vadd.f32 %v1879, %v1854
  %v1881 = vadd.f32 %v1880, %v1856
  %v1882 = vadd.f32 %v1881, %v1858
  %v1883 = vrot.slane %v1882, 4
  %v1884 = vadd.f32 %v1882, %v1883
  %v1885 = vrot.slane %v1884, 2
  %v1886 = vadd.f32 %v1884, %v1885
  %v1887 = vrot.slane %v1886, 1
  %v1888 = vadd.f32 %v1886, %v1887
  %v1889 = vadd.f32 %v1845, %v1847
  %v1890 = vadd.f32 %v1889, %v1849
  %v1891 = vadd.f32 %v1890, %v1851
  %v1892 = vadd.f32 %v1891, %v1853
  %v1893 = vadd.f32 %v1892, %v1855
  %v1894 = vadd.f32 %v1893, %v1857
  %v1895 = vadd.f32 %v1894, %v1859
  %v1896 = vrot.slane %v1895, 4
  %v1897 = vadd.f32 %v1895, %v1896
  %v1898 = vrot.slane %v1897, 2
  %v1899 = vadd.f32 %v1897, %v1898
  %v1900 = vrot.slane %v1899, 1
  %v1901 = vadd.f32 %v1899, %v1900
  %v1902 = vadd.f32 %v1860, %v1862
  %v1903 = vadd.f32 %v1902, %v1864
  %v1904 = vadd.f32 %v1903, %v1866
  %v1905 = vadd.f32 %v1904, %v1868
  %v1906 = vadd.f32 %v1905, %v1870
  %v1907 = vadd.f32 %v1906, %v1872
  %v1908 = vadd.f32 %v1907, %v1874
  %v1909 = vrot.slane %v1908, 4
  %v1910 = vadd.f32 %v1908, %v1909
  %v1911 = vrot.slane %v1910, 2
  %v1912 = vadd.f32 %v1910, %v1911
  %v1913 = vrot.slane %v1912, 1
  %v1914 = vadd.f32 %v1912, %v1913
  %v1915 = vadd.f32 %v1861, %v1863
  %v1916 = vadd.f32 %v1915, %v1865
  %v1917 = vadd.f32 %v1916, %v1867
  %v1918 = vadd.f32 %v1917, %v1869
  %v1919 = vadd.f32 %v1918, %v1871
  %v1920 = vadd.f32 %v1919, %v1873
  %v1921 = vadd.f32 %v1920, %v1875
  %v1922 = vrot.slane %v1921, 4
  %v1923 = vadd.f32 %v1921, %v1922
  %v1924 = vrot.slane %v1923, 2
  %v1925 = vadd.f32 %v1923, %v1924
  %v1926 = vrot.slane %v1925, 1
  %v1927 = vadd.f32 %v1925, %v1926
  %v1929 = vlaneseq
  %v1930 = vshrl.u32 %v1929, 7
  %v1931 = vsub.s32 0, %v1930
  %v1932 = vrot.slane %v206, %v1931
  %1933 = vset.pattern.permute.xlu0 0
  %1934 = vperm.xlu0 %1933, %v1932
  %v1935 = vpop.permute.xlu0 %1934
  %v1937 = vadd.f32 %v1888, %v1935
  %v1938 = vadd.f32 %v1901, %v1935
  %v1939 = vadd.f32 %v1914, %v1935
  %v1940 = vadd.f32 %v1927, %v1935
  %v1941 = vxor.u32 %v1937, 2147483648
  %v1942 = vxor.u32 %v1938, 2147483648
  %v1943 = vxor.u32 %v1939, 2147483648
  %v1944 = vxor.u32 %v1940, 2147483648
  %v1945 = vmul.f32 %v1941, 1.442695
  %v1946 = vpow.pop %v1945
  %v1947 = vmul.f32 %v1942, 1.442695
  %v1948 = vpow.pop %v1947
  %v1949 = vmul.f32 %v1943, 1.442695
  %v1950 = vpow.pop %v1949
  %v1951 = vmul.f32 %v1944, 1.442695
  %v1952 = vpow.pop %v1951
  %v1953 = vadd.f32 %v1946, 1.0
  %v1954 = vadd.f32 %v1948, 1.0
  %v1955 = vadd.f32 %v1950, 1.0
  %v1956 = vadd.f32 %v1952, 1.0
  %v1957 = vrcp.pop %v1953
  %v1958 = vmul.f32 1.0, %v1957
  %v1959 = vrcp.pop %v1954
  %v1960 = vmul.f32 1.0, %v1959
  %v1961 = vrcp.pop %v1955
  %v1962 = vmul.f32 1.0, %v1961
  %v1963 = vrcp.pop %v1956
  %v1964 = vmul.f32 1.0, %v1963
  %vm1969 = vcmask 1041409
  %v1970 = vsel %vm1969, %v1962, %v1958
  %v1971 = vsel %vm1969, %v1964, %v1960
  %vm1972 = vcmask 15360
  %v1974 = vsel %vm1972, %v79, 0
  %v1977 = vsel %vm1972, %v80, 0
  %v1980 = vsel %vm1972, %v81, 0
  %v1983 = vsel %vm1972, %v82, 0
  %v1986 = vsel %vm1972, %v83, 0
  %v1989 = vsel %vm1972, %v84, 0
  %v1992 = vsel %vm1972, %v85, 0
  %v1995 = vsel %vm1972, %v86, 0
  %v1998 = vsel %vm1972, %v87, 0
  %v2001 = vsel %vm1972, %v88, 0
  %v2004 = vsel %vm1972, %v89, 0
  %v2007 = vsel %vm1972, %v90, 0
  %v2010 = vsel %vm1972, %v91, 0
  %v2012 = vsel %vm1312, %v1970, 0
  %v2014 = vsel %vm1312, %v1971, 0
  %2016 = vmatprep.subr.mxu0 %v2014
  %2017 = vmatpush1.msra.mxu0 %v2012
  %2018 = vmatprep.subr.mxu0 0.0
  %2019 = vmatpush1.msra.mxu0 0.0
  %2020 = vmatprep.subr.mxu0 0.0
  %2021 = vmatpush1.msra.mxu0 0.0
  %2022 = vmatprep.subr.mxu0 0.0
  %2023 = vmatpush1.msra.mxu0 0.0
  %2024 = vmatprep.subr.mxu0 0.0
  %2025 = vmatpush1.msra.mxu0 0.0
  %2026 = vmatprep.subr.mxu0 0.0
  %2027 = vmatpush1.msra.mxu0 0.0
  %2028 = vmatprep.subr.mxu0 0.0
  %2029 = vmatpush1.msra.mxu0 0.0
  %2030 = vmatprep.subr.mxu0 0.0
  %2031 = vmatpush1.msra.mxu0 0.0
  %2032 = vmatprep.subr.mxu0 0.0
  %2033 = vmatpush1.msra.mxu0 0.0
  %2034 = vmatprep.subr.mxu0 0.0
  %2035 = vmatpush1.msra.mxu0 0.0
  %2036 = vmatprep.subr.mxu0 0.0
  %2037 = vmatpush1.msra.mxu0 0.0
  %2038 = vmatprep.subr.mxu0 0.0
  %2039 = vmatpush1.msra.mxu0 0.0
  %2040 = vmatprep.subr.mxu0 0.0
  %2041 = vmatpush1.msra.mxu0 0.0
  %2042 = vmatprep.subr.mxu0 0.0
  %2043 = vmatpush1.msra.mxu0 0.0
  %2044 = vmatprep.subr.mxu0 0.0
  %2045 = vmatpush1.msra.mxu0 0.0
  %2046 = vmatprep.subr.mxu0 0.0
  %2047 = vmatpush1.msra.mxu0 0.0
  %2048 = vmatprep.subr.mxu0 0.0
  %2049 = vmatpush1.msra.mxu0 0.0
  %2050 = vmatprep.subr.mxu0 0.0
  %2051 = vmatpush1.msra.mxu0 0.0
  %2052 = vmatprep.subr.mxu0 0.0
  %2053 = vmatpush1.msra.mxu0 0.0
  %2054 = vmatprep.subr.mxu0 0.0
  %2055 = vmatpush1.msra.mxu0 0.0
  %2056 = vmatprep.subr.mxu0 0.0
  %2057 = vmatpush1.msra.mxu0 0.0
  %2058 = vmatprep.subr.mxu0 0.0
  %2059 = vmatpush1.msra.mxu0 0.0
  %2060 = vmatprep.subr.mxu0 0.0
  %2061 = vmatpush1.msra.mxu0 0.0
  %2062 = vmatprep.subr.mxu0 0.0
  %2063 = vmatpush1.msra.mxu0 0.0
  %2064 = vmatprep.subr.mxu0 0.0
  %2065 = vmatpush1.msra.mxu0 0.0
  %2066 = vmatprep.subr.mxu0 0.0
  %2067 = vmatpush1.msra.mxu0 0.0
  %2068 = vmatprep.subr.mxu0 0.0
  %2069 = vmatpush1.msra.mxu0 0.0
  %2070 = vmatprep.subr.mxu0 0.0
  %2071 = vmatpush1.msra.mxu0 0.0
  %2072 = vmatprep.subr.mxu0 0.0
  %2073 = vmatpush1.msra.mxu0 0.0
  %2074 = vmatprep.subr.mxu0 0.0
  %2075 = vmatpush1.msra.mxu0 0.0
  %2076 = vmatprep.subr.mxu0 0.0
  %2077 = vmatpush1.msra.mxu0 0.0
  %2078 = vmatprep.subr.mxu0 0.0
  %2079 = vmatpush1.msra.mxu0 0.0
  %2080 = vmatprep.mubr.f32.mxu0 0.0
  %2081 = vmatmul.mubr.f32.gmra.mrb[0].mxu0 %v1974
  %v2082 = vpop.f32.mrb[0].mxu0
  %v2083 = vadd.f32 0.0, %v2082
  %v2084 = vpop.f32.mrb[0].mxu0
  %v2085 = vadd.f32 0.0, %v2084
  %2086 = vmatprep.mubr.f32.mxu0 0.0
  %2087 = vmatmul.mubr.f32.gmra.mrb[0].mxu0 %v1977
  %v2088 = vpop.f32.mrb[0].mxu0
  %v2089 = vadd.f32 0.0, %v2088
  %v2090 = vpop.f32.mrb[0].mxu0
  %v2091 = vadd.f32 0.0, %v2090
  %2092 = vmatprep.mubr.f32.mxu0 0.0
  %2093 = vmatmul.mubr.f32.gmra.mrb[0].mxu0 %v1980
  %v2094 = vpop.f32.mrb[0].mxu0
  %v2095 = vadd.f32 0.0, %v2094
  %v2096 = vpop.f32.mrb[0].mxu0
  %v2097 = vadd.f32 0.0, %v2096
  %2098 = vmatprep.mubr.f32.mxu0 0.0
  %2099 = vmatmul.mubr.f32.gmra.mrb[0].mxu0 %v1983
  %v2100 = vpop.f32.mrb[0].mxu0
  %v2101 = vadd.f32 0.0, %v2100
  %v2102 = vpop.f32.mrb[0].mxu0
  %v2103 = vadd.f32 0.0, %v2102
  %2104 = vmatprep.mubr.f32.mxu0 0.0
  %2105 = vmatmul.mubr.f32.gmra.mrb[0].mxu0 %v1986
  %v2106 = vpop.f32.mrb[0].mxu0
  %v2107 = vadd.f32 0.0, %v2106
  %v2108 = vpop.f32.mrb[0].mxu0
  %v2109 = vadd.f32 0.0, %v2108
  %2110 = vmatprep.mubr.f32.mxu0 0.0
  %2111 = vmatmul.mubr.f32.gmra.mrb[0].mxu0 %v1989
  %v2112 = vpop.f32.mrb[0].mxu0
  %v2113 = vadd.f32 0.0, %v2112
  %v2114 = vpop.f32.mrb[0].mxu0
  %v2115 = vadd.f32 0.0, %v2114
  %2116 = vmatprep.mubr.f32.mxu0 0.0
  %2117 = vmatmul.mubr.f32.gmra.mrb[0].mxu0 %v1992
  %v2118 = vpop.f32.mrb[0].mxu0
  %v2119 = vadd.f32 0.0, %v2118
  %v2120 = vpop.f32.mrb[0].mxu0
  %v2121 = vadd.f32 0.0, %v2120
  %2122 = vmatprep.mubr.f32.mxu0 0.0
  %2123 = vmatmul.mubr.f32.gmra.mrb[0].mxu0 %v1995
  %v2124 = vpop.f32.mrb[0].mxu0
  %v2125 = vadd.f32 0.0, %v2124
  %v2126 = vpop.f32.mrb[0].mxu0
  %v2127 = vadd.f32 0.0, %v2126
  %2128 = vmatprep.mubr.f32.mxu0 0.0
  %2129 = vmatmul.mubr.f32.gmra.mrb[0].mxu0 %v1998
  %v2130 = vpop.f32.mrb[0].mxu0
  %v2131 = vadd.f32 0.0, %v2130
  %v2132 = vpop.f32.mrb[0].mxu0
  %v2133 = vadd.f32 0.0, %v2132
  %2134 = vmatprep.mubr.f32.mxu0 0.0
  %2135 = vmatmul.mubr.f32.gmra.mrb[0].mxu0 %v2001
  %v2136 = vpop.f32.mrb[0].mxu0
  %v2137 = vadd.f32 0.0, %v2136
  %v2138 = vpop.f32.mrb[0].mxu0
  %v2139 = vadd.f32 0.0, %v2138
  %2140 = vmatprep.mubr.f32.mxu0 0.0
  %2141 = vmatmul.mubr.f32.gmra.mrb[0].mxu0 %v2004
  %v2142 = vpop.f32.mrb[0].mxu0
  %v2143 = vadd.f32 0.0, %v2142
  %v2144 = vpop.f32.mrb[0].mxu0
  %v2145 = vadd.f32 0.0, %v2144
  %2146 = vmatprep.mubr.f32.mxu0 0.0
  %2147 = vmatmul.mubr.f32.gmra.mrb[0].mxu0 %v2007
  %v2148 = vpop.f32.mrb[0].mxu0
  %v2149 = vadd.f32 0.0, %v2148
  %v2150 = vpop.f32.mrb[0].mxu0
  %v2151 = vadd.f32 0.0, %v2150
  %2152 = vmatprep.mubr.f32.mxu0 0.0
  %2153 = vmatmul.mubr.f32.gmra.mrb[0].mxu0 %v2010
  %v2154 = vpop.f32.mrb[0].mxu0
  %v2155 = vadd.f32 0.0, %v2154
  %v2156 = vpop.f32.mrb[0].mxu0
  %v2157 = vadd.f32 0.0, %v2156
  %2158 = vdwg.mxu0
  %v2159 = vmul.f32 %v1242, %v2083
  %v2160 = vmul.f32 %v1244, %v2085
  %v2161 = vmul.f32 %v1246, %v2089
  %v2162 = vmul.f32 %v1248, %v2091
  %v2163 = vmul.f32 %v1252, %v2095
  %v2164 = vmul.f32 %v1254, %v2097
  %v2165 = vmul.f32 %v1256, %v2101
  %v2166 = vmul.f32 %v1258, %v2103
  %v2167 = vmul.f32 %v1262, %v2107
  %v2168 = vmul.f32 %v1264, %v2109
  %v2169 = vmul.f32 %v1266, %v2113
  %v2170 = vmul.f32 %v1268, %v2115
  %v2171 = vmul.f32 %v1272, %v2119
  %v2172 = vmul.f32 %v1274, %v2121
  %v2173 = vmul.f32 %v1276, %v2125
  %v2174 = vmul.f32 %v1278, %v2127
  %v2175 = vmul.f32 %v1282, %v2131
  %v2176 = vmul.f32 %v1284, %v2133
  %v2177 = vmul.f32 %v1286, %v2137
  %v2178 = vmul.f32 %v1288, %v2139
  %v2179 = vmul.f32 %v1292, %v2143
  %v2180 = vmul.f32 %v1294, %v2145
  %v2181 = vmul.f32 %v1296, %v2149
  %v2182 = vmul.f32 %v1298, %v2151
  %v2183 = vmul.f32 %v1302, %v2155
  %v2184 = vmul.f32 %v1304, %v2157
  %v2185 = vpack.c.bf16 %v2161, %v2159
  %v2186 = vpack.c.bf16 %v2162, %v2160
  %v2187 = vpack.c.bf16 %v2165, %v2163
  %v2188 = vpack.c.bf16 %v2166, %v2164
  %v2189 = vpack.c.bf16 %v2169, %v2167
  %v2190 = vpack.c.bf16 %v2170, %v2168
  %v2191 = vpack.c.bf16 %v2173, %v2171
  %v2192 = vpack.c.bf16 %v2174, %v2172
  %v2193 = vpack.c.bf16 %v2177, %v2175
  %v2194 = vpack.c.bf16 %v2178, %v2176
  %v2195 = vpack.c.bf16 %v2181, %v2179
  %v2196 = vpack.c.bf16 %v2182, %v2180
  %v2197 = vpack.c.bf16 %v2183, %v2183
  %v2198 = vpack.c.bf16 %v2184, %v2184
  %v2200 = vlaneseq
  %v2201 = vshrl.u32 %v2200, 7
  %v2202 = vsub.s32 0, %v2201
  %v2203 = vrot.slane %v239, %v2202
  %v2237 = vunpack.c.l.b16 %v207
  %v2238 = vunpack.c.l.b16 %v208
  %v2239 = vunpack.c.l.b16 %v209
  %v2240 = vunpack.c.l.b16 %v210
  %v2241 = vunpack.c.l.b16 %v211
  %v2242 = vunpack.c.l.b16 %v212
  %v2243 = vunpack.c.l.b16 %v213
  %v2244 = vunpack.c.l.b16 %v214
  %v2245 = vunpack.c.l.b16 %v215
  %v2246 = vunpack.c.l.b16 %v216
  %v2247 = vunpack.c.l.b16 %v217
  %v2248 = vunpack.c.l.b16 %v218
  %v2249 = vunpack.c.l.b16 %v219
  %v2250 = vunpack.c.l.b16 %v220
  %v2251 = vunpack.c.l.b16 %v221
  %v2252 = vunpack.c.l.b16 %v222
  %v2253 = vunpack.c.l.b16 %v223
  %v2254 = vunpack.c.l.b16 %v224
  %v2255 = vunpack.c.l.b16 %v225
  %v2256 = vunpack.c.l.b16 %v226
  %v2257 = vunpack.c.l.b16 %v227
  %v2258 = vunpack.c.l.b16 %v228
  %v2259 = vunpack.c.l.b16 %v229
  %v2260 = vunpack.c.l.b16 %v230
  %v2261 = vunpack.c.l.b16 %v231
  %v2262 = vunpack.c.l.b16 %v232
  %v2263 = vunpack.c.l.b16 %v233
  %v2264 = vunpack.c.l.b16 %v234
  %v2265 = vunpack.c.l.b16 %v235
  %v2266 = vunpack.c.l.b16 %v236
  %v2267 = vunpack.c.l.b16 %v237
  %v2268 = vunpack.c.l.b16 %v238
  %v2269 = vpack.c.b16 %v2238, %v2237
  %v2270 = vpack.c.b16 %v2240, %v2239
  %v2271 = vpack.c.b16 %v2242, %v2241
  %v2272 = vpack.c.b16 %v2244, %v2243
  %v2273 = vpack.c.b16 %v2246, %v2245
  %v2274 = vpack.c.b16 %v2248, %v2247
  %v2275 = vpack.c.b16 %v2250, %v2249
  %v2276 = vpack.c.b16 %v2252, %v2251
  %v2277 = vpack.c.b16 %v2254, %v2253
  %v2278 = vpack.c.b16 %v2256, %v2255
  %v2279 = vpack.c.b16 %v2258, %v2257
  %v2280 = vpack.c.b16 %v2260, %v2259
  %v2281 = vpack.c.b16 %v2262, %v2261
  %v2282 = vpack.c.b16 %v2264, %v2263
  %v2283 = vpack.c.b16 %v2266, %v2265
  %v2284 = vpack.c.b16 %v2268, %v2267
  %2301 = vmatprep.subr.bf16.mxu0 0
  %2302 = vmatpush1.bf16.msra.mxu0 %v2269
  %2303 = vmatprep.subr.bf16.mxu0 0
  %2304 = vmatpush1.bf16.msra.mxu0 %v2270
  %2305 = vmatprep.subr.bf16.mxu0 0
  %2306 = vmatpush1.bf16.msra.mxu0 %v2271
  %2307 = vmatprep.subr.bf16.mxu0 0
  %2308 = vmatpush1.bf16.msra.mxu0 %v2272
  %2309 = vmatprep.subr.bf16.mxu0 0
  %2310 = vmatpush1.bf16.msra.mxu0 %v2273
  %2311 = vmatprep.subr.bf16.mxu0 0
  %2312 = vmatpush1.bf16.msra.mxu0 %v2274
  %2313 = vmatprep.subr.bf16.mxu0 0
  %2314 = vmatpush1.bf16.msra.mxu0 %v2275
  %2315 = vmatprep.subr.bf16.mxu0 0
  %2316 = vmatpush1.bf16.msra.mxu0 %v2276
  %2317 = vmatprep.subr.bf16.mxu0 0
  %2318 = vmatpush1.bf16.msra.mxu0 %v2277
  %2319 = vmatprep.subr.bf16.mxu0 0
  %2320 = vmatpush1.bf16.msra.mxu0 %v2278
  %2321 = vmatprep.subr.bf16.mxu0 0
  %2322 = vmatpush1.bf16.msra.mxu0 %v2279
  %2323 = vmatprep.subr.bf16.mxu0 0
  %2324 = vmatpush1.bf16.msra.mxu0 %v2280
  %2325 = vmatprep.subr.bf16.mxu0 0
  %2326 = vmatpush1.bf16.msra.mxu0 %v2281
  %2327 = vmatprep.subr.bf16.mxu0 0
  %2328 = vmatpush1.bf16.msra.mxu0 %v2282
  %2329 = vmatprep.subr.bf16.mxu0 0
  %2330 = vmatpush1.bf16.msra.mxu0 %v2283
  %2331 = vmatprep.subr.bf16.mxu0 0
  %2332 = vmatpush1.bf16.msra.mxu0 %v2284
  %2333 = vmatprep.mubr.bf16.mxu0 %v2186
  %2334 = vmatmul.mubr.bf16.gmra.mrb[0].mxu0 %v2185
  %v2335 = vpop.f32.mrb[0].mxu0
  %v2336 = vadd.f32 %v2203, %v2335
  %v2337 = vpop.f32.mrb[0].mxu0
  %v2338 = vpop.f32.mrb[0].mxu0
  %v2339 = vadd.f32 %v2203, %v2338
  %v2340 = vpop.f32.mrb[0].mxu0
  %2341 = vmatprep.mubr.bf16.mxu0 %v2188
  %2342 = vmatmul.mubr.bf16.gmra.mrb[0].mxu0 %v2187
  %v2343 = vpop.f32.mrb[0].mxu0
  %v2344 = vadd.f32 %v2203, %v2343
  %v2345 = vpop.f32.mrb[0].mxu0
  %v2346 = vpop.f32.mrb[0].mxu0
  %v2347 = vadd.f32 %v2203, %v2346
  %v2348 = vpop.f32.mrb[0].mxu0
  %2349 = vmatprep.mubr.bf16.mxu0 %v2190
  %2350 = vmatmul.mubr.bf16.gmra.mrb[0].mxu0 %v2189
  %v2351 = vpop.f32.mrb[0].mxu0
  %v2352 = vadd.f32 %v2203, %v2351
  %v2353 = vpop.f32.mrb[0].mxu0
  %v2354 = vpop.f32.mrb[0].mxu0
  %v2355 = vadd.f32 %v2203, %v2354
  %v2356 = vpop.f32.mrb[0].mxu0
  %2357 = vmatprep.mubr.bf16.mxu0 %v2192
  %2358 = vmatmul.mubr.bf16.gmra.mrb[0].mxu0 %v2191
  %v2359 = vpop.f32.mrb[0].mxu0
  %v2360 = vadd.f32 %v2203, %v2359
  %v2361 = vpop.f32.mrb[0].mxu0
  %v2362 = vpop.f32.mrb[0].mxu0
  %v2363 = vadd.f32 %v2203, %v2362
  %v2364 = vpop.f32.mrb[0].mxu0
  %2365 = vmatprep.mubr.bf16.mxu0 %v2194
  %2366 = vmatmul.mubr.bf16.gmra.mrb[0].mxu0 %v2193
  %v2367 = vpop.f32.mrb[0].mxu0
  %v2368 = vadd.f32 %v2203, %v2367
  %v2369 = vpop.f32.mrb[0].mxu0
  %v2370 = vpop.f32.mrb[0].mxu0
  %v2371 = vadd.f32 %v2203, %v2370
  %v2372 = vpop.f32.mrb[0].mxu0
  %2373 = vmatprep.mubr.bf16.mxu0 %v2196
  %2374 = vmatmul.mubr.bf16.gmra.mrb[0].mxu0 %v2195
  %v2375 = vpop.f32.mrb[0].mxu0
  %v2376 = vadd.f32 %v2203, %v2375
  %v2377 = vpop.f32.mrb[0].mxu0
  %v2378 = vpop.f32.mrb[0].mxu0
  %v2379 = vadd.f32 %v2203, %v2378
  %v2380 = vpop.f32.mrb[0].mxu0
  %2381 = vmatprep.mubr.bf16.mxu0 %v2198
  %2382 = vmatmul.mubr.bf16.gmra.mrb[0].mxu0 %v2197
  %v2383 = vpop.f32.mrb[0].mxu0
  %v2384 = vadd.f32 %v2203, %v2383
  %v2385 = vpop.f32.mrb[0].mxu0
  %v2386 = vpop.f32.mrb[0].mxu0
  %v2387 = vpop.f32.mrb[0].mxu0
  %2388 = vdwg.mxu0
  %v2405 = vunpack.c.l.b16 %v240
  %v2406 = vunpack.c.l.b16 %v241
  %v2407 = vunpack.c.l.b16 %v242
  %v2408 = vunpack.c.l.b16 %v243
  %v2409 = vunpack.c.l.b16 %v244
  %v2410 = vunpack.c.l.b16 %v245
  %v2411 = vunpack.c.l.b16 %v246
  %v2412 = vunpack.c.l.b16 %v247
  %v2413 = vunpack.c.l.b16 %v248
  %v2414 = vunpack.c.l.b16 %v249
  %v2415 = vunpack.c.l.b16 %v250
  %v2416 = vunpack.c.l.b16 %v251
  %v2417 = vunpack.c.l.b16 %v252
  %v2418 = vunpack.c.l.b16 %v253
  %v2419 = vunpack.c.l.b16 %v254
  %v2420 = vunpack.c.l.b16 %v255
  %v2421 = vpack.c.b16 %v2406, %v2405
  %v2422 = vpack.c.b16 %v2408, %v2407
  %v2423 = vpack.c.b16 %v2410, %v2409
  %v2424 = vpack.c.b16 %v2412, %v2411
  %v2425 = vpack.c.b16 %v2414, %v2413
  %v2426 = vpack.c.b16 %v2416, %v2415
  %v2427 = vpack.c.b16 %v2418, %v2417
  %v2428 = vpack.c.b16 %v2420, %v2419
  %2437 = vmatprep.subr.bf16.mxu0 0
  %2438 = vmatpush1.bf16.msra.mxu0 %v2421
  %2439 = vmatprep.subr.bf16.mxu0 0
  %2440 = vmatpush1.bf16.msra.mxu0 %v2422
  %2441 = vmatprep.subr.bf16.mxu0 0
  %2442 = vmatpush1.bf16.msra.mxu0 %v2423
  %2443 = vmatprep.subr.bf16.mxu0 0
  %2444 = vmatpush1.bf16.msra.mxu0 %v2424
  %2445 = vmatprep.subr.bf16.mxu0 0
  %2446 = vmatpush1.bf16.msra.mxu0 %v2425
  %2447 = vmatprep.subr.bf16.mxu0 0
  %2448 = vmatpush1.bf16.msra.mxu0 %v2426
  %2449 = vmatprep.subr.bf16.mxu0 0
  %2450 = vmatpush1.bf16.msra.mxu0 %v2427
  %2451 = vmatprep.subr.bf16.mxu0 0
  %2452 = vmatpush1.bf16.msra.mxu0 %v2428
  %2453 = vmatprep.subr.bf16.mxu0 0
  %2454 = vmatpush1.bf16.msra.mxu0 0
  %2455 = vmatprep.subr.bf16.mxu0 0
  %2456 = vmatpush1.bf16.msra.mxu0 0
  %2457 = vmatprep.subr.bf16.mxu0 0
  %2458 = vmatpush1.bf16.msra.mxu0 0
  %2459 = vmatprep.subr.bf16.mxu0 0
  %2460 = vmatpush1.bf16.msra.mxu0 0
  %2461 = vmatprep.subr.bf16.mxu0 0
  %2462 = vmatpush1.bf16.msra.mxu0 0
  %2463 = vmatprep.subr.bf16.mxu0 0
  %2464 = vmatpush1.bf16.msra.mxu0 0
  %2465 = vmatprep.subr.bf16.mxu0 0
  %2466 = vmatpush1.bf16.msra.mxu0 0
  %2467 = vmatprep.subr.bf16.mxu0 0
  %2468 = vmatpush1.bf16.msra.mxu0 0
  %2469 = vmatprep.mubr.bf16.mxu0 0
  %2470 = vmatmul.mubr.bf16.gmra.mrb[0].mxu0 %v1392
  %v2471 = vpop.f32.mrb[0].mxu0
  %v2472 = vadd.f32 0.0, %v2471
  %v2473 = vpop.f32.mrb[0].mxu0
  %v2474 = vpop.f32.mrb[0].mxu0
  %v2475 = vpop.f32.mrb[0].mxu0
  %2476 = vdwg.mxu0
  %v2478 = vsel %vm1312, %v2472, 0
  %2480 = vmatprep.subr.mxu0 0.0
  %2481 = vmatpush1.msra.mxu0 %v2478
  %2482 = vmatprep.subr.mxu0 0.0
  %2483 = vmatpush1.msra.mxu0 0.0
  %2484 = vmatprep.subr.mxu0 0.0
  %2485 = vmatpush1.msra.mxu0 0.0
  %2486 = vmatprep.subr.mxu0 0.0
  %2487 = vmatpush1.msra.mxu0 0.0
  %2488 = vmatprep.subr.mxu0 0.0
  %2489 = vmatpush1.msra.mxu0 0.0
  %2490 = vmatprep.subr.mxu0 0.0
  %2491 = vmatpush1.msra.mxu0 0.0
  %2492 = vmatprep.subr.mxu0 0.0
  %2493 = vmatpush1.msra.mxu0 0.0
  %2494 = vmatprep.subr.mxu0 0.0
  %2495 = vmatpush1.msra.mxu0 0.0
  %2496 = vmatprep.subr.mxu0 0.0
  %2497 = vmatpush1.msra.mxu0 0.0
  %2498 = vmatprep.subr.mxu0 0.0
  %2499 = vmatpush1.msra.mxu0 0.0
  %2500 = vmatprep.subr.mxu0 0.0
  %2501 = vmatpush1.msra.mxu0 0.0
  %2502 = vmatprep.subr.mxu0 0.0
  %2503 = vmatpush1.msra.mxu0 0.0
  %2504 = vmatprep.subr.mxu0 0.0
  %2505 = vmatpush1.msra.mxu0 0.0
  %2506 = vmatprep.subr.mxu0 0.0
  %2507 = vmatpush1.msra.mxu0 0.0
  %2508 = vmatprep.subr.mxu0 0.0
  %2509 = vmatpush1.msra.mxu0 0.0
  %2510 = vmatprep.subr.mxu0 0.0
  %2511 = vmatpush1.msra.mxu0 0.0
  %2512 = vmatprep.subr.mxu0 0.0
  %2513 = vmatpush1.msra.mxu0 0.0
  %2514 = vmatprep.subr.mxu0 0.0
  %2515 = vmatpush1.msra.mxu0 0.0
  %2516 = vmatprep.subr.mxu0 0.0
  %2517 = vmatpush1.msra.mxu0 0.0
  %2518 = vmatprep.subr.mxu0 0.0
  %2519 = vmatpush1.msra.mxu0 0.0
  %2520 = vmatprep.subr.mxu0 0.0
  %2521 = vmatpush1.msra.mxu0 0.0
  %2522 = vmatprep.subr.mxu0 0.0
  %2523 = vmatpush1.msra.mxu0 0.0
  %2524 = vmatprep.subr.mxu0 0.0
  %2525 = vmatpush1.msra.mxu0 0.0
  %2526 = vmatprep.subr.mxu0 0.0
  %2527 = vmatpush1.msra.mxu0 0.0
  %2528 = vmatprep.subr.mxu0 0.0
  %2529 = vmatpush1.msra.mxu0 0.0
  %2530 = vmatprep.subr.mxu0 0.0
  %2531 = vmatpush1.msra.mxu0 0.0
  %2532 = vmatprep.subr.mxu0 0.0
  %2533 = vmatpush1.msra.mxu0 0.0
  %2534 = vmatprep.subr.mxu0 0.0
  %2535 = vmatpush1.msra.mxu0 0.0
  %2536 = vmatprep.subr.mxu0 0.0
  %2537 = vmatpush1.msra.mxu0 0.0
  %2538 = vmatprep.subr.mxu0 0.0
  %2539 = vmatpush1.msra.mxu0 0.0
  %2540 = vmatprep.subr.mxu0 0.0
  %2541 = vmatpush1.msra.mxu0 0.0
  %2542 = vmatprep.subr.mxu0 0.0
  %2543 = vmatpush1.msra.mxu0 0.0
  %2544 = vmatprep.mubr.f32.mxu0 0.0
  %2545 = vmatmul.mubr.f32.gmra.mrb[0].mxu0 %v1974
  %v2546 = vpop.f32.mrb[0].mxu0
  %v2547 = vadd.f32 0.0, %v2546
  %v2548 = vpop.f32.mrb[0].mxu0
  %2549 = vmatprep.mubr.f32.mxu0 0.0
  %2550 = vmatmul.mubr.f32.gmra.mrb[0].mxu0 %v1977
  %v2551 = vpop.f32.mrb[0].mxu0
  %v2552 = vadd.f32 0.0, %v2551
  %v2553 = vpop.f32.mrb[0].mxu0
  %2554 = vmatprep.mubr.f32.mxu0 0.0
  %2555 = vmatmul.mubr.f32.gmra.mrb[0].mxu0 %v1980
  %v2556 = vpop.f32.mrb[0].mxu0
  %v2557 = vadd.f32 0.0, %v2556
  %v2558 = vpop.f32.mrb[0].mxu0
  %2559 = vmatprep.mubr.f32.mxu0 0.0
  %2560 = vmatmul.mubr.f32.gmra.mrb[0].mxu0 %v1983
  %v2561 = vpop.f32.mrb[0].mxu0
  %v2562 = vadd.f32 0.0, %v2561
  %v2563 = vpop.f32.mrb[0].mxu0
  %2564 = vmatprep.mubr.f32.mxu0 0.0
  %2565 = vmatmul.mubr.f32.gmra.mrb[0].mxu0 %v1986
  %v2566 = vpop.f32.mrb[0].mxu0
  %v2567 = vadd.f32 0.0, %v2566
  %v2568 = vpop.f32.mrb[0].mxu0
  %2569 = vmatprep.mubr.f32.mxu0 0.0
  %2570 = vmatmul.mubr.f32.gmra.mrb[0].mxu0 %v1989
  %v2571 = vpop.f32.mrb[0].mxu0
  %v2572 = vadd.f32 0.0, %v2571
  %v2573 = vpop.f32.mrb[0].mxu0
  %2574 = vmatprep.mubr.f32.mxu0 0.0
  %2575 = vmatmul.mubr.f32.gmra.mrb[0].mxu0 %v1992
  %v2576 = vpop.f32.mrb[0].mxu0
  %v2577 = vadd.f32 0.0, %v2576
  %v2578 = vpop.f32.mrb[0].mxu0
  %2579 = vmatprep.mubr.f32.mxu0 0.0
  %2580 = vmatmul.mubr.f32.gmra.mrb[0].mxu0 %v1995
  %v2581 = vpop.f32.mrb[0].mxu0
  %v2582 = vadd.f32 0.0, %v2581
  %v2583 = vpop.f32.mrb[0].mxu0
  %2584 = vmatprep.mubr.f32.mxu0 0.0
  %2585 = vmatmul.mubr.f32.gmra.mrb[0].mxu0 %v1998
  %v2586 = vpop.f32.mrb[0].mxu0
  %v2587 = vadd.f32 0.0, %v2586
  %v2588 = vpop.f32.mrb[0].mxu0
  %2589 = vmatprep.mubr.f32.mxu0 0.0
  %2590 = vmatmul.mubr.f32.gmra.mrb[0].mxu0 %v2001
  %v2591 = vpop.f32.mrb[0].mxu0
  %v2592 = vadd.f32 0.0, %v2591
  %v2593 = vpop.f32.mrb[0].mxu0
  %2594 = vmatprep.mubr.f32.mxu0 0.0
  %2595 = vmatmul.mubr.f32.gmra.mrb[0].mxu0 %v2004
  %v2596 = vpop.f32.mrb[0].mxu0
  %v2597 = vadd.f32 0.0, %v2596
  %v2598 = vpop.f32.mrb[0].mxu0
  %2599 = vmatprep.mubr.f32.mxu0 0.0
  %2600 = vmatmul.mubr.f32.gmra.mrb[0].mxu0 %v2007
  %v2601 = vpop.f32.mrb[0].mxu0
  %v2602 = vadd.f32 0.0, %v2601
  %v2603 = vpop.f32.mrb[0].mxu0
  %2604 = vmatprep.mubr.f32.mxu0 0.0
  %2605 = vmatmul.mubr.f32.gmra.mrb[0].mxu0 %v2010
  %v2606 = vpop.f32.mrb[0].mxu0
  %v2607 = vadd.f32 0.0, %v2606
  %v2608 = vpop.f32.mrb[0].mxu0
  %2609 = vdwg.mxu0
  %v2610 = vadd.f32 %v2336, %v2547
  %v2611 = vadd.f32 %v2339, %v2552
  %v2612 = vadd.f32 %v2344, %v2557
  %v2613 = vadd.f32 %v2347, %v2562
  %v2614 = vadd.f32 %v2352, %v2567
  %v2615 = vadd.f32 %v2355, %v2572
  %v2616 = vadd.f32 %v2360, %v2577
  %v2617 = vadd.f32 %v2363, %v2582
  %v2618 = vadd.f32 %v2368, %v2587
  %v2619 = vadd.f32 %v2371, %v2592
  %v2620 = vadd.f32 %v2376, %v2597
  %v2621 = vadd.f32 %v2379, %v2602
  %v2622 = vadd.f32 %v2384, %v2607
  %v2623 = vtanh.pop %v2610
  %v2624 = vtanh.pop %v2611
  %v2625 = vtanh.pop %v2612
  %v2626 = vtanh.pop %v2613
  %v2627 = vtanh.pop %v2614
  %v2628 = vtanh.pop %v2615
  %v2629 = vtanh.pop %v2616
  %v2630 = vtanh.pop %v2617
  %v2631 = vtanh.pop %v2618
  %v2632 = vtanh.pop %v2619
  %v2633 = vtanh.pop %v2620
  %v2634 = vtanh.pop %v2621
  %v2635 = vtanh.pop %v2622
  %v2637 = vlaneseq
  %v2638 = vshrl.u32 %v2637, 7
  %v2639 = vsub.s32 0, %v2638
  %v2640 = vrot.slane %v264, %v2639
  %vm2642 = vcmask 523264
  %v2644 = vsel %vm2642, %v2623, 0
  %v2647 = vsel %vm2642, %v2624, 0
  %v2650 = vsel %vm2642, %v2625, 0
  %v2653 = vsel %vm2642, %v2626, 0
  %v2656 = vsel %vm2642, %v2627, 0
  %v2659 = vsel %vm2642, %v2628, 0
  %v2662 = vsel %vm2642, %v2629, 0
  %v2665 = vsel %vm2642, %v2630, 0
  %v2668 = vsel %vm2642, %v2631, 0
  %v2671 = vsel %vm2642, %v2632, 0
  %v2674 = vsel %vm2642, %v2633, 0
  %v2677 = vsel %vm2642, %v2634, 0
  %v2680 = vsel %vm2642, %v2635, 0
  %2682 = vmatprep.subr.mxu0 0.0
  %2683 = vmatpush1.msra.mxu0 %v256
  %2684 = vmatprep.subr.mxu0 0.0
  %2685 = vmatpush1.msra.mxu0 %v257
  %2686 = vmatprep.subr.mxu0 0.0
  %2687 = vmatpush1.msra.mxu0 %v258
  %2688 = vmatprep.subr.mxu0 0.0
  %2689 = vmatpush1.msra.mxu0 %v259
  %2690 = vmatprep.subr.mxu0 0.0
  %2691 = vmatpush1.msra.mxu0 %v260
  %2692 = vmatprep.subr.mxu0 0.0
  %2693 = vmatpush1.msra.mxu0 %v261
  %2694 = vmatprep.subr.mxu0 0.0
  %2695 = vmatpush1.msra.mxu0 %v262
  %2696 = vmatprep.subr.mxu0 0.0
  %2697 = vmatpush1.msra.mxu0 %v263
  %2698 = vmatprep.subr.mxu0 0.0
  %2699 = vmatpush1.msra.mxu0 0.0
  %2700 = vmatprep.subr.mxu0 0.0
  %2701 = vmatpush1.msra.mxu0 0.0
  %2702 = vmatprep.subr.mxu0 0.0
  %2703 = vmatpush1.msra.mxu0 0.0
  %2704 = vmatprep.subr.mxu0 0.0
  %2705 = vmatpush1.msra.mxu0 0.0
  %2706 = vmatprep.subr.mxu0 0.0
  %2707 = vmatpush1.msra.mxu0 0.0
  %2708 = vmatprep.subr.mxu0 0.0
  %2709 = vmatpush1.msra.mxu0 0.0
  %2710 = vmatprep.subr.mxu0 0.0
  %2711 = vmatpush1.msra.mxu0 0.0
  %2712 = vmatprep.subr.mxu0 0.0
  %2713 = vmatpush1.msra.mxu0 0.0
  %2714 = vmatprep.subr.mxu0 0.0
  %2715 = vmatpush1.msra.mxu0 0.0
  %2716 = vmatprep.subr.mxu0 0.0
  %2717 = vmatpush1.msra.mxu0 0.0
  %2718 = vmatprep.subr.mxu0 0.0
  %2719 = vmatpush1.msra.mxu0 0.0
  %2720 = vmatprep.subr.mxu0 0.0
  %2721 = vmatpush1.msra.mxu0 0.0
  %2722 = vmatprep.subr.mxu0 0.0
  %2723 = vmatpush1.msra.mxu0 0.0
  %2724 = vmatprep.subr.mxu0 0.0
  %2725 = vmatpush1.msra.mxu0 0.0
  %2726 = vmatprep.subr.mxu0 0.0
  %2727 = vmatpush1.msra.mxu0 0.0
  %2728 = vmatprep.subr.mxu0 0.0
  %2729 = vmatpush1.msra.mxu0 0.0
  %2730 = vmatprep.subr.mxu0 0.0
  %2731 = vmatpush1.msra.mxu0 0.0
  %2732 = vmatprep.subr.mxu0 0.0
  %2733 = vmatpush1.msra.mxu0 0.0
  %2734 = vmatprep.subr.mxu0 0.0
  %2735 = vmatpush1.msra.mxu0 0.0
  %2736 = vmatprep.subr.mxu0 0.0
  %2737 = vmatpush1.msra.mxu0 0.0
  %2738 = vmatprep.subr.mxu0 0.0
  %2739 = vmatpush1.msra.mxu0 0.0
  %2740 = vmatprep.subr.mxu0 0.0
  %2741 = vmatpush1.msra.mxu0 0.0
  %2742 = vmatprep.subr.mxu0 0.0
  %2743 = vmatpush1.msra.mxu0 0.0
  %2744 = vmatprep.subr.mxu0 0.0
  %2745 = vmatpush1.msra.mxu0 0.0
  %2746 = vmatprep.mubr.f32.mxu0 0.0
  %2747 = vmatmul.mubr.f32.gmra.mrb[0].mxu0 %v2644
  %v2748 = vpop.f32.mrb[0].mxu0
  %v2749 = vadd.f32 %v2640, %v2748
  %v2750 = vpop.f32.mrb[0].mxu0
  %2751 = vmatprep.mubr.f32.mxu0 0.0
  %2752 = vmatmul.mubr.f32.gmra.mrb[0].mxu0 %v2647
  %v2753 = vpop.f32.mrb[0].mxu0
  %v2754 = vadd.f32 %v2640, %v2753
  %v2755 = vpop.f32.mrb[0].mxu0
  %2756 = vmatprep.mubr.f32.mxu0 0.0
  %2757 = vmatmul.mubr.f32.gmra.mrb[0].mxu0 %v2650
  %v2758 = vpop.f32.mrb[0].mxu0
  %v2759 = vadd.f32 %v2640, %v2758
  %v2760 = vpop.f32.mrb[0].mxu0
  %2761 = vmatprep.mubr.f32.mxu0 0.0
  %2762 = vmatmul.mubr.f32.gmra.mrb[0].mxu0 %v2653
  %v2763 = vpop.f32.mrb[0].mxu0
  %v2764 = vadd.f32 %v2640, %v2763
  %v2765 = vpop.f32.mrb[0].mxu0
  %2766 = vmatprep.mubr.f32.mxu0 0.0
  %2767 = vmatmul.mubr.f32.gmra.mrb[0].mxu0 %v2656
  %v2768 = vpop.f32.mrb[0].mxu0
  %v2769 = vadd.f32 %v2640, %v2768
  %v2770 = vpop.f32.mrb[0].mxu0
  %2771 = vmatprep.mubr.f32.mxu0 0.0
  %2772 = vmatmul.mubr.f32.gmra.mrb[0].mxu0 %v2659
  %v2773 = vpop.f32.mrb[0].mxu0
  %v2774 = vadd.f32 %v2640, %v2773
  %v2775 = vpop.f32.mrb[0].mxu0
  %2776 = vmatprep.mubr.f32.mxu0 0.0
  %2777 = vmatmul.mubr.f32.gmra.mrb[0].mxu0 %v2662
  %v2778 = vpop.f32.mrb[0].mxu0
  %v2779 = vadd.f32 %v2640, %v2778
  %v2780 = vpop.f32.mrb[0].mxu0
  %2781 = vmatprep.mubr.f32.mxu0 0.0
  %2782 = vmatmul.mubr.f32.gmra.mrb[0].mxu0 %v2665
  %v2783 = vpop.f32.mrb[0].mxu0
  %v2784 = vadd.f32 %v2640, %v2783
  %v2785 = vpop.f32.mrb[0].mxu0
  %2786 = vmatprep.mubr.f32.mxu0 0.0
  %2787 = vmatmul.mubr.f32.gmra.mrb[0].mxu0 %v2668
  %v2788 = vpop.f32.mrb[0].mxu0
  %v2789 = vadd.f32 %v2640, %v2788
  %v2790 = vpop.f32.mrb[0].mxu0
  %2791 = vmatprep.mubr.f32.mxu0 0.0
  %2792 = vmatmul.mubr.f32.gmra.mrb[0].mxu0 %v2671
  %v2793 = vpop.f32.mrb[0].mxu0
  %v2794 = vadd.f32 %v2640, %v2793
  %v2795 = vpop.f32.mrb[0].mxu0
  %2796 = vmatprep.mubr.f32.mxu0 0.0
  %2797 = vmatmul.mubr.f32.gmra.mrb[0].mxu0 %v2674
  %v2798 = vpop.f32.mrb[0].mxu0
  %v2799 = vadd.f32 %v2640, %v2798
  %v2800 = vpop.f32.mrb[0].mxu0
  %2801 = vmatprep.mubr.f32.mxu0 0.0
  %2802 = vmatmul.mubr.f32.gmra.mrb[0].mxu0 %v2677
  %v2803 = vpop.f32.mrb[0].mxu0
  %v2804 = vadd.f32 %v2640, %v2803
  %v2805 = vpop.f32.mrb[0].mxu0
  %2806 = vmatprep.mubr.f32.mxu0 0.0
  %2807 = vmatmul.mubr.f32.gmra.mrb[0].mxu0 %v2680
  %v2808 = vpop.f32.mrb[0].mxu0
  %v2809 = vadd.f32 %v2640, %v2808
  %v2810 = vpop.f32.mrb[0].mxu0
  %2811 = vdwg.mxu0
  %vm2812 = vcmask 7168
  %v2813 = vsel %vm2812, %v2749, -inf
  %v2814 = vsel %vm2812, %v2754, -inf
  %v2815 = vsel %vm2812, %v2759, -inf
  %v2816 = vsel %vm2812, %v2764, -inf
  %v2817 = vsel %vm2812, %v2769, -inf
  %v2818 = vmax.f32 %v2813, %v2817
  %v2819 = vsel %vm2812, %v2774, -inf
  %v2820 = vmax.f32 %v2814, %v2819
  %v2821 = vsel %vm2812, %v2779, -inf
  %v2822 = vmax.f32 %v2815, %v2821
  %v2823 = vsel %vm2812, %v2784, -inf
  %v2824 = vmax.f32 %v2816, %v2823
  %v2825 = vsel %vm2812, %v2789, -inf
  %v2826 = vmax.f32 %v2818, %v2825
  %v2827 = vsel %vm2812, %v2794, -inf
  %v2828 = vmax.f32 %v2820, %v2827
  %v2829 = vsel %vm2812, %v2799, -inf
  %v2830 = vmax.f32 %v2822, %v2829
  %v2831 = vsel %vm2812, %v2804, -inf
  %v2832 = vmax.f32 %v2824, %v2831
  %vm2833 = vcmask 1024
  %v2834 = vsel %vm2833, %v2809, -inf
  %v2835 = vmax.f32 %v2826, %v2834
  %v2836 = vmax.f32 %v2835, %v2828
  %v2837 = vmax.f32 %v2830, %v2832
  %v2838 = vmax.f32 %v2836, %v2837
  %v2839 = vrot.slane %v2838, 4
  %v2840 = vmax.f32 %v2838, %v2839
  %v2841 = vrot.slane %v2840, 2
  %v2842 = vmax.f32 %v2840, %v2841
  %v2843 = vrot.slane %v2842, 1
  %v2844 = vmax.f32 %v2842, %v2843
  %v2845 = vsub.f32 %v2749, %v2844
  %v2846 = vsub.f32 %v2754, %v2844
  %v2847 = vsub.f32 %v2759, %v2844
  %v2848 = vsub.f32 %v2764, %v2844
  %v2849 = vsub.f32 %v2769, %v2844
  %v2850 = vsub.f32 %v2774, %v2844
  %v2851 = vsub.f32 %v2779, %v2844
  %v2852 = vsub.f32 %v2784, %v2844
  %v2853 = vsub.f32 %v2789, %v2844
  %v2854 = vsub.f32 %v2794, %v2844
  %v2855 = vsub.f32 %v2799, %v2844
  %v2856 = vsub.f32 %v2804, %v2844
  %v2857 = vsub.f32 %v2809, %v2844
  %v2858 = vmul.f32 %v2845, 1.442695
  %v2859 = vpow.pop %v2858
  %v2860 = vmul.f32 %v2846, 1.442695
  %v2861 = vpow.pop %v2860
  %v2862 = vmul.f32 %v2847, 1.442695
  %v2863 = vpow.pop %v2862
  %v2864 = vmul.f32 %v2848, 1.442695
  %v2865 = vpow.pop %v2864
  %v2866 = vmul.f32 %v2849, 1.442695
  %v2867 = vpow.pop %v2866
  %v2868 = vmul.f32 %v2850, 1.442695
  %v2869 = vpow.pop %v2868
  %v2870 = vmul.f32 %v2851, 1.442695
  %v2871 = vpow.pop %v2870
  %v2872 = vmul.f32 %v2852, 1.442695
  %v2873 = vpow.pop %v2872
  %v2874 = vmul.f32 %v2853, 1.442695
  %v2875 = vpow.pop %v2874
  %v2876 = vmul.f32 %v2854, 1.442695
  %v2877 = vpow.pop %v2876
  %v2878 = vmul.f32 %v2855, 1.442695
  %v2879 = vpow.pop %v2878
  %v2880 = vmul.f32 %v2856, 1.442695
  %v2881 = vpow.pop %v2880
  %v2882 = vmul.f32 %v2857, 1.442695
  %v2883 = vpow.pop %v2882
  %v2885 = vsel %vm1312, %v2883, 0
  %2887 = vmatprep.subr.mxu0 0.0
  %2888 = vmatpush1.msra.mxu0 %v2859
  %2889 = vmatprep.subr.mxu0 0.0
  %2890 = vmatpush1.msra.mxu0 %v2861
  %2891 = vmatprep.subr.mxu0 0.0
  %2892 = vmatpush1.msra.mxu0 %v2863
  %2893 = vmatprep.subr.mxu0 0.0
  %2894 = vmatpush1.msra.mxu0 %v2865
  %2895 = vmatprep.subr.mxu0 0.0
  %2896 = vmatpush1.msra.mxu0 %v2867
  %2897 = vmatprep.subr.mxu0 0.0
  %2898 = vmatpush1.msra.mxu0 %v2869
  %2899 = vmatprep.subr.mxu0 0.0
  %2900 = vmatpush1.msra.mxu0 %v2871
  %2901 = vmatprep.subr.mxu0 0.0
  %2902 = vmatpush1.msra.mxu0 %v2873
  %2903 = vmatprep.subr.mxu0 0.0
  %2904 = vmatpush1.msra.mxu0 %v2875
  %2905 = vmatprep.subr.mxu0 0.0
  %2906 = vmatpush1.msra.mxu0 %v2877
  %2907 = vmatprep.subr.mxu0 0.0
  %2908 = vmatpush1.msra.mxu0 %v2879
  %2909 = vmatprep.subr.mxu0 0.0
  %2910 = vmatpush1.msra.mxu0 %v2881
  %2911 = vmatprep.subr.mxu0 0.0
  %2912 = vmatpush1.msra.mxu0 %v2885
  %2913 = vmatprep.subr.mxu0 0.0
  %2914 = vmatpush1.msra.mxu0 0.0
  %2915 = vmatprep.subr.mxu0 0.0
  %2916 = vmatpush1.msra.mxu0 0.0
  %2917 = vmatprep.subr.mxu0 0.0
  %2918 = vmatpush1.msra.mxu0 0.0
  %2919 = vmatprep.subr.mxu0 0.0
  %2920 = vmatpush1.msra.mxu0 0.0
  %2921 = vmatprep.subr.mxu0 0.0
  %2922 = vmatpush1.msra.mxu0 0.0
  %2923 = vmatprep.subr.mxu0 0.0
  %2924 = vmatpush1.msra.mxu0 0.0
  %2925 = vmatprep.subr.mxu0 0.0
  %2926 = vmatpush1.msra.mxu0 0.0
  %2927 = vmatprep.subr.mxu0 0.0
  %2928 = vmatpush1.msra.mxu0 0.0
  %2929 = vmatprep.subr.mxu0 0.0
  %2930 = vmatpush1.msra.mxu0 0.0
  %2931 = vmatprep.subr.mxu0 0.0
  %2932 = vmatpush1.msra.mxu0 0.0
  %2933 = vmatprep.subr.mxu0 0.0
  %2934 = vmatpush1.msra.mxu0 0.0
  %2935 = vmatprep.subr.mxu0 0.0
  %2936 = vmatpush1.msra.mxu0 0.0
  %2937 = vmatprep.subr.mxu0 0.0
  %2938 = vmatpush1.msra.mxu0 0.0
  %2939 = vmatprep.subr.mxu0 0.0
  %2940 = vmatpush1.msra.mxu0 0.0
  %2941 = vmatprep.subr.mxu0 0.0
  %2942 = vmatpush1.msra.mxu0 0.0
  %2943 = vmatprep.subr.mxu0 0.0
  %2944 = vmatpush1.msra.mxu0 0.0
  %2945 = vmatprep.subr.mxu0 0.0
  %2946 = vmatpush1.msra.mxu0 0.0
  %2947 = vmatprep.subr.mxu0 0.0
  %2948 = vmatpush1.msra.mxu0 0.0
  %2949 = vmatprep.subr.mxu0 0.0
  %2950 = vmatpush1.msra.mxu0 0.0
  %2951 = vmatprep.mubr.f32.mxu0 0.0
  %2952 = vmatmul.mubr.f32.gmra.mrb[0].mxu0 %v1310
  %v2953 = vpop.f32.mrb[0].mxu0
  %v2954 = vadd.f32 0.0, %v2953
  %v2955 = vpop.f32.mrb[0].mxu0
  %2956 = vdwg.mxu0
  %v2957 = vrcp.pop %v2954
  %v2959 = vsel %vm1312, %v2957, 0
  %2961 = vmatprep.subr.mxu0 0.0
  %2962 = vmatpush1.msra.mxu0 %v2959
  %2963 = vmatprep.subr.mxu0 0.0
  %2964 = vmatpush1.msra.mxu0 0.0
  %2965 = vmatprep.subr.mxu0 0.0
  %2966 = vmatpush1.msra.mxu0 0.0
  %2967 = vmatprep.subr.mxu0 0.0
  %2968 = vmatpush1.msra.mxu0 0.0
  %2969 = vmatprep.subr.mxu0 0.0
  %2970 = vmatpush1.msra.mxu0 0.0
  %2971 = vmatprep.subr.mxu0 0.0
  %2972 = vmatpush1.msra.mxu0 0.0
  %2973 = vmatprep.subr.mxu0 0.0
  %2974 = vmatpush1.msra.mxu0 0.0
  %2975 = vmatprep.subr.mxu0 0.0
  %2976 = vmatpush1.msra.mxu0 0.0
  %2977 = vmatprep.subr.mxu0 0.0
  %2978 = vmatpush1.msra.mxu0 0.0
  %2979 = vmatprep.subr.mxu0 0.0
  %2980 = vmatpush1.msra.mxu0 0.0
  %2981 = vmatprep.subr.mxu0 0.0
  %2982 = vmatpush1.msra.mxu0 0.0
  %2983 = vmatprep.subr.mxu0 0.0
  %2984 = vmatpush1.msra.mxu0 0.0
  %2985 = vmatprep.subr.mxu0 0.0
  %2986 = vmatpush1.msra.mxu0 0.0
  %2987 = vmatprep.subr.mxu0 0.0
  %2988 = vmatpush1.msra.mxu0 0.0
  %2989 = vmatprep.subr.mxu0 0.0
  %2990 = vmatpush1.msra.mxu0 0.0
  %2991 = vmatprep.subr.mxu0 0.0
  %2992 = vmatpush1.msra.mxu0 0.0
  %2993 = vmatprep.subr.mxu0 0.0
  %2994 = vmatpush1.msra.mxu0 0.0
  %2995 = vmatprep.subr.mxu0 0.0
  %2996 = vmatpush1.msra.mxu0 0.0
  %2997 = vmatprep.subr.mxu0 0.0
  %2998 = vmatpush1.msra.mxu0 0.0
  %2999 = vmatprep.subr.mxu0 0.0
  %3000 = vmatpush1.msra.mxu0 0.0
  %3001 = vmatprep.subr.mxu0 0.0
  %3002 = vmatpush1.msra.mxu0 0.0
  %3003 = vmatprep.subr.mxu0 0.0
  %3004 = vmatpush1.msra.mxu0 0.0
  %3005 = vmatprep.subr.mxu0 0.0
  %3006 = vmatpush1.msra.mxu0 0.0
  %3007 = vmatprep.subr.mxu0 0.0
  %3008 = vmatpush1.msra.mxu0 0.0
  %3009 = vmatprep.subr.mxu0 0.0
  %3010 = vmatpush1.msra.mxu0 0.0
  %3011 = vmatprep.subr.mxu0 0.0
  %3012 = vmatpush1.msra.mxu0 0.0
  %3013 = vmatprep.subr.mxu0 0.0
  %3014 = vmatpush1.msra.mxu0 0.0
  %3015 = vmatprep.subr.mxu0 0.0
  %3016 = vmatpush1.msra.mxu0 0.0
  %3017 = vmatprep.subr.mxu0 0.0
  %3018 = vmatpush1.msra.mxu0 0.0
  %3019 = vmatprep.subr.mxu0 0.0
  %3020 = vmatpush1.msra.mxu0 0.0
  %3021 = vmatprep.subr.mxu0 0.0
  %3022 = vmatpush1.msra.mxu0 0.0
  %3023 = vmatprep.subr.mxu0 0.0
  %3024 = vmatpush1.msra.mxu0 0.0
  %3025 = vmatprep.mubr.f32.mxu0 0.0
  %3026 = vmatmul.mubr.f32.gmra.mrb[0].mxu0 %v1974
  %v3027 = vpop.f32.mrb[0].mxu0
  %v3028 = vadd.f32 0.0, %v3027
  %v3029 = vpop.f32.mrb[0].mxu0
  %3030 = vmatprep.mubr.f32.mxu0 0.0
  %3031 = vmatmul.mubr.f32.gmra.mrb[0].mxu0 %v1977
  %v3032 = vpop.f32.mrb[0].mxu0
  %v3033 = vadd.f32 0.0, %v3032
  %v3034 = vpop.f32.mrb[0].mxu0
  %3035 = vmatprep.mubr.f32.mxu0 0.0
  %3036 = vmatmul.mubr.f32.gmra.mrb[0].mxu0 %v1980
  %v3037 = vpop.f32.mrb[0].mxu0
  %v3038 = vadd.f32 0.0, %v3037
  %v3039 = vpop.f32.mrb[0].mxu0
  %3040 = vmatprep.mubr.f32.mxu0 0.0
  %3041 = vmatmul.mubr.f32.gmra.mrb[0].mxu0 %v1983
  %v3042 = vpop.f32.mrb[0].mxu0
  %v3043 = vadd.f32 0.0, %v3042
  %v3044 = vpop.f32.mrb[0].mxu0
  %3045 = vmatprep.mubr.f32.mxu0 0.0
  %3046 = vmatmul.mubr.f32.gmra.mrb[0].mxu0 %v1986
  %v3047 = vpop.f32.mrb[0].mxu0
  %v3048 = vadd.f32 0.0, %v3047
  %v3049 = vpop.f32.mrb[0].mxu0
  %3050 = vmatprep.mubr.f32.mxu0 0.0
  %3051 = vmatmul.mubr.f32.gmra.mrb[0].mxu0 %v1989
  %v3052 = vpop.f32.mrb[0].mxu0
  %v3053 = vadd.f32 0.0, %v3052
  %v3054 = vpop.f32.mrb[0].mxu0
  %3055 = vmatprep.mubr.f32.mxu0 0.0
  %3056 = vmatmul.mubr.f32.gmra.mrb[0].mxu0 %v1992
  %v3057 = vpop.f32.mrb[0].mxu0
  %v3058 = vadd.f32 0.0, %v3057
  %v3059 = vpop.f32.mrb[0].mxu0
  %3060 = vmatprep.mubr.f32.mxu0 0.0
  %3061 = vmatmul.mubr.f32.gmra.mrb[0].mxu0 %v1995
  %v3062 = vpop.f32.mrb[0].mxu0
  %v3063 = vadd.f32 0.0, %v3062
  %v3064 = vpop.f32.mrb[0].mxu0
  %3065 = vmatprep.mubr.f32.mxu0 0.0
  %3066 = vmatmul.mubr.f32.gmra.mrb[0].mxu0 %v1998
  %v3067 = vpop.f32.mrb[0].mxu0
  %v3068 = vadd.f32 0.0, %v3067
  %v3069 = vpop.f32.mrb[0].mxu0
  %3070 = vmatprep.mubr.f32.mxu0 0.0
  %3071 = vmatmul.mubr.f32.gmra.mrb[0].mxu0 %v2001
  %v3072 = vpop.f32.mrb[0].mxu0
  %v3073 = vadd.f32 0.0, %v3072
  %v3074 = vpop.f32.mrb[0].mxu0
  %3075 = vmatprep.mubr.f32.mxu0 0.0
  %3076 = vmatmul.mubr.f32.gmra.mrb[0].mxu0 %v2004
  %v3077 = vpop.f32.mrb[0].mxu0
  %v3078 = vadd.f32 0.0, %v3077
  %v3079 = vpop.f32.mrb[0].mxu0
  %3080 = vmatprep.mubr.f32.mxu0 0.0
  %3081 = vmatmul.mubr.f32.gmra.mrb[0].mxu0 %v2007
  %v3082 = vpop.f32.mrb[0].mxu0
  %v3083 = vadd.f32 0.0, %v3082
  %v3084 = vpop.f32.mrb[0].mxu0
  %3085 = vmatprep.mubr.f32.mxu0 0.0
  %3086 = vmatmul.mubr.f32.gmra.mrb[0].mxu0 %v2010
  %v3087 = vpop.f32.mrb[0].mxu0
  %v3088 = vadd.f32 0.0, %v3087
  %v3089 = vpop.f32.mrb[0].mxu0
  %3090 = vdwg.mxu0
  %v3091 = vmul.f32 %v2859, %v3028
  %v3092 = vmul.f32 %v2861, %v3033
  %v3093 = vmul.f32 %v2863, %v3038
  %v3094 = vmul.f32 %v2865, %v3043
  %v3095 = vmul.f32 %v2867, %v3048
  %v3096 = vmul.f32 %v2869, %v3053
  %v3097 = vmul.f32 %v2871, %v3058
  %v3098 = vmul.f32 %v2873, %v3063
  %v3099 = vmul.f32 %v2875, %v3068
  %v3100 = vmul.f32 %v2877, %v3073
  %v3101 = vmul.f32 %v2879, %v3078
  %v3102 = vmul.f32 %v2881, %v3083
  %v3103 = vmul.f32 %v2883, %v3088
  %3105 = vset.pattern.permute.xlu0 0
  %3106 = vperm.xlu0 %3105, %v3091
  %v3107 = vpop.permute.xlu0 %3106
  %3110 = vset.pattern.permute.xlu0 0
  %3111 = vperm.xlu0 %3110, %v3092
  %v3112 = vpop.permute.xlu0 %3111
  %3115 = vset.pattern.permute.xlu0 0
  %3116 = vperm.xlu0 %3115, %v3093
  %v3117 = vpop.permute.xlu0 %3116
  %3120 = vset.pattern.permute.xlu0 0
  %3121 = vperm.xlu0 %3120, %v3094
  %v3122 = vpop.permute.xlu0 %3121
  %3125 = vset.pattern.permute.xlu0 0
  %3126 = vperm.xlu0 %3125, %v3095
  %v3127 = vpop.permute.xlu0 %3126
  %3130 = vset.pattern.permute.xlu0 0
  %3131 = vperm.xlu0 %3130, %v3096
  %v3132 = vpop.permute.xlu0 %3131
  %3135 = vset.pattern.permute.xlu0 0
  %3136 = vperm.xlu0 %3135, %v3097
  %v3137 = vpop.permute.xlu0 %3136
  %3140 = vset.pattern.permute.xlu0 0
  %3141 = vperm.xlu0 %3140, %v3098
  %v3142 = vpop.permute.xlu0 %3141
  %3145 = vset.pattern.permute.xlu0 0
  %3146 = vperm.xlu0 %3145, %v3099
  %v3147 = vpop.permute.xlu0 %3146
  %3150 = vset.pattern.permute.xlu0 0
  %3151 = vperm.xlu0 %3150, %v3100
  %v3152 = vpop.permute.xlu0 %3151
  %3155 = vset.pattern.permute.xlu0 0
  %3156 = vperm.xlu0 %3155, %v3101
  %v3157 = vpop.permute.xlu0 %3156
  %3160 = vset.pattern.permute.xlu0 0
  %3161 = vperm.xlu0 %3160, %v3102
  %v3162 = vpop.permute.xlu0 %3161
  %3165 = vset.pattern.permute.xlu0 0
  %3166 = vperm.xlu0 %3165, %v3103
  %v3167 = vpop.permute.xlu0 %3166
  %v3169 = vmul.f32 %v2159, %v3107
  %v3170 = vmul.f32 %v2160, %v3107
  %v3171 = vmul.f32 %v2161, %v3112
  %v3172 = vmul.f32 %v2162, %v3112
  %v3173 = vmul.f32 %v2163, %v3117
  %v3174 = vmul.f32 %v2164, %v3117
  %v3175 = vmul.f32 %v2165, %v3122
  %v3176 = vmul.f32 %v2166, %v3122
  %v3177 = vmul.f32 %v2167, %v3127
  %v3178 = vmul.f32 %v2168, %v3127
  %v3179 = vmul.f32 %v2169, %v3132
  %v3180 = vmul.f32 %v2170, %v3132
  %v3181 = vmul.f32 %v2171, %v3137
  %v3182 = vmul.f32 %v2172, %v3137
  %v3183 = vmul.f32 %v2173, %v3142
  %v3184 = vmul.f32 %v2174, %v3142
  %v3185 = vmul.f32 %v2175, %v3147
  %v3186 = vmul.f32 %v2176, %v3147
  %v3187 = vmul.f32 %v2177, %v3152
  %v3188 = vmul.f32 %v2178, %v3152
  %v3189 = vmul.f32 %v2179, %v3157
  %v3190 = vmul.f32 %v2180, %v3157
  %v3191 = vmul.f32 %v2181, %v3162
  %v3192 = vmul.f32 %v2182, %v3162
  %v3193 = vmul.f32 %v2183, %v3167
  %v3194 = vmul.f32 %v2184, %v3167
  %v3196 = vsel %vm1312, %v3193, 0
  %v3199 = vsel %vm1312, %v3194, 0
  %3201 = vmatprep.subr.mxu0 %v3170
  %3202 = vmatpush1.msra.mxu0 %v3169
  %3203 = vmatprep.subr.mxu0 %v3172
  %3204 = vmatpush1.msra.mxu0 %v3171
  %3205 = vmatprep.subr.mxu0 %v3174
  %3206 = vmatpush1.msra.mxu0 %v3173
  %3207 = vmatprep.subr.mxu0 %v3176
  %3208 = vmatpush1.msra.mxu0 %v3175
  %3209 = vmatprep.subr.mxu0 %v3178
  %3210 = vmatpush1.msra.mxu0 %v3177
  %3211 = vmatprep.subr.mxu0 %v3180
  %3212 = vmatpush1.msra.mxu0 %v3179
  %3213 = vmatprep.subr.mxu0 %v3182
  %3214 = vmatpush1.msra.mxu0 %v3181
  %3215 = vmatprep.subr.mxu0 %v3184
  %3216 = vmatpush1.msra.mxu0 %v3183
  %3217 = vmatprep.subr.mxu0 %v3186
  %3218 = vmatpush1.msra.mxu0 %v3185
  %3219 = vmatprep.subr.mxu0 %v3188
  %3220 = vmatpush1.msra.mxu0 %v3187
  %3221 = vmatprep.subr.mxu0 %v3190
  %3222 = vmatpush1.msra.mxu0 %v3189
  %3223 = vmatprep.subr.mxu0 %v3192
  %3224 = vmatpush1.msra.mxu0 %v3191
  %3225 = vmatprep.subr.mxu0 %v3199
  %3226 = vmatpush1.msra.mxu0 %v3196
  %3227 = vmatprep.subr.mxu0 0.0
  %3228 = vmatpush1.msra.mxu0 0.0
  %3229 = vmatprep.subr.mxu0 0.0
  %3230 = vmatpush1.msra.mxu0 0.0
  %3231 = vmatprep.subr.mxu0 0.0
  %3232 = vmatpush1.msra.mxu0 0.0
  %3233 = vmatprep.subr.mxu0 0.0
  %3234 = vmatpush1.msra.mxu0 0.0
  %3235 = vmatprep.subr.mxu0 0.0
  %3236 = vmatpush1.msra.mxu0 0.0
  %3237 = vmatprep.subr.mxu0 0.0
  %3238 = vmatpush1.msra.mxu0 0.0
  %3239 = vmatprep.subr.mxu0 0.0
  %3240 = vmatpush1.msra.mxu0 0.0
  %3241 = vmatprep.subr.mxu0 0.0
  %3242 = vmatpush1.msra.mxu0 0.0
  %3243 = vmatprep.subr.mxu0 0.0
  %3244 = vmatpush1.msra.mxu0 0.0
  %3245 = vmatprep.subr.mxu0 0.0
  %3246 = vmatpush1.msra.mxu0 0.0
  %3247 = vmatprep.subr.mxu0 0.0
  %3248 = vmatpush1.msra.mxu0 0.0
  %3249 = vmatprep.subr.mxu0 0.0
  %3250 = vmatpush1.msra.mxu0 0.0
  %3251 = vmatprep.subr.mxu0 0.0
  %3252 = vmatpush1.msra.mxu0 0.0
  %3253 = vmatprep.subr.mxu0 0.0
  %3254 = vmatpush1.msra.mxu0 0.0
  %3255 = vmatprep.subr.mxu0 0.0
  %3256 = vmatpush1.msra.mxu0 0.0
  %3257 = vmatprep.subr.mxu0 0.0
  %3258 = vmatpush1.msra.mxu0 0.0
  %3259 = vmatprep.subr.mxu0 0.0
  %3260 = vmatpush1.msra.mxu0 0.0
  %3261 = vmatprep.subr.mxu0 0.0
  %3262 = vmatpush1.msra.mxu0 0.0
  %3263 = vmatprep.subr.mxu0 0.0
  %3264 = vmatpush1.msra.mxu0 0.0
  %3265 = vmatprep.mubr.f32.mxu0 0.0
  %3266 = vmatmul.mubr.f32.gmra.mrb[0].mxu0 %v1310
  %v3267 = vpop.f32.mrb[0].mxu0
  %v3268 = vadd.f32 0.0, %v3267
  %v3269 = vpop.f32.mrb[0].mxu0
  %v3270 = vadd.f32 0.0, %v3269
  %3271 = vdwg.mxu0
  %v3272 = vpack.c.bf16 %v3268, %v3268
  %v3273 = vpack.c.bf16 %v3270, %v3270
  %v3275 = vlaneseq
  %v3276 = vshrl.u32 %v3275, 7
  %v3277 = vsub.s32 0, %v3276
  %v3278 = vrot.slane %v329, %v3277
  %v3279 = vlaneseq
  %v3280 = vshrl.u32 %v3279, 7
  %v3281 = vsub.s32 1, %v3280
  %v3282 = vrot.slane %v329, %v3281
  %v3283 = vlaneseq
  %v3284 = vshrl.u32 %v3283, 7
  %v3285 = vsub.s32 2, %v3284
  %v3286 = vrot.slane %v329, %v3285
  %v3354 = vunpack.c.l.b16 %v265
  %v3355 = vunpack.c.h.b16 %v265
  %v3356 = vunpack.c.l.b16 %v266
  %v3357 = vunpack.c.l.b16 %v267
  %v3358 = vunpack.c.h.b16 %v267
  %v3359 = vunpack.c.l.b16 %v268
  %v3360 = vunpack.c.l.b16 %v269
  %v3361 = vunpack.c.h.b16 %v269
  %v3362 = vunpack.c.l.b16 %v270
  %v3363 = vunpack.c.l.b16 %v271
  %v3364 = vunpack.c.h.b16 %v271
  %v3365 = vunpack.c.l.b16 %v272
  %v3366 = vunpack.c.l.b16 %v273
  %v3367 = vunpack.c.h.b16 %v273
  %v3368 = vunpack.c.l.b16 %v274
  %v3369 = vunpack.c.l.b16 %v275
  %v3370 = vunpack.c.h.b16 %v275
  %v3371 = vunpack.c.l.b16 %v276
  %v3372 = vunpack.c.l.b16 %v277
  %v3373 = vunpack.c.h.b16 %v277
  %v3374 = vunpack.c.l.b16 %v278
  %v3375 = vunpack.c.l.b16 %v279
  %v3376 = vunpack.c.h.b16 %v279
  %v3377 = vunpack.c.l.b16 %v280
  %v3378 = vunpack.c.l.b16 %v281
  %v3379 = vunpack.c.h.b16 %v281
  %v3380 = vunpack.c.l.b16 %v282
  %v3381 = vunpack.c.l.b16 %v283
  %v3382 = vunpack.c.h.b16 %v283
  %v3383 = vunpack.c.l.b16 %v284
  %v3384 = vunpack.c.l.b16 %v285
  %v3385 = vunpack.c.h.b16 %v285
  %v3386 = vunpack.c.l.b16 %v286
  %v3387 = vunpack.c.l.b16 %v287
  %v3388 = vunpack.c.h.b16 %v287
  %v3389 = vunpack.c.l.b16 %v288
  %v3390 = vunpack.c.l.b16 %v289
  %v3391 = vunpack.c.h.b16 %v289
  %v3392 = vunpack.c.l.b16 %v290
  %v3393 = vunpack.c.l.b16 %v291
  %v3394 = vunpack.c.h.b16 %v291
  %v3395 = vunpack.c.l.b16 %v292
  %v3396 = vunpack.c.l.b16 %v293
  %v3397 = vunpack.c.h.b16 %v293
  %v3398 = vunpack.c.l.b16 %v294
  %v3399 = vunpack.c.l.b16 %v295
  %v3400 = vunpack.c.h.b16 %v295
  %v3401 = vunpack.c.l.b16 %v296
  %v3402 = vunpack.c.l.b16 %v297
  %v3403 = vunpack.c.h.b16 %v297
  %v3404 = vunpack.c.l.b16 %v298
  %v3405 = vunpack.c.l.b16 %v299
  %v3406 = vunpack.c.h.b16 %v299
  %v3407 = vunpack.c.l.b16 %v300
  %v3408 = vunpack.c.l.b16 %v301
  %v3409 = vunpack.c.h.b16 %v301
  %v3410 = vunpack.c.l.b16 %v302
  %v3411 = vunpack.c.l.b16 %v303
  %v3412 = vunpack.c.h.b16 %v303
  %v3413 = vunpack.c.l.b16 %v304
  %v3414 = vunpack.c.l.b16 %v305
  %v3415 = vunpack.c.h.b16 %v305
  %v3416 = vunpack.c.l.b16 %v306
  %v3417 = vunpack.c.l.b16 %v307
  %v3418 = vunpack.c.h.b16 %v307
  %v3419 = vunpack.c.l.b16 %v308
  %v3420 = vunpack.c.l.b16 %v309
  %v3421 = vunpack.c.h.b16 %v309
  %v3422 = vunpack.c.l.b16 %v310
  %v3423 = vunpack.c.l.b16 %v311
  %v3424 = vunpack.c.h.b16 %v311
  %v3425 = vunpack.c.l.b16 %v312
  %v3426 = vunpack.c.l.b16 %v313
  %v3427 = vunpack.c.h.b16 %v313
  %v3428 = vunpack.c.l.b16 %v314
  %v3429 = vunpack.c.l.b16 %v315
  %v3430 = vunpack.c.h.b16 %v315
  %v3431 = vunpack.c.l.b16 %v316
  %v3432 = vunpack.c.l.b16 %v317
  %v3433 = vunpack.c.h.b16 %v317
  %v3434 = vunpack.c.l.b16 %v318
  %v3435 = vunpack.c.l.b16 %v319
  %v3436 = vunpack.c.h.b16 %v319
  %v3437 = vunpack.c.l.b16 %v320
  %v3438 = vunpack.c.l.b16 %v321
  %v3439 = vunpack.c.h.b16 %v321
  %v3440 = vunpack.c.l.b16 %v322
  %v3441 = vunpack.c.l.b16 %v323
  %v3442 = vunpack.c.h.b16 %v323
  %v3443 = vunpack.c.l.b16 %v324
  %v3444 = vunpack.c.l.b16 %v325
  %v3445 = vunpack.c.h.b16 %v325
  %v3446 = vunpack.c.l.b16 %v326
  %v3447 = vunpack.c.l.b16 %v327
  %v3448 = vunpack.c.h.b16 %v327
  %v3449 = vunpack.c.l.b16 %v328
  %v3450 = vpack.c.b16 %v3357, %v3354
  %v3451 = vpack.c.b16 %v3358, %v3355
  %v3452 = vpack.c.b16 %v3359, %v3356
  %v3453 = vpack.c.b16 %v3363, %v3360
  %v3454 = vpack.c.b16 %v3364, %v3361
  %v3455 = vpack.c.b16 %v3365, %v3362
  %v3456 = vpack.c.b16 %v3369, %v3366
  %v3457 = vpack.c.b16 %v3370, %v3367
  %v3458 = vpack.c.b16 %v3371, %v3368
  %v3459 = vpack.c.b16 %v3375, %v3372
  %v3460 = vpack.c.b16 %v3376, %v3373
  %v3461 = vpack.c.b16 %v3377, %v3374
  %v3462 = vpack.c.b16 %v3381, %v3378
  %v3463 = vpack.c.b16 %v3382, %v3379
  %v3464 = vpack.c.b16 %v3383, %v3380
  %v3465 = vpack.c.b16 %v3387, %v3384
  %v3466 = vpack.c.b16 %v3388, %v3385
  %v3467 = vpack.c.b16 %v3389, %v3386
  %v3468 = vpack.c.b16 %v3393, %v3390
  %v3469 = vpack.c.b16 %v3394, %v3391
  %v3470 = vpack.c.b16 %v3395, %v3392
  %v3471 = vpack.c.b16 %v3399, %v3396
  %v3472 = vpack.c.b16 %v3400, %v3397
  %v3473 = vpack.c.b16 %v3401, %v3398
  %v3474 = vpack.c.b16 %v3405, %v3402
  %v3475 = vpack.c.b16 %v3406, %v3403
  %v3476 = vpack.c.b16 %v3407, %v3404
  %v3477 = vpack.c.b16 %v3411, %v3408
  %v3478 = vpack.c.b16 %v3412, %v3409
  %v3479 = vpack.c.b16 %v3413, %v3410
  %v3480 = vpack.c.b16 %v3417, %v3414
  %v3481 = vpack.c.b16 %v3418, %v3415
  %v3482 = vpack.c.b16 %v3419, %v3416
  %v3483 = vpack.c.b16 %v3423, %v3420
  %v3484 = vpack.c.b16 %v3424, %v3421
  %v3485 = vpack.c.b16 %v3425, %v3422
  %v3486 = vpack.c.b16 %v3429, %v3426
  %v3487 = vpack.c.b16 %v3430, %v3427
  %v3488 = vpack.c.b16 %v3431, %v3428
  %v3489 = vpack.c.b16 %v3435, %v3432
  %v3490 = vpack.c.b16 %v3436, %v3433
  %v3491 = vpack.c.b16 %v3437, %v3434
  %v3492 = vpack.c.b16 %v3441, %v3438
  %v3493 = vpack.c.b16 %v3442, %v3439
  %v3494 = vpack.c.b16 %v3443, %v3440
  %v3495 = vpack.c.b16 %v3447, %v3444
  %v3496 = vpack.c.b16 %v3448, %v3445
  %v3497 = vpack.c.b16 %v3449, %v3446
  %3546 = vmatprep.subr.bf16.mxu0 %v3451
  %3547 = vmatpush1.bf16.msra.mxu0 %v3450
  %3548 = vmatprep.subr.bf16.mxu0 %v3454
  %3549 = vmatpush1.bf16.msra.mxu0 %v3453
  %3550 = vmatprep.subr.bf16.mxu0 %v3457
  %3551 = vmatpush1.bf16.msra.mxu0 %v3456
  %3552 = vmatprep.subr.bf16.mxu0 %v3460
  %3553 = vmatpush1.bf16.msra.mxu0 %v3459
  %3554 = vmatprep.subr.bf16.mxu0 %v3463
  %3555 = vmatpush1.bf16.msra.mxu0 %v3462
  %3556 = vmatprep.subr.bf16.mxu0 %v3466
  %3557 = vmatpush1.bf16.msra.mxu0 %v3465
  %3558 = vmatprep.subr.bf16.mxu0 %v3469
  %3559 = vmatpush1.bf16.msra.mxu0 %v3468
  %3560 = vmatprep.subr.bf16.mxu0 %v3472
  %3561 = vmatpush1.bf16.msra.mxu0 %v3471
  %3562 = vmatprep.subr.bf16.mxu0 %v3475
  %3563 = vmatpush1.bf16.msra.mxu0 %v3474
  %3564 = vmatprep.subr.bf16.mxu0 %v3478
  %3565 = vmatpush1.bf16.msra.mxu0 %v3477
  %3566 = vmatprep.subr.bf16.mxu0 %v3481
  %3567 = vmatpush1.bf16.msra.mxu0 %v3480
  %3568 = vmatprep.subr.bf16.mxu0 %v3484
  %3569 = vmatpush1.bf16.msra.mxu0 %v3483
  %3570 = vmatprep.subr.bf16.mxu0 %v3487
  %3571 = vmatpush1.bf16.msra.mxu0 %v3486
  %3572 = vmatprep.subr.bf16.mxu0 %v3490
  %3573 = vmatpush1.bf16.msra.mxu0 %v3489
  %3574 = vmatprep.subr.bf16.mxu0 %v3493
  %3575 = vmatpush1.bf16.msra.mxu0 %v3492
  %3576 = vmatprep.subr.bf16.mxu0 %v3496
  %3577 = vmatpush1.bf16.msra.mxu0 %v3495
  %3578 = vmatprep.mubr.bf16.mxu0 %v3273
  %3579 = vmatmul.mubr.bf16.gmra.mrb[0].mxu0 %v3272
  %v3580 = vpop.f32.mrb[0].mxu0
  %v3581 = vadd.f32 %v3278, %v3580
  %v3582 = vpop.f32.mrb[0].mxu0
  %v3583 = vadd.f32 %v3282, %v3582
  %v3584 = vpop.f32.mrb[0].mxu0
  %v3585 = vpop.f32.mrb[0].mxu0
  %3586 = vdwg.mxu0
  %3587 = vmatprep.subr.bf16.mxu0 0
  %3588 = vmatpush1.bf16.msra.mxu0 %v3452
  %3589 = vmatprep.subr.bf16.mxu0 0
  %3590 = vmatpush1.bf16.msra.mxu0 %v3455
  %3591 = vmatprep.subr.bf16.mxu0 0
  %3592 = vmatpush1.bf16.msra.mxu0 %v3458
  %3593 = vmatprep.subr.bf16.mxu0 0
  %3594 = vmatpush1.bf16.msra.mxu0 %v3461
  %3595 = vmatprep.subr.bf16.mxu0 0
  %3596 = vmatpush1.bf16.msra.mxu0 %v3464
  %3597 = vmatprep.subr.bf16.mxu0 0
  %3598 = vmatpush1.bf16.msra.mxu0 %v3467
  %3599 = vmatprep.subr.bf16.mxu0 0
  %3600 = vmatpush1.bf16.msra.mxu0 %v3470
  %3601 = vmatprep.subr.bf16.mxu0 0
  %3602 = vmatpush1.bf16.msra.mxu0 %v3473
  %3603 = vmatprep.subr.bf16.mxu0 0
  %3604 = vmatpush1.bf16.msra.mxu0 %v3476
  %3605 = vmatprep.subr.bf16.mxu0 0
  %3606 = vmatpush1.bf16.msra.mxu0 %v3479
  %3607 = vmatprep.subr.bf16.mxu0 0
  %3608 = vmatpush1.bf16.msra.mxu0 %v3482
  %3609 = vmatprep.subr.bf16.mxu0 0
  %3610 = vmatpush1.bf16.msra.mxu0 %v3485
  %3611 = vmatprep.subr.bf16.mxu0 0
  %3612 = vmatpush1.bf16.msra.mxu0 %v3488
  %3613 = vmatprep.subr.bf16.mxu0 0
  %3614 = vmatpush1.bf16.msra.mxu0 %v3491
  %3615 = vmatprep.subr.bf16.mxu0 0
  %3616 = vmatpush1.bf16.msra.mxu0 %v3494
  %3617 = vmatprep.subr.bf16.mxu0 0
  %3618 = vmatpush1.bf16.msra.mxu0 %v3497
  %3619 = vmatprep.mubr.bf16.mxu0 %v3273
  %3620 = vmatmul.mubr.bf16.gmra.mrb[0].mxu0 %v3272
  %v3621 = vpop.f32.mrb[0].mxu0
  %v3622 = vadd.f32 %v3286, %v3621
  %v3623 = vpop.f32.mrb[0].mxu0
  %v3624 = vpop.f32.mrb[0].mxu0
  %v3625 = vpop.f32.mrb[0].mxu0
  %3626 = vdwg.mxu0
  %v3628 = vlaneseq
  %v3629 = vshrl.u32 %v3628, 7
  %v3630 = vsub.s32 0, %v3629
  %v3631 = vrot.slane %v362, %v3630
  %v3632 = vlaneseq
  %v3633 = vshrl.u32 %v3632, 7
  %v3634 = vsub.s32 1, %v3633
  %v3635 = vrot.slane %v362, %v3634
  %v3636 = vlaneseq
  %v3637 = vshrl.u32 %v3636, 7
  %v3638 = vsub.s32 2, %v3637
  %v3639 = vrot.slane %v362, %v3638
  %v3675 = vunpack.c.l.b16 %v330
  %v3676 = vunpack.c.h.b16 %v330
  %v3677 = vunpack.c.l.b16 %v331
  %v3678 = vunpack.c.l.b16 %v332
  %v3679 = vunpack.c.h.b16 %v332
  %v3680 = vunpack.c.l.b16 %v333
  %v3681 = vunpack.c.l.b16 %v334
  %v3682 = vunpack.c.h.b16 %v334
  %v3683 = vunpack.c.l.b16 %v335
  %v3684 = vunpack.c.l.b16 %v336
  %v3685 = vunpack.c.h.b16 %v336
  %v3686 = vunpack.c.l.b16 %v337
  %v3687 = vunpack.c.l.b16 %v338
  %v3688 = vunpack.c.h.b16 %v338
  %v3689 = vunpack.c.l.b16 %v339
  %v3690 = vunpack.c.l.b16 %v340
  %v3691 = vunpack.c.h.b16 %v340
  %v3692 = vunpack.c.l.b16 %v341
  %v3693 = vunpack.c.l.b16 %v342
  %v3694 = vunpack.c.h.b16 %v342
  %v3695 = vunpack.c.l.b16 %v343
  %v3696 = vunpack.c.l.b16 %v344
  %v3697 = vunpack.c.h.b16 %v344
  %v3698 = vunpack.c.l.b16 %v345
  %v3699 = vunpack.c.l.b16 %v346
  %v3700 = vunpack.c.h.b16 %v346
  %v3701 = vunpack.c.l.b16 %v347
  %v3702 = vunpack.c.l.b16 %v348
  %v3703 = vunpack.c.h.b16 %v348
  %v3704 = vunpack.c.l.b16 %v349
  %v3705 = vunpack.c.l.b16 %v350
  %v3706 = vunpack.c.h.b16 %v350
  %v3707 = vunpack.c.l.b16 %v351
  %v3708 = vunpack.c.l.b16 %v352
  %v3709 = vunpack.c.h.b16 %v352
  %v3710 = vunpack.c.l.b16 %v353
  %v3711 = vunpack.c.l.b16 %v354
  %v3712 = vunpack.c.h.b16 %v354
  %v3713 = vunpack.c.l.b16 %v355
  %v3714 = vunpack.c.l.b16 %v356
  %v3715 = vunpack.c.h.b16 %v356
  %v3716 = vunpack.c.l.b16 %v357
  %v3717 = vunpack.c.l.b16 %v358
  %v3718 = vunpack.c.h.b16 %v358
  %v3719 = vunpack.c.l.b16 %v359
  %v3720 = vunpack.c.l.b16 %v360
  %v3721 = vunpack.c.h.b16 %v360
  %v3722 = vunpack.c.l.b16 %v361
  %v3723 = vpack.c.b16 %v3678, %v3675
  %v3724 = vpack.c.b16 %v3679, %v3676
  %v3725 = vpack.c.b16 %v3680, %v3677
  %v3726 = vpack.c.b16 %v3684, %v3681
  %v3727 = vpack.c.b16 %v3685, %v3682
  %v3728 = vpack.c.b16 %v3686, %v3683
  %v3729 = vpack.c.b16 %v3690, %v3687
  %v3730 = vpack.c.b16 %v3691, %v3688
  %v3731 = vpack.c.b16 %v3692, %v3689
  %v3732 = vpack.c.b16 %v3696, %v3693
  %v3733 = vpack.c.b16 %v3697, %v3694
  %v3734 = vpack.c.b16 %v3698, %v3695
  %v3735 = vpack.c.b16 %v3702, %v3699
  %v3736 = vpack.c.b16 %v3703, %v3700
  %v3737 = vpack.c.b16 %v3704, %v3701
  %v3738 = vpack.c.b16 %v3708, %v3705
  %v3739 = vpack.c.b16 %v3709, %v3706
  %v3740 = vpack.c.b16 %v3710, %v3707
  %v3741 = vpack.c.b16 %v3714, %v3711
  %v3742 = vpack.c.b16 %v3715, %v3712
  %v3743 = vpack.c.b16 %v3716, %v3713
  %v3744 = vpack.c.b16 %v3720, %v3717
  %v3745 = vpack.c.b16 %v3721, %v3718
  %v3746 = vpack.c.b16 %v3722, %v3719
  %3771 = vmatprep.subr.bf16.mxu0 %v3724
  %3772 = vmatpush1.bf16.msra.mxu0 %v3723
  %3773 = vmatprep.subr.bf16.mxu0 %v3727
  %3774 = vmatpush1.bf16.msra.mxu0 %v3726
  %3775 = vmatprep.subr.bf16.mxu0 %v3730
  %3776 = vmatpush1.bf16.msra.mxu0 %v3729
  %3777 = vmatprep.subr.bf16.mxu0 %v3733
  %3778 = vmatpush1.bf16.msra.mxu0 %v3732
  %3779 = vmatprep.subr.bf16.mxu0 %v3736
  %3780 = vmatpush1.bf16.msra.mxu0 %v3735
  %3781 = vmatprep.subr.bf16.mxu0 %v3739
  %3782 = vmatpush1.bf16.msra.mxu0 %v3738
  %3783 = vmatprep.subr.bf16.mxu0 %v3742
  %3784 = vmatpush1.bf16.msra.mxu0 %v3741
  %3785 = vmatprep.subr.bf16.mxu0 %v3745
  %3786 = vmatpush1.bf16.msra.mxu0 %v3744
  %3787 = vmatprep.subr.bf16.mxu0 0
  %3788 = vmatpush1.bf16.msra.mxu0 0
  %3789 = vmatprep.subr.bf16.mxu0 0
  %3790 = vmatpush1.bf16.msra.mxu0 0
  %3791 = vmatprep.subr.bf16.mxu0 0
  %3792 = vmatpush1.bf16.msra.mxu0 0
  %3793 = vmatprep.subr.bf16.mxu0 0
  %3794 = vmatpush1.bf16.msra.mxu0 0
  %3795 = vmatprep.subr.bf16.mxu0 0
  %3796 = vmatpush1.bf16.msra.mxu0 0
  %3797 = vmatprep.subr.bf16.mxu0 0
  %3798 = vmatpush1.bf16.msra.mxu0 0
  %3799 = vmatprep.subr.bf16.mxu0 0
  %3800 = vmatpush1.bf16.msra.mxu0 0
  %3801 = vmatprep.subr.bf16.mxu0 0
  %3802 = vmatpush1.bf16.msra.mxu0 0
  %3803 = vmatprep.mubr.bf16.mxu0 0
  %3804 = vmatmul.mubr.bf16.gmra.mrb[0].mxu0 %v1392
  %v3805 = vpop.f32.mrb[0].mxu0
  %v3806 = vadd.f32 %v3631, %v3805
  %v3807 = vpop.f32.mrb[0].mxu0
  %v3808 = vadd.f32 %v3635, %v3807
  %v3809 = vpop.f32.mrb[0].mxu0
  %v3810 = vpop.f32.mrb[0].mxu0
  %3811 = vdwg.mxu0
  %3812 = vmatprep.subr.bf16.mxu0 0
  %3813 = vmatpush1.bf16.msra.mxu0 %v3725
  %3814 = vmatprep.subr.bf16.mxu0 0
  %3815 = vmatpush1.bf16.msra.mxu0 %v3728
  %3816 = vmatprep.subr.bf16.mxu0 0
  %3817 = vmatpush1.bf16.msra.mxu0 %v3731
  %3818 = vmatprep.subr.bf16.mxu0 0
  %3819 = vmatpush1.bf16.msra.mxu0 %v3734
  %3820 = vmatprep.subr.bf16.mxu0 0
  %3821 = vmatpush1.bf16.msra.mxu0 %v3737
  %3822 = vmatprep.subr.bf16.mxu0 0
  %3823 = vmatpush1.bf16.msra.mxu0 %v3740
  %3824 = vmatprep.subr.bf16.mxu0 0
  %3825 = vmatpush1.bf16.msra.mxu0 %v3743
  %3826 = vmatprep.subr.bf16.mxu0 0
  %3827 = vmatpush1.bf16.msra.mxu0 %v3746
  %3828 = vmatprep.subr.bf16.mxu0 0
  %3829 = vmatpush1.bf16.msra.mxu0 0
  %3830 = vmatprep.subr.bf16.mxu0 0
  %3831 = vmatpush1.bf16.msra.mxu0 0
  %3832 = vmatprep.subr.bf16.mxu0 0
  %3833 = vmatpush1.bf16.msra.mxu0 0
  %3834 = vmatprep.subr.bf16.mxu0 0
  %3835 = vmatpush1.bf16.msra.mxu0 0
  %3836 = vmatprep.subr.bf16.mxu0 0
  %3837 = vmatpush1.bf16.msra.mxu0 0
  %3838 = vmatprep.subr.bf16.mxu0 0
  %3839 = vmatpush1.bf16.msra.mxu0 0
  %3840 = vmatprep.subr.bf16.mxu0 0
  %3841 = vmatpush1.bf16.msra.mxu0 0
  %3842 = vmatprep.subr.bf16.mxu0 0
  %3843 = vmatpush1.bf16.msra.mxu0 0
  %3844 = vmatprep.mubr.bf16.mxu0 0
  %3845 = vmatmul.mubr.bf16.gmra.mrb[0].mxu0 %v1392
  %v3846 = vpop.f32.mrb[0].mxu0
  %v3847 = vadd.f32 %v3639, %v3846
  %v3848 = vpop.f32.mrb[0].mxu0
  %v3849 = vpop.f32.mrb[0].mxu0
  %v3850 = vpop.f32.mrb[0].mxu0
  %3851 = vdwg.mxu0
  %v3852 = vadd.f32 %v3581, %v3806
  %v3853 = vxor.u32 %v3852, 2147483648
  %v3854 = vmul.f32 %v3853, 1.442695
  %v3855 = vpow.pop %v3854
  %v3856 = vadd.f32 %v3855, 1.0
  %v3857 = vrcp.pop %v3856
  %v3858 = vmul.f32 1.0, %v3857
  %v3859 = vadd.f32 %v3583, %v3808
  %v3860 = vxor.u32 %v3859, 2147483648
  %v3861 = vmul.f32 %v3860, 1.442695
  %v3862 = vpow.pop %v3861
  %v3863 = vadd.f32 %v3862, 1.0
  %v3864 = vrcp.pop %v3863
  %v3865 = vmul.f32 1.0, %v3864
  %v3866 = vmul.f32 %v3858, %v3847
  %v3867 = vadd.f32 %v3622, %v3866
  %v3868 = vtanh.pop %v3867
  %v3869 = vsub.f32 1.0, %v3865
  %v3870 = vmul.f32 %v3869, %v3868
  %v3871 = vmul.f32 %v3865, %v363
  %v3872 = vadd.f32 %v3870, %v3871
  %s3873 = scalar_lea.vmem %s0, 52
  %v3874 = vld [vmem:[%s3873] sm:$0xf]
  %v3875 = vld [vmem:[%s3873 + $0x4] sm:$0xf]
  %v3876 = vld [vmem:[%s3873 + $0x8] sm:$0xf]
  %v3877 = vld [vmem:[%s3873 + $0xc] sm:$0xf]
  %v3878 = vld [vmem:[%s3873 + $0x10] sm:$0xf]
  %v3879 = vld [vmem:[%s3873 + $0x14] sm:$0xf]
  %v3880 = vld [vmem:[%s3873 + $0x18] sm:$0xf]
  %v3881 = vld [vmem:[%s3873 + $0x1c] sm:$0xf]
  %v3882 = vld [vmem:[%s3873 + $0x20] sm:$0xf]
  %v3883 = vld [vmem:[%s3873 + $0x24] sm:$0xf]
  %v3884 = vld [vmem:[%s3873 + $0x28] sm:$0xf]
  %v3885 = vld [vmem:[%s3873 + $0x2c] sm:$0xf]
  %v3886 = vld [vmem:[%s3873 + $0x30] sm:$0x1]
  %v3900 = vunpack.c.l.b16 %v3874
  %v3901 = vunpack.c.l.b16 %v3875
  %v3902 = vunpack.c.l.b16 %v3876
  %v3903 = vunpack.c.l.b16 %v3877
  %v3904 = vunpack.c.l.b16 %v3878
  %v3905 = vunpack.c.l.b16 %v3879
  %v3906 = vunpack.c.l.b16 %v3880
  %v3907 = vunpack.c.l.b16 %v3881
  %v3908 = vunpack.c.l.b16 %v3882
  %v3909 = vunpack.c.l.b16 %v3883
  %v3910 = vunpack.c.l.b16 %v3884
  %v3911 = vunpack.c.l.b16 %v3885
  %v3912 = vunpack.c.l.b16 %v3886
  %v3913 = vpack.c.b16 %v3901, %v3900
  %v3914 = vpack.c.b16 %v3903, %v3902
  %v3915 = vpack.c.b16 %v3905, %v3904
  %v3916 = vpack.c.b16 %v3907, %v3906
  %v3917 = vpack.c.b16 %v3909, %v3908
  %v3918 = vpack.c.b16 %v3911, %v3910
  %v3919 = vpack.c.b16 %v3912, %v3912
  %v3921 = vsel %vm471, %v3913, 0
  %v3924 = vsel %vm471, %v3914, 0
  %v3927 = vsel %vm471, %v3915, 0
  %v3930 = vsel %vm471, %v3916, 0
  %v3933 = vsel %vm471, %v3917, 0
  %v3936 = vsel %vm471, %v3918, 0
  %v3939 = vsel %vm471, %v3919, 0
  %3941 = vmatprep.subr.bf16.mxu0 %v456
  %3942 = vmatpush1.bf16.msra.mxu0 %v455
  %3943 = vmatprep.subr.bf16.mxu0 %v460
  %3944 = vmatpush1.bf16.msra.mxu0 %v459
  %3945 = vmatprep.subr.bf16.mxu0 0
  %3946 = vmatpush1.bf16.msra.mxu0 0
  %3947 = vmatprep.subr.bf16.mxu0 0
  %3948 = vmatpush1.bf16.msra.mxu0 0
  %3949 = vmatprep.subr.bf16.mxu0 0
  %3950 = vmatpush1.bf16.msra.mxu0 0
  %3951 = vmatprep.subr.bf16.mxu0 0
  %3952 = vmatpush1.bf16.msra.mxu0 0
  %3953 = vmatprep.subr.bf16.mxu0 0
  %3954 = vmatpush1.bf16.msra.mxu0 0
  %3955 = vmatprep.subr.bf16.mxu0 0
  %3956 = vmatpush1.bf16.msra.mxu0 0
  %3957 = vmatprep.subr.bf16.mxu0 0
  %3958 = vmatpush1.bf16.msra.mxu0 0
  %3959 = vmatprep.subr.bf16.mxu0 0
  %3960 = vmatpush1.bf16.msra.mxu0 0
  %3961 = vmatprep.subr.bf16.mxu0 0
  %3962 = vmatpush1.bf16.msra.mxu0 0
  %3963 = vmatprep.subr.bf16.mxu0 0
  %3964 = vmatpush1.bf16.msra.mxu0 0
  %3965 = vmatprep.subr.bf16.mxu0 0
  %3966 = vmatpush1.bf16.msra.mxu0 0
  %3967 = vmatprep.subr.bf16.mxu0 0
  %3968 = vmatpush1.bf16.msra.mxu0 0
  %3969 = vmatprep.subr.bf16.mxu0 0
  %3970 = vmatpush1.bf16.msra.mxu0 0
  %3971 = vmatprep.subr.bf16.mxu0 0
  %3972 = vmatpush1.bf16.msra.mxu0 0
  %3973 = vmatprep.mubr.bf16.mxu0 0
  %3974 = vmatmul.mubr.bf16.gmra.mrb[0].mxu0 %v3921
  %v3975 = vpop.f32.mrb[0].mxu0
  %v3976 = vadd.f32 %v381, %v3975
  %v3977 = vpop.f32.mrb[0].mxu0
  %v3978 = vadd.f32 %v385, %v3977
  %v3979 = vpop.f32.mrb[0].mxu0
  %v3980 = vadd.f32 %v381, %v3979
  %v3981 = vpop.f32.mrb[0].mxu0
  %v3982 = vadd.f32 %v385, %v3981
  %3983 = vmatprep.mubr.bf16.mxu0 0
  %3984 = vmatmul.mubr.bf16.gmra.mrb[0].mxu0 %v3924
  %v3985 = vpop.f32.mrb[0].mxu0
  %v3986 = vadd.f32 %v381, %v3985
  %v3987 = vpop.f32.mrb[0].mxu0
  %v3988 = vadd.f32 %v385, %v3987
  %v3989 = vpop.f32.mrb[0].mxu0
  %v3990 = vadd.f32 %v381, %v3989
  %v3991 = vpop.f32.mrb[0].mxu0
  %v3992 = vadd.f32 %v385, %v3991
  %3993 = vmatprep.mubr.bf16.mxu0 0
  %3994 = vmatmul.mubr.bf16.gmra.mrb[0].mxu0 %v3927
  %v3995 = vpop.f32.mrb[0].mxu0
  %v3996 = vadd.f32 %v381, %v3995
  %v3997 = vpop.f32.mrb[0].mxu0
  %v3998 = vadd.f32 %v385, %v3997
  %v3999 = vpop.f32.mrb[0].mxu0
  %v4000 = vadd.f32 %v381, %v3999
  %v4001 = vpop.f32.mrb[0].mxu0
  %v4002 = vadd.f32 %v385, %v4001
  %4003 = vmatprep.mubr.bf16.mxu0 0
  %4004 = vmatmul.mubr.bf16.gmra.mrb[0].mxu0 %v3930
  %v4005 = vpop.f32.mrb[0].mxu0
  %v4006 = vadd.f32 %v381, %v4005
  %v4007 = vpop.f32.mrb[0].mxu0
  %v4008 = vadd.f32 %v385, %v4007
  %v4009 = vpop.f32.mrb[0].mxu0
  %v4010 = vadd.f32 %v381, %v4009
  %v4011 = vpop.f32.mrb[0].mxu0
  %v4012 = vadd.f32 %v385, %v4011
  %4013 = vmatprep.mubr.bf16.mxu0 0
  %4014 = vmatmul.mubr.bf16.gmra.mrb[0].mxu0 %v3933
  %v4015 = vpop.f32.mrb[0].mxu0
  %v4016 = vadd.f32 %v381, %v4015
  %v4017 = vpop.f32.mrb[0].mxu0
  %v4018 = vadd.f32 %v385, %v4017
  %v4019 = vpop.f32.mrb[0].mxu0
  %v4020 = vadd.f32 %v381, %v4019
  %v4021 = vpop.f32.mrb[0].mxu0
  %v4022 = vadd.f32 %v385, %v4021
  %4023 = vmatprep.mubr.bf16.mxu0 0
  %4024 = vmatmul.mubr.bf16.gmra.mrb[0].mxu0 %v3936
  %v4025 = vpop.f32.mrb[0].mxu0
  %v4026 = vadd.f32 %v381, %v4025
  %v4027 = vpop.f32.mrb[0].mxu0
  %v4028 = vadd.f32 %v385, %v4027
  %v4029 = vpop.f32.mrb[0].mxu0
  %v4030 = vadd.f32 %v381, %v4029
  %v4031 = vpop.f32.mrb[0].mxu0
  %v4032 = vadd.f32 %v385, %v4031
  %4033 = vmatprep.mubr.bf16.mxu0 0
  %4034 = vmatmul.mubr.bf16.gmra.mrb[0].mxu0 %v3939
  %v4035 = vpop.f32.mrb[0].mxu0
  %v4036 = vadd.f32 %v381, %v4035
  %v4037 = vpop.f32.mrb[0].mxu0
  %v4038 = vadd.f32 %v385, %v4037
  %v4039 = vpop.f32.mrb[0].mxu0
  %v4040 = vpop.f32.mrb[0].mxu0
  %4041 = vdwg.mxu0
  %4042 = vmatprep.subr.bf16.mxu0 %v458
  %4043 = vmatpush1.bf16.msra.mxu0 %v457
  %4044 = vmatprep.subr.bf16.mxu0 %v462
  %4045 = vmatpush1.bf16.msra.mxu0 %v461
  %4046 = vmatprep.subr.bf16.mxu0 0
  %4047 = vmatpush1.bf16.msra.mxu0 0
  %4048 = vmatprep.subr.bf16.mxu0 0
  %4049 = vmatpush1.bf16.msra.mxu0 0
  %4050 = vmatprep.subr.bf16.mxu0 0
  %4051 = vmatpush1.bf16.msra.mxu0 0
  %4052 = vmatprep.subr.bf16.mxu0 0
  %4053 = vmatpush1.bf16.msra.mxu0 0
  %4054 = vmatprep.subr.bf16.mxu0 0
  %4055 = vmatpush1.bf16.msra.mxu0 0
  %4056 = vmatprep.subr.bf16.mxu0 0
  %4057 = vmatpush1.bf16.msra.mxu0 0
  %4058 = vmatprep.subr.bf16.mxu0 0
  %4059 = vmatpush1.bf16.msra.mxu0 0
  %4060 = vmatprep.subr.bf16.mxu0 0
  %4061 = vmatpush1.bf16.msra.mxu0 0
  %4062 = vmatprep.subr.bf16.mxu0 0
  %4063 = vmatpush1.bf16.msra.mxu0 0
  %4064 = vmatprep.subr.bf16.mxu0 0
  %4065 = vmatpush1.bf16.msra.mxu0 0
  %4066 = vmatprep.subr.bf16.mxu0 0
  %4067 = vmatpush1.bf16.msra.mxu0 0
  %4068 = vmatprep.subr.bf16.mxu0 0
  %4069 = vmatpush1.bf16.msra.mxu0 0
  %4070 = vmatprep.subr.bf16.mxu0 0
  %4071 = vmatpush1.bf16.msra.mxu0 0
  %4072 = vmatprep.subr.bf16.mxu0 0
  %4073 = vmatpush1.bf16.msra.mxu0 0
  %4074 = vmatprep.mubr.bf16.mxu0 0
  %4075 = vmatmul.mubr.bf16.gmra.mrb[0].mxu0 %v3921
  %v4076 = vpop.f32.mrb[0].mxu0
  %v4077 = vadd.f32 %v389, %v4076
  %v4078 = vpop.f32.mrb[0].mxu0
  %v4079 = vadd.f32 %v393, %v4078
  %v4080 = vpop.f32.mrb[0].mxu0
  %v4081 = vadd.f32 %v389, %v4080
  %v4082 = vpop.f32.mrb[0].mxu0
  %v4083 = vadd.f32 %v393, %v4082
  %4084 = vmatprep.mubr.bf16.mxu0 0
  %4085 = vmatmul.mubr.bf16.gmra.mrb[0].mxu0 %v3924
  %v4086 = vpop.f32.mrb[0].mxu0
  %v4087 = vadd.f32 %v389, %v4086
  %v4088 = vpop.f32.mrb[0].mxu0
  %v4089 = vadd.f32 %v393, %v4088
  %v4090 = vpop.f32.mrb[0].mxu0
  %v4091 = vadd.f32 %v389, %v4090
  %v4092 = vpop.f32.mrb[0].mxu0
  %v4093 = vadd.f32 %v393, %v4092
  %4094 = vmatprep.mubr.bf16.mxu0 0
  %4095 = vmatmul.mubr.bf16.gmra.mrb[0].mxu0 %v3927
  %v4096 = vpop.f32.mrb[0].mxu0
  %v4097 = vadd.f32 %v389, %v4096
  %v4098 = vpop.f32.mrb[0].mxu0
  %v4099 = vadd.f32 %v393, %v4098
  %v4100 = vpop.f32.mrb[0].mxu0
  %v4101 = vadd.f32 %v389, %v4100
  %v4102 = vpop.f32.mrb[0].mxu0
  %v4103 = vadd.f32 %v393, %v4102
  %4104 = vmatprep.mubr.bf16.mxu0 0
  %4105 = vmatmul.mubr.bf16.gmra.mrb[0].mxu0 %v3930
  %v4106 = vpop.f32.mrb[0].mxu0
  %v4107 = vadd.f32 %v389, %v4106
  %v4108 = vpop.f32.mrb[0].mxu0
  %v4109 = vadd.f32 %v393, %v4108
  %v4110 = vpop.f32.mrb[0].mxu0
  %v4111 = vadd.f32 %v389, %v4110
  %v4112 = vpop.f32.mrb[0].mxu0
  %v4113 = vadd.f32 %v393, %v4112
  %4114 = vmatprep.mubr.bf16.mxu0 0
  %4115 = vmatmul.mubr.bf16.gmra.mrb[0].mxu0 %v3933
  %v4116 = vpop.f32.mrb[0].mxu0
  %v4117 = vadd.f32 %v389, %v4116
  %v4118 = vpop.f32.mrb[0].mxu0
  %v4119 = vadd.f32 %v393, %v4118
  %v4120 = vpop.f32.mrb[0].mxu0
  %v4121 = vadd.f32 %v389, %v4120
  %v4122 = vpop.f32.mrb[0].mxu0
  %v4123 = vadd.f32 %v393, %v4122
  %4124 = vmatprep.mubr.bf16.mxu0 0
  %4125 = vmatmul.mubr.bf16.gmra.mrb[0].mxu0 %v3936
  %v4126 = vpop.f32.mrb[0].mxu0
  %v4127 = vadd.f32 %v389, %v4126
  %v4128 = vpop.f32.mrb[0].mxu0
  %v4129 = vadd.f32 %v393, %v4128
  %v4130 = vpop.f32.mrb[0].mxu0
  %v4131 = vadd.f32 %v389, %v4130
  %v4132 = vpop.f32.mrb[0].mxu0
  %v4133 = vadd.f32 %v393, %v4132
  %4134 = vmatprep.mubr.bf16.mxu0 0
  %4135 = vmatmul.mubr.bf16.gmra.mrb[0].mxu0 %v3939
  %v4136 = vpop.f32.mrb[0].mxu0
  %v4137 = vadd.f32 %v389, %v4136
  %v4138 = vpop.f32.mrb[0].mxu0
  %v4139 = vadd.f32 %v393, %v4138
  %v4140 = vpop.f32.mrb[0].mxu0
  %v4141 = vpop.f32.mrb[0].mxu0
  %4142 = vdwg.mxu0
  %v4143 = vmax.f32 %v3976, 0.0
  %v4144 = vmax.f32 %v3978, 0.0
  %v4145 = vmax.f32 %v4077, 0.0
  %v4146 = vmax.f32 %v4079, 0.0
  %v4147 = vmax.f32 %v3980, 0.0
  %v4148 = vmax.f32 %v3982, 0.0
  %v4149 = vmax.f32 %v4081, 0.0
  %v4150 = vmax.f32 %v4083, 0.0
  %v4151 = vmax.f32 %v3986, 0.0
  %v4152 = vmax.f32 %v3988, 0.0
  %v4153 = vmax.f32 %v4087, 0.0
  %v4154 = vmax.f32 %v4089, 0.0
  %v4155 = vmax.f32 %v3990, 0.0
  %v4156 = vmax.f32 %v3992, 0.0
  %v4157 = vmax.f32 %v4091, 0.0
  %v4158 = vmax.f32 %v4093, 0.0
  %v4159 = vmax.f32 %v3996, 0.0
  %v4160 = vmax.f32 %v3998, 0.0
  %v4161 = vmax.f32 %v4097, 0.0
  %v4162 = vmax.f32 %v4099, 0.0
  %v4163 = vmax.f32 %v4000, 0.0
  %v4164 = vmax.f32 %v4002, 0.0
  %v4165 = vmax.f32 %v4101, 0.0
  %v4166 = vmax.f32 %v4103, 0.0
  %v4167 = vmax.f32 %v4006, 0.0
  %v4168 = vmax.f32 %v4008, 0.0
  %v4169 = vmax.f32 %v4107, 0.0
  %v4170 = vmax.f32 %v4109, 0.0
  %v4171 = vmax.f32 %v4010, 0.0
  %v4172 = vmax.f32 %v4012, 0.0
  %v4173 = vmax.f32 %v4111, 0.0
  %v4174 = vmax.f32 %v4113, 0.0
  %v4175 = vmax.f32 %v4016, 0.0
  %v4176 = vmax.f32 %v4018, 0.0
  %v4177 = vmax.f32 %v4117, 0.0
  %v4178 = vmax.f32 %v4119, 0.0
  %v4179 = vmax.f32 %v4020, 0.0
  %v4180 = vmax.f32 %v4022, 0.0
  %v4181 = vmax.f32 %v4121, 0.0
  %v4182 = vmax.f32 %v4123, 0.0
  %v4183 = vmax.f32 %v4026, 0.0
  %v4184 = vmax.f32 %v4028, 0.0
  %v4185 = vmax.f32 %v4127, 0.0
  %v4186 = vmax.f32 %v4129, 0.0
  %v4187 = vmax.f32 %v4030, 0.0
  %v4188 = vmax.f32 %v4032, 0.0
  %v4189 = vmax.f32 %v4131, 0.0
  %v4190 = vmax.f32 %v4133, 0.0
  %v4191 = vmax.f32 %v4036, 0.0
  %v4192 = vmax.f32 %v4038, 0.0
  %v4193 = vmax.f32 %v4137, 0.0
  %v4194 = vmax.f32 %v4139, 0.0
  %v4195 = vpack.c.bf16 %v4147, %v4143
  %v4196 = vpack.c.bf16 %v4148, %v4144
  %v4197 = vpack.c.bf16 %v4149, %v4145
  %v4198 = vpack.c.bf16 %v4150, %v4146
  %v4199 = vpack.c.bf16 %v4155, %v4151
  %v4200 = vpack.c.bf16 %v4156, %v4152
  %v4201 = vpack.c.bf16 %v4157, %v4153
  %v4202 = vpack.c.bf16 %v4158, %v4154
  %v4203 = vpack.c.bf16 %v4163, %v4159
  %v4204 = vpack.c.bf16 %v4164, %v4160
  %v4205 = vpack.c.bf16 %v4165, %v4161
  %v4206 = vpack.c.bf16 %v4166, %v4162
  %v4207 = vpack.c.bf16 %v4171, %v4167
  %v4208 = vpack.c.bf16 %v4172, %v4168
  %v4209 = vpack.c.bf16 %v4173, %v4169
  %v4210 = vpack.c.bf16 %v4174, %v4170
  %v4211 = vpack.c.bf16 %v4179, %v4175
  %v4212 = vpack.c.bf16 %v4180, %v4176
  %v4213 = vpack.c.bf16 %v4181, %v4177
  %v4214 = vpack.c.bf16 %v4182, %v4178
  %v4215 = vpack.c.bf16 %v4187, %v4183
  %v4216 = vpack.c.bf16 %v4188, %v4184
  %v4217 = vpack.c.bf16 %v4189, %v4185
  %v4218 = vpack.c.bf16 %v4190, %v4186
  %v4219 = vpack.c.bf16 %v4191, %v4191
  %v4220 = vpack.c.bf16 %v4192, %v4192
  %v4221 = vpack.c.bf16 %v4193, %v4193
  %v4222 = vpack.c.bf16 %v4194, %v4194
  %4223 = vmatprep.subr.bf16.mxu0 %v979
  %4224 = vmatpush1.bf16.msra.mxu0 %v978
  %4225 = vmatprep.subr.bf16.mxu0 %v981
  %4226 = vmatpush1.bf16.msra.mxu0 %v980
  %4227 = vmatprep.subr.bf16.mxu0 %v983
  %4228 = vmatpush1.bf16.msra.mxu0 %v982
  %4229 = vmatprep.subr.bf16.mxu0 %v985
  %4230 = vmatpush1.bf16.msra.mxu0 %v984
  %4231 = vmatprep.subr.bf16.mxu0 %v987
  %4232 = vmatpush1.bf16.msra.mxu0 %v986
  %4233 = vmatprep.subr.bf16.mxu0 %v989
  %4234 = vmatpush1.bf16.msra.mxu0 %v988
  %4235 = vmatprep.subr.bf16.mxu0 %v991
  %4236 = vmatpush1.bf16.msra.mxu0 %v990
  %4237 = vmatprep.subr.bf16.mxu0 %v993
  %4238 = vmatpush1.bf16.msra.mxu0 %v992
  %4239 = vmatprep.subr.bf16.mxu0 %v995
  %4240 = vmatpush1.bf16.msra.mxu0 %v994
  %4241 = vmatprep.subr.bf16.mxu0 %v997
  %4242 = vmatpush1.bf16.msra.mxu0 %v996
  %4243 = vmatprep.subr.bf16.mxu0 %v999
  %4244 = vmatpush1.bf16.msra.mxu0 %v998
  %4245 = vmatprep.subr.bf16.mxu0 %v1001
  %4246 = vmatpush1.bf16.msra.mxu0 %v1000
  %4247 = vmatprep.subr.bf16.mxu0 %v1003
  %4248 = vmatpush1.bf16.msra.mxu0 %v1002
  %4249 = vmatprep.subr.bf16.mxu0 %v1005
  %4250 = vmatpush1.bf16.msra.mxu0 %v1004
  %4251 = vmatprep.subr.bf16.mxu0 %v1007
  %4252 = vmatpush1.bf16.msra.mxu0 %v1006
  %4253 = vmatprep.subr.bf16.mxu0 %v1009
  %4254 = vmatpush1.bf16.msra.mxu0 %v1008
  %4255 = vmatprep.mubr.bf16.mxu0 %v4196
  %4256 = vmatmul.mubr.bf16.gmra.mrb[0].mxu0 %v4195
  %v4257 = vpop.f32.mrb[0].mxu0
  %v4258 = vadd.f32 %v779, %v4257
  %v4259 = vpop.f32.mrb[0].mxu0
  %v4260 = vadd.f32 %v783, %v4259
  %v4261 = vpop.f32.mrb[0].mxu0
  %v4262 = vadd.f32 %v779, %v4261
  %v4263 = vpop.f32.mrb[0].mxu0
  %v4264 = vadd.f32 %v783, %v4263
  %4265 = vmatprep.mubr.bf16.mxu0 %v4200
  %4266 = vmatmul.mubr.bf16.gmra.mrb[0].mxu0 %v4199
  %v4267 = vpop.f32.mrb[0].mxu0
  %v4268 = vadd.f32 %v779, %v4267
  %v4269 = vpop.f32.mrb[0].mxu0
  %v4270 = vadd.f32 %v783, %v4269
  %v4271 = vpop.f32.mrb[0].mxu0
  %v4272 = vadd.f32 %v779, %v4271
  %v4273 = vpop.f32.mrb[0].mxu0
  %v4274 = vadd.f32 %v783, %v4273
  %4275 = vmatprep.mubr.bf16.mxu0 %v4204
  %4276 = vmatmul.mubr.bf16.gmra.mrb[0].mxu0 %v4203
  %v4277 = vpop.f32.mrb[0].mxu0
  %v4278 = vadd.f32 %v779, %v4277
  %v4279 = vpop.f32.mrb[0].mxu0
  %v4280 = vadd.f32 %v783, %v4279
  %v4281 = vpop.f32.mrb[0].mxu0
  %v4282 = vadd.f32 %v779, %v4281
  %v4283 = vpop.f32.mrb[0].mxu0
  %v4284 = vadd.f32 %v783, %v4283
  %4285 = vmatprep.mubr.bf16.mxu0 %v4208
  %4286 = vmatmul.mubr.bf16.gmra.mrb[0].mxu0 %v4207
  %v4287 = vpop.f32.mrb[0].mxu0
  %v4288 = vadd.f32 %v779, %v4287
  %v4289 = vpop.f32.mrb[0].mxu0
  %v4290 = vadd.f32 %v783, %v4289
  %v4291 = vpop.f32.mrb[0].mxu0
  %v4292 = vadd.f32 %v779, %v4291
  %v4293 = vpop.f32.mrb[0].mxu0
  %v4294 = vadd.f32 %v783, %v4293
  %4295 = vmatprep.mubr.bf16.mxu0 %v4212
  %4296 = vmatmul.mubr.bf16.gmra.mrb[0].mxu0 %v4211
  %v4297 = vpop.f32.mrb[0].mxu0
  %v4298 = vadd.f32 %v779, %v4297
  %v4299 = vpop.f32.mrb[0].mxu0
  %v4300 = vadd.f32 %v783, %v4299
  %v4301 = vpop.f32.mrb[0].mxu0
  %v4302 = vadd.f32 %v779, %v4301
  %v4303 = vpop.f32.mrb[0].mxu0
  %v4304 = vadd.f32 %v783, %v4303
  %4305 = vmatprep.mubr.bf16.mxu0 %v4216
  %4306 = vmatmul.mubr.bf16.gmra.mrb[0].mxu0 %v4215
  %v4307 = vpop.f32.mrb[0].mxu0
  %v4308 = vadd.f32 %v779, %v4307
  %v4309 = vpop.f32.mrb[0].mxu0
  %v4310 = vadd.f32 %v783, %v4309
  %v4311 = vpop.f32.mrb[0].mxu0
  %v4312 = vadd.f32 %v779, %v4311
  %v4313 = vpop.f32.mrb[0].mxu0
  %v4314 = vadd.f32 %v783, %v4313
  %4315 = vmatprep.mubr.bf16.mxu0 %v4220
  %4316 = vmatmul.mubr.bf16.gmra.mrb[0].mxu0 %v4219
  %v4317 = vpop.f32.mrb[0].mxu0
  %v4318 = vadd.f32 %v779, %v4317
  %v4319 = vpop.f32.mrb[0].mxu0
  %v4320 = vadd.f32 %v783, %v4319
  %v4321 = vpop.f32.mrb[0].mxu0
  %v4322 = vpop.f32.mrb[0].mxu0
  %4323 = vdwg.mxu0
  %4324 = vmatprep.subr.bf16.mxu0 %v1011
  %4325 = vmatpush1.bf16.msra.mxu0 %v1010
  %4326 = vmatprep.subr.bf16.mxu0 %v1013
  %4327 = vmatpush1.bf16.msra.mxu0 %v1012
  %4328 = vmatprep.subr.bf16.mxu0 %v1015
  %4329 = vmatpush1.bf16.msra.mxu0 %v1014
  %4330 = vmatprep.subr.bf16.mxu0 %v1017
  %4331 = vmatpush1.bf16.msra.mxu0 %v1016
  %4332 = vmatprep.subr.bf16.mxu0 %v1019
  %4333 = vmatpush1.bf16.msra.mxu0 %v1018
  %4334 = vmatprep.subr.bf16.mxu0 %v1021
  %4335 = vmatpush1.bf16.msra.mxu0 %v1020
  %4336 = vmatprep.subr.bf16.mxu0 %v1023
  %4337 = vmatpush1.bf16.msra.mxu0 %v1022
  %4338 = vmatprep.subr.bf16.mxu0 %v1025
  %4339 = vmatpush1.bf16.msra.mxu0 %v1024
  %4340 = vmatprep.subr.bf16.mxu0 %v1027
  %4341 = vmatpush1.bf16.msra.mxu0 %v1026
  %4342 = vmatprep.subr.bf16.mxu0 %v1029
  %4343 = vmatpush1.bf16.msra.mxu0 %v1028
  %4344 = vmatprep.subr.bf16.mxu0 %v1031
  %4345 = vmatpush1.bf16.msra.mxu0 %v1030
  %4346 = vmatprep.subr.bf16.mxu0 %v1033
  %4347 = vmatpush1.bf16.msra.mxu0 %v1032
  %4348 = vmatprep.subr.bf16.mxu0 %v1035
  %4349 = vmatpush1.bf16.msra.mxu0 %v1034
  %4350 = vmatprep.subr.bf16.mxu0 %v1037
  %4351 = vmatpush1.bf16.msra.mxu0 %v1036
  %4352 = vmatprep.subr.bf16.mxu0 %v1039
  %4353 = vmatpush1.bf16.msra.mxu0 %v1038
  %4354 = vmatprep.subr.bf16.mxu0 %v1041
  %4355 = vmatpush1.bf16.msra.mxu0 %v1040
  %4356 = vmatprep.mubr.bf16.mxu0 %v4198
  %4357 = vmatmul.mubr.bf16.gmra.mrb[0].mxu0 %v4197
  %v4358 = vpop.f32.mrb[0].mxu0
  %v4359 = vadd.f32 %v4258, %v4358
  %v4360 = vpop.f32.mrb[0].mxu0
  %v4361 = vadd.f32 %v4260, %v4360
  %v4362 = vpop.f32.mrb[0].mxu0
  %v4363 = vadd.f32 %v4262, %v4362
  %v4364 = vpop.f32.mrb[0].mxu0
  %v4365 = vadd.f32 %v4264, %v4364
  %4366 = vmatprep.mubr.bf16.mxu0 %v4202
  %4367 = vmatmul.mubr.bf16.gmra.mrb[0].mxu0 %v4201
  %v4368 = vpop.f32.mrb[0].mxu0
  %v4369 = vadd.f32 %v4268, %v4368
  %v4370 = vpop.f32.mrb[0].mxu0
  %v4371 = vadd.f32 %v4270, %v4370
  %v4372 = vpop.f32.mrb[0].mxu0
  %v4373 = vadd.f32 %v4272, %v4372
  %v4374 = vpop.f32.mrb[0].mxu0
  %v4375 = vadd.f32 %v4274, %v4374
  %4376 = vmatprep.mubr.bf16.mxu0 %v4206
  %4377 = vmatmul.mubr.bf16.gmra.mrb[0].mxu0 %v4205
  %v4378 = vpop.f32.mrb[0].mxu0
  %v4379 = vadd.f32 %v4278, %v4378
  %v4380 = vpop.f32.mrb[0].mxu0
  %v4381 = vadd.f32 %v4280, %v4380
  %v4382 = vpop.f32.mrb[0].mxu0
  %v4383 = vadd.f32 %v4282, %v4382
  %v4384 = vpop.f32.mrb[0].mxu0
  %v4385 = vadd.f32 %v4284, %v4384
  %4386 = vmatprep.mubr.bf16.mxu0 %v4210
  %4387 = vmatmul.mubr.bf16.gmra.mrb[0].mxu0 %v4209
  %v4388 = vpop.f32.mrb[0].mxu0
  %v4389 = vadd.f32 %v4288, %v4388
  %v4390 = vpop.f32.mrb[0].mxu0
  %v4391 = vadd.f32 %v4290, %v4390
  %v4392 = vpop.f32.mrb[0].mxu0
  %v4393 = vadd.f32 %v4292, %v4392
  %v4394 = vpop.f32.mrb[0].mxu0
  %v4395 = vadd.f32 %v4294, %v4394
  %4396 = vmatprep.mubr.bf16.mxu0 %v4214
  %4397 = vmatmul.mubr.bf16.gmra.mrb[0].mxu0 %v4213
  %v4398 = vpop.f32.mrb[0].mxu0
  %v4399 = vadd.f32 %v4298, %v4398
  %v4400 = vpop.f32.mrb[0].mxu0
  %v4401 = vadd.f32 %v4300, %v4400
  %v4402 = vpop.f32.mrb[0].mxu0
  %v4403 = vadd.f32 %v4302, %v4402
  %v4404 = vpop.f32.mrb[0].mxu0
  %v4405 = vadd.f32 %v4304, %v4404
  %4406 = vmatprep.mubr.bf16.mxu0 %v4218
  %4407 = vmatmul.mubr.bf16.gmra.mrb[0].mxu0 %v4217
  %v4408 = vpop.f32.mrb[0].mxu0
  %v4409 = vadd.f32 %v4308, %v4408
  %v4410 = vpop.f32.mrb[0].mxu0
  %v4411 = vadd.f32 %v4310, %v4410
  %v4412 = vpop.f32.mrb[0].mxu0
  %v4413 = vadd.f32 %v4312, %v4412
  %v4414 = vpop.f32.mrb[0].mxu0
  %v4415 = vadd.f32 %v4314, %v4414
  %4416 = vmatprep.mubr.bf16.mxu0 %v4222
  %4417 = vmatmul.mubr.bf16.gmra.mrb[0].mxu0 %v4221
  %v4418 = vpop.f32.mrb[0].mxu0
  %v4419 = vadd.f32 %v4318, %v4418
  %v4420 = vpop.f32.mrb[0].mxu0
  %v4421 = vadd.f32 %v4320, %v4420
  %v4422 = vpop.f32.mrb[0].mxu0
  %v4423 = vpop.f32.mrb[0].mxu0
  %4424 = vdwg.mxu0
  %v4426 = vsel %vm1312, %v4419, 0
  %v4429 = vsel %vm1312, %v4421, 0
  %4431 = vmatprep.subr.mxu0 %v4361
  %4432 = vmatpush1.msra.mxu0 %v4359
  %4433 = vmatprep.subr.mxu0 %v4365
  %4434 = vmatpush1.msra.mxu0 %v4363
  %4435 = vmatprep.subr.mxu0 %v4371
  %4436 = vmatpush1.msra.mxu0 %v4369
  %4437 = vmatprep.subr.mxu0 %v4375
  %4438 = vmatpush1.msra.mxu0 %v4373
  %4439 = vmatprep.subr.mxu0 %v4381
  %4440 = vmatpush1.msra.mxu0 %v4379
  %4441 = vmatprep.subr.mxu0 %v4385
  %4442 = vmatpush1.msra.mxu0 %v4383
  %4443 = vmatprep.subr.mxu0 %v4391
  %4444 = vmatpush1.msra.mxu0 %v4389
  %4445 = vmatprep.subr.mxu0 %v4395
  %4446 = vmatpush1.msra.mxu0 %v4393
  %4447 = vmatprep.subr.mxu0 %v4401
  %4448 = vmatpush1.msra.mxu0 %v4399
  %4449 = vmatprep.subr.mxu0 %v4405
  %4450 = vmatpush1.msra.mxu0 %v4403
  %4451 = vmatprep.subr.mxu0 %v4411
  %4452 = vmatpush1.msra.mxu0 %v4409
  %4453 = vmatprep.subr.mxu0 %v4415
  %4454 = vmatpush1.msra.mxu0 %v4413
  %4455 = vmatprep.subr.mxu0 %v4429
  %4456 = vmatpush1.msra.mxu0 %v4426
  %4457 = vmatprep.subr.mxu0 0.0
  %4458 = vmatpush1.msra.mxu0 0.0
  %4459 = vmatprep.subr.mxu0 0.0
  %4460 = vmatpush1.msra.mxu0 0.0
  %4461 = vmatprep.subr.mxu0 0.0
  %4462 = vmatpush1.msra.mxu0 0.0
  %4463 = vmatprep.subr.mxu0 0.0
  %4464 = vmatpush1.msra.mxu0 0.0
  %4465 = vmatprep.subr.mxu0 0.0
  %4466 = vmatpush1.msra.mxu0 0.0
  %4467 = vmatprep.subr.mxu0 0.0
  %4468 = vmatpush1.msra.mxu0 0.0
  %4469 = vmatprep.subr.mxu0 0.0
  %4470 = vmatpush1.msra.mxu0 0.0
  %4471 = vmatprep.subr.mxu0 0.0
  %4472 = vmatpush1.msra.mxu0 0.0
  %4473 = vmatprep.subr.mxu0 0.0
  %4474 = vmatpush1.msra.mxu0 0.0
  %4475 = vmatprep.subr.mxu0 0.0
  %4476 = vmatpush1.msra.mxu0 0.0
  %4477 = vmatprep.subr.mxu0 0.0
  %4478 = vmatpush1.msra.mxu0 0.0
  %4479 = vmatprep.subr.mxu0 0.0
  %4480 = vmatpush1.msra.mxu0 0.0
  %4481 = vmatprep.subr.mxu0 0.0
  %4482 = vmatpush1.msra.mxu0 0.0
  %4483 = vmatprep.subr.mxu0 0.0
  %4484 = vmatpush1.msra.mxu0 0.0
  %4485 = vmatprep.subr.mxu0 0.0
  %4486 = vmatpush1.msra.mxu0 0.0
  %4487 = vmatprep.subr.mxu0 0.0
  %4488 = vmatpush1.msra.mxu0 0.0
  %4489 = vmatprep.subr.mxu0 0.0
  %4490 = vmatpush1.msra.mxu0 0.0
  %4491 = vmatprep.subr.mxu0 0.0
  %4492 = vmatpush1.msra.mxu0 0.0
  %4493 = vmatprep.subr.mxu0 0.0
  %4494 = vmatpush1.msra.mxu0 0.0
  %4495 = vmatprep.mubr.f32.mxu0 0.0
  %4496 = vmatmul.mubr.f32.gmra.mrb[0].mxu0 %v1310
  %v4497 = vpop.f32.mrb[0].mxu0
  %v4498 = vadd.f32 0.0, %v4497
  %v4499 = vpop.f32.mrb[0].mxu0
  %v4500 = vadd.f32 0.0, %v4499
  %4501 = vdwg.mxu0
  %v4502 = vmul.f32 %v4498, 0.020408163
  %v4503 = vmul.f32 %v4500, 0.020408163
  %v4504 = vpack.c.bf16 %v3872, %v3872
  %4505 = vmatprep.subr.bf16.mxu0 0
  %4506 = vmatpush1.bf16.msra.mxu0 %v1425
  %4507 = vmatprep.subr.bf16.mxu0 0
  %4508 = vmatpush1.bf16.msra.mxu0 %v1426
  %4509 = vmatprep.subr.bf16.mxu0 0
  %4510 = vmatpush1.bf16.msra.mxu0 %v1427
  %4511 = vmatprep.subr.bf16.mxu0 0
  %4512 = vmatpush1.bf16.msra.mxu0 %v1428
  %4513 = vmatprep.subr.bf16.mxu0 0
  %4514 = vmatpush1.bf16.msra.mxu0 %v1429
  %4515 = vmatprep.subr.bf16.mxu0 0
  %4516 = vmatpush1.bf16.msra.mxu0 %v1430
  %4517 = vmatprep.subr.bf16.mxu0 0
  %4518 = vmatpush1.bf16.msra.mxu0 %v1431
  %4519 = vmatprep.subr.bf16.mxu0 0
  %4520 = vmatpush1.bf16.msra.mxu0 %v1432
  %4521 = vmatprep.subr.bf16.mxu0 0
  %4522 = vmatpush1.bf16.msra.mxu0 0
  %4523 = vmatprep.subr.bf16.mxu0 0
  %4524 = vmatpush1.bf16.msra.mxu0 0
  %4525 = vmatprep.subr.bf16.mxu0 0
  %4526 = vmatpush1.bf16.msra.mxu0 0
  %4527 = vmatprep.subr.bf16.mxu0 0
  %4528 = vmatpush1.bf16.msra.mxu0 0
  %4529 = vmatprep.subr.bf16.mxu0 0
  %4530 = vmatpush1.bf16.msra.mxu0 0
  %4531 = vmatprep.subr.bf16.mxu0 0
  %4532 = vmatpush1.bf16.msra.mxu0 0
  %4533 = vmatprep.subr.bf16.mxu0 0
  %4534 = vmatpush1.bf16.msra.mxu0 0
  %4535 = vmatprep.subr.bf16.mxu0 0
  %4536 = vmatpush1.bf16.msra.mxu0 0
  %4537 = vmatprep.mubr.bf16.mxu0 0
  %4538 = vmatmul.mubr.bf16.gmra.mrb[0].mxu0 %v4504
  %v4539 = vpop.f32.mrb[0].mxu0
  %v4540 = vadd.f32 0.0, %v4539
  %v4541 = vpop.f32.mrb[0].mxu0
  %v4542 = vpop.f32.mrb[0].mxu0
  %v4543 = vpop.f32.mrb[0].mxu0
  %4544 = vdwg.mxu0
  %v4547 = vcombine.low %v4502, %v4503
  %v4549 = vunpack.c.l.s4 1966171168
  %v4550 = vunpack.c.0.s8 %v4549
  %v4551 = vlaneseq
  %v4552 = vshrl.u32 %v4551, 7
  %v4553 = vsub.s32 %v4550, %v4552
  %v4554 = vrot.slane %v4547, %v4553
  %v4555 = vcombine.high %v4554, %v4554
  %v4557 = vunpack.c.l.s4 1966171168
  %v4558 = vunpack.c.0.s8 %v4557
  %v4559 = vlaneseq
  %v4560 = vshrl.u32 %v4559, 7
  %v4561 = vsub.s32 %v4558, %v4560
  %v4562 = vrot.slane %v4554, %v4561
  %v4564 = vunpack.c.l.s4 1966171168
  %v4565 = vunpack.c.0.s8 %v4564
  %v4566 = vlaneseq
  %v4567 = vshrl.u32 %v4566, 7
  %v4568 = vsub.s32 %v4565, %v4567
  %v4569 = vrot.slane %v4555, %v4568
  %v4570 = vlaneseq
  %v4571 = vshrl.u32 %v4570, 7
  %v4572 = vsub.s32 0, %v4571
  %v4573 = vrot.slane %v4562, %v4572
  %v4574 = vlaneseq
  %v4575 = vshrl.u32 %v4574, 7
  %v4576 = vsub.s32 1, %v4575
  %v4577 = vrot.slane %v4562, %v4576
  %v4578 = vlaneseq
  %v4579 = vshrl.u32 %v4578, 7
  %v4580 = vsub.s32 0, %v4579
  %v4581 = vrot.slane %v4569, %v4580
  %v4582 = vlaneseq
  %v4583 = vshrl.u32 %v4582, 7
  %v4584 = vsub.s32 1, %v4583
  %v4585 = vrot.slane %v4569, %v4584
  %v4590 = vmul.f32 %v4573, %v1529
  %v4591 = vmul.f32 %v4577, %v1529
  %v4592 = vmul.f32 %v4573, %v1534
  %v4593 = vmul.f32 %v4577, %v1534
  %v4594 = vmul.f32 %v4573, %v1539
  %v4595 = vmul.f32 %v4577, %v1539
  %v4596 = vmul.f32 %v4573, %v1544
  %v4597 = vmul.f32 %v4577, %v1544
  %v4598 = vmul.f32 %v4573, %v1549
  %v4599 = vmul.f32 %v4577, %v1549
  %v4600 = vmul.f32 %v4573, %v1554
  %v4601 = vmul.f32 %v4577, %v1554
  %v4602 = vmul.f32 %v4573, %v1559
  %v4603 = vmul.f32 %v4577, %v1559
  %v4604 = vmul.f32 %v4573, %v1564
  %v4605 = vmul.f32 %v4577, %v1564
  %v4606 = vmul.f32 %v4581, %v1529
  %v4607 = vmul.f32 %v4585, %v1529
  %v4608 = vmul.f32 %v4581, %v1534
  %v4609 = vmul.f32 %v4585, %v1534
  %v4610 = vmul.f32 %v4581, %v1539
  %v4611 = vmul.f32 %v4585, %v1539
  %v4612 = vmul.f32 %v4581, %v1544
  %v4613 = vmul.f32 %v4585, %v1544
  %v4614 = vmul.f32 %v4581, %v1549
  %v4615 = vmul.f32 %v4585, %v1549
  %v4616 = vmul.f32 %v4581, %v1554
  %v4617 = vmul.f32 %v4585, %v1554
  %v4618 = vmul.f32 %v4581, %v1559
  %v4619 = vmul.f32 %v4585, %v1559
  %v4620 = vmul.f32 %v4581, %v1564
  %v4621 = vmul.f32 %v4585, %v1564
  %v4622 = vadd.f32 %v4590, %v1601
  %v4623 = vadd.f32 %v4591, %v1601
  %v4624 = vadd.f32 %v4592, %v1606
  %v4625 = vadd.f32 %v4593, %v1606
  %v4626 = vadd.f32 %v4594, %v1611
  %v4627 = vadd.f32 %v4595, %v1611
  %v4628 = vadd.f32 %v4596, %v1616
  %v4629 = vadd.f32 %v4597, %v1616
  %v4630 = vadd.f32 %v4598, %v1621
  %v4631 = vadd.f32 %v4599, %v1621
  %v4632 = vadd.f32 %v4600, %v1626
  %v4633 = vadd.f32 %v4601, %v1626
  %v4634 = vadd.f32 %v4602, %v1631
  %v4635 = vadd.f32 %v4603, %v1631
  %v4636 = vadd.f32 %v4604, %v1636
  %v4637 = vadd.f32 %v4605, %v1636
  %v4638 = vadd.f32 %v4606, %v1601
  %v4639 = vadd.f32 %v4607, %v1601
  %v4640 = vadd.f32 %v4608, %v1606
  %v4641 = vadd.f32 %v4609, %v1606
  %v4642 = vadd.f32 %v4610, %v1611
  %v4643 = vadd.f32 %v4611, %v1611
  %v4644 = vadd.f32 %v4612, %v1616
  %v4645 = vadd.f32 %v4613, %v1616
  %v4646 = vadd.f32 %v4614, %v1621
  %v4647 = vadd.f32 %v4615, %v1621
  %v4648 = vadd.f32 %v4616, %v1626
  %v4649 = vadd.f32 %v4617, %v1626
  %v4650 = vadd.f32 %v4618, %v1631
  %v4651 = vadd.f32 %v4619, %v1631
  %v4652 = vadd.f32 %v4620, %v1636
  %v4653 = vadd.f32 %v4621, %v1636
  %v4654 = vlaneseq
  %v4655 = vshrl.u32 %v4654, 7
  %v4656 = vsub.s32 0, %v4655
  %v4657 = vrot.slane %v4540, %v4656
  %4659 = vbcast.lane.b32.xlu0 %v4657, 256
  %v4660 = vpop.permute.xlu0 %4659
  %s4662 = sor.u32 256, 8
  %4663 = vbcast.lane.b32.xlu0 %v4657, %s4662
  %v4664 = vpop.permute.xlu0 %4663
  %s4666 = sor.u32 256, 16
  %4667 = vbcast.lane.b32.xlu0 %v4657, %s4666
  %v4668 = vpop.permute.xlu0 %4667
  %s4670 = sor.u32 256, 24
  %4671 = vbcast.lane.b32.xlu0 %v4657, %s4670
  %v4672 = vpop.permute.xlu0 %4671
  %s4674 = sor.u32 256, 32
  %4675 = vbcast.lane.b32.xlu0 %v4657, %s4674
  %v4676 = vpop.permute.xlu0 %4675
  %s4678 = sor.u32 256, 40
  %4679 = vbcast.lane.b32.xlu0 %v4657, %s4678
  %v4680 = vpop.permute.xlu0 %4679
  %s4682 = sor.u32 256, 48
  %4683 = vbcast.lane.b32.xlu0 %v4657, %s4682
  %v4684 = vpop.permute.xlu0 %4683
  %s4686 = sor.u32 256, 56
  %4687 = vbcast.lane.b32.xlu0 %v4657, %s4686
  %v4688 = vpop.permute.xlu0 %4687
  %v4689 = vlaneseq
  %v4690 = vshrl.u32 %v4689, 7
  %v4691 = vsub.s32 1, %v4690
  %v4692 = vrot.slane %v4540, %v4691
  %4694 = vbcast.lane.b32.xlu0 %v4692, 256
  %v4695 = vpop.permute.xlu0 %4694
  %s4697 = sor.u32 256, 8
  %4698 = vbcast.lane.b32.xlu0 %v4692, %s4697
  %v4699 = vpop.permute.xlu0 %4698
  %s4701 = sor.u32 256, 16
  %4702 = vbcast.lane.b32.xlu0 %v4692, %s4701
  %v4703 = vpop.permute.xlu0 %4702
  %s4705 = sor.u32 256, 24
  %4706 = vbcast.lane.b32.xlu0 %v4692, %s4705
  %v4707 = vpop.permute.xlu0 %4706
  %s4709 = sor.u32 256, 32
  %4710 = vbcast.lane.b32.xlu0 %v4692, %s4709
  %v4711 = vpop.permute.xlu0 %4710
  %s4713 = sor.u32 256, 40
  %4714 = vbcast.lane.b32.xlu0 %v4692, %s4713
  %v4715 = vpop.permute.xlu0 %4714
  %s4717 = sor.u32 256, 48
  %4718 = vbcast.lane.b32.xlu0 %v4692, %s4717
  %v4719 = vpop.permute.xlu0 %4718
  %s4721 = sor.u32 256, 56
  %4722 = vbcast.lane.b32.xlu0 %v4692, %s4721
  %v4723 = vpop.permute.xlu0 %4722
  %v4724 = vadd.f32 %v4622, %v4660
  %v4725 = vadd.f32 %v4623, %v4660
  %v4726 = vadd.f32 %v4624, %v4664
  %v4727 = vadd.f32 %v4625, %v4664
  %v4728 = vadd.f32 %v4626, %v4668
  %v4729 = vadd.f32 %v4627, %v4668
  %v4730 = vadd.f32 %v4628, %v4672
  %v4731 = vadd.f32 %v4629, %v4672
  %v4732 = vadd.f32 %v4630, %v4676
  %v4733 = vadd.f32 %v4631, %v4676
  %v4734 = vadd.f32 %v4632, %v4680
  %v4735 = vadd.f32 %v4633, %v4680
  %v4736 = vadd.f32 %v4634, %v4684
  %v4737 = vadd.f32 %v4635, %v4684
  %v4738 = vadd.f32 %v4636, %v4688
  %v4739 = vadd.f32 %v4637, %v4688
  %v4740 = vadd.f32 %v4638, %v4695
  %v4741 = vadd.f32 %v4639, %v4695
  %v4742 = vadd.f32 %v4640, %v4699
  %v4743 = vadd.f32 %v4641, %v4699
  %v4744 = vadd.f32 %v4642, %v4703
  %v4745 = vadd.f32 %v4643, %v4703
  %v4746 = vadd.f32 %v4644, %v4707
  %v4747 = vadd.f32 %v4645, %v4707
  %v4748 = vadd.f32 %v4646, %v4711
  %v4749 = vadd.f32 %v4647, %v4711
  %v4750 = vadd.f32 %v4648, %v4715
  %v4751 = vadd.f32 %v4649, %v4715
  %v4752 = vadd.f32 %v4650, %v4719
  %v4753 = vadd.f32 %v4651, %v4719
  %v4754 = vadd.f32 %v4652, %v4723
  %v4755 = vadd.f32 %v4653, %v4723
  %v4756 = vtanh.pop %v4724
  %v4757 = vtanh.pop %v4725
  %v4758 = vtanh.pop %v4726
  %v4759 = vtanh.pop %v4727
  %v4760 = vtanh.pop %v4728
  %v4761 = vtanh.pop %v4729
  %v4762 = vtanh.pop %v4730
  %v4763 = vtanh.pop %v4731
  %v4764 = vtanh.pop %v4732
  %v4765 = vtanh.pop %v4733
  %v4766 = vtanh.pop %v4734
  %v4767 = vtanh.pop %v4735
  %v4768 = vtanh.pop %v4736
  %v4769 = vtanh.pop %v4737
  %v4770 = vtanh.pop %v4738
  %v4771 = vtanh.pop %v4739
  %v4772 = vtanh.pop %v4740
  %v4773 = vtanh.pop %v4741
  %v4774 = vtanh.pop %v4742
  %v4775 = vtanh.pop %v4743
  %v4776 = vtanh.pop %v4744
  %v4777 = vtanh.pop %v4745
  %v4778 = vtanh.pop %v4746
  %v4779 = vtanh.pop %v4747
  %v4780 = vtanh.pop %v4748
  %v4781 = vtanh.pop %v4749
  %v4782 = vtanh.pop %v4750
  %v4783 = vtanh.pop %v4751
  %v4784 = vtanh.pop %v4752
  %v4785 = vtanh.pop %v4753
  %v4786 = vtanh.pop %v4754
  %v4787 = vtanh.pop %v4755
  %v4788 = vmul.f32 %v4756, %v1807
  %v4789 = vmul.f32 %v4757, %v1807
  %v4790 = vmul.f32 %v4758, %v1812
  %v4791 = vmul.f32 %v4759, %v1812
  %v4792 = vmul.f32 %v4760, %v1817
  %v4793 = vmul.f32 %v4761, %v1817
  %v4794 = vmul.f32 %v4762, %v1822
  %v4795 = vmul.f32 %v4763, %v1822
  %v4796 = vmul.f32 %v4764, %v1827
  %v4797 = vmul.f32 %v4765, %v1827
  %v4798 = vmul.f32 %v4766, %v1832
  %v4799 = vmul.f32 %v4767, %v1832
  %v4800 = vmul.f32 %v4768, %v1837
  %v4801 = vmul.f32 %v4769, %v1837
  %v4802 = vmul.f32 %v4770, %v1842
  %v4803 = vmul.f32 %v4771, %v1842
  %v4804 = vmul.f32 %v4772, %v1807
  %v4805 = vmul.f32 %v4773, %v1807
  %v4806 = vmul.f32 %v4774, %v1812
  %v4807 = vmul.f32 %v4775, %v1812
  %v4808 = vmul.f32 %v4776, %v1817
  %v4809 = vmul.f32 %v4777, %v1817
  %v4810 = vmul.f32 %v4778, %v1822
  %v4811 = vmul.f32 %v4779, %v1822
  %v4812 = vmul.f32 %v4780, %v1827
  %v4813 = vmul.f32 %v4781, %v1827
  %v4814 = vmul.f32 %v4782, %v1832
  %v4815 = vmul.f32 %v4783, %v1832
  %v4816 = vmul.f32 %v4784, %v1837
  %v4817 = vmul.f32 %v4785, %v1837
  %v4818 = vmul.f32 %v4786, %v1842
  %v4819 = vmul.f32 %v4787, %v1842
  %v4820 = vadd.f32 %v4788, %v4790
  %v4821 = vadd.f32 %v4820, %v4792
  %v4822 = vadd.f32 %v4821, %v4794
  %v4823 = vadd.f32 %v4822, %v4796
  %v4824 = vadd.f32 %v4823, %v4798
  %v4825 = vadd.f32 %v4824, %v4800
  %v4826 = vadd.f32 %v4825, %v4802
  %v4827 = vrot.slane %v4826, 4
  %v4828 = vadd.f32 %v4826, %v4827
  %v4829 = vrot.slane %v4828, 2
  %v4830 = vadd.f32 %v4828, %v4829
  %v4831 = vrot.slane %v4830, 1
  %v4832 = vadd.f32 %v4830, %v4831
  %v4833 = vadd.f32 %v4789, %v4791
  %v4834 = vadd.f32 %v4833, %v4793
  %v4835 = vadd.f32 %v4834, %v4795
  %v4836 = vadd.f32 %v4835, %v4797
  %v4837 = vadd.f32 %v4836, %v4799
  %v4838 = vadd.f32 %v4837, %v4801
  %v4839 = vadd.f32 %v4838, %v4803
  %v4840 = vrot.slane %v4839, 4
  %v4841 = vadd.f32 %v4839, %v4840
  %v4842 = vrot.slane %v4841, 2
  %v4843 = vadd.f32 %v4841, %v4842
  %v4844 = vrot.slane %v4843, 1
  %v4845 = vadd.f32 %v4843, %v4844
  %v4846 = vadd.f32 %v4804, %v4806
  %v4847 = vadd.f32 %v4846, %v4808
  %v4848 = vadd.f32 %v4847, %v4810
  %v4849 = vadd.f32 %v4848, %v4812
  %v4850 = vadd.f32 %v4849, %v4814
  %v4851 = vadd.f32 %v4850, %v4816
  %v4852 = vadd.f32 %v4851, %v4818
  %v4853 = vrot.slane %v4852, 4
  %v4854 = vadd.f32 %v4852, %v4853
  %v4855 = vrot.slane %v4854, 2
  %v4856 = vadd.f32 %v4854, %v4855
  %v4857 = vrot.slane %v4856, 1
  %v4858 = vadd.f32 %v4856, %v4857
  %v4859 = vadd.f32 %v4805, %v4807
  %v4860 = vadd.f32 %v4859, %v4809
  %v4861 = vadd.f32 %v4860, %v4811
  %v4862 = vadd.f32 %v4861, %v4813
  %v4863 = vadd.f32 %v4862, %v4815
  %v4864 = vadd.f32 %v4863, %v4817
  %v4865 = vadd.f32 %v4864, %v4819
  %v4866 = vrot.slane %v4865, 4
  %v4867 = vadd.f32 %v4865, %v4866
  %v4868 = vrot.slane %v4867, 2
  %v4869 = vadd.f32 %v4867, %v4868
  %v4870 = vrot.slane %v4869, 1
  %v4871 = vadd.f32 %v4869, %v4870
  %v4872 = vadd.f32 %v4832, %v1935
  %v4873 = vadd.f32 %v4845, %v1935
  %v4874 = vadd.f32 %v4858, %v1935
  %v4875 = vadd.f32 %v4871, %v1935
  %v4876 = vxor.u32 %v4872, 2147483648
  %v4877 = vxor.u32 %v4873, 2147483648
  %v4878 = vxor.u32 %v4874, 2147483648
  %v4879 = vxor.u32 %v4875, 2147483648
  %v4880 = vmul.f32 %v4876, 1.442695
  %v4881 = vpow.pop %v4880
  %v4882 = vmul.f32 %v4877, 1.442695
  %v4883 = vpow.pop %v4882
  %v4884 = vmul.f32 %v4878, 1.442695
  %v4885 = vpow.pop %v4884
  %v4886 = vmul.f32 %v4879, 1.442695
  %v4887 = vpow.pop %v4886
  %v4888 = vadd.f32 %v4881, 1.0
  %v4889 = vadd.f32 %v4883, 1.0
  %v4890 = vadd.f32 %v4885, 1.0
  %v4891 = vadd.f32 %v4887, 1.0
  %v4892 = vrcp.pop %v4888
  %v4893 = vmul.f32 1.0, %v4892
  %v4894 = vrcp.pop %v4889
  %v4895 = vmul.f32 1.0, %v4894
  %v4896 = vrcp.pop %v4890
  %v4897 = vmul.f32 1.0, %v4896
  %v4898 = vrcp.pop %v4891
  %v4899 = vmul.f32 1.0, %v4898
  %v4904 = vsel %vm1969, %v4897, %v4893
  %v4905 = vsel %vm1969, %v4899, %v4895
  %v4906 = vsel %vm1312, %v4904, 0
  %v4908 = vsel %vm1312, %v4905, 0
  %4910 = vmatprep.subr.mxu0 %v4908
  %4911 = vmatpush1.msra.mxu0 %v4906
  %4912 = vmatprep.subr.mxu0 0.0
  %4913 = vmatpush1.msra.mxu0 0.0
  %4914 = vmatprep.subr.mxu0 0.0
  %4915 = vmatpush1.msra.mxu0 0.0
  %4916 = vmatprep.subr.mxu0 0.0
  %4917 = vmatpush1.msra.mxu0 0.0
  %4918 = vmatprep.subr.mxu0 0.0
  %4919 = vmatpush1.msra.mxu0 0.0
  %4920 = vmatprep.subr.mxu0 0.0
  %4921 = vmatpush1.msra.mxu0 0.0
  %4922 = vmatprep.subr.mxu0 0.0
  %4923 = vmatpush1.msra.mxu0 0.0
  %4924 = vmatprep.subr.mxu0 0.0
  %4925 = vmatpush1.msra.mxu0 0.0
  %4926 = vmatprep.subr.mxu0 0.0
  %4927 = vmatpush1.msra.mxu0 0.0
  %4928 = vmatprep.subr.mxu0 0.0
  %4929 = vmatpush1.msra.mxu0 0.0
  %4930 = vmatprep.subr.mxu0 0.0
  %4931 = vmatpush1.msra.mxu0 0.0
  %4932 = vmatprep.subr.mxu0 0.0
  %4933 = vmatpush1.msra.mxu0 0.0
  %4934 = vmatprep.subr.mxu0 0.0
  %4935 = vmatpush1.msra.mxu0 0.0
  %4936 = vmatprep.subr.mxu0 0.0
  %4937 = vmatpush1.msra.mxu0 0.0
  %4938 = vmatprep.subr.mxu0 0.0
  %4939 = vmatpush1.msra.mxu0 0.0
  %4940 = vmatprep.subr.mxu0 0.0
  %4941 = vmatpush1.msra.mxu0 0.0
  %4942 = vmatprep.subr.mxu0 0.0
  %4943 = vmatpush1.msra.mxu0 0.0
  %4944 = vmatprep.subr.mxu0 0.0
  %4945 = vmatpush1.msra.mxu0 0.0
  %4946 = vmatprep.subr.mxu0 0.0
  %4947 = vmatpush1.msra.mxu0 0.0
  %4948 = vmatprep.subr.mxu0 0.0
  %4949 = vmatpush1.msra.mxu0 0.0
  %4950 = vmatprep.subr.mxu0 0.0
  %4951 = vmatpush1.msra.mxu0 0.0
  %4952 = vmatprep.subr.mxu0 0.0
  %4953 = vmatpush1.msra.mxu0 0.0
  %4954 = vmatprep.subr.mxu0 0.0
  %4955 = vmatpush1.msra.mxu0 0.0
  %4956 = vmatprep.subr.mxu0 0.0
  %4957 = vmatpush1.msra.mxu0 0.0
  %4958 = vmatprep.subr.mxu0 0.0
  %4959 = vmatpush1.msra.mxu0 0.0
  %4960 = vmatprep.subr.mxu0 0.0
  %4961 = vmatpush1.msra.mxu0 0.0
  %4962 = vmatprep.subr.mxu0 0.0
  %4963 = vmatpush1.msra.mxu0 0.0
  %4964 = vmatprep.subr.mxu0 0.0
  %4965 = vmatpush1.msra.mxu0 0.0
  %4966 = vmatprep.subr.mxu0 0.0
  %4967 = vmatpush1.msra.mxu0 0.0
  %4968 = vmatprep.subr.mxu0 0.0
  %4969 = vmatpush1.msra.mxu0 0.0
  %4970 = vmatprep.subr.mxu0 0.0
  %4971 = vmatpush1.msra.mxu0 0.0
  %4972 = vmatprep.subr.mxu0 0.0
  %4973 = vmatpush1.msra.mxu0 0.0
  %4974 = vmatprep.mubr.f32.mxu0 0.0
  %4975 = vmatmul.mubr.f32.gmra.mrb[0].mxu0 %v1974
  %v4976 = vpop.f32.mrb[0].mxu0
  %v4977 = vadd.f32 0.0, %v4976
  %v4978 = vpop.f32.mrb[0].mxu0
  %v4979 = vadd.f32 0.0, %v4978
  %4980 = vmatprep.mubr.f32.mxu0 0.0
  %4981 = vmatmul.mubr.f32.gmra.mrb[0].mxu0 %v1977
  %v4982 = vpop.f32.mrb[0].mxu0
  %v4983 = vadd.f32 0.0, %v4982
  %v4984 = vpop.f32.mrb[0].mxu0
  %v4985 = vadd.f32 0.0, %v4984
  %4986 = vmatprep.mubr.f32.mxu0 0.0
  %4987 = vmatmul.mubr.f32.gmra.mrb[0].mxu0 %v1980
  %v4988 = vpop.f32.mrb[0].mxu0
  %v4989 = vadd.f32 0.0, %v4988
  %v4990 = vpop.f32.mrb[0].mxu0
  %v4991 = vadd.f32 0.0, %v4990
  %4992 = vmatprep.mubr.f32.mxu0 0.0
  %4993 = vmatmul.mubr.f32.gmra.mrb[0].mxu0 %v1983
  %v4994 = vpop.f32.mrb[0].mxu0
  %v4995 = vadd.f32 0.0, %v4994
  %v4996 = vpop.f32.mrb[0].mxu0
  %v4997 = vadd.f32 0.0, %v4996
  %4998 = vmatprep.mubr.f32.mxu0 0.0
  %4999 = vmatmul.mubr.f32.gmra.mrb[0].mxu0 %v1986
  %v5000 = vpop.f32.mrb[0].mxu0
  %v5001 = vadd.f32 0.0, %v5000
  %v5002 = vpop.f32.mrb[0].mxu0
  %v5003 = vadd.f32 0.0, %v5002
  %5004 = vmatprep.mubr.f32.mxu0 0.0
  %5005 = vmatmul.mubr.f32.gmra.mrb[0].mxu0 %v1989
  %v5006 = vpop.f32.mrb[0].mxu0
  %v5007 = vadd.f32 0.0, %v5006
  %v5008 = vpop.f32.mrb[0].mxu0
  %v5009 = vadd.f32 0.0, %v5008
  %5010 = vmatprep.mubr.f32.mxu0 0.0
  %5011 = vmatmul.mubr.f32.gmra.mrb[0].mxu0 %v1992
  %v5012 = vpop.f32.mrb[0].mxu0
  %v5013 = vadd.f32 0.0, %v5012
  %v5014 = vpop.f32.mrb[0].mxu0
  %v5015 = vadd.f32 0.0, %v5014
  %5016 = vmatprep.mubr.f32.mxu0 0.0
  %5017 = vmatmul.mubr.f32.gmra.mrb[0].mxu0 %v1995
  %v5018 = vpop.f32.mrb[0].mxu0
  %v5019 = vadd.f32 0.0, %v5018
  %v5020 = vpop.f32.mrb[0].mxu0
  %v5021 = vadd.f32 0.0, %v5020
  %5022 = vmatprep.mubr.f32.mxu0 0.0
  %5023 = vmatmul.mubr.f32.gmra.mrb[0].mxu0 %v1998
  %v5024 = vpop.f32.mrb[0].mxu0
  %v5025 = vadd.f32 0.0, %v5024
  %v5026 = vpop.f32.mrb[0].mxu0
  %v5027 = vadd.f32 0.0, %v5026
  %5028 = vmatprep.mubr.f32.mxu0 0.0
  %5029 = vmatmul.mubr.f32.gmra.mrb[0].mxu0 %v2001
  %v5030 = vpop.f32.mrb[0].mxu0
  %v5031 = vadd.f32 0.0, %v5030
  %v5032 = vpop.f32.mrb[0].mxu0
  %v5033 = vadd.f32 0.0, %v5032
  %5034 = vmatprep.mubr.f32.mxu0 0.0
  %5035 = vmatmul.mubr.f32.gmra.mrb[0].mxu0 %v2004
  %v5036 = vpop.f32.mrb[0].mxu0
  %v5037 = vadd.f32 0.0, %v5036
  %v5038 = vpop.f32.mrb[0].mxu0
  %v5039 = vadd.f32 0.0, %v5038
  %5040 = vmatprep.mubr.f32.mxu0 0.0
  %5041 = vmatmul.mubr.f32.gmra.mrb[0].mxu0 %v2007
  %v5042 = vpop.f32.mrb[0].mxu0
  %v5043 = vadd.f32 0.0, %v5042
  %v5044 = vpop.f32.mrb[0].mxu0
  %v5045 = vadd.f32 0.0, %v5044
  %5046 = vmatprep.mubr.f32.mxu0 0.0
  %5047 = vmatmul.mubr.f32.gmra.mrb[0].mxu0 %v2010
  %v5048 = vpop.f32.mrb[0].mxu0
  %v5049 = vadd.f32 0.0, %v5048
  %v5050 = vpop.f32.mrb[0].mxu0
  %v5051 = vadd.f32 0.0, %v5050
  %5052 = vdwg.mxu0
  %v5053 = vmul.f32 %v4359, %v4977
  %v5054 = vmul.f32 %v4361, %v4979
  %v5055 = vmul.f32 %v4363, %v4983
  %v5056 = vmul.f32 %v4365, %v4985
  %v5057 = vmul.f32 %v4369, %v4989
  %v5058 = vmul.f32 %v4371, %v4991
  %v5059 = vmul.f32 %v4373, %v4995
  %v5060 = vmul.f32 %v4375, %v4997
  %v5061 = vmul.f32 %v4379, %v5001
  %v5062 = vmul.f32 %v4381, %v5003
  %v5063 = vmul.f32 %v4383, %v5007
  %v5064 = vmul.f32 %v4385, %v5009
  %v5065 = vmul.f32 %v4389, %v5013
  %v5066 = vmul.f32 %v4391, %v5015
  %v5067 = vmul.f32 %v4393, %v5019
  %v5068 = vmul.f32 %v4395, %v5021
  %v5069 = vmul.f32 %v4399, %v5025
  %v5070 = vmul.f32 %v4401, %v5027
  %v5071 = vmul.f32 %v4403, %v5031
  %v5072 = vmul.f32 %v4405, %v5033
  %v5073 = vmul.f32 %v4409, %v5037
  %v5074 = vmul.f32 %v4411, %v5039
  %v5075 = vmul.f32 %v4413, %v5043
  %v5076 = vmul.f32 %v4415, %v5045
  %v5077 = vmul.f32 %v4419, %v5049
  %v5078 = vmul.f32 %v4421, %v5051
  %v5079 = vpack.c.bf16 %v5055, %v5053
  %v5080 = vpack.c.bf16 %v5056, %v5054
  %v5081 = vpack.c.bf16 %v5059, %v5057
  %v5082 = vpack.c.bf16 %v5060, %v5058
  %v5083 = vpack.c.bf16 %v5063, %v5061
  %v5084 = vpack.c.bf16 %v5064, %v5062
  %v5085 = vpack.c.bf16 %v5067, %v5065
  %v5086 = vpack.c.bf16 %v5068, %v5066
  %v5087 = vpack.c.bf16 %v5071, %v5069
  %v5088 = vpack.c.bf16 %v5072, %v5070
  %v5089 = vpack.c.bf16 %v5075, %v5073
  %v5090 = vpack.c.bf16 %v5076, %v5074
  %v5091 = vpack.c.bf16 %v5077, %v5077
  %v5092 = vpack.c.bf16 %v5078, %v5078
  %5093 = vmatprep.subr.bf16.mxu0 0
  %5094 = vmatpush1.bf16.msra.mxu0 %v2269
  %5095 = vmatprep.subr.bf16.mxu0 0
  %5096 = vmatpush1.bf16.msra.mxu0 %v2270
  %5097 = vmatprep.subr.bf16.mxu0 0
  %5098 = vmatpush1.bf16.msra.mxu0 %v2271
  %5099 = vmatprep.subr.bf16.mxu0 0
  %5100 = vmatpush1.bf16.msra.mxu0 %v2272
  %5101 = vmatprep.subr.bf16.mxu0 0
  %5102 = vmatpush1.bf16.msra.mxu0 %v2273
  %5103 = vmatprep.subr.bf16.mxu0 0
  %5104 = vmatpush1.bf16.msra.mxu0 %v2274
  %5105 = vmatprep.subr.bf16.mxu0 0
  %5106 = vmatpush1.bf16.msra.mxu0 %v2275
  %5107 = vmatprep.subr.bf16.mxu0 0
  %5108 = vmatpush1.bf16.msra.mxu0 %v2276
  %5109 = vmatprep.subr.bf16.mxu0 0
  %5110 = vmatpush1.bf16.msra.mxu0 %v2277
  %5111 = vmatprep.subr.bf16.mxu0 0
  %5112 = vmatpush1.bf16.msra.mxu0 %v2278
  %5113 = vmatprep.subr.bf16.mxu0 0
  %5114 = vmatpush1.bf16.msra.mxu0 %v2279
  %5115 = vmatprep.subr.bf16.mxu0 0
  %5116 = vmatpush1.bf16.msra.mxu0 %v2280
  %5117 = vmatprep.subr.bf16.mxu0 0
  %5118 = vmatpush1.bf16.msra.mxu0 %v2281
  %5119 = vmatprep.subr.bf16.mxu0 0
  %5120 = vmatpush1.bf16.msra.mxu0 %v2282
  %5121 = vmatprep.subr.bf16.mxu0 0
  %5122 = vmatpush1.bf16.msra.mxu0 %v2283
  %5123 = vmatprep.subr.bf16.mxu0 0
  %5124 = vmatpush1.bf16.msra.mxu0 %v2284
  %5125 = vmatprep.mubr.bf16.mxu0 %v5080
  %5126 = vmatmul.mubr.bf16.gmra.mrb[0].mxu0 %v5079
  %v5127 = vpop.f32.mrb[0].mxu0
  %v5128 = vadd.f32 %v2203, %v5127
  %v5129 = vpop.f32.mrb[0].mxu0
  %v5130 = vpop.f32.mrb[0].mxu0
  %v5131 = vadd.f32 %v2203, %v5130
  %v5132 = vpop.f32.mrb[0].mxu0
  %5133 = vmatprep.mubr.bf16.mxu0 %v5082
  %5134 = vmatmul.mubr.bf16.gmra.mrb[0].mxu0 %v5081
  %v5135 = vpop.f32.mrb[0].mxu0
  %v5136 = vadd.f32 %v2203, %v5135
  %v5137 = vpop.f32.mrb[0].mxu0
  %v5138 = vpop.f32.mrb[0].mxu0
  %v5139 = vadd.f32 %v2203, %v5138
  %v5140 = vpop.f32.mrb[0].mxu0
  %5141 = vmatprep.mubr.bf16.mxu0 %v5084
  %5142 = vmatmul.mubr.bf16.gmra.mrb[0].mxu0 %v5083
  %v5143 = vpop.f32.mrb[0].mxu0
  %v5144 = vadd.f32 %v2203, %v5143
  %v5145 = vpop.f32.mrb[0].mxu0
  %v5146 = vpop.f32.mrb[0].mxu0
  %v5147 = vadd.f32 %v2203, %v5146
  %v5148 = vpop.f32.mrb[0].mxu0
  %5149 = vmatprep.mubr.bf16.mxu0 %v5086
  %5150 = vmatmul.mubr.bf16.gmra.mrb[0].mxu0 %v5085
  %v5151 = vpop.f32.mrb[0].mxu0
  %v5152 = vadd.f32 %v2203, %v5151
  %v5153 = vpop.f32.mrb[0].mxu0
  %v5154 = vpop.f32.mrb[0].mxu0
  %v5155 = vadd.f32 %v2203, %v5154
  %v5156 = vpop.f32.mrb[0].mxu0
  %5157 = vmatprep.mubr.bf16.mxu0 %v5088
  %5158 = vmatmul.mubr.bf16.gmra.mrb[0].mxu0 %v5087
  %v5159 = vpop.f32.mrb[0].mxu0
  %v5160 = vadd.f32 %v2203, %v5159
  %v5161 = vpop.f32.mrb[0].mxu0
  %v5162 = vpop.f32.mrb[0].mxu0
  %v5163 = vadd.f32 %v2203, %v5162
  %v5164 = vpop.f32.mrb[0].mxu0
  %5165 = vmatprep.mubr.bf16.mxu0 %v5090
  %5166 = vmatmul.mubr.bf16.gmra.mrb[0].mxu0 %v5089
  %v5167 = vpop.f32.mrb[0].mxu0
  %v5168 = vadd.f32 %v2203, %v5167
  %v5169 = vpop.f32.mrb[0].mxu0
  %v5170 = vpop.f32.mrb[0].mxu0
  %v5171 = vadd.f32 %v2203, %v5170
  %v5172 = vpop.f32.mrb[0].mxu0
  %5173 = vmatprep.mubr.bf16.mxu0 %v5092
  %5174 = vmatmul.mubr.bf16.gmra.mrb[0].mxu0 %v5091
  %v5175 = vpop.f32.mrb[0].mxu0
  %v5176 = vadd.f32 %v2203, %v5175
  %v5177 = vpop.f32.mrb[0].mxu0
  %v5178 = vpop.f32.mrb[0].mxu0
  %v5179 = vpop.f32.mrb[0].mxu0
  %5180 = vdwg.mxu0
  %5181 = vmatprep.subr.bf16.mxu0 0
  %5182 = vmatpush1.bf16.msra.mxu0 %v2421
  %5183 = vmatprep.subr.bf16.mxu0 0
  %5184 = vmatpush1.bf16.msra.mxu0 %v2422
  %5185 = vmatprep.subr.bf16.mxu0 0
  %5186 = vmatpush1.bf16.msra.mxu0 %v2423
  %5187 = vmatprep.subr.bf16.mxu0 0
  %5188 = vmatpush1.bf16.msra.mxu0 %v2424
  %5189 = vmatprep.subr.bf16.mxu0 0
  %5190 = vmatpush1.bf16.msra.mxu0 %v2425
  %5191 = vmatprep.subr.bf16.mxu0 0
  %5192 = vmatpush1.bf16.msra.mxu0 %v2426
  %5193 = vmatprep.subr.bf16.mxu0 0
  %5194 = vmatpush1.bf16.msra.mxu0 %v2427
  %5195 = vmatprep.subr.bf16.mxu0 0
  %5196 = vmatpush1.bf16.msra.mxu0 %v2428
  %5197 = vmatprep.subr.bf16.mxu0 0
  %5198 = vmatpush1.bf16.msra.mxu0 0
  %5199 = vmatprep.subr.bf16.mxu0 0
  %5200 = vmatpush1.bf16.msra.mxu0 0
  %5201 = vmatprep.subr.bf16.mxu0 0
  %5202 = vmatpush1.bf16.msra.mxu0 0
  %5203 = vmatprep.subr.bf16.mxu0 0
  %5204 = vmatpush1.bf16.msra.mxu0 0
  %5205 = vmatprep.subr.bf16.mxu0 0
  %5206 = vmatpush1.bf16.msra.mxu0 0
  %5207 = vmatprep.subr.bf16.mxu0 0
  %5208 = vmatpush1.bf16.msra.mxu0 0
  %5209 = vmatprep.subr.bf16.mxu0 0
  %5210 = vmatpush1.bf16.msra.mxu0 0
  %5211 = vmatprep.subr.bf16.mxu0 0
  %5212 = vmatpush1.bf16.msra.mxu0 0
  %5213 = vmatprep.mubr.bf16.mxu0 0
  %5214 = vmatmul.mubr.bf16.gmra.mrb[0].mxu0 %v4504
  %v5215 = vpop.f32.mrb[0].mxu0
  %v5216 = vadd.f32 0.0, %v5215
  %v5217 = vpop.f32.mrb[0].mxu0
  %v5218 = vpop.f32.mrb[0].mxu0
  %v5219 = vpop.f32.mrb[0].mxu0
  %5220 = vdwg.mxu0
  %v5222 = vsel %vm1312, %v5216, 0
  %5224 = vmatprep.subr.mxu0 0.0
  %5225 = vmatpush1.msra.mxu0 %v5222
  %5226 = vmatprep.subr.mxu0 0.0
  %5227 = vmatpush1.msra.mxu0 0.0
  %5228 = vmatprep.subr.mxu0 0.0
  %5229 = vmatpush1.msra.mxu0 0.0
  %5230 = vmatprep.subr.mxu0 0.0
  %5231 = vmatpush1.msra.mxu0 0.0
  %5232 = vmatprep.subr.mxu0 0.0
  %5233 = vmatpush1.msra.mxu0 0.0
  %5234 = vmatprep.subr.mxu0 0.0
  %5235 = vmatpush1.msra.mxu0 0.0
  %5236 = vmatprep.subr.mxu0 0.0
  %5237 = vmatpush1.msra.mxu0 0.0
  %5238 = vmatprep.subr.mxu0 0.0
  %5239 = vmatpush1.msra.mxu0 0.0
  %5240 = vmatprep.subr.mxu0 0.0
  %5241 = vmatpush1.msra.mxu0 0.0
  %5242 = vmatprep.subr.mxu0 0.0
  %5243 = vmatpush1.msra.mxu0 0.0
  %5244 = vmatprep.subr.mxu0 0.0
  %5245 = vmatpush1.msra.mxu0 0.0
  %5246 = vmatprep.subr.mxu0 0.0
  %5247 = vmatpush1.msra.mxu0 0.0
  %5248 = vmatprep.subr.mxu0 0.0
  %5249 = vmatpush1.msra.mxu0 0.0
  %5250 = vmatprep.subr.mxu0 0.0
  %5251 = vmatpush1.msra.mxu0 0.0
  %5252 = vmatprep.subr.mxu0 0.0
  %5253 = vmatpush1.msra.mxu0 0.0
  %5254 = vmatprep.subr.mxu0 0.0
  %5255 = vmatpush1.msra.mxu0 0.0
  %5256 = vmatprep.subr.mxu0 0.0
  %5257 = vmatpush1.msra.mxu0 0.0
  %5258 = vmatprep.subr.mxu0 0.0
  %5259 = vmatpush1.msra.mxu0 0.0
  %5260 = vmatprep.subr.mxu0 0.0
  %5261 = vmatpush1.msra.mxu0 0.0
  %5262 = vmatprep.subr.mxu0 0.0
  %5263 = vmatpush1.msra.mxu0 0.0
  %5264 = vmatprep.subr.mxu0 0.0
  %5265 = vmatpush1.msra.mxu0 0.0
  %5266 = vmatprep.subr.mxu0 0.0
  %5267 = vmatpush1.msra.mxu0 0.0
  %5268 = vmatprep.subr.mxu0 0.0
  %5269 = vmatpush1.msra.mxu0 0.0
  %5270 = vmatprep.subr.mxu0 0.0
  %5271 = vmatpush1.msra.mxu0 0.0
  %5272 = vmatprep.subr.mxu0 0.0
  %5273 = vmatpush1.msra.mxu0 0.0
  %5274 = vmatprep.subr.mxu0 0.0
  %5275 = vmatpush1.msra.mxu0 0.0
  %5276 = vmatprep.subr.mxu0 0.0
  %5277 = vmatpush1.msra.mxu0 0.0
  %5278 = vmatprep.subr.mxu0 0.0
  %5279 = vmatpush1.msra.mxu0 0.0
  %5280 = vmatprep.subr.mxu0 0.0
  %5281 = vmatpush1.msra.mxu0 0.0
  %5282 = vmatprep.subr.mxu0 0.0
  %5283 = vmatpush1.msra.mxu0 0.0
  %5284 = vmatprep.subr.mxu0 0.0
  %5285 = vmatpush1.msra.mxu0 0.0
  %5286 = vmatprep.subr.mxu0 0.0
  %5287 = vmatpush1.msra.mxu0 0.0
  %5288 = vmatprep.mubr.f32.mxu0 0.0
  %5289 = vmatmul.mubr.f32.gmra.mrb[0].mxu0 %v1974
  %v5290 = vpop.f32.mrb[0].mxu0
  %v5291 = vadd.f32 0.0, %v5290
  %v5292 = vpop.f32.mrb[0].mxu0
  %5293 = vmatprep.mubr.f32.mxu0 0.0
  %5294 = vmatmul.mubr.f32.gmra.mrb[0].mxu0 %v1977
  %v5295 = vpop.f32.mrb[0].mxu0
  %v5296 = vadd.f32 0.0, %v5295
  %v5297 = vpop.f32.mrb[0].mxu0
  %5298 = vmatprep.mubr.f32.mxu0 0.0
  %5299 = vmatmul.mubr.f32.gmra.mrb[0].mxu0 %v1980
  %v5300 = vpop.f32.mrb[0].mxu0
  %v5301 = vadd.f32 0.0, %v5300
  %v5302 = vpop.f32.mrb[0].mxu0
  %5303 = vmatprep.mubr.f32.mxu0 0.0
  %5304 = vmatmul.mubr.f32.gmra.mrb[0].mxu0 %v1983
  %v5305 = vpop.f32.mrb[0].mxu0
  %v5306 = vadd.f32 0.0, %v5305
  %v5307 = vpop.f32.mrb[0].mxu0
  %5308 = vmatprep.mubr.f32.mxu0 0.0
  %5309 = vmatmul.mubr.f32.gmra.mrb[0].mxu0 %v1986
  %v5310 = vpop.f32.mrb[0].mxu0
  %v5311 = vadd.f32 0.0, %v5310
  %v5312 = vpop.f32.mrb[0].mxu0
  %5313 = vmatprep.mubr.f32.mxu0 0.0
  %5314 = vmatmul.mubr.f32.gmra.mrb[0].mxu0 %v1989
  %v5315 = vpop.f32.mrb[0].mxu0
  %v5316 = vadd.f32 0.0, %v5315
  %v5317 = vpop.f32.mrb[0].mxu0
  %5318 = vmatprep.mubr.f32.mxu0 0.0
  %5319 = vmatmul.mubr.f32.gmra.mrb[0].mxu0 %v1992
  %v5320 = vpop.f32.mrb[0].mxu0
  %v5321 = vadd.f32 0.0, %v5320
  %v5322 = vpop.f32.mrb[0].mxu0
  %5323 = vmatprep.mubr.f32.mxu0 0.0
  %5324 = vmatmul.mubr.f32.gmra.mrb[0].mxu0 %v1995
  %v5325 = vpop.f32.mrb[0].mxu0
  %v5326 = vadd.f32 0.0, %v5325
  %v5327 = vpop.f32.mrb[0].mxu0
  %5328 = vmatprep.mubr.f32.mxu0 0.0
  %5329 = vmatmul.mubr.f32.gmra.mrb[0].mxu0 %v1998
  %v5330 = vpop.f32.mrb[0].mxu0
  %v5331 = vadd.f32 0.0, %v5330
  %v5332 = vpop.f32.mrb[0].mxu0
  %5333 = vmatprep.mubr.f32.mxu0 0.0
  %5334 = vmatmul.mubr.f32.gmra.mrb[0].mxu0 %v2001
  %v5335 = vpop.f32.mrb[0].mxu0
  %v5336 = vadd.f32 0.0, %v5335
  %v5337 = vpop.f32.mrb[0].mxu0
  %5338 = vmatprep.mubr.f32.mxu0 0.0
  %5339 = vmatmul.mubr.f32.gmra.mrb[0].mxu0 %v2004
  %v5340 = vpop.f32.mrb[0].mxu0
  %v5341 = vadd.f32 0.0, %v5340
  %v5342 = vpop.f32.mrb[0].mxu0
  %5343 = vmatprep.mubr.f32.mxu0 0.0
  %5344 = vmatmul.mubr.f32.gmra.mrb[0].mxu0 %v2007
  %v5345 = vpop.f32.mrb[0].mxu0
  %v5346 = vadd.f32 0.0, %v5345
  %v5347 = vpop.f32.mrb[0].mxu0
  %5348 = vmatprep.mubr.f32.mxu0 0.0
  %5349 = vmatmul.mubr.f32.gmra.mrb[0].mxu0 %v2010
  %v5350 = vpop.f32.mrb[0].mxu0
  %v5351 = vadd.f32 0.0, %v5350
  %v5352 = vpop.f32.mrb[0].mxu0
  %5353 = vdwg.mxu0
  %v5354 = vadd.f32 %v5128, %v5291
  %v5355 = vadd.f32 %v5131, %v5296
  %v5356 = vadd.f32 %v5136, %v5301
  %v5357 = vadd.f32 %v5139, %v5306
  %v5358 = vadd.f32 %v5144, %v5311
  %v5359 = vadd.f32 %v5147, %v5316
  %v5360 = vadd.f32 %v5152, %v5321
  %v5361 = vadd.f32 %v5155, %v5326
  %v5362 = vadd.f32 %v5160, %v5331
  %v5363 = vadd.f32 %v5163, %v5336
  %v5364 = vadd.f32 %v5168, %v5341
  %v5365 = vadd.f32 %v5171, %v5346
  %v5366 = vadd.f32 %v5176, %v5351
  %v5367 = vtanh.pop %v5354
  %v5368 = vtanh.pop %v5355
  %v5369 = vtanh.pop %v5356
  %v5370 = vtanh.pop %v5357
  %v5371 = vtanh.pop %v5358
  %v5372 = vtanh.pop %v5359
  %v5373 = vtanh.pop %v5360
  %v5374 = vtanh.pop %v5361
  %v5375 = vtanh.pop %v5362
  %v5376 = vtanh.pop %v5363
  %v5377 = vtanh.pop %v5364
  %v5378 = vtanh.pop %v5365
  %v5379 = vtanh.pop %v5366
  %v5381 = vsel %vm2642, %v5367, 0
  %v5384 = vsel %vm2642, %v5368, 0
  %v5387 = vsel %vm2642, %v5369, 0
  %v5390 = vsel %vm2642, %v5370, 0
  %v5393 = vsel %vm2642, %v5371, 0
  %v5396 = vsel %vm2642, %v5372, 0
  %v5399 = vsel %vm2642, %v5373, 0
  %v5402 = vsel %vm2642, %v5374, 0
  %v5405 = vsel %vm2642, %v5375, 0
  %v5408 = vsel %vm2642, %v5376, 0
  %v5411 = vsel %vm2642, %v5377, 0
  %v5414 = vsel %vm2642, %v5378, 0
  %v5417 = vsel %vm2642, %v5379, 0
  %5419 = vmatprep.subr.mxu0 0.0
  %5420 = vmatpush1.msra.mxu0 %v256
  %5421 = vmatprep.subr.mxu0 0.0
  %5422 = vmatpush1.msra.mxu0 %v257
  %5423 = vmatprep.subr.mxu0 0.0
  %5424 = vmatpush1.msra.mxu0 %v258
  %5425 = vmatprep.subr.mxu0 0.0
  %5426 = vmatpush1.msra.mxu0 %v259
  %5427 = vmatprep.subr.mxu0 0.0
  %5428 = vmatpush1.msra.mxu0 %v260
  %5429 = vmatprep.subr.mxu0 0.0
  %5430 = vmatpush1.msra.mxu0 %v261
  %5431 = vmatprep.subr.mxu0 0.0
  %5432 = vmatpush1.msra.mxu0 %v262
  %5433 = vmatprep.subr.mxu0 0.0
  %5434 = vmatpush1.msra.mxu0 %v263
  %5435 = vmatprep.subr.mxu0 0.0
  %5436 = vmatpush1.msra.mxu0 0.0
  %5437 = vmatprep.subr.mxu0 0.0
  %5438 = vmatpush1.msra.mxu0 0.0
  %5439 = vmatprep.subr.mxu0 0.0
  %5440 = vmatpush1.msra.mxu0 0.0
  %5441 = vmatprep.subr.mxu0 0.0
  %5442 = vmatpush1.msra.mxu0 0.0
  %5443 = vmatprep.subr.mxu0 0.0
  %5444 = vmatpush1.msra.mxu0 0.0
  %5445 = vmatprep.subr.mxu0 0.0
  %5446 = vmatpush1.msra.mxu0 0.0
  %5447 = vmatprep.subr.mxu0 0.0
  %5448 = vmatpush1.msra.mxu0 0.0
  %5449 = vmatprep.subr.mxu0 0.0
  %5450 = vmatpush1.msra.mxu0 0.0
  %5451 = vmatprep.subr.mxu0 0.0
  %5452 = vmatpush1.msra.mxu0 0.0
  %5453 = vmatprep.subr.mxu0 0.0
  %5454 = vmatpush1.msra.mxu0 0.0
  %5455 = vmatprep.subr.mxu0 0.0
  %5456 = vmatpush1.msra.mxu0 0.0
  %5457 = vmatprep.subr.mxu0 0.0
  %5458 = vmatpush1.msra.mxu0 0.0
  %5459 = vmatprep.subr.mxu0 0.0
  %5460 = vmatpush1.msra.mxu0 0.0
  %5461 = vmatprep.subr.mxu0 0.0
  %5462 = vmatpush1.msra.mxu0 0.0
  %5463 = vmatprep.subr.mxu0 0.0
  %5464 = vmatpush1.msra.mxu0 0.0
  %5465 = vmatprep.subr.mxu0 0.0
  %5466 = vmatpush1.msra.mxu0 0.0
  %5467 = vmatprep.subr.mxu0 0.0
  %5468 = vmatpush1.msra.mxu0 0.0
  %5469 = vmatprep.subr.mxu0 0.0
  %5470 = vmatpush1.msra.mxu0 0.0
  %5471 = vmatprep.subr.mxu0 0.0
  %5472 = vmatpush1.msra.mxu0 0.0
  %5473 = vmatprep.subr.mxu0 0.0
  %5474 = vmatpush1.msra.mxu0 0.0
  %5475 = vmatprep.subr.mxu0 0.0
  %5476 = vmatpush1.msra.mxu0 0.0
  %5477 = vmatprep.subr.mxu0 0.0
  %5478 = vmatpush1.msra.mxu0 0.0
  %5479 = vmatprep.subr.mxu0 0.0
  %5480 = vmatpush1.msra.mxu0 0.0
  %5481 = vmatprep.subr.mxu0 0.0
  %5482 = vmatpush1.msra.mxu0 0.0
  %5483 = vmatprep.mubr.f32.mxu0 0.0
  %5484 = vmatmul.mubr.f32.gmra.mrb[0].mxu0 %v5381
  %v5485 = vpop.f32.mrb[0].mxu0
  %v5486 = vadd.f32 %v2640, %v5485
  %v5487 = vpop.f32.mrb[0].mxu0
  %5488 = vmatprep.mubr.f32.mxu0 0.0
  %5489 = vmatmul.mubr.f32.gmra.mrb[0].mxu0 %v5384
  %v5490 = vpop.f32.mrb[0].mxu0
  %v5491 = vadd.f32 %v2640, %v5490
  %v5492 = vpop.f32.mrb[0].mxu0
  %5493 = vmatprep.mubr.f32.mxu0 0.0
  %5494 = vmatmul.mubr.f32.gmra.mrb[0].mxu0 %v5387
  %v5495 = vpop.f32.mrb[0].mxu0
  %v5496 = vadd.f32 %v2640, %v5495
  %v5497 = vpop.f32.mrb[0].mxu0
  %5498 = vmatprep.mubr.f32.mxu0 0.0
  %5499 = vmatmul.mubr.f32.gmra.mrb[0].mxu0 %v5390
  %v5500 = vpop.f32.mrb[0].mxu0
  %v5501 = vadd.f32 %v2640, %v5500
  %v5502 = vpop.f32.mrb[0].mxu0
  %5503 = vmatprep.mubr.f32.mxu0 0.0
  %5504 = vmatmul.mubr.f32.gmra.mrb[0].mxu0 %v5393
  %v5505 = vpop.f32.mrb[0].mxu0
  %v5506 = vadd.f32 %v2640, %v5505
  %v5507 = vpop.f32.mrb[0].mxu0
  %5508 = vmatprep.mubr.f32.mxu0 0.0
  %5509 = vmatmul.mubr.f32.gmra.mrb[0].mxu0 %v5396
  %v5510 = vpop.f32.mrb[0].mxu0
  %v5511 = vadd.f32 %v2640, %v5510
  %v5512 = vpop.f32.mrb[0].mxu0
  %5513 = vmatprep.mubr.f32.mxu0 0.0
  %5514 = vmatmul.mubr.f32.gmra.mrb[0].mxu0 %v5399
  %v5515 = vpop.f32.mrb[0].mxu0
  %v5516 = vadd.f32 %v2640, %v5515
  %v5517 = vpop.f32.mrb[0].mxu0
  %5518 = vmatprep.mubr.f32.mxu0 0.0
  %5519 = vmatmul.mubr.f32.gmra.mrb[0].mxu0 %v5402
  %v5520 = vpop.f32.mrb[0].mxu0
  %v5521 = vadd.f32 %v2640, %v5520
  %v5522 = vpop.f32.mrb[0].mxu0
  %5523 = vmatprep.mubr.f32.mxu0 0.0
  %5524 = vmatmul.mubr.f32.gmra.mrb[0].mxu0 %v5405
  %v5525 = vpop.f32.mrb[0].mxu0
  %v5526 = vadd.f32 %v2640, %v5525
  %v5527 = vpop.f32.mrb[0].mxu0
  %5528 = vmatprep.mubr.f32.mxu0 0.0
  %5529 = vmatmul.mubr.f32.gmra.mrb[0].mxu0 %v5408
  %v5530 = vpop.f32.mrb[0].mxu0
  %v5531 = vadd.f32 %v2640, %v5530
  %v5532 = vpop.f32.mrb[0].mxu0
  %5533 = vmatprep.mubr.f32.mxu0 0.0
  %5534 = vmatmul.mubr.f32.gmra.mrb[0].mxu0 %v5411
  %v5535 = vpop.f32.mrb[0].mxu0
  %v5536 = vadd.f32 %v2640, %v5535
  %v5537 = vpop.f32.mrb[0].mxu0
  %5538 = vmatprep.mubr.f32.mxu0 0.0
  %5539 = vmatmul.mubr.f32.gmra.mrb[0].mxu0 %v5414
  %v5540 = vpop.f32.mrb[0].mxu0
  %v5541 = vadd.f32 %v2640, %v5540
  %v5542 = vpop.f32.mrb[0].mxu0
  %5543 = vmatprep.mubr.f32.mxu0 0.0
  %5544 = vmatmul.mubr.f32.gmra.mrb[0].mxu0 %v5417
  %v5545 = vpop.f32.mrb[0].mxu0
  %v5546 = vadd.f32 %v2640, %v5545
  %v5547 = vpop.f32.mrb[0].mxu0
  %5548 = vdwg.mxu0
  %v5549 = vsel %vm2812, %v5486, -inf
  %v5550 = vsel %vm2812, %v5491, -inf
  %v5551 = vsel %vm2812, %v5496, -inf
  %v5552 = vsel %vm2812, %v5501, -inf
  %v5553 = vsel %vm2812, %v5506, -inf
  %v5554 = vmax.f32 %v5549, %v5553
  %v5555 = vsel %vm2812, %v5511, -inf
  %v5556 = vmax.f32 %v5550, %v5555
  %v5557 = vsel %vm2812, %v5516, -inf
  %v5558 = vmax.f32 %v5551, %v5557
  %v5559 = vsel %vm2812, %v5521, -inf
  %v5560 = vmax.f32 %v5552, %v5559
  %v5561 = vsel %vm2812, %v5526, -inf
  %v5562 = vmax.f32 %v5554, %v5561
  %v5563 = vsel %vm2812, %v5531, -inf
  %v5564 = vmax.f32 %v5556, %v5563
  %v5565 = vsel %vm2812, %v5536, -inf
  %v5566 = vmax.f32 %v5558, %v5565
  %v5567 = vsel %vm2812, %v5541, -inf
  %v5568 = vmax.f32 %v5560, %v5567
  %v5569 = vsel %vm2833, %v5546, -inf
  %v5570 = vmax.f32 %v5562, %v5569
  %v5571 = vmax.f32 %v5570, %v5564
  %v5572 = vmax.f32 %v5566, %v5568
  %v5573 = vmax.f32 %v5571, %v5572
  %v5574 = vrot.slane %v5573, 4
  %v5575 = vmax.f32 %v5573, %v5574
  %v5576 = vrot.slane %v5575, 2
  %v5577 = vmax.f32 %v5575, %v5576
  %v5578 = vrot.slane %v5577, 1
  %v5579 = vmax.f32 %v5577, %v5578
  %v5580 = vsub.f32 %v5486, %v5579
  %v5581 = vsub.f32 %v5491, %v5579
  %v5582 = vsub.f32 %v5496, %v5579
  %v5583 = vsub.f32 %v5501, %v5579
  %v5584 = vsub.f32 %v5506, %v5579
  %v5585 = vsub.f32 %v5511, %v5579
  %v5586 = vsub.f32 %v5516, %v5579
  %v5587 = vsub.f32 %v5521, %v5579
  %v5588 = vsub.f32 %v5526, %v5579
  %v5589 = vsub.f32 %v5531, %v5579
  %v5590 = vsub.f32 %v5536, %v5579
  %v5591 = vsub.f32 %v5541, %v5579
  %v5592 = vsub.f32 %v5546, %v5579
  %v5593 = vmul.f32 %v5580, 1.442695
  %v5594 = vpow.pop %v5593
  %v5595 = vmul.f32 %v5581, 1.442695
  %v5596 = vpow.pop %v5595
  %v5597 = vmul.f32 %v5582, 1.442695
  %v5598 = vpow.pop %v5597
  %v5599 = vmul.f32 %v5583, 1.442695
  %v5600 = vpow.pop %v5599
  %v5601 = vmul.f32 %v5584, 1.442695
  %v5602 = vpow.pop %v5601
  %v5603 = vmul.f32 %v5585, 1.442695
  %v5604 = vpow.pop %v5603
  %v5605 = vmul.f32 %v5586, 1.442695
  %v5606 = vpow.pop %v5605
  %v5607 = vmul.f32 %v5587, 1.442695
  %v5608 = vpow.pop %v5607
  %v5609 = vmul.f32 %v5588, 1.442695
  %v5610 = vpow.pop %v5609
  %v5611 = vmul.f32 %v5589, 1.442695
  %v5612 = vpow.pop %v5611
  %v5613 = vmul.f32 %v5590, 1.442695
  %v5614 = vpow.pop %v5613
  %v5615 = vmul.f32 %v5591, 1.442695
  %v5616 = vpow.pop %v5615
  %v5617 = vmul.f32 %v5592, 1.442695
  %v5618 = vpow.pop %v5617
  %v5620 = vsel %vm1312, %v5618, 0
  %5622 = vmatprep.subr.mxu0 0.0
  %5623 = vmatpush1.msra.mxu0 %v5594
  %5624 = vmatprep.subr.mxu0 0.0
  %5625 = vmatpush1.msra.mxu0 %v5596
  %5626 = vmatprep.subr.mxu0 0.0
  %5627 = vmatpush1.msra.mxu0 %v5598
  %5628 = vmatprep.subr.mxu0 0.0
  %5629 = vmatpush1.msra.mxu0 %v5600
  %5630 = vmatprep.subr.mxu0 0.0
  %5631 = vmatpush1.msra.mxu0 %v5602
  %5632 = vmatprep.subr.mxu0 0.0
  %5633 = vmatpush1.msra.mxu0 %v5604
  %5634 = vmatprep.subr.mxu0 0.0
  %5635 = vmatpush1.msra.mxu0 %v5606
  %5636 = vmatprep.subr.mxu0 0.0
  %5637 = vmatpush1.msra.mxu0 %v5608
  %5638 = vmatprep.subr.mxu0 0.0
  %5639 = vmatpush1.msra.mxu0 %v5610
  %5640 = vmatprep.subr.mxu0 0.0
  %5641 = vmatpush1.msra.mxu0 %v5612
  %5642 = vmatprep.subr.mxu0 0.0
  %5643 = vmatpush1.msra.mxu0 %v5614
  %5644 = vmatprep.subr.mxu0 0.0
  %5645 = vmatpush1.msra.mxu0 %v5616
  %5646 = vmatprep.subr.mxu0 0.0
  %5647 = vmatpush1.msra.mxu0 %v5620
  %5648 = vmatprep.subr.mxu0 0.0
  %5649 = vmatpush1.msra.mxu0 0.0
  %5650 = vmatprep.subr.mxu0 0.0
  %5651 = vmatpush1.msra.mxu0 0.0
  %5652 = vmatprep.subr.mxu0 0.0
  %5653 = vmatpush1.msra.mxu0 0.0
  %5654 = vmatprep.subr.mxu0 0.0
  %5655 = vmatpush1.msra.mxu0 0.0
  %5656 = vmatprep.subr.mxu0 0.0
  %5657 = vmatpush1.msra.mxu0 0.0
  %5658 = vmatprep.subr.mxu0 0.0
  %5659 = vmatpush1.msra.mxu0 0.0
  %5660 = vmatprep.subr.mxu0 0.0
  %5661 = vmatpush1.msra.mxu0 0.0
  %5662 = vmatprep.subr.mxu0 0.0
  %5663 = vmatpush1.msra.mxu0 0.0
  %5664 = vmatprep.subr.mxu0 0.0
  %5665 = vmatpush1.msra.mxu0 0.0
  %5666 = vmatprep.subr.mxu0 0.0
  %5667 = vmatpush1.msra.mxu0 0.0
  %5668 = vmatprep.subr.mxu0 0.0
  %5669 = vmatpush1.msra.mxu0 0.0
  %5670 = vmatprep.subr.mxu0 0.0
  %5671 = vmatpush1.msra.mxu0 0.0
  %5672 = vmatprep.subr.mxu0 0.0
  %5673 = vmatpush1.msra.mxu0 0.0
  %5674 = vmatprep.subr.mxu0 0.0
  %5675 = vmatpush1.msra.mxu0 0.0
  %5676 = vmatprep.subr.mxu0 0.0
  %5677 = vmatpush1.msra.mxu0 0.0
  %5678 = vmatprep.subr.mxu0 0.0
  %5679 = vmatpush1.msra.mxu0 0.0
  %5680 = vmatprep.subr.mxu0 0.0
  %5681 = vmatpush1.msra.mxu0 0.0
  %5682 = vmatprep.subr.mxu0 0.0
  %5683 = vmatpush1.msra.mxu0 0.0
  %5684 = vmatprep.subr.mxu0 0.0
  %5685 = vmatpush1.msra.mxu0 0.0
  %5686 = vmatprep.mubr.f32.mxu0 0.0
  %5687 = vmatmul.mubr.f32.gmra.mrb[0].mxu0 %v1310
  %v5688 = vpop.f32.mrb[0].mxu0
  %v5689 = vadd.f32 0.0, %v5688
  %v5690 = vpop.f32.mrb[0].mxu0
  %5691 = vdwg.mxu0
  %v5692 = vrcp.pop %v5689
  %v5694 = vsel %vm1312, %v5692, 0
  %5696 = vmatprep.subr.mxu0 0.0
  %5697 = vmatpush1.msra.mxu0 %v5694
  %5698 = vmatprep.subr.mxu0 0.0
  %5699 = vmatpush1.msra.mxu0 0.0
  %5700 = vmatprep.subr.mxu0 0.0
  %5701 = vmatpush1.msra.mxu0 0.0
  %5702 = vmatprep.subr.mxu0 0.0
  %5703 = vmatpush1.msra.mxu0 0.0
  %5704 = vmatprep.subr.mxu0 0.0
  %5705 = vmatpush1.msra.mxu0 0.0
  %5706 = vmatprep.subr.mxu0 0.0
  %5707 = vmatpush1.msra.mxu0 0.0
  %5708 = vmatprep.subr.mxu0 0.0
  %5709 = vmatpush1.msra.mxu0 0.0
  %5710 = vmatprep.subr.mxu0 0.0
  %5711 = vmatpush1.msra.mxu0 0.0
  %5712 = vmatprep.subr.mxu0 0.0
  %5713 = vmatpush1.msra.mxu0 0.0
  %5714 = vmatprep.subr.mxu0 0.0
  %5715 = vmatpush1.msra.mxu0 0.0
  %5716 = vmatprep.subr.mxu0 0.0
  %5717 = vmatpush1.msra.mxu0 0.0
  %5718 = vmatprep.subr.mxu0 0.0
  %5719 = vmatpush1.msra.mxu0 0.0
  %5720 = vmatprep.subr.mxu0 0.0
  %5721 = vmatpush1.msra.mxu0 0.0
  %5722 = vmatprep.subr.mxu0 0.0
  %5723 = vmatpush1.msra.mxu0 0.0
  %5724 = vmatprep.subr.mxu0 0.0
  %5725 = vmatpush1.msra.mxu0 0.0
  %5726 = vmatprep.subr.mxu0 0.0
  %5727 = vmatpush1.msra.mxu0 0.0
  %5728 = vmatprep.subr.mxu0 0.0
  %5729 = vmatpush1.msra.mxu0 0.0
  %5730 = vmatprep.subr.mxu0 0.0
  %5731 = vmatpush1.msra.mxu0 0.0
  %5732 = vmatprep.subr.mxu0 0.0
  %5733 = vmatpush1.msra.mxu0 0.0
  %5734 = vmatprep.subr.mxu0 0.0
  %5735 = vmatpush1.msra.mxu0 0.0
  %5736 = vmatprep.subr.mxu0 0.0
  %5737 = vmatpush1.msra.mxu0 0.0
  %5738 = vmatprep.subr.mxu0 0.0
  %5739 = vmatpush1.msra.mxu0 0.0
  %5740 = vmatprep.subr.mxu0 0.0
  %5741 = vmatpush1.msra.mxu0 0.0
  %5742 = vmatprep.subr.mxu0 0.0
  %5743 = vmatpush1.msra.mxu0 0.0
  %5744 = vmatprep.subr.mxu0 0.0
  %5745 = vmatpush1.msra.mxu0 0.0
  %5746 = vmatprep.subr.mxu0 0.0
  %5747 = vmatpush1.msra.mxu0 0.0
  %5748 = vmatprep.subr.mxu0 0.0
  %5749 = vmatpush1.msra.mxu0 0.0
  %5750 = vmatprep.subr.mxu0 0.0
  %5751 = vmatpush1.msra.mxu0 0.0
  %5752 = vmatprep.subr.mxu0 0.0
  %5753 = vmatpush1.msra.mxu0 0.0
  %5754 = vmatprep.subr.mxu0 0.0
  %5755 = vmatpush1.msra.mxu0 0.0
  %5756 = vmatprep.subr.mxu0 0.0
  %5757 = vmatpush1.msra.mxu0 0.0
  %5758 = vmatprep.subr.mxu0 0.0
  %5759 = vmatpush1.msra.mxu0 0.0
  %5760 = vmatprep.mubr.f32.mxu0 0.0
  %5761 = vmatmul.mubr.f32.gmra.mrb[0].mxu0 %v1974
  %v5762 = vpop.f32.mrb[0].mxu0
  %v5763 = vadd.f32 0.0, %v5762
  %v5764 = vpop.f32.mrb[0].mxu0
  %5765 = vmatprep.mubr.f32.mxu0 0.0
  %5766 = vmatmul.mubr.f32.gmra.mrb[0].mxu0 %v1977
  %v5767 = vpop.f32.mrb[0].mxu0
  %v5768 = vadd.f32 0.0, %v5767
  %v5769 = vpop.f32.mrb[0].mxu0
  %5770 = vmatprep.mubr.f32.mxu0 0.0
  %5771 = vmatmul.mubr.f32.gmra.mrb[0].mxu0 %v1980
  %v5772 = vpop.f32.mrb[0].mxu0
  %v5773 = vadd.f32 0.0, %v5772
  %v5774 = vpop.f32.mrb[0].mxu0
  %5775 = vmatprep.mubr.f32.mxu0 0.0
  %5776 = vmatmul.mubr.f32.gmra.mrb[0].mxu0 %v1983
  %v5777 = vpop.f32.mrb[0].mxu0
  %v5778 = vadd.f32 0.0, %v5777
  %v5779 = vpop.f32.mrb[0].mxu0
  %5780 = vmatprep.mubr.f32.mxu0 0.0
  %5781 = vmatmul.mubr.f32.gmra.mrb[0].mxu0 %v1986
  %v5782 = vpop.f32.mrb[0].mxu0
  %v5783 = vadd.f32 0.0, %v5782
  %v5784 = vpop.f32.mrb[0].mxu0
  %5785 = vmatprep.mubr.f32.mxu0 0.0
  %5786 = vmatmul.mubr.f32.gmra.mrb[0].mxu0 %v1989
  %v5787 = vpop.f32.mrb[0].mxu0
  %v5788 = vadd.f32 0.0, %v5787
  %v5789 = vpop.f32.mrb[0].mxu0
  %5790 = vmatprep.mubr.f32.mxu0 0.0
  %5791 = vmatmul.mubr.f32.gmra.mrb[0].mxu0 %v1992
  %v5792 = vpop.f32.mrb[0].mxu0
  %v5793 = vadd.f32 0.0, %v5792
  %v5794 = vpop.f32.mrb[0].mxu0
  %5795 = vmatprep.mubr.f32.mxu0 0.0
  %5796 = vmatmul.mubr.f32.gmra.mrb[0].mxu0 %v1995
  %v5797 = vpop.f32.mrb[0].mxu0
  %v5798 = vadd.f32 0.0, %v5797
  %v5799 = vpop.f32.mrb[0].mxu0
  %5800 = vmatprep.mubr.f32.mxu0 0.0
  %5801 = vmatmul.mubr.f32.gmra.mrb[0].mxu0 %v1998
  %v5802 = vpop.f32.mrb[0].mxu0
  %v5803 = vadd.f32 0.0, %v5802
  %v5804 = vpop.f32.mrb[0].mxu0
  %5805 = vmatprep.mubr.f32.mxu0 0.0
  %5806 = vmatmul.mubr.f32.gmra.mrb[0].mxu0 %v2001
  %v5807 = vpop.f32.mrb[0].mxu0
  %v5808 = vadd.f32 0.0, %v5807
  %v5809 = vpop.f32.mrb[0].mxu0
  %5810 = vmatprep.mubr.f32.mxu0 0.0
  %5811 = vmatmul.mubr.f32.gmra.mrb[0].mxu0 %v2004
  %v5812 = vpop.f32.mrb[0].mxu0
  %v5813 = vadd.f32 0.0, %v5812
  %v5814 = vpop.f32.mrb[0].mxu0
  %5815 = vmatprep.mubr.f32.mxu0 0.0
  %5816 = vmatmul.mubr.f32.gmra.mrb[0].mxu0 %v2007
  %v5817 = vpop.f32.mrb[0].mxu0
  %v5818 = vadd.f32 0.0, %v5817
  %v5819 = vpop.f32.mrb[0].mxu0
  %5820 = vmatprep.mubr.f32.mxu0 0.0
  %5821 = vmatmul.mubr.f32.gmra.mrb[0].mxu0 %v2010
  %v5822 = vpop.f32.mrb[0].mxu0
  %v5823 = vadd.f32 0.0, %v5822
  %v5824 = vpop.f32.mrb[0].mxu0
  %5825 = vdwg.mxu0
  %v5826 = vmul.f32 %v5594, %v5763
  %v5827 = vmul.f32 %v5596, %v5768
  %v5828 = vmul.f32 %v5598, %v5773
  %v5829 = vmul.f32 %v5600, %v5778
  %v5830 = vmul.f32 %v5602, %v5783
  %v5831 = vmul.f32 %v5604, %v5788
  %v5832 = vmul.f32 %v5606, %v5793
  %v5833 = vmul.f32 %v5608, %v5798
  %v5834 = vmul.f32 %v5610, %v5803
  %v5835 = vmul.f32 %v5612, %v5808
  %v5836 = vmul.f32 %v5614, %v5813
  %v5837 = vmul.f32 %v5616, %v5818
  %v5838 = vmul.f32 %v5618, %v5823
  %5840 = vset.pattern.permute.xlu0 0
  %5841 = vperm.xlu0 %5840, %v5826
  %v5842 = vpop.permute.xlu0 %5841
  %5845 = vset.pattern.permute.xlu0 0
  %5846 = vperm.xlu0 %5845, %v5827
  %v5847 = vpop.permute.xlu0 %5846
  %5850 = vset.pattern.permute.xlu0 0
  %5851 = vperm.xlu0 %5850, %v5828
  %v5852 = vpop.permute.xlu0 %5851
  %5855 = vset.pattern.permute.xlu0 0
  %5856 = vperm.xlu0 %5855, %v5829
  %v5857 = vpop.permute.xlu0 %5856
  %5860 = vset.pattern.permute.xlu0 0
  %5861 = vperm.xlu0 %5860, %v5830
  %v5862 = vpop.permute.xlu0 %5861
  %5865 = vset.pattern.permute.xlu0 0
  %5866 = vperm.xlu0 %5865, %v5831
  %v5867 = vpop.permute.xlu0 %5866
  %5870 = vset.pattern.permute.xlu0 0
  %5871 = vperm.xlu0 %5870, %v5832
  %v5872 = vpop.permute.xlu0 %5871
  %5875 = vset.pattern.permute.xlu0 0
  %5876 = vperm.xlu0 %5875, %v5833
  %v5877 = vpop.permute.xlu0 %5876
  %5880 = vset.pattern.permute.xlu0 0
  %5881 = vperm.xlu0 %5880, %v5834
  %v5882 = vpop.permute.xlu0 %5881
  %5885 = vset.pattern.permute.xlu0 0
  %5886 = vperm.xlu0 %5885, %v5835
  %v5887 = vpop.permute.xlu0 %5886
  %5890 = vset.pattern.permute.xlu0 0
  %5891 = vperm.xlu0 %5890, %v5836
  %v5892 = vpop.permute.xlu0 %5891
  %5895 = vset.pattern.permute.xlu0 0
  %5896 = vperm.xlu0 %5895, %v5837
  %v5897 = vpop.permute.xlu0 %5896
  %5900 = vset.pattern.permute.xlu0 0
  %5901 = vperm.xlu0 %5900, %v5838
  %v5902 = vpop.permute.xlu0 %5901
  %v5904 = vmul.f32 %v5053, %v5842
  %v5905 = vmul.f32 %v5054, %v5842
  %v5906 = vmul.f32 %v5055, %v5847
  %v5907 = vmul.f32 %v5056, %v5847
  %v5908 = vmul.f32 %v5057, %v5852
  %v5909 = vmul.f32 %v5058, %v5852
  %v5910 = vmul.f32 %v5059, %v5857
  %v5911 = vmul.f32 %v5060, %v5857
  %v5912 = vmul.f32 %v5061, %v5862
  %v5913 = vmul.f32 %v5062, %v5862
  %v5914 = vmul.f32 %v5063, %v5867
  %v5915 = vmul.f32 %v5064, %v5867
  %v5916 = vmul.f32 %v5065, %v5872
  %v5917 = vmul.f32 %v5066, %v5872
  %v5918 = vmul.f32 %v5067, %v5877
  %v5919 = vmul.f32 %v5068, %v5877
  %v5920 = vmul.f32 %v5069, %v5882
  %v5921 = vmul.f32 %v5070, %v5882
  %v5922 = vmul.f32 %v5071, %v5887
  %v5923 = vmul.f32 %v5072, %v5887
  %v5924 = vmul.f32 %v5073, %v5892
  %v5925 = vmul.f32 %v5074, %v5892
  %v5926 = vmul.f32 %v5075, %v5897
  %v5927 = vmul.f32 %v5076, %v5897
  %v5928 = vmul.f32 %v5077, %v5902
  %v5929 = vmul.f32 %v5078, %v5902
  %v5931 = vsel %vm1312, %v5928, 0
  %v5934 = vsel %vm1312, %v5929, 0
  %5936 = vmatprep.subr.mxu0 %v5905
  %5937 = vmatpush1.msra.mxu0 %v5904
  %5938 = vmatprep.subr.mxu0 %v5907
  %5939 = vmatpush1.msra.mxu0 %v5906
  %5940 = vmatprep.subr.mxu0 %v5909
  %5941 = vmatpush1.msra.mxu0 %v5908
  %5942 = vmatprep.subr.mxu0 %v5911
  %5943 = vmatpush1.msra.mxu0 %v5910
  %5944 = vmatprep.subr.mxu0 %v5913
  %5945 = vmatpush1.msra.mxu0 %v5912
  %5946 = vmatprep.subr.mxu0 %v5915
  %5947 = vmatpush1.msra.mxu0 %v5914
  %5948 = vmatprep.subr.mxu0 %v5917
  %5949 = vmatpush1.msra.mxu0 %v5916
  %5950 = vmatprep.subr.mxu0 %v5919
  %5951 = vmatpush1.msra.mxu0 %v5918
  %5952 = vmatprep.subr.mxu0 %v5921
  %5953 = vmatpush1.msra.mxu0 %v5920
  %5954 = vmatprep.subr.mxu0 %v5923
  %5955 = vmatpush1.msra.mxu0 %v5922
  %5956 = vmatprep.subr.mxu0 %v5925
  %5957 = vmatpush1.msra.mxu0 %v5924
  %5958 = vmatprep.subr.mxu0 %v5927
  %5959 = vmatpush1.msra.mxu0 %v5926
  %5960 = vmatprep.subr.mxu0 %v5934
  %5961 = vmatpush1.msra.mxu0 %v5931
  %5962 = vmatprep.subr.mxu0 0.0
  %5963 = vmatpush1.msra.mxu0 0.0
  %5964 = vmatprep.subr.mxu0 0.0
  %5965 = vmatpush1.msra.mxu0 0.0
  %5966 = vmatprep.subr.mxu0 0.0
  %5967 = vmatpush1.msra.mxu0 0.0
  %5968 = vmatprep.subr.mxu0 0.0
  %5969 = vmatpush1.msra.mxu0 0.0
  %5970 = vmatprep.subr.mxu0 0.0
  %5971 = vmatpush1.msra.mxu0 0.0
  %5972 = vmatprep.subr.mxu0 0.0
  %5973 = vmatpush1.msra.mxu0 0.0
  %5974 = vmatprep.subr.mxu0 0.0
  %5975 = vmatpush1.msra.mxu0 0.0
  %5976 = vmatprep.subr.mxu0 0.0
  %5977 = vmatpush1.msra.mxu0 0.0
  %5978 = vmatprep.subr.mxu0 0.0
  %5979 = vmatpush1.msra.mxu0 0.0
  %5980 = vmatprep.subr.mxu0 0.0
  %5981 = vmatpush1.msra.mxu0 0.0
  %5982 = vmatprep.subr.mxu0 0.0
  %5983 = vmatpush1.msra.mxu0 0.0
  %5984 = vmatprep.subr.mxu0 0.0
  %5985 = vmatpush1.msra.mxu0 0.0
  %5986 = vmatprep.subr.mxu0 0.0
  %5987 = vmatpush1.msra.mxu0 0.0
  %5988 = vmatprep.subr.mxu0 0.0
  %5989 = vmatpush1.msra.mxu0 0.0
  %5990 = vmatprep.subr.mxu0 0.0
  %5991 = vmatpush1.msra.mxu0 0.0
  %5992 = vmatprep.subr.mxu0 0.0
  %5993 = vmatpush1.msra.mxu0 0.0
  %5994 = vmatprep.subr.mxu0 0.0
  %5995 = vmatpush1.msra.mxu0 0.0
  %5996 = vmatprep.subr.mxu0 0.0
  %5997 = vmatpush1.msra.mxu0 0.0
  %5998 = vmatprep.subr.mxu0 0.0
  %5999 = vmatpush1.msra.mxu0 0.0
  %6000 = vmatprep.mubr.f32.mxu0 0.0
  %6001 = vmatmul.mubr.f32.gmra.mrb[0].mxu0 %v1310
  %v6002 = vpop.f32.mrb[0].mxu0
  %v6003 = vadd.f32 0.0, %v6002
  %v6004 = vpop.f32.mrb[0].mxu0
  %v6005 = vadd.f32 0.0, %v6004
  %6006 = vdwg.mxu0
  %v6007 = vpack.c.bf16 %v6003, %v6003
  %v6008 = vpack.c.bf16 %v6005, %v6005
  %6009 = vmatprep.subr.bf16.mxu0 %v3451
  %6010 = vmatpush1.bf16.msra.mxu0 %v3450
  %6011 = vmatprep.subr.bf16.mxu0 %v3454
  %6012 = vmatpush1.bf16.msra.mxu0 %v3453
  %6013 = vmatprep.subr.bf16.mxu0 %v3457
  %6014 = vmatpush1.bf16.msra.mxu0 %v3456
  %6015 = vmatprep.subr.bf16.mxu0 %v3460
  %6016 = vmatpush1.bf16.msra.mxu0 %v3459
  %6017 = vmatprep.subr.bf16.mxu0 %v3463
  %6018 = vmatpush1.bf16.msra.mxu0 %v3462
  %6019 = vmatprep.subr.bf16.mxu0 %v3466
  %6020 = vmatpush1.bf16.msra.mxu0 %v3465
  %6021 = vmatprep.subr.bf16.mxu0 %v3469
  %6022 = vmatpush1.bf16.msra.mxu0 %v3468
  %6023 = vmatprep.subr.bf16.mxu0 %v3472
  %6024 = vmatpush1.bf16.msra.mxu0 %v3471
  %6025 = vmatprep.subr.bf16.mxu0 %v3475
  %6026 = vmatpush1.bf16.msra.mxu0 %v3474
  %6027 = vmatprep.subr.bf16.mxu0 %v3478
  %6028 = vmatpush1.bf16.msra.mxu0 %v3477
  %6029 = vmatprep.subr.bf16.mxu0 %v3481
  %6030 = vmatpush1.bf16.msra.mxu0 %v3480
  %6031 = vmatprep.subr.bf16.mxu0 %v3484
  %6032 = vmatpush1.bf16.msra.mxu0 %v3483
  %6033 = vmatprep.subr.bf16.mxu0 %v3487
  %6034 = vmatpush1.bf16.msra.mxu0 %v3486
  %6035 = vmatprep.subr.bf16.mxu0 %v3490
  %6036 = vmatpush1.bf16.msra.mxu0 %v3489
  %6037 = vmatprep.subr.bf16.mxu0 %v3493
  %6038 = vmatpush1.bf16.msra.mxu0 %v3492
  %6039 = vmatprep.subr.bf16.mxu0 %v3496
  %6040 = vmatpush1.bf16.msra.mxu0 %v3495
  %6041 = vmatprep.mubr.bf16.mxu0 %v6008
  %6042 = vmatmul.mubr.bf16.gmra.mrb[0].mxu0 %v6007
  %v6043 = vpop.f32.mrb[0].mxu0
  %v6044 = vadd.f32 %v3278, %v6043
  %v6045 = vpop.f32.mrb[0].mxu0
  %v6046 = vadd.f32 %v3282, %v6045
  %v6047 = vpop.f32.mrb[0].mxu0
  %v6048 = vpop.f32.mrb[0].mxu0
  %6049 = vdwg.mxu0
  %6050 = vmatprep.subr.bf16.mxu0 0
  %6051 = vmatpush1.bf16.msra.mxu0 %v3452
  %6052 = vmatprep.subr.bf16.mxu0 0
  %6053 = vmatpush1.bf16.msra.mxu0 %v3455
  %6054 = vmatprep.subr.bf16.mxu0 0
  %6055 = vmatpush1.bf16.msra.mxu0 %v3458
  %6056 = vmatprep.subr.bf16.mxu0 0
  %6057 = vmatpush1.bf16.msra.mxu0 %v3461
  %6058 = vmatprep.subr.bf16.mxu0 0
  %6059 = vmatpush1.bf16.msra.mxu0 %v3464
  %6060 = vmatprep.subr.bf16.mxu0 0
  %6061 = vmatpush1.bf16.msra.mxu0 %v3467
  %6062 = vmatprep.subr.bf16.mxu0 0
  %6063 = vmatpush1.bf16.msra.mxu0 %v3470
  %6064 = vmatprep.subr.bf16.mxu0 0
  %6065 = vmatpush1.bf16.msra.mxu0 %v3473
  %6066 = vmatprep.subr.bf16.mxu0 0
  %6067 = vmatpush1.bf16.msra.mxu0 %v3476
  %6068 = vmatprep.subr.bf16.mxu0 0
  %6069 = vmatpush1.bf16.msra.mxu0 %v3479
  %6070 = vmatprep.subr.bf16.mxu0 0
  %6071 = vmatpush1.bf16.msra.mxu0 %v3482
  %6072 = vmatprep.subr.bf16.mxu0 0
  %6073 = vmatpush1.bf16.msra.mxu0 %v3485
  %6074 = vmatprep.subr.bf16.mxu0 0
  %6075 = vmatpush1.bf16.msra.mxu0 %v3488
  %6076 = vmatprep.subr.bf16.mxu0 0
  %6077 = vmatpush1.bf16.msra.mxu0 %v3491
  %6078 = vmatprep.subr.bf16.mxu0 0
  %6079 = vmatpush1.bf16.msra.mxu0 %v3494
  %6080 = vmatprep.subr.bf16.mxu0 0
  %6081 = vmatpush1.bf16.msra.mxu0 %v3497
  %6082 = vmatprep.mubr.bf16.mxu0 %v6008
  %6083 = vmatmul.mubr.bf16.gmra.mrb[0].mxu0 %v6007
  %v6084 = vpop.f32.mrb[0].mxu0
  %v6085 = vadd.f32 %v3286, %v6084
  %v6086 = vpop.f32.mrb[0].mxu0
  %v6087 = vpop.f32.mrb[0].mxu0
  %v6088 = vpop.f32.mrb[0].mxu0
  %6089 = vdwg.mxu0
  %6090 = vmatprep.subr.bf16.mxu0 %v3724
  %6091 = vmatpush1.bf16.msra.mxu0 %v3723
  %6092 = vmatprep.subr.bf16.mxu0 %v3727
  %6093 = vmatpush1.bf16.msra.mxu0 %v3726
  %6094 = vmatprep.subr.bf16.mxu0 %v3730
  %6095 = vmatpush1.bf16.msra.mxu0 %v3729
  %6096 = vmatprep.subr.bf16.mxu0 %v3733
  %6097 = vmatpush1.bf16.msra.mxu0 %v3732
  %6098 = vmatprep.subr.bf16.mxu0 %v3736
  %6099 = vmatpush1.bf16.msra.mxu0 %v3735
  %6100 = vmatprep.subr.bf16.mxu0 %v3739
  %6101 = vmatpush1.bf16.msra.mxu0 %v3738
  %6102 = vmatprep.subr.bf16.mxu0 %v3742
  %6103 = vmatpush1.bf16.msra.mxu0 %v3741
  %6104 = vmatprep.subr.bf16.mxu0 %v3745
  %6105 = vmatpush1.bf16.msra.mxu0 %v3744
  %6106 = vmatprep.subr.bf16.mxu0 0
  %6107 = vmatpush1.bf16.msra.mxu0 0
  %6108 = vmatprep.subr.bf16.mxu0 0
  %6109 = vmatpush1.bf16.msra.mxu0 0
  %6110 = vmatprep.subr.bf16.mxu0 0
  %6111 = vmatpush1.bf16.msra.mxu0 0
  %6112 = vmatprep.subr.bf16.mxu0 0
  %6113 = vmatpush1.bf16.msra.mxu0 0
  %6114 = vmatprep.subr.bf16.mxu0 0
  %6115 = vmatpush1.bf16.msra.mxu0 0
  %6116 = vmatprep.subr.bf16.mxu0 0
  %6117 = vmatpush1.bf16.msra.mxu0 0
  %6118 = vmatprep.subr.bf16.mxu0 0
  %6119 = vmatpush1.bf16.msra.mxu0 0
  %6120 = vmatprep.subr.bf16.mxu0 0
  %6121 = vmatpush1.bf16.msra.mxu0 0
  %6122 = vmatprep.mubr.bf16.mxu0 0
  %6123 = vmatmul.mubr.bf16.gmra.mrb[0].mxu0 %v4504
  %v6124 = vpop.f32.mrb[0].mxu0
  %v6125 = vadd.f32 %v3631, %v6124
  %v6126 = vpop.f32.mrb[0].mxu0
  %v6127 = vadd.f32 %v3635, %v6126
  %v6128 = vpop.f32.mrb[0].mxu0
  %v6129 = vpop.f32.mrb[0].mxu0
  %6130 = vdwg.mxu0
  %6131 = vmatprep.subr.bf16.mxu0 0
  %6132 = vmatpush1.bf16.msra.mxu0 %v3725
  %6133 = vmatprep.subr.bf16.mxu0 0
  %6134 = vmatpush1.bf16.msra.mxu0 %v3728
  %6135 = vmatprep.subr.bf16.mxu0 0
  %6136 = vmatpush1.bf16.msra.mxu0 %v3731
  %6137 = vmatprep.subr.bf16.mxu0 0
  %6138 = vmatpush1.bf16.msra.mxu0 %v3734
  %6139 = vmatprep.subr.bf16.mxu0 0
  %6140 = vmatpush1.bf16.msra.mxu0 %v3737
  %6141 = vmatprep.subr.bf16.mxu0 0
  %6142 = vmatpush1.bf16.msra.mxu0 %v3740
  %6143 = vmatprep.subr.bf16.mxu0 0
  %6144 = vmatpush1.bf16.msra.mxu0 %v3743
  %6145 = vmatprep.subr.bf16.mxu0 0
  %6146 = vmatpush1.bf16.msra.mxu0 %v3746
  %6147 = vmatprep.subr.bf16.mxu0 0
  %6148 = vmatpush1.bf16.msra.mxu0 0
  %6149 = vmatprep.subr.bf16.mxu0 0
  %6150 = vmatpush1.bf16.msra.mxu0 0
  %6151 = vmatprep.subr.bf16.mxu0 0
  %6152 = vmatpush1.bf16.msra.mxu0 0
  %6153 = vmatprep.subr.bf16.mxu0 0
  %6154 = vmatpush1.bf16.msra.mxu0 0
  %6155 = vmatprep.subr.bf16.mxu0 0
  %6156 = vmatpush1.bf16.msra.mxu0 0
  %6157 = vmatprep.subr.bf16.mxu0 0
  %6158 = vmatpush1.bf16.msra.mxu0 0
  %6159 = vmatprep.subr.bf16.mxu0 0
  %6160 = vmatpush1.bf16.msra.mxu0 0
  %6161 = vmatprep.subr.bf16.mxu0 0
  %6162 = vmatpush1.bf16.msra.mxu0 0
  %6163 = vmatprep.mubr.bf16.mxu0 0
  %6164 = vmatmul.mubr.bf16.gmra.mrb[0].mxu0 %v4504
  %v6165 = vpop.f32.mrb[0].mxu0
  %v6166 = vadd.f32 %v3639, %v6165
  %v6167 = vpop.f32.mrb[0].mxu0
  %v6168 = vpop.f32.mrb[0].mxu0
  %v6169 = vpop.f32.mrb[0].mxu0
  %6170 = vdwg.mxu0
  %v6171 = vadd.f32 %v6044, %v6125
  %v6172 = vxor.u32 %v6171, 2147483648
  %v6173 = vmul.f32 %v6172, 1.442695
  %v6174 = vpow.pop %v6173
  %v6175 = vadd.f32 %v6174, 1.0
  %v6176 = vrcp.pop %v6175
  %v6177 = vmul.f32 1.0, %v6176
  %v6178 = vadd.f32 %v6046, %v6127
  %v6179 = vxor.u32 %v6178, 2147483648
  %v6180 = vmul.f32 %v6179, 1.442695
  %v6181 = vpow.pop %v6180
  %v6182 = vadd.f32 %v6181, 1.0
  %v6183 = vrcp.pop %v6182
  %v6184 = vmul.f32 1.0, %v6183
  %v6185 = vmul.f32 %v6177, %v6166
  %v6186 = vadd.f32 %v6085, %v6185
  %v6187 = vtanh.pop %v6186
  %v6188 = vsub.f32 1.0, %v6184
  %v6189 = vmul.f32 %v6188, %v6187
  %v6190 = vmul.f32 %v6184, %v3872
  %v6191 = vadd.f32 %v6189, %v6190
  %s6192 = scalar_lea.vmem %s0, 104
  %v6193 = vld [vmem:[%s6192] sm:$0xf]
  %v6194 = vld [vmem:[%s6192 + $0x4] sm:$0xf]
  %v6195 = vld [vmem:[%s6192 + $0x8] sm:$0xf]
  %v6196 = vld [vmem:[%s6192 + $0xc] sm:$0xf]
  %v6197 = vld [vmem:[%s6192 + $0x10] sm:$0xf]
  %v6198 = vld [vmem:[%s6192 + $0x14] sm:$0xf]
  %v6199 = vld [vmem:[%s6192 + $0x18] sm:$0xf]
  %v6200 = vld [vmem:[%s6192 + $0x1c] sm:$0xf]
  %v6201 = vld [vmem:[%s6192 + $0x20] sm:$0xf]
  %v6202 = vld [vmem:[%s6192 + $0x24] sm:$0xf]
  %v6203 = vld [vmem:[%s6192 + $0x28] sm:$0xf]
  %v6204 = vld [vmem:[%s6192 + $0x2c] sm:$0xf]
  %v6205 = vld [vmem:[%s6192 + $0x30] sm:$0x1]
  %v6219 = vunpack.c.l.b16 %v6193
  %v6220 = vunpack.c.l.b16 %v6194
  %v6221 = vunpack.c.l.b16 %v6195
  %v6222 = vunpack.c.l.b16 %v6196
  %v6223 = vunpack.c.l.b16 %v6197
  %v6224 = vunpack.c.l.b16 %v6198
  %v6225 = vunpack.c.l.b16 %v6199
  %v6226 = vunpack.c.l.b16 %v6200
  %v6227 = vunpack.c.l.b16 %v6201
  %v6228 = vunpack.c.l.b16 %v6202
  %v6229 = vunpack.c.l.b16 %v6203
  %v6230 = vunpack.c.l.b16 %v6204
  %v6231 = vunpack.c.l.b16 %v6205
  %v6232 = vpack.c.b16 %v6220, %v6219
  %v6233 = vpack.c.b16 %v6222, %v6221
  %v6234 = vpack.c.b16 %v6224, %v6223
  %v6235 = vpack.c.b16 %v6226, %v6225
  %v6236 = vpack.c.b16 %v6228, %v6227
  %v6237 = vpack.c.b16 %v6230, %v6229
  %v6238 = vpack.c.b16 %v6231, %v6231
  %v6240 = vsel %vm471, %v6232, 0
  %v6243 = vsel %vm471, %v6233, 0
  %v6246 = vsel %vm471, %v6234, 0
  %v6249 = vsel %vm471, %v6235, 0
  %v6252 = vsel %vm471, %v6236, 0
  %v6255 = vsel %vm471, %v6237, 0
  %v6258 = vsel %vm471, %v6238, 0
  %6260 = vmatprep.subr.bf16.mxu0 %v456
  %6261 = vmatpush1.bf16.msra.mxu0 %v455
  %6262 = vmatprep.subr.bf16.mxu0 %v460
  %6263 = vmatpush1.bf16.msra.mxu0 %v459
  %6264 = vmatprep.subr.bf16.mxu0 0
  %6265 = vmatpush1.bf16.msra.mxu0 0
  %6266 = vmatprep.subr.bf16.mxu0 0
  %6267 = vmatpush1.bf16.msra.mxu0 0
  %6268 = vmatprep.subr.bf16.mxu0 0
  %6269 = vmatpush1.bf16.msra.mxu0 0
  %6270 = vmatprep.subr.bf16.mxu0 0
  %6271 = vmatpush1.bf16.msra.mxu0 0
  %6272 = vmatprep.subr.bf16.mxu0 0
  %6273 = vmatpush1.bf16.msra.mxu0 0
  %6274 = vmatprep.subr.bf16.mxu0 0
  %6275 = vmatpush1.bf16.msra.mxu0 0
  %6276 = vmatprep.subr.bf16.mxu0 0
  %6277 = vmatpush1.bf16.msra.mxu0 0
  %6278 = vmatprep.subr.bf16.mxu0 0
  %6279 = vmatpush1.bf16.msra.mxu0 0
  %6280 = vmatprep.subr.bf16.mxu0 0
  %6281 = vmatpush1.bf16.msra.mxu0 0
  %6282 = vmatprep.subr.bf16.mxu0 0
  %6283 = vmatpush1.bf16.msra.mxu0 0
  %6284 = vmatprep.subr.bf16.mxu0 0
  %6285 = vmatpush1.bf16.msra.mxu0 0
  %6286 = vmatprep.subr.bf16.mxu0 0
  %6287 = vmatpush1.bf16.msra.mxu0 0
  %6288 = vmatprep.subr.bf16.mxu0 0
  %6289 = vmatpush1.bf16.msra.mxu0 0
  %6290 = vmatprep.subr.bf16.mxu0 0
  %6291 = vmatpush1.bf16.msra.mxu0 0
  %6292 = vmatprep.mubr.bf16.mxu0 0
  %6293 = vmatmul.mubr.bf16.gmra.mrb[0].mxu0 %v6240
  %v6294 = vpop.f32.mrb[0].mxu0
  %v6295 = vadd.f32 %v381, %v6294
  %v6296 = vpop.f32.mrb[0].mxu0
  %v6297 = vadd.f32 %v385, %v6296
  %v6298 = vpop.f32.mrb[0].mxu0
  %v6299 = vadd.f32 %v381, %v6298
  %v6300 = vpop.f32.mrb[0].mxu0
  %v6301 = vadd.f32 %v385, %v6300
  %6302 = vmatprep.mubr.bf16.mxu0 0
  %6303 = vmatmul.mubr.bf16.gmra.mrb[0].mxu0 %v6243
  %v6304 = vpop.f32.mrb[0].mxu0
  %v6305 = vadd.f32 %v381, %v6304
  %v6306 = vpop.f32.mrb[0].mxu0
  %v6307 = vadd.f32 %v385, %v6306
  %v6308 = vpop.f32.mrb[0].mxu0
  %v6309 = vadd.f32 %v381, %v6308
  %v6310 = vpop.f32.mrb[0].mxu0
  %v6311 = vadd.f32 %v385, %v6310
  %6312 = vmatprep.mubr.bf16.mxu0 0
  %6313 = vmatmul.mubr.bf16.gmra.mrb[0].mxu0 %v6246
  %v6314 = vpop.f32.mrb[0].mxu0
  %v6315 = vadd.f32 %v381, %v6314
  %v6316 = vpop.f32.mrb[0].mxu0
  %v6317 = vadd.f32 %v385, %v6316
  %v6318 = vpop.f32.mrb[0].mxu0
  %v6319 = vadd.f32 %v381, %v6318
  %v6320 = vpop.f32.mrb[0].mxu0
  %v6321 = vadd.f32 %v385, %v6320
  %6322 = vmatprep.mubr.bf16.mxu0 0
  %6323 = vmatmul.mubr.bf16.gmra.mrb[0].mxu0 %v6249
  %v6324 = vpop.f32.mrb[0].mxu0
  %v6325 = vadd.f32 %v381, %v6324
  %v6326 = vpop.f32.mrb[0].mxu0
  %v6327 = vadd.f32 %v385, %v6326
  %v6328 = vpop.f32.mrb[0].mxu0
  %v6329 = vadd.f32 %v381, %v6328
  %v6330 = vpop.f32.mrb[0].mxu0
  %v6331 = vadd.f32 %v385, %v6330
  %6332 = vmatprep.mubr.bf16.mxu0 0
  %6333 = vmatmul.mubr.bf16.gmra.mrb[0].mxu0 %v6252
  %v6334 = vpop.f32.mrb[0].mxu0
  %v6335 = vadd.f32 %v381, %v6334
  %v6336 = vpop.f32.mrb[0].mxu0
  %v6337 = vadd.f32 %v385, %v6336
  %v6338 = vpop.f32.mrb[0].mxu0
  %v6339 = vadd.f32 %v381, %v6338
  %v6340 = vpop.f32.mrb[0].mxu0
  %v6341 = vadd.f32 %v385, %v6340
  %6342 = vmatprep.mubr.bf16.mxu0 0
  %6343 = vmatmul.mubr.bf16.gmra.mrb[0].mxu0 %v6255
  %v6344 = vpop.f32.mrb[0].mxu0
  %v6345 = vadd.f32 %v381, %v6344
  %v6346 = vpop.f32.mrb[0].mxu0
  %v6347 = vadd.f32 %v385, %v6346
  %v6348 = vpop.f32.mrb[0].mxu0
  %v6349 = vadd.f32 %v381, %v6348
  %v6350 = vpop.f32.mrb[0].mxu0
  %v6351 = vadd.f32 %v385, %v6350
  %6352 = vmatprep.mubr.bf16.mxu0 0
  %6353 = vmatmul.mubr.bf16.gmra.mrb[0].mxu0 %v6258
  %v6354 = vpop.f32.mrb[0].mxu0
  %v6355 = vadd.f32 %v381, %v6354
  %v6356 = vpop.f32.mrb[0].mxu0
  %v6357 = vadd.f32 %v385, %v6356
  %v6358 = vpop.f32.mrb[0].mxu0
  %v6359 = vpop.f32.mrb[0].mxu0
  %6360 = vdwg.mxu0
  %6361 = vmatprep.subr.bf16.mxu0 %v458
  %6362 = vmatpush1.bf16.msra.mxu0 %v457
  %6363 = vmatprep.subr.bf16.mxu0 %v462
  %6364 = vmatpush1.bf16.msra.mxu0 %v461
  %6365 = vmatprep.subr.bf16.mxu0 0
  %6366 = vmatpush1.bf16.msra.mxu0 0
  %6367 = vmatprep.subr.bf16.mxu0 0
  %6368 = vmatpush1.bf16.msra.mxu0 0
  %6369 = vmatprep.subr.bf16.mxu0 0
  %6370 = vmatpush1.bf16.msra.mxu0 0
  %6371 = vmatprep.subr.bf16.mxu0 0
  %6372 = vmatpush1.bf16.msra.mxu0 0
  %6373 = vmatprep.subr.bf16.mxu0 0
  %6374 = vmatpush1.bf16.msra.mxu0 0
  %6375 = vmatprep.subr.bf16.mxu0 0
  %6376 = vmatpush1.bf16.msra.mxu0 0
  %6377 = vmatprep.subr.bf16.mxu0 0
  %6378 = vmatpush1.bf16.msra.mxu0 0
  %6379 = vmatprep.subr.bf16.mxu0 0
  %6380 = vmatpush1.bf16.msra.mxu0 0
  %6381 = vmatprep.subr.bf16.mxu0 0
  %6382 = vmatpush1.bf16.msra.mxu0 0
  %6383 = vmatprep.subr.bf16.mxu0 0
  %6384 = vmatpush1.bf16.msra.mxu0 0
  %6385 = vmatprep.subr.bf16.mxu0 0
  %6386 = vmatpush1.bf16.msra.mxu0 0
  %6387 = vmatprep.subr.bf16.mxu0 0
  %6388 = vmatpush1.bf16.msra.mxu0 0
  %6389 = vmatprep.subr.bf16.mxu0 0
  %6390 = vmatpush1.bf16.msra.mxu0 0
  %6391 = vmatprep.subr.bf16.mxu0 0
  %6392 = vmatpush1.bf16.msra.mxu0 0
  %6393 = vmatprep.mubr.bf16.mxu0 0
  %6394 = vmatmul.mubr.bf16.gmra.mrb[0].mxu0 %v6240
  %v6395 = vpop.f32.mrb[0].mxu0
  %v6396 = vadd.f32 %v389, %v6395
  %v6397 = vpop.f32.mrb[0].mxu0
  %v6398 = vadd.f32 %v393, %v6397
  %v6399 = vpop.f32.mrb[0].mxu0
  %v6400 = vadd.f32 %v389, %v6399
  %v6401 = vpop.f32.mrb[0].mxu0
  %v6402 = vadd.f32 %v393, %v6401
  %6403 = vmatprep.mubr.bf16.mxu0 0
  %6404 = vmatmul.mubr.bf16.gmra.mrb[0].mxu0 %v6243
  %v6405 = vpop.f32.mrb[0].mxu0
  %v6406 = vadd.f32 %v389, %v6405
  %v6407 = vpop.f32.mrb[0].mxu0
  %v6408 = vadd.f32 %v393, %v6407
  %v6409 = vpop.f32.mrb[0].mxu0
  %v6410 = vadd.f32 %v389, %v6409
  %v6411 = vpop.f32.mrb[0].mxu0
  %v6412 = vadd.f32 %v393, %v6411
  %6413 = vmatprep.mubr.bf16.mxu0 0
  %6414 = vmatmul.mubr.bf16.gmra.mrb[0].mxu0 %v6246
  %v6415 = vpop.f32.mrb[0].mxu0
  %v6416 = vadd.f32 %v389, %v6415
  %v6417 = vpop.f32.mrb[0].mxu0
  %v6418 = vadd.f32 %v393, %v6417
  %v6419 = vpop.f32.mrb[0].mxu0
  %v6420 = vadd.f32 %v389, %v6419
  %v6421 = vpop.f32.mrb[0].mxu0
  %v6422 = vadd.f32 %v393, %v6421
  %6423 = vmatprep.mubr.bf16.mxu0 0
  %6424 = vmatmul.mubr.bf16.gmra.mrb[0].mxu0 %v6249
  %v6425 = vpop.f32.mrb[0].mxu0
  %v6426 = vadd.f32 %v389, %v6425
  %v6427 = vpop.f32.mrb[0].mxu0
  %v6428 = vadd.f32 %v393, %v6427
  %v6429 = vpop.f32.mrb[0].mxu0
  %v6430 = vadd.f32 %v389, %v6429
  %v6431 = vpop.f32.mrb[0].mxu0
  %v6432 = vadd.f32 %v393, %v6431
  %6433 = vmatprep.mubr.bf16.mxu0 0
  %6434 = vmatmul.mubr.bf16.gmra.mrb[0].mxu0 %v6252
  %v6435 = vpop.f32.mrb[0].mxu0
  %v6436 = vadd.f32 %v389, %v6435
  %v6437 = vpop.f32.mrb[0].mxu0
  %v6438 = vadd.f32 %v393, %v6437
  %v6439 = vpop.f32.mrb[0].mxu0
  %v6440 = vadd.f32 %v389, %v6439
  %v6441 = vpop.f32.mrb[0].mxu0
  %v6442 = vadd.f32 %v393, %v6441
  %6443 = vmatprep.mubr.bf16.mxu0 0
  %6444 = vmatmul.mubr.bf16.gmra.mrb[0].mxu0 %v6255
  %v6445 = vpop.f32.mrb[0].mxu0
  %v6446 = vadd.f32 %v389, %v6445
  %v6447 = vpop.f32.mrb[0].mxu0
  %v6448 = vadd.f32 %v393, %v6447
  %v6449 = vpop.f32.mrb[0].mxu0
  %v6450 = vadd.f32 %v389, %v6449
  %v6451 = vpop.f32.mrb[0].mxu0
  %v6452 = vadd.f32 %v393, %v6451
  %6453 = vmatprep.mubr.bf16.mxu0 0
  %6454 = vmatmul.mubr.bf16.gmra.mrb[0].mxu0 %v6258
  %v6455 = vpop.f32.mrb[0].mxu0
  %v6456 = vadd.f32 %v389, %v6455
  %v6457 = vpop.f32.mrb[0].mxu0
  %v6458 = vadd.f32 %v393, %v6457
  %v6459 = vpop.f32.mrb[0].mxu0
  %v6460 = vpop.f32.mrb[0].mxu0
  %6461 = vdwg.mxu0
  %v6462 = vmax.f32 %v6295, 0.0
  %v6463 = vmax.f32 %v6297, 0.0
  %v6464 = vmax.f32 %v6396, 0.0
  %v6465 = vmax.f32 %v6398, 0.0
  %v6466 = vmax.f32 %v6299, 0.0
  %v6467 = vmax.f32 %v6301, 0.0
  %v6468 = vmax.f32 %v6400, 0.0
  %v6469 = vmax.f32 %v6402, 0.0
  %v6470 = vmax.f32 %v6305, 0.0
  %v6471 = vmax.f32 %v6307, 0.0
  %v6472 = vmax.f32 %v6406, 0.0
  %v6473 = vmax.f32 %v6408, 0.0
  %v6474 = vmax.f32 %v6309, 0.0
  %v6475 = vmax.f32 %v6311, 0.0
  %v6476 = vmax.f32 %v6410, 0.0
  %v6477 = vmax.f32 %v6412, 0.0
  %v6478 = vmax.f32 %v6315, 0.0
  %v6479 = vmax.f32 %v6317, 0.0
  %v6480 = vmax.f32 %v6416, 0.0
  %v6481 = vmax.f32 %v6418, 0.0
  %v6482 = vmax.f32 %v6319, 0.0
  %v6483 = vmax.f32 %v6321, 0.0
  %v6484 = vmax.f32 %v6420, 0.0
  %v6485 = vmax.f32 %v6422, 0.0
  %v6486 = vmax.f32 %v6325, 0.0
  %v6487 = vmax.f32 %v6327, 0.0
  %v6488 = vmax.f32 %v6426, 0.0
  %v6489 = vmax.f32 %v6428, 0.0
  %v6490 = vmax.f32 %v6329, 0.0
  %v6491 = vmax.f32 %v6331, 0.0
  %v6492 = vmax.f32 %v6430, 0.0
  %v6493 = vmax.f32 %v6432, 0.0
  %v6494 = vmax.f32 %v6335, 0.0
  %v6495 = vmax.f32 %v6337, 0.0
  %v6496 = vmax.f32 %v6436, 0.0
  %v6497 = vmax.f32 %v6438, 0.0
  %v6498 = vmax.f32 %v6339, 0.0
  %v6499 = vmax.f32 %v6341, 0.0
  %v6500 = vmax.f32 %v6440, 0.0
  %v6501 = vmax.f32 %v6442, 0.0
  %v6502 = vmax.f32 %v6345, 0.0
  %v6503 = vmax.f32 %v6347, 0.0
  %v6504 = vmax.f32 %v6446, 0.0
  %v6505 = vmax.f32 %v6448, 0.0
  %v6506 = vmax.f32 %v6349, 0.0
  %v6507 = vmax.f32 %v6351, 0.0
  %v6508 = vmax.f32 %v6450, 0.0
  %v6509 = vmax.f32 %v6452, 0.0
  %v6510 = vmax.f32 %v6355, 0.0
  %v6511 = vmax.f32 %v6357, 0.0
  %v6512 = vmax.f32 %v6456, 0.0
  %v6513 = vmax.f32 %v6458, 0.0
  %v6514 = vpack.c.bf16 %v6466, %v6462
  %v6515 = vpack.c.bf16 %v6467, %v6463
  %v6516 = vpack.c.bf16 %v6468, %v6464
  %v6517 = vpack.c.bf16 %v6469, %v6465
  %v6518 = vpack.c.bf16 %v6474, %v6470
  %v6519 = vpack.c.bf16 %v6475, %v6471
  %v6520 = vpack.c.bf16 %v6476, %v6472
  %v6521 = vpack.c.bf16 %v6477, %v6473
  %v6522 = vpack.c.bf16 %v6482, %v6478
  %v6523 = vpack.c.bf16 %v6483, %v6479
  %v6524 = vpack.c.bf16 %v6484, %v6480
  %v6525 = vpack.c.bf16 %v6485, %v6481
  %v6526 = vpack.c.bf16 %v6490, %v6486
  %v6527 = vpack.c.bf16 %v6491, %v6487
  %v6528 = vpack.c.bf16 %v6492, %v6488
  %v6529 = vpack.c.bf16 %v6493, %v6489
  %v6530 = vpack.c.bf16 %v6498, %v6494
  %v6531 = vpack.c.bf16 %v6499, %v6495
  %v6532 = vpack.c.bf16 %v6500, %v6496
  %v6533 = vpack.c.bf16 %v6501, %v6497
  %v6534 = vpack.c.bf16 %v6506, %v6502
  %v6535 = vpack.c.bf16 %v6507, %v6503
  %v6536 = vpack.c.bf16 %v6508, %v6504
  %v6537 = vpack.c.bf16 %v6509, %v6505
  %v6538 = vpack.c.bf16 %v6510, %v6510
  %v6539 = vpack.c.bf16 %v6511, %v6511
  %v6540 = vpack.c.bf16 %v6512, %v6512
  %v6541 = vpack.c.bf16 %v6513, %v6513
  %6542 = vmatprep.subr.bf16.mxu0 %v979
  %6543 = vmatpush1.bf16.msra.mxu0 %v978
  %6544 = vmatprep.subr.bf16.mxu0 %v981
  %6545 = vmatpush1.bf16.msra.mxu0 %v980
  %6546 = vmatprep.subr.bf16.mxu0 %v983
  %6547 = vmatpush1.bf16.msra.mxu0 %v982
  %6548 = vmatprep.subr.bf16.mxu0 %v985
  %6549 = vmatpush1.bf16.msra.mxu0 %v984
  %6550 = vmatprep.subr.bf16.mxu0 %v987
  %6551 = vmatpush1.bf16.msra.mxu0 %v986
  %6552 = vmatprep.subr.bf16.mxu0 %v989
  %6553 = vmatpush1.bf16.msra.mxu0 %v988
  %6554 = vmatprep.subr.bf16.mxu0 %v991
  %6555 = vmatpush1.bf16.msra.mxu0 %v990
  %6556 = vmatprep.subr.bf16.mxu0 %v993
  %6557 = vmatpush1.bf16.msra.mxu0 %v992
  %6558 = vmatprep.subr.bf16.mxu0 %v995
  %6559 = vmatpush1.bf16.msra.mxu0 %v994
  %6560 = vmatprep.subr.bf16.mxu0 %v997
  %6561 = vmatpush1.bf16.msra.mxu0 %v996
  %6562 = vmatprep.subr.bf16.mxu0 %v999
  %6563 = vmatpush1.bf16.msra.mxu0 %v998
  %6564 = vmatprep.subr.bf16.mxu0 %v1001
  %6565 = vmatpush1.bf16.msra.mxu0 %v1000
  %6566 = vmatprep.subr.bf16.mxu0 %v1003
  %6567 = vmatpush1.bf16.msra.mxu0 %v1002
  %6568 = vmatprep.subr.bf16.mxu0 %v1005
  %6569 = vmatpush1.bf16.msra.mxu0 %v1004
  %6570 = vmatprep.subr.bf16.mxu0 %v1007
  %6571 = vmatpush1.bf16.msra.mxu0 %v1006
  %6572 = vmatprep.subr.bf16.mxu0 %v1009
  %6573 = vmatpush1.bf16.msra.mxu0 %v1008
  %6574 = vmatprep.mubr.bf16.mxu0 %v6515
  %6575 = vmatmul.mubr.bf16.gmra.mrb[0].mxu0 %v6514
  %v6576 = vpop.f32.mrb[0].mxu0
  %v6577 = vadd.f32 %v779, %v6576
  %v6578 = vpop.f32.mrb[0].mxu0
  %v6579 = vadd.f32 %v783, %v6578
  %v6580 = vpop.f32.mrb[0].mxu0
  %v6581 = vadd.f32 %v779, %v6580
  %v6582 = vpop.f32.mrb[0].mxu0
  %v6583 = vadd.f32 %v783, %v6582
  %6584 = vmatprep.mubr.bf16.mxu0 %v6519
  %6585 = vmatmul.mubr.bf16.gmra.mrb[0].mxu0 %v6518
  %v6586 = vpop.f32.mrb[0].mxu0
  %v6587 = vadd.f32 %v779, %v6586
  %v6588 = vpop.f32.mrb[0].mxu0
  %v6589 = vadd.f32 %v783, %v6588
  %v6590 = vpop.f32.mrb[0].mxu0
  %v6591 = vadd.f32 %v779, %v6590
  %v6592 = vpop.f32.mrb[0].mxu0
  %v6593 = vadd.f32 %v783, %v6592
  %6594 = vmatprep.mubr.bf16.mxu0 %v6523
  %6595 = vmatmul.mubr.bf16.gmra.mrb[0].mxu0 %v6522
  %v6596 = vpop.f32.mrb[0].mxu0
  %v6597 = vadd.f32 %v779, %v6596
  %v6598 = vpop.f32.mrb[0].mxu0
  %v6599 = vadd.f32 %v783, %v6598
  %v6600 = vpop.f32.mrb[0].mxu0
  %v6601 = vadd.f32 %v779, %v6600
  %v6602 = vpop.f32.mrb[0].mxu0
  %v6603 = vadd.f32 %v783, %v6602
  %6604 = vmatprep.mubr.bf16.mxu0 %v6527
  %6605 = vmatmul.mubr.bf16.gmra.mrb[0].mxu0 %v6526
  %v6606 = vpop.f32.mrb[0].mxu0
  %v6607 = vadd.f32 %v779, %v6606
  %v6608 = vpop.f32.mrb[0].mxu0
  %v6609 = vadd.f32 %v783, %v6608
  %v6610 = vpop.f32.mrb[0].mxu0
  %v6611 = vadd.f32 %v779, %v6610
  %v6612 = vpop.f32.mrb[0].mxu0
  %v6613 = vadd.f32 %v783, %v6612
  %6614 = vmatprep.mubr.bf16.mxu0 %v6531
  %6615 = vmatmul.mubr.bf16.gmra.mrb[0].mxu0 %v6530
  %v6616 = vpop.f32.mrb[0].mxu0
  %v6617 = vadd.f32 %v779, %v6616
  %v6618 = vpop.f32.mrb[0].mxu0
  %v6619 = vadd.f32 %v783, %v6618
  %v6620 = vpop.f32.mrb[0].mxu0
  %v6621 = vadd.f32 %v779, %v6620
  %v6622 = vpop.f32.mrb[0].mxu0
  %v6623 = vadd.f32 %v783, %v6622
  %6624 = vmatprep.mubr.bf16.mxu0 %v6535
  %6625 = vmatmul.mubr.bf16.gmra.mrb[0].mxu0 %v6534
  %v6626 = vpop.f32.mrb[0].mxu0
  %v6627 = vadd.f32 %v779, %v6626
  %v6628 = vpop.f32.mrb[0].mxu0
  %v6629 = vadd.f32 %v783, %v6628
  %v6630 = vpop.f32.mrb[0].mxu0
  %v6631 = vadd.f32 %v779, %v6630
  %v6632 = vpop.f32.mrb[0].mxu0
  %v6633 = vadd.f32 %v783, %v6632
  %6634 = vmatprep.mubr.bf16.mxu0 %v6539
  %6635 = vmatmul.mubr.bf16.gmra.mrb[0].mxu0 %v6538
  %v6636 = vpop.f32.mrb[0].mxu0
  %v6637 = vadd.f32 %v779, %v6636
  %v6638 = vpop.f32.mrb[0].mxu0
  %v6639 = vadd.f32 %v783, %v6638
  %v6640 = vpop.f32.mrb[0].mxu0
  %v6641 = vpop.f32.mrb[0].mxu0
  %6642 = vdwg.mxu0
  %6643 = vmatprep.subr.bf16.mxu0 %v1011
  %6644 = vmatpush1.bf16.msra.mxu0 %v1010
  %6645 = vmatprep.subr.bf16.mxu0 %v1013
  %6646 = vmatpush1.bf16.msra.mxu0 %v1012
  %6647 = vmatprep.subr.bf16.mxu0 %v1015
  %6648 = vmatpush1.bf16.msra.mxu0 %v1014
  %6649 = vmatprep.subr.bf16.mxu0 %v1017
  %6650 = vmatpush1.bf16.msra.mxu0 %v1016
  %6651 = vmatprep.subr.bf16.mxu0 %v1019
  %6652 = vmatpush1.bf16.msra.mxu0 %v1018
  %6653 = vmatprep.subr.bf16.mxu0 %v1021
  %6654 = vmatpush1.bf16.msra.mxu0 %v1020
  %6655 = vmatprep.subr.bf16.mxu0 %v1023
  %6656 = vmatpush1.bf16.msra.mxu0 %v1022
  %6657 = vmatprep.subr.bf16.mxu0 %v1025
  %6658 = vmatpush1.bf16.msra.mxu0 %v1024
  %6659 = vmatprep.subr.bf16.mxu0 %v1027
  %6660 = vmatpush1.bf16.msra.mxu0 %v1026
  %6661 = vmatprep.subr.bf16.mxu0 %v1029
  %6662 = vmatpush1.bf16.msra.mxu0 %v1028
  %6663 = vmatprep.subr.bf16.mxu0 %v1031
  %6664 = vmatpush1.bf16.msra.mxu0 %v1030
  %6665 = vmatprep.subr.bf16.mxu0 %v1033
  %6666 = vmatpush1.bf16.msra.mxu0 %v1032
  %6667 = vmatprep.subr.bf16.mxu0 %v1035
  %6668 = vmatpush1.bf16.msra.mxu0 %v1034
  %6669 = vmatprep.subr.bf16.mxu0 %v1037
  %6670 = vmatpush1.bf16.msra.mxu0 %v1036
  %6671 = vmatprep.subr.bf16.mxu0 %v1039
  %6672 = vmatpush1.bf16.msra.mxu0 %v1038
  %6673 = vmatprep.subr.bf16.mxu0 %v1041
  %6674 = vmatpush1.bf16.msra.mxu0 %v1040
  %6675 = vmatprep.mubr.bf16.mxu0 %v6517
  %6676 = vmatmul.mubr.bf16.gmra.mrb[0].mxu0 %v6516
  %v6677 = vpop.f32.mrb[0].mxu0
  %v6678 = vadd.f32 %v6577, %v6677
  %v6679 = vpop.f32.mrb[0].mxu0
  %v6680 = vadd.f32 %v6579, %v6679
  %v6681 = vpop.f32.mrb[0].mxu0
  %v6682 = vadd.f32 %v6581, %v6681
  %v6683 = vpop.f32.mrb[0].mxu0
  %v6684 = vadd.f32 %v6583, %v6683
  %6685 = vmatprep.mubr.bf16.mxu0 %v6521
  %6686 = vmatmul.mubr.bf16.gmra.mrb[0].mxu0 %v6520
  %v6687 = vpop.f32.mrb[0].mxu0
  %v6688 = vadd.f32 %v6587, %v6687
  %v6689 = vpop.f32.mrb[0].mxu0
  %v6690 = vadd.f32 %v6589, %v6689
  %v6691 = vpop.f32.mrb[0].mxu0
  %v6692 = vadd.f32 %v6591, %v6691
  %v6693 = vpop.f32.mrb[0].mxu0
  %v6694 = vadd.f32 %v6593, %v6693
  %6695 = vmatprep.mubr.bf16.mxu0 %v6525
  %6696 = vmatmul.mubr.bf16.gmra.mrb[0].mxu0 %v6524
  %v6697 = vpop.f32.mrb[0].mxu0
  %v6698 = vadd.f32 %v6597, %v6697
  %v6699 = vpop.f32.mrb[0].mxu0
  %v6700 = vadd.f32 %v6599, %v6699
  %v6701 = vpop.f32.mrb[0].mxu0
  %v6702 = vadd.f32 %v6601, %v6701
  %v6703 = vpop.f32.mrb[0].mxu0
  %v6704 = vadd.f32 %v6603, %v6703
  %6705 = vmatprep.mubr.bf16.mxu0 %v6529
  %6706 = vmatmul.mubr.bf16.gmra.mrb[0].mxu0 %v6528
  %v6707 = vpop.f32.mrb[0].mxu0
  %v6708 = vadd.f32 %v6607, %v6707
  %v6709 = vpop.f32.mrb[0].mxu0
  %v6710 = vadd.f32 %v6609, %v6709
  %v6711 = vpop.f32.mrb[0].mxu0
  %v6712 = vadd.f32 %v6611, %v6711
  %v6713 = vpop.f32.mrb[0].mxu0
  %v6714 = vadd.f32 %v6613, %v6713
  %6715 = vmatprep.mubr.bf16.mxu0 %v6533
  %6716 = vmatmul.mubr.bf16.gmra.mrb[0].mxu0 %v6532
  %v6717 = vpop.f32.mrb[0].mxu0
  %v6718 = vadd.f32 %v6617, %v6717
  %v6719 = vpop.f32.mrb[0].mxu0
  %v6720 = vadd.f32 %v6619, %v6719
  %v6721 = vpop.f32.mrb[0].mxu0
  %v6722 = vadd.f32 %v6621, %v6721
  %v6723 = vpop.f32.mrb[0].mxu0
  %v6724 = vadd.f32 %v6623, %v6723
  %6725 = vmatprep.mubr.bf16.mxu0 %v6537
  %6726 = vmatmul.mubr.bf16.gmra.mrb[0].mxu0 %v6536
  %v6727 = vpop.f32.mrb[0].mxu0
  %v6728 = vadd.f32 %v6627, %v6727
  %v6729 = vpop.f32.mrb[0].mxu0
  %v6730 = vadd.f32 %v6629, %v6729
  %v6731 = vpop.f32.mrb[0].mxu0
  %v6732 = vadd.f32 %v6631, %v6731
  %v6733 = vpop.f32.mrb[0].mxu0
  %v6734 = vadd.f32 %v6633, %v6733
  %6735 = vmatprep.mubr.bf16.mxu0 %v6541
  %6736 = vmatmul.mubr.bf16.gmra.mrb[0].mxu0 %v6540
  %v6737 = vpop.f32.mrb[0].mxu0
  %v6738 = vadd.f32 %v6637, %v6737
  %v6739 = vpop.f32.mrb[0].mxu0
  %v6740 = vadd.f32 %v6639, %v6739
  %v6741 = vpop.f32.mrb[0].mxu0
  %v6742 = vpop.f32.mrb[0].mxu0
  %6743 = vdwg.mxu0
  %v6745 = vsel %vm1312, %v6738, 0
  %v6748 = vsel %vm1312, %v6740, 0
  %6750 = vmatprep.subr.mxu0 %v6680
  %6751 = vmatpush1.msra.mxu0 %v6678
  %6752 = vmatprep.subr.mxu0 %v6684
  %6753 = vmatpush1.msra.mxu0 %v6682
  %6754 = vmatprep.subr.mxu0 %v6690
  %6755 = vmatpush1.msra.mxu0 %v6688
  %6756 = vmatprep.subr.mxu0 %v6694
  %6757 = vmatpush1.msra.mxu0 %v6692
  %6758 = vmatprep.subr.mxu0 %v6700
  %6759 = vmatpush1.msra.mxu0 %v6698
  %6760 = vmatprep.subr.mxu0 %v6704
  %6761 = vmatpush1.msra.mxu0 %v6702
  %6762 = vmatprep.subr.mxu0 %v6710
  %6763 = vmatpush1.msra.mxu0 %v6708
  %6764 = vmatprep.subr.mxu0 %v6714
  %6765 = vmatpush1.msra.mxu0 %v6712
  %6766 = vmatprep.subr.mxu0 %v6720
  %6767 = vmatpush1.msra.mxu0 %v6718
  %6768 = vmatprep.subr.mxu0 %v6724
  %6769 = vmatpush1.msra.mxu0 %v6722
  %6770 = vmatprep.subr.mxu0 %v6730
  %6771 = vmatpush1.msra.mxu0 %v6728
  %6772 = vmatprep.subr.mxu0 %v6734
  %6773 = vmatpush1.msra.mxu0 %v6732
  %6774 = vmatprep.subr.mxu0 %v6748
  %6775 = vmatpush1.msra.mxu0 %v6745
  %6776 = vmatprep.subr.mxu0 0.0
  %6777 = vmatpush1.msra.mxu0 0.0
  %6778 = vmatprep.subr.mxu0 0.0
  %6779 = vmatpush1.msra.mxu0 0.0
  %6780 = vmatprep.subr.mxu0 0.0
  %6781 = vmatpush1.msra.mxu0 0.0
  %6782 = vmatprep.subr.mxu0 0.0
  %6783 = vmatpush1.msra.mxu0 0.0
  %6784 = vmatprep.subr.mxu0 0.0
  %6785 = vmatpush1.msra.mxu0 0.0
  %6786 = vmatprep.subr.mxu0 0.0
  %6787 = vmatpush1.msra.mxu0 0.0
  %6788 = vmatprep.subr.mxu0 0.0
  %6789 = vmatpush1.msra.mxu0 0.0
  %6790 = vmatprep.subr.mxu0 0.0
  %6791 = vmatpush1.msra.mxu0 0.0
  %6792 = vmatprep.subr.mxu0 0.0
  %6793 = vmatpush1.msra.mxu0 0.0
  %6794 = vmatprep.subr.mxu0 0.0
  %6795 = vmatpush1.msra.mxu0 0.0
  %6796 = vmatprep.subr.mxu0 0.0
  %6797 = vmatpush1.msra.mxu0 0.0
  %6798 = vmatprep.subr.mxu0 0.0
  %6799 = vmatpush1.msra.mxu0 0.0
  %6800 = vmatprep.subr.mxu0 0.0
  %6801 = vmatpush1.msra.mxu0 0.0
  %6802 = vmatprep.subr.mxu0 0.0
  %6803 = vmatpush1.msra.mxu0 0.0
  %6804 = vmatprep.subr.mxu0 0.0
  %6805 = vmatpush1.msra.mxu0 0.0
  %6806 = vmatprep.subr.mxu0 0.0
  %6807 = vmatpush1.msra.mxu0 0.0
  %6808 = vmatprep.subr.mxu0 0.0
  %6809 = vmatpush1.msra.mxu0 0.0
  %6810 = vmatprep.subr.mxu0 0.0
  %6811 = vmatpush1.msra.mxu0 0.0
  %6812 = vmatprep.subr.mxu0 0.0
  %6813 = vmatpush1.msra.mxu0 0.0
  %6814 = vmatprep.mubr.f32.mxu0 0.0
  %6815 = vmatmul.mubr.f32.gmra.mrb[0].mxu0 %v1310
  %v6816 = vpop.f32.mrb[0].mxu0
  %v6817 = vadd.f32 0.0, %v6816
  %v6818 = vpop.f32.mrb[0].mxu0
  %v6819 = vadd.f32 0.0, %v6818
  %6820 = vdwg.mxu0
  %v6821 = vmul.f32 %v6817, 0.020408163
  %v6822 = vmul.f32 %v6819, 0.020408163
  %v6823 = vpack.c.bf16 %v6191, %v6191
  %6824 = vmatprep.subr.bf16.mxu0 0
  %6825 = vmatpush1.bf16.msra.mxu0 %v1425
  %6826 = vmatprep.subr.bf16.mxu0 0
  %6827 = vmatpush1.bf16.msra.mxu0 %v1426
  %6828 = vmatprep.subr.bf16.mxu0 0
  %6829 = vmatpush1.bf16.msra.mxu0 %v1427
  %6830 = vmatprep.subr.bf16.mxu0 0
  %6831 = vmatpush1.bf16.msra.mxu0 %v1428
  %6832 = vmatprep.subr.bf16.mxu0 0
  %6833 = vmatpush1.bf16.msra.mxu0 %v1429
  %6834 = vmatprep.subr.bf16.mxu0 0
  %6835 = vmatpush1.bf16.msra.mxu0 %v1430
  %6836 = vmatprep.subr.bf16.mxu0 0
  %6837 = vmatpush1.bf16.msra.mxu0 %v1431
  %6838 = vmatprep.subr.bf16.mxu0 0
  %6839 = vmatpush1.bf16.msra.mxu0 %v1432
  %6840 = vmatprep.subr.bf16.mxu0 0
  %6841 = vmatpush1.bf16.msra.mxu0 0
  %6842 = vmatprep.subr.bf16.mxu0 0
  %6843 = vmatpush1.bf16.msra.mxu0 0
  %6844 = vmatprep.subr.bf16.mxu0 0
  %6845 = vmatpush1.bf16.msra.mxu0 0
  %6846 = vmatprep.subr.bf16.mxu0 0
  %6847 = vmatpush1.bf16.msra.mxu0 0
  %6848 = vmatprep.subr.bf16.mxu0 0
  %6849 = vmatpush1.bf16.msra.mxu0 0
  %6850 = vmatprep.subr.bf16.mxu0 0
  %6851 = vmatpush1.bf16.msra.mxu0 0
  %6852 = vmatprep.subr.bf16.mxu0 0
  %6853 = vmatpush1.bf16.msra.mxu0 0
  %6854 = vmatprep.subr.bf16.mxu0 0
  %6855 = vmatpush1.bf16.msra.mxu0 0
  %6856 = vmatprep.mubr.bf16.mxu0 0
  %6857 = vmatmul.mubr.bf16.gmra.mrb[0].mxu0 %v6823
  %v6858 = vpop.f32.mrb[0].mxu0
  %v6859 = vadd.f32 0.0, %v6858
  %v6860 = vpop.f32.mrb[0].mxu0
  %v6861 = vpop.f32.mrb[0].mxu0
  %v6862 = vpop.f32.mrb[0].mxu0
  %6863 = vdwg.mxu0
  %v6866 = vcombine.low %v6821, %v6822
  %v6868 = vunpack.c.l.s4 1966171168
  %v6869 = vunpack.c.0.s8 %v6868
  %v6870 = vlaneseq
  %v6871 = vshrl.u32 %v6870, 7
  %v6872 = vsub.s32 %v6869, %v6871
  %v6873 = vrot.slane %v6866, %v6872
  %v6874 = vcombine.high %v6873, %v6873
  %v6876 = vunpack.c.l.s4 1966171168
  %v6877 = vunpack.c.0.s8 %v6876
  %v6878 = vlaneseq
  %v6879 = vshrl.u32 %v6878, 7
  %v6880 = vsub.s32 %v6877, %v6879
  %v6881 = vrot.slane %v6873, %v6880
  %v6883 = vunpack.c.l.s4 1966171168
  %v6884 = vunpack.c.0.s8 %v6883
  %v6885 = vlaneseq
  %v6886 = vshrl.u32 %v6885, 7
  %v6887 = vsub.s32 %v6884, %v6886
  %v6888 = vrot.slane %v6874, %v6887
  %v6889 = vlaneseq
  %v6890 = vshrl.u32 %v6889, 7
  %v6891 = vsub.s32 0, %v6890
  %v6892 = vrot.slane %v6881, %v6891
  %v6893 = vlaneseq
  %v6894 = vshrl.u32 %v6893, 7
  %v6895 = vsub.s32 1, %v6894
  %v6896 = vrot.slane %v6881, %v6895
  %v6897 = vlaneseq
  %v6898 = vshrl.u32 %v6897, 7
  %v6899 = vsub.s32 0, %v6898
  %v6900 = vrot.slane %v6888, %v6899
  %v6901 = vlaneseq
  %v6902 = vshrl.u32 %v6901, 7
  %v6903 = vsub.s32 1, %v6902
  %v6904 = vrot.slane %v6888, %v6903
  %v6909 = vmul.f32 %v6892, %v1529
  %v6910 = vmul.f32 %v6896, %v1529
  %v6911 = vmul.f32 %v6892, %v1534
  %v6912 = vmul.f32 %v6896, %v1534
  %v6913 = vmul.f32 %v6892, %v1539
  %v6914 = vmul.f32 %v6896, %v1539
  %v6915 = vmul.f32 %v6892, %v1544
  %v6916 = vmul.f32 %v6896, %v1544
  %v6917 = vmul.f32 %v6892, %v1549
  %v6918 = vmul.f32 %v6896, %v1549
  %v6919 = vmul.f32 %v6892, %v1554
  %v6920 = vmul.f32 %v6896, %v1554
  %v6921 = vmul.f32 %v6892, %v1559
  %v6922 = vmul.f32 %v6896, %v1559
  %v6923 = vmul.f32 %v6892, %v1564
  %v6924 = vmul.f32 %v6896, %v1564
  %v6925 = vmul.f32 %v6900, %v1529
  %v6926 = vmul.f32 %v6904, %v1529
  %v6927 = vmul.f32 %v6900, %v1534
  %v6928 = vmul.f32 %v6904, %v1534
  %v6929 = vmul.f32 %v6900, %v1539
  %v6930 = vmul.f32 %v6904, %v1539
  %v6931 = vmul.f32 %v6900, %v1544
  %v6932 = vmul.f32 %v6904, %v1544
  %v6933 = vmul.f32 %v6900, %v1549
  %v6934 = vmul.f32 %v6904, %v1549
  %v6935 = vmul.f32 %v6900, %v1554
  %v6936 = vmul.f32 %v6904, %v1554
  %v6937 = vmul.f32 %v6900, %v1559
  %v6938 = vmul.f32 %v6904, %v1559
  %v6939 = vmul.f32 %v6900, %v1564
  %v6940 = vmul.f32 %v6904, %v1564
  %v6941 = vadd.f32 %v6909, %v1601
  %v6942 = vadd.f32 %v6910, %v1601
  %v6943 = vadd.f32 %v6911, %v1606
  %v6944 = vadd.f32 %v6912, %v1606
  %v6945 = vadd.f32 %v6913, %v1611
  %v6946 = vadd.f32 %v6914, %v1611
  %v6947 = vadd.f32 %v6915, %v1616
  %v6948 = vadd.f32 %v6916, %v1616
  %v6949 = vadd.f32 %v6917, %v1621
  %v6950 = vadd.f32 %v6918, %v1621
  %v6951 = vadd.f32 %v6919, %v1626
  %v6952 = vadd.f32 %v6920, %v1626
  %v6953 = vadd.f32 %v6921, %v1631
  %v6954 = vadd.f32 %v6922, %v1631
  %v6955 = vadd.f32 %v6923, %v1636
  %v6956 = vadd.f32 %v6924, %v1636
  %v6957 = vadd.f32 %v6925, %v1601
  %v6958 = vadd.f32 %v6926, %v1601
  %v6959 = vadd.f32 %v6927, %v1606
  %v6960 = vadd.f32 %v6928, %v1606
  %v6961 = vadd.f32 %v6929, %v1611
  %v6962 = vadd.f32 %v6930, %v1611
  %v6963 = vadd.f32 %v6931, %v1616
  %v6964 = vadd.f32 %v6932, %v1616
  %v6965 = vadd.f32 %v6933, %v1621
  %v6966 = vadd.f32 %v6934, %v1621
  %v6967 = vadd.f32 %v6935, %v1626
  %v6968 = vadd.f32 %v6936, %v1626
  %v6969 = vadd.f32 %v6937, %v1631
  %v6970 = vadd.f32 %v6938, %v1631
  %v6971 = vadd.f32 %v6939, %v1636
  %v6972 = vadd.f32 %v6940, %v1636
  %v6973 = vlaneseq
  %v6974 = vshrl.u32 %v6973, 7
  %v6975 = vsub.s32 0, %v6974
  %v6976 = vrot.slane %v6859, %v6975
  %6978 = vbcast.lane.b32.xlu0 %v6976, 256
  %v6979 = vpop.permute.xlu0 %6978
  %s6981 = sor.u32 256, 8
  %6982 = vbcast.lane.b32.xlu0 %v6976, %s6981
  %v6983 = vpop.permute.xlu0 %6982
  %s6985 = sor.u32 256, 16
  %6986 = vbcast.lane.b32.xlu0 %v6976, %s6985
  %v6987 = vpop.permute.xlu0 %6986
  %s6989 = sor.u32 256, 24
  %6990 = vbcast.lane.b32.xlu0 %v6976, %s6989
  %v6991 = vpop.permute.xlu0 %6990
  %s6993 = sor.u32 256, 32
  %6994 = vbcast.lane.b32.xlu0 %v6976, %s6993
  %v6995 = vpop.permute.xlu0 %6994
  %s6997 = sor.u32 256, 40
  %6998 = vbcast.lane.b32.xlu0 %v6976, %s6997
  %v6999 = vpop.permute.xlu0 %6998
  %s7001 = sor.u32 256, 48
  %7002 = vbcast.lane.b32.xlu0 %v6976, %s7001
  %v7003 = vpop.permute.xlu0 %7002
  %s7005 = sor.u32 256, 56
  %7006 = vbcast.lane.b32.xlu0 %v6976, %s7005
  %v7007 = vpop.permute.xlu0 %7006
  %v7008 = vlaneseq
  %v7009 = vshrl.u32 %v7008, 7
  %v7010 = vsub.s32 1, %v7009
  %v7011 = vrot.slane %v6859, %v7010
  %7013 = vbcast.lane.b32.xlu0 %v7011, 256
  %v7014 = vpop.permute.xlu0 %7013
  %s7016 = sor.u32 256, 8
  %7017 = vbcast.lane.b32.xlu0 %v7011, %s7016
  %v7018 = vpop.permute.xlu0 %7017
  %s7020 = sor.u32 256, 16
  %7021 = vbcast.lane.b32.xlu0 %v7011, %s7020
  %v7022 = vpop.permute.xlu0 %7021
  %s7024 = sor.u32 256, 24
  %7025 = vbcast.lane.b32.xlu0 %v7011, %s7024
  %v7026 = vpop.permute.xlu0 %7025
  %s7028 = sor.u32 256, 32
  %7029 = vbcast.lane.b32.xlu0 %v7011, %s7028
  %v7030 = vpop.permute.xlu0 %7029
  %s7032 = sor.u32 256, 40
  %7033 = vbcast.lane.b32.xlu0 %v7011, %s7032
  %v7034 = vpop.permute.xlu0 %7033
  %s7036 = sor.u32 256, 48
  %7037 = vbcast.lane.b32.xlu0 %v7011, %s7036
  %v7038 = vpop.permute.xlu0 %7037
  %s7040 = sor.u32 256, 56
  %7041 = vbcast.lane.b32.xlu0 %v7011, %s7040
  %v7042 = vpop.permute.xlu0 %7041
  %v7043 = vadd.f32 %v6941, %v6979
  %v7044 = vadd.f32 %v6942, %v6979
  %v7045 = vadd.f32 %v6943, %v6983
  %v7046 = vadd.f32 %v6944, %v6983
  %v7047 = vadd.f32 %v6945, %v6987
  %v7048 = vadd.f32 %v6946, %v6987
  %v7049 = vadd.f32 %v6947, %v6991
  %v7050 = vadd.f32 %v6948, %v6991
  %v7051 = vadd.f32 %v6949, %v6995
  %v7052 = vadd.f32 %v6950, %v6995
  %v7053 = vadd.f32 %v6951, %v6999
  %v7054 = vadd.f32 %v6952, %v6999
  %v7055 = vadd.f32 %v6953, %v7003
  %v7056 = vadd.f32 %v6954, %v7003
  %v7057 = vadd.f32 %v6955, %v7007
  %v7058 = vadd.f32 %v6956, %v7007
  %v7059 = vadd.f32 %v6957, %v7014
  %v7060 = vadd.f32 %v6958, %v7014
  %v7061 = vadd.f32 %v6959, %v7018
  %v7062 = vadd.f32 %v6960, %v7018
  %v7063 = vadd.f32 %v6961, %v7022
  %v7064 = vadd.f32 %v6962, %v7022
  %v7065 = vadd.f32 %v6963, %v7026
  %v7066 = vadd.f32 %v6964, %v7026
  %v7067 = vadd.f32 %v6965, %v7030
  %v7068 = vadd.f32 %v6966, %v7030
  %v7069 = vadd.f32 %v6967, %v7034
  %v7070 = vadd.f32 %v6968, %v7034
  %v7071 = vadd.f32 %v6969, %v7038
  %v7072 = vadd.f32 %v6970, %v7038
  %v7073 = vadd.f32 %v6971, %v7042
  %v7074 = vadd.f32 %v6972, %v7042
  %v7075 = vtanh.pop %v7043
  %v7076 = vtanh.pop %v7044
  %v7077 = vtanh.pop %v7045
  %v7078 = vtanh.pop %v7046
  %v7079 = vtanh.pop %v7047
  %v7080 = vtanh.pop %v7048
  %v7081 = vtanh.pop %v7049
  %v7082 = vtanh.pop %v7050
  %v7083 = vtanh.pop %v7051
  %v7084 = vtanh.pop %v7052
  %v7085 = vtanh.pop %v7053
  %v7086 = vtanh.pop %v7054
  %v7087 = vtanh.pop %v7055
  %v7088 = vtanh.pop %v7056
  %v7089 = vtanh.pop %v7057
  %v7090 = vtanh.pop %v7058
  %v7091 = vtanh.pop %v7059
  %v7092 = vtanh.pop %v7060
  %v7093 = vtanh.pop %v7061
  %v7094 = vtanh.pop %v7062
  %v7095 = vtanh.pop %v7063
  %v7096 = vtanh.pop %v7064
  %v7097 = vtanh.pop %v7065
  %v7098 = vtanh.pop %v7066
  %v7099 = vtanh.pop %v7067
  %v7100 = vtanh.pop %v7068
  %v7101 = vtanh.pop %v7069
  %v7102 = vtanh.pop %v7070
  %v7103 = vtanh.pop %v7071
  %v7104 = vtanh.pop %v7072
  %v7105 = vtanh.pop %v7073
  %v7106 = vtanh.pop %v7074
  %v7107 = vmul.f32 %v7075, %v1807
  %v7108 = vmul.f32 %v7076, %v1807
  %v7109 = vmul.f32 %v7077, %v1812
  %v7110 = vmul.f32 %v7078, %v1812
  %v7111 = vmul.f32 %v7079, %v1817
  %v7112 = vmul.f32 %v7080, %v1817
  %v7113 = vmul.f32 %v7081, %v1822
  %v7114 = vmul.f32 %v7082, %v1822
  %v7115 = vmul.f32 %v7083, %v1827
  %v7116 = vmul.f32 %v7084, %v1827
  %v7117 = vmul.f32 %v7085, %v1832
  %v7118 = vmul.f32 %v7086, %v1832
  %v7119 = vmul.f32 %v7087, %v1837
  %v7120 = vmul.f32 %v7088, %v1837
  %v7121 = vmul.f32 %v7089, %v1842
  %v7122 = vmul.f32 %v7090, %v1842
  %v7123 = vmul.f32 %v7091, %v1807
  %v7124 = vmul.f32 %v7092, %v1807
  %v7125 = vmul.f32 %v7093, %v1812
  %v7126 = vmul.f32 %v7094, %v1812
  %v7127 = vmul.f32 %v7095, %v1817
  %v7128 = vmul.f32 %v7096, %v1817
  %v7129 = vmul.f32 %v7097, %v1822
  %v7130 = vmul.f32 %v7098, %v1822
  %v7131 = vmul.f32 %v7099, %v1827
  %v7132 = vmul.f32 %v7100, %v1827
  %v7133 = vmul.f32 %v7101, %v1832
  %v7134 = vmul.f32 %v7102, %v1832
  %v7135 = vmul.f32 %v7103, %v1837
  %v7136 = vmul.f32 %v7104, %v1837
  %v7137 = vmul.f32 %v7105, %v1842
  %v7138 = vmul.f32 %v7106, %v1842
  %v7139 = vadd.f32 %v7107, %v7109
  %v7140 = vadd.f32 %v7139, %v7111
  %v7141 = vadd.f32 %v7140, %v7113
  %v7142 = vadd.f32 %v7141, %v7115
  %v7143 = vadd.f32 %v7142, %v7117
  %v7144 = vadd.f32 %v7143, %v7119
  %v7145 = vadd.f32 %v7144, %v7121
  %v7146 = vrot.slane %v7145, 4
  %v7147 = vadd.f32 %v7145, %v7146
  %v7148 = vrot.slane %v7147, 2
  %v7149 = vadd.f32 %v7147, %v7148
  %v7150 = vrot.slane %v7149, 1
  %v7151 = vadd.f32 %v7149, %v7150
  %v7152 = vadd.f32 %v7108, %v7110
  %v7153 = vadd.f32 %v7152, %v7112
  %v7154 = vadd.f32 %v7153, %v7114
  %v7155 = vadd.f32 %v7154, %v7116
  %v7156 = vadd.f32 %v7155, %v7118
  %v7157 = vadd.f32 %v7156, %v7120
  %v7158 = vadd.f32 %v7157, %v7122
  %v7159 = vrot.slane %v7158, 4
  %v7160 = vadd.f32 %v7158, %v7159
  %v7161 = vrot.slane %v7160, 2
  %v7162 = vadd.f32 %v7160, %v7161
  %v7163 = vrot.slane %v7162, 1
  %v7164 = vadd.f32 %v7162, %v7163
  %v7165 = vadd.f32 %v7123, %v7125
  %v7166 = vadd.f32 %v7165, %v7127
  %v7167 = vadd.f32 %v7166, %v7129
  %v7168 = vadd.f32 %v7167, %v7131
  %v7169 = vadd.f32 %v7168, %v7133
  %v7170 = vadd.f32 %v7169, %v7135
  %v7171 = vadd.f32 %v7170, %v7137
  %v7172 = vrot.slane %v7171, 4
  %v7173 = vadd.f32 %v7171, %v7172
  %v7174 = vrot.slane %v7173, 2
  %v7175 = vadd.f32 %v7173, %v7174
  %v7176 = vrot.slane %v7175, 1
  %v7177 = vadd.f32 %v7175, %v7176
  %v7178 = vadd.f32 %v7124, %v7126
  %v7179 = vadd.f32 %v7178, %v7128
  %v7180 = vadd.f32 %v7179, %v7130
  %v7181 = vadd.f32 %v7180, %v7132
  %v7182 = vadd.f32 %v7181, %v7134
  %v7183 = vadd.f32 %v7182, %v7136
  %v7184 = vadd.f32 %v7183, %v7138
  %v7185 = vrot.slane %v7184, 4
  %v7186 = vadd.f32 %v7184, %v7185
  %v7187 = vrot.slane %v7186, 2
  %v7188 = vadd.f32 %v7186, %v7187
  %v7189 = vrot.slane %v7188, 1
  %v7190 = vadd.f32 %v7188, %v7189
  %v7191 = vadd.f32 %v7151, %v1935
  %v7192 = vadd.f32 %v7164, %v1935
  %v7193 = vadd.f32 %v7177, %v1935
  %v7194 = vadd.f32 %v7190, %v1935
  %v7195 = vxor.u32 %v7191, 2147483648
  %v7196 = vxor.u32 %v7192, 2147483648
  %v7197 = vxor.u32 %v7193, 2147483648
  %v7198 = vxor.u32 %v7194, 2147483648
  %v7199 = vmul.f32 %v7195, 1.442695
  %v7200 = vpow.pop %v7199
  %v7201 = vmul.f32 %v7196, 1.442695
  %v7202 = vpow.pop %v7201
  %v7203 = vmul.f32 %v7197, 1.442695
  %v7204 = vpow.pop %v7203
  %v7205 = vmul.f32 %v7198, 1.442695
  %v7206 = vpow.pop %v7205
  %v7207 = vadd.f32 %v7200, 1.0
  %v7208 = vadd.f32 %v7202, 1.0
  %v7209 = vadd.f32 %v7204, 1.0
  %v7210 = vadd.f32 %v7206, 1.0
  %v7211 = vrcp.pop %v7207
  %v7212 = vmul.f32 1.0, %v7211
  %v7213 = vrcp.pop %v7208
  %v7214 = vmul.f32 1.0, %v7213
  %v7215 = vrcp.pop %v7209
  %v7216 = vmul.f32 1.0, %v7215
  %v7217 = vrcp.pop %v7210
  %v7218 = vmul.f32 1.0, %v7217
  %v7223 = vsel %vm1969, %v7216, %v7212
  %v7224 = vsel %vm1969, %v7218, %v7214
  %v7225 = vsel %vm1312, %v7223, 0
  %v7227 = vsel %vm1312, %v7224, 0
  %7229 = vmatprep.subr.mxu0 %v7227
  %7230 = vmatpush1.msra.mxu0 %v7225
  %7231 = vmatprep.subr.mxu0 0.0
  %7232 = vmatpush1.msra.mxu0 0.0
  %7233 = vmatprep.subr.mxu0 0.0
  %7234 = vmatpush1.msra.mxu0 0.0
  %7235 = vmatprep.subr.mxu0 0.0
  %7236 = vmatpush1.msra.mxu0 0.0
  %7237 = vmatprep.subr.mxu0 0.0
  %7238 = vmatpush1.msra.mxu0 0.0
  %7239 = vmatprep.subr.mxu0 0.0
  %7240 = vmatpush1.msra.mxu0 0.0
  %7241 = vmatprep.subr.mxu0 0.0
  %7242 = vmatpush1.msra.mxu0 0.0
  %7243 = vmatprep.subr.mxu0 0.0
  %7244 = vmatpush1.msra.mxu0 0.0
  %7245 = vmatprep.subr.mxu0 0.0
  %7246 = vmatpush1.msra.mxu0 0.0
  %7247 = vmatprep.subr.mxu0 0.0
  %7248 = vmatpush1.msra.mxu0 0.0
  %7249 = vmatprep.subr.mxu0 0.0
  %7250 = vmatpush1.msra.mxu0 0.0
  %7251 = vmatprep.subr.mxu0 0.0
  %7252 = vmatpush1.msra.mxu0 0.0
  %7253 = vmatprep.subr.mxu0 0.0
  %7254 = vmatpush1.msra.mxu0 0.0
  %7255 = vmatprep.subr.mxu0 0.0
  %7256 = vmatpush1.msra.mxu0 0.0
  %7257 = vmatprep.subr.mxu0 0.0
  %7258 = vmatpush1.msra.mxu0 0.0
  %7259 = vmatprep.subr.mxu0 0.0
  %7260 = vmatpush1.msra.mxu0 0.0
  %7261 = vmatprep.subr.mxu0 0.0
  %7262 = vmatpush1.msra.mxu0 0.0
  %7263 = vmatprep.subr.mxu0 0.0
  %7264 = vmatpush1.msra.mxu0 0.0
  %7265 = vmatprep.subr.mxu0 0.0
  %7266 = vmatpush1.msra.mxu0 0.0
  %7267 = vmatprep.subr.mxu0 0.0
  %7268 = vmatpush1.msra.mxu0 0.0
  %7269 = vmatprep.subr.mxu0 0.0
  %7270 = vmatpush1.msra.mxu0 0.0
  %7271 = vmatprep.subr.mxu0 0.0
  %7272 = vmatpush1.msra.mxu0 0.0
  %7273 = vmatprep.subr.mxu0 0.0
  %7274 = vmatpush1.msra.mxu0 0.0
  %7275 = vmatprep.subr.mxu0 0.0
  %7276 = vmatpush1.msra.mxu0 0.0
  %7277 = vmatprep.subr.mxu0 0.0
  %7278 = vmatpush1.msra.mxu0 0.0
  %7279 = vmatprep.subr.mxu0 0.0
  %7280 = vmatpush1.msra.mxu0 0.0
  %7281 = vmatprep.subr.mxu0 0.0
  %7282 = vmatpush1.msra.mxu0 0.0
  %7283 = vmatprep.subr.mxu0 0.0
  %7284 = vmatpush1.msra.mxu0 0.0
  %7285 = vmatprep.subr.mxu0 0.0
  %7286 = vmatpush1.msra.mxu0 0.0
  %7287 = vmatprep.subr.mxu0 0.0
  %7288 = vmatpush1.msra.mxu0 0.0
  %7289 = vmatprep.subr.mxu0 0.0
  %7290 = vmatpush1.msra.mxu0 0.0
  %7291 = vmatprep.subr.mxu0 0.0
  %7292 = vmatpush1.msra.mxu0 0.0
  %7293 = vmatprep.mubr.f32.mxu0 0.0
  %7294 = vmatmul.mubr.f32.gmra.mrb[0].mxu0 %v1974
  %v7295 = vpop.f32.mrb[0].mxu0
  %v7296 = vadd.f32 0.0, %v7295
  %v7297 = vpop.f32.mrb[0].mxu0
  %v7298 = vadd.f32 0.0, %v7297
  %7299 = vmatprep.mubr.f32.mxu0 0.0
  %7300 = vmatmul.mubr.f32.gmra.mrb[0].mxu0 %v1977
  %v7301 = vpop.f32.mrb[0].mxu0
  %v7302 = vadd.f32 0.0, %v7301
  %v7303 = vpop.f32.mrb[0].mxu0
  %v7304 = vadd.f32 0.0, %v7303
  %7305 = vmatprep.mubr.f32.mxu0 0.0
  %7306 = vmatmul.mubr.f32.gmra.mrb[0].mxu0 %v1980
  %v7307 = vpop.f32.mrb[0].mxu0
  %v7308 = vadd.f32 0.0, %v7307
  %v7309 = vpop.f32.mrb[0].mxu0
  %v7310 = vadd.f32 0.0, %v7309
  %7311 = vmatprep.mubr.f32.mxu0 0.0
  %7312 = vmatmul.mubr.f32.gmra.mrb[0].mxu0 %v1983
  %v7313 = vpop.f32.mrb[0].mxu0
  %v7314 = vadd.f32 0.0, %v7313
  %v7315 = vpop.f32.mrb[0].mxu0
  %v7316 = vadd.f32 0.0, %v7315
  %7317 = vmatprep.mubr.f32.mxu0 0.0
  %7318 = vmatmul.mubr.f32.gmra.mrb[0].mxu0 %v1986
  %v7319 = vpop.f32.mrb[0].mxu0
  %v7320 = vadd.f32 0.0, %v7319
  %v7321 = vpop.f32.mrb[0].mxu0
  %v7322 = vadd.f32 0.0, %v7321
  %7323 = vmatprep.mubr.f32.mxu0 0.0
  %7324 = vmatmul.mubr.f32.gmra.mrb[0].mxu0 %v1989
  %v7325 = vpop.f32.mrb[0].mxu0
  %v7326 = vadd.f32 0.0, %v7325
  %v7327 = vpop.f32.mrb[0].mxu0
  %v7328 = vadd.f32 0.0, %v7327
  %7329 = vmatprep.mubr.f32.mxu0 0.0
  %7330 = vmatmul.mubr.f32.gmra.mrb[0].mxu0 %v1992
  %v7331 = vpop.f32.mrb[0].mxu0
  %v7332 = vadd.f32 0.0, %v7331
  %v7333 = vpop.f32.mrb[0].mxu0
  %v7334 = vadd.f32 0.0, %v7333
  %7335 = vmatprep.mubr.f32.mxu0 0.0
  %7336 = vmatmul.mubr.f32.gmra.mrb[0].mxu0 %v1995
  %v7337 = vpop.f32.mrb[0].mxu0
  %v7338 = vadd.f32 0.0, %v7337
  %v7339 = vpop.f32.mrb[0].mxu0
  %v7340 = vadd.f32 0.0, %v7339
  %7341 = vmatprep.mubr.f32.mxu0 0.0
  %7342 = vmatmul.mubr.f32.gmra.mrb[0].mxu0 %v1998
  %v7343 = vpop.f32.mrb[0].mxu0
  %v7344 = vadd.f32 0.0, %v7343
  %v7345 = vpop.f32.mrb[0].mxu0
  %v7346 = vadd.f32 0.0, %v7345
  %7347 = vmatprep.mubr.f32.mxu0 0.0
  %7348 = vmatmul.mubr.f32.gmra.mrb[0].mxu0 %v2001
  %v7349 = vpop.f32.mrb[0].mxu0
  %v7350 = vadd.f32 0.0, %v7349
  %v7351 = vpop.f32.mrb[0].mxu0
  %v7352 = vadd.f32 0.0, %v7351
  %7353 = vmatprep.mubr.f32.mxu0 0.0
  %7354 = vmatmul.mubr.f32.gmra.mrb[0].mxu0 %v2004
  %v7355 = vpop.f32.mrb[0].mxu0
  %v7356 = vadd.f32 0.0, %v7355
  %v7357 = vpop.f32.mrb[0].mxu0
  %v7358 = vadd.f32 0.0, %v7357
  %7359 = vmatprep.mubr.f32.mxu0 0.0
  %7360 = vmatmul.mubr.f32.gmra.mrb[0].mxu0 %v2007
  %v7361 = vpop.f32.mrb[0].mxu0
  %v7362 = vadd.f32 0.0, %v7361
  %v7363 = vpop.f32.mrb[0].mxu0
  %v7364 = vadd.f32 0.0, %v7363
  %7365 = vmatprep.mubr.f32.mxu0 0.0
  %7366 = vmatmul.mubr.f32.gmra.mrb[0].mxu0 %v2010
  %v7367 = vpop.f32.mrb[0].mxu0
  %v7368 = vadd.f32 0.0, %v7367
  %v7369 = vpop.f32.mrb[0].mxu0
  %v7370 = vadd.f32 0.0, %v7369
  %7371 = vdwg.mxu0
  %v7372 = vmul.f32 %v6678, %v7296
  %v7373 = vmul.f32 %v6680, %v7298
  %v7374 = vmul.f32 %v6682, %v7302
  %v7375 = vmul.f32 %v6684, %v7304
  %v7376 = vmul.f32 %v6688, %v7308
  %v7377 = vmul.f32 %v6690, %v7310
  %v7378 = vmul.f32 %v6692, %v7314
  %v7379 = vmul.f32 %v6694, %v7316
  %v7380 = vmul.f32 %v6698, %v7320
  %v7381 = vmul.f32 %v6700, %v7322
  %v7382 = vmul.f32 %v6702, %v7326
  %v7383 = vmul.f32 %v6704, %v7328
  %v7384 = vmul.f32 %v6708, %v7332
  %v7385 = vmul.f32 %v6710, %v7334
  %v7386 = vmul.f32 %v6712, %v7338
  %v7387 = vmul.f32 %v6714, %v7340
  %v7388 = vmul.f32 %v6718, %v7344
  %v7389 = vmul.f32 %v6720, %v7346
  %v7390 = vmul.f32 %v6722, %v7350
  %v7391 = vmul.f32 %v6724, %v7352
  %v7392 = vmul.f32 %v6728, %v7356
  %v7393 = vmul.f32 %v6730, %v7358
  %v7394 = vmul.f32 %v6732, %v7362
  %v7395 = vmul.f32 %v6734, %v7364
  %v7396 = vmul.f32 %v6738, %v7368
  %v7397 = vmul.f32 %v6740, %v7370
  %v7398 = vpack.c.bf16 %v7374, %v7372
  %v7399 = vpack.c.bf16 %v7375, %v7373
  %v7400 = vpack.c.bf16 %v7378, %v7376
  %v7401 = vpack.c.bf16 %v7379, %v7377
  %v7402 = vpack.c.bf16 %v7382, %v7380
  %v7403 = vpack.c.bf16 %v7383, %v7381
  %v7404 = vpack.c.bf16 %v7386, %v7384
  %v7405 = vpack.c.bf16 %v7387, %v7385
  %v7406 = vpack.c.bf16 %v7390, %v7388
  %v7407 = vpack.c.bf16 %v7391, %v7389
  %v7408 = vpack.c.bf16 %v7394, %v7392
  %v7409 = vpack.c.bf16 %v7395, %v7393
  %v7410 = vpack.c.bf16 %v7396, %v7396
  %v7411 = vpack.c.bf16 %v7397, %v7397
  %7412 = vmatprep.subr.bf16.mxu0 0
  %7413 = vmatpush1.bf16.msra.mxu0 %v2269
  %7414 = vmatprep.subr.bf16.mxu0 0
  %7415 = vmatpush1.bf16.msra.mxu0 %v2270
  %7416 = vmatprep.subr.bf16.mxu0 0
  %7417 = vmatpush1.bf16.msra.mxu0 %v2271
  %7418 = vmatprep.subr.bf16.mxu0 0
  %7419 = vmatpush1.bf16.msra.mxu0 %v2272
  %7420 = vmatprep.subr.bf16.mxu0 0
  %7421 = vmatpush1.bf16.msra.mxu0 %v2273
  %7422 = vmatprep.subr.bf16.mxu0 0
  %7423 = vmatpush1.bf16.msra.mxu0 %v2274
  %7424 = vmatprep.subr.bf16.mxu0 0
  %7425 = vmatpush1.bf16.msra.mxu0 %v2275
  %7426 = vmatprep.subr.bf16.mxu0 0
  %7427 = vmatpush1.bf16.msra.mxu0 %v2276
  %7428 = vmatprep.subr.bf16.mxu0 0
  %7429 = vmatpush1.bf16.msra.mxu0 %v2277
  %7430 = vmatprep.subr.bf16.mxu0 0
  %7431 = vmatpush1.bf16.msra.mxu0 %v2278
  %7432 = vmatprep.subr.bf16.mxu0 0
  %7433 = vmatpush1.bf16.msra.mxu0 %v2279
  %7434 = vmatprep.subr.bf16.mxu0 0
  %7435 = vmatpush1.bf16.msra.mxu0 %v2280
  %7436 = vmatprep.subr.bf16.mxu0 0
  %7437 = vmatpush1.bf16.msra.mxu0 %v2281
  %7438 = vmatprep.subr.bf16.mxu0 0
  %7439 = vmatpush1.bf16.msra.mxu0 %v2282
  %7440 = vmatprep.subr.bf16.mxu0 0
  %7441 = vmatpush1.bf16.msra.mxu0 %v2283
  %7442 = vmatprep.subr.bf16.mxu0 0
  %7443 = vmatpush1.bf16.msra.mxu0 %v2284
  %7444 = vmatprep.mubr.bf16.mxu0 %v7399
  %7445 = vmatmul.mubr.bf16.gmra.mrb[0].mxu0 %v7398
  %v7446 = vpop.f32.mrb[0].mxu0
  %v7447 = vadd.f32 %v2203, %v7446
  %v7448 = vpop.f32.mrb[0].mxu0
  %v7449 = vpop.f32.mrb[0].mxu0
  %v7450 = vadd.f32 %v2203, %v7449
  %v7451 = vpop.f32.mrb[0].mxu0
  %7452 = vmatprep.mubr.bf16.mxu0 %v7401
  %7453 = vmatmul.mubr.bf16.gmra.mrb[0].mxu0 %v7400
  %v7454 = vpop.f32.mrb[0].mxu0
  %v7455 = vadd.f32 %v2203, %v7454
  %v7456 = vpop.f32.mrb[0].mxu0
  %v7457 = vpop.f32.mrb[0].mxu0
  %v7458 = vadd.f32 %v2203, %v7457
  %v7459 = vpop.f32.mrb[0].mxu0
  %7460 = vmatprep.mubr.bf16.mxu0 %v7403
  %7461 = vmatmul.mubr.bf16.gmra.mrb[0].mxu0 %v7402
  %v7462 = vpop.f32.mrb[0].mxu0
  %v7463 = vadd.f32 %v2203, %v7462
  %v7464 = vpop.f32.mrb[0].mxu0
  %v7465 = vpop.f32.mrb[0].mxu0
  %v7466 = vadd.f32 %v2203, %v7465
  %v7467 = vpop.f32.mrb[0].mxu0
  %7468 = vmatprep.mubr.bf16.mxu0 %v7405
  %7469 = vmatmul.mubr.bf16.gmra.mrb[0].mxu0 %v7404
  %v7470 = vpop.f32.mrb[0].mxu0
  %v7471 = vadd.f32 %v2203, %v7470
  %v7472 = vpop.f32.mrb[0].mxu0
  %v7473 = vpop.f32.mrb[0].mxu0
  %v7474 = vadd.f32 %v2203, %v7473
  %v7475 = vpop.f32.mrb[0].mxu0
  %7476 = vmatprep.mubr.bf16.mxu0 %v7407
  %7477 = vmatmul.mubr.bf16.gmra.mrb[0].mxu0 %v7406
  %v7478 = vpop.f32.mrb[0].mxu0
  %v7479 = vadd.f32 %v2203, %v7478
  %v7480 = vpop.f32.mrb[0].mxu0
  %v7481 = vpop.f32.mrb[0].mxu0
  %v7482 = vadd.f32 %v2203, %v7481
  %v7483 = vpop.f32.mrb[0].mxu0
  %7484 = vmatprep.mubr.bf16.mxu0 %v7409
  %7485 = vmatmul.mubr.bf16.gmra.mrb[0].mxu0 %v7408
  %v7486 = vpop.f32.mrb[0].mxu0
  %v7487 = vadd.f32 %v2203, %v7486
  %v7488 = vpop.f32.mrb[0].mxu0
  %v7489 = vpop.f32.mrb[0].mxu0
  %v7490 = vadd.f32 %v2203, %v7489
  %v7491 = vpop.f32.mrb[0].mxu0
  %7492 = vmatprep.mubr.bf16.mxu0 %v7411
  %7493 = vmatmul.mubr.bf16.gmra.mrb[0].mxu0 %v7410
  %v7494 = vpop.f32.mrb[0].mxu0
  %v7495 = vadd.f32 %v2203, %v7494
  %v7496 = vpop.f32.mrb[0].mxu0
  %v7497 = vpop.f32.mrb[0].mxu0
  %v7498 = vpop.f32.mrb[0].mxu0
  %7499 = vdwg.mxu0
  %7500 = vmatprep.subr.bf16.mxu0 0
  %7501 = vmatpush1.bf16.msra.mxu0 %v2421
  %7502 = vmatprep.subr.bf16.mxu0 0
  %7503 = vmatpush1.bf16.msra.mxu0 %v2422
  %7504 = vmatprep.subr.bf16.mxu0 0
  %7505 = vmatpush1.bf16.msra.mxu0 %v2423
  %7506 = vmatprep.subr.bf16.mxu0 0
  %7507 = vmatpush1.bf16.msra.mxu0 %v2424
  %7508 = vmatprep.subr.bf16.mxu0 0
  %7509 = vmatpush1.bf16.msra.mxu0 %v2425
  %7510 = vmatprep.subr.bf16.mxu0 0
  %7511 = vmatpush1.bf16.msra.mxu0 %v2426
  %7512 = vmatprep.subr.bf16.mxu0 0
  %7513 = vmatpush1.bf16.msra.mxu0 %v2427
  %7514 = vmatprep.subr.bf16.mxu0 0
  %7515 = vmatpush1.bf16.msra.mxu0 %v2428
  %7516 = vmatprep.subr.bf16.mxu0 0
  %7517 = vmatpush1.bf16.msra.mxu0 0
  %7518 = vmatprep.subr.bf16.mxu0 0
  %7519 = vmatpush1.bf16.msra.mxu0 0
  %7520 = vmatprep.subr.bf16.mxu0 0
  %7521 = vmatpush1.bf16.msra.mxu0 0
  %7522 = vmatprep.subr.bf16.mxu0 0
  %7523 = vmatpush1.bf16.msra.mxu0 0
  %7524 = vmatprep.subr.bf16.mxu0 0
  %7525 = vmatpush1.bf16.msra.mxu0 0
  %7526 = vmatprep.subr.bf16.mxu0 0
  %7527 = vmatpush1.bf16.msra.mxu0 0
  %7528 = vmatprep.subr.bf16.mxu0 0
  %7529 = vmatpush1.bf16.msra.mxu0 0
  %7530 = vmatprep.subr.bf16.mxu0 0
  %7531 = vmatpush1.bf16.msra.mxu0 0
  %7532 = vmatprep.mubr.bf16.mxu0 0
  %7533 = vmatmul.mubr.bf16.gmra.mrb[0].mxu0 %v6823
  %v7534 = vpop.f32.mrb[0].mxu0
  %v7535 = vadd.f32 0.0, %v7534
  %v7536 = vpop.f32.mrb[0].mxu0
  %v7537 = vpop.f32.mrb[0].mxu0
  %v7538 = vpop.f32.mrb[0].mxu0
  %7539 = vdwg.mxu0
  %v7541 = vsel %vm1312, %v7535, 0
  %7543 = vmatprep.subr.mxu0 0.0
  %7544 = vmatpush1.msra.mxu0 %v7541
  %7545 = vmatprep.subr.mxu0 0.0
  %7546 = vmatpush1.msra.mxu0 0.0
  %7547 = vmatprep.subr.mxu0 0.0
  %7548 = vmatpush1.msra.mxu0 0.0
  %7549 = vmatprep.subr.mxu0 0.0
  %7550 = vmatpush1.msra.mxu0 0.0
  %7551 = vmatprep.subr.mxu0 0.0
  %7552 = vmatpush1.msra.mxu0 0.0
  %7553 = vmatprep.subr.mxu0 0.0
  %7554 = vmatpush1.msra.mxu0 0.0
  %7555 = vmatprep.subr.mxu0 0.0
  %7556 = vmatpush1.msra.mxu0 0.0
  %7557 = vmatprep.subr.mxu0 0.0
  %7558 = vmatpush1.msra.mxu0 0.0
  %7559 = vmatprep.subr.mxu0 0.0
  %7560 = vmatpush1.msra.mxu0 0.0
  %7561 = vmatprep.subr.mxu0 0.0
  %7562 = vmatpush1.msra.mxu0 0.0
  %7563 = vmatprep.subr.mxu0 0.0
  %7564 = vmatpush1.msra.mxu0 0.0
  %7565 = vmatprep.subr.mxu0 0.0
  %7566 = vmatpush1.msra.mxu0 0.0
  %7567 = vmatprep.subr.mxu0 0.0
  %7568 = vmatpush1.msra.mxu0 0.0
  %7569 = vmatprep.subr.mxu0 0.0
  %7570 = vmatpush1.msra.mxu0 0.0
  %7571 = vmatprep.subr.mxu0 0.0
  %7572 = vmatpush1.msra.mxu0 0.0
  %7573 = vmatprep.subr.mxu0 0.0
  %7574 = vmatpush1.msra.mxu0 0.0
  %7575 = vmatprep.subr.mxu0 0.0
  %7576 = vmatpush1.msra.mxu0 0.0
  %7577 = vmatprep.subr.mxu0 0.0
  %7578 = vmatpush1.msra.mxu0 0.0
  %7579 = vmatprep.subr.mxu0 0.0
  %7580 = vmatpush1.msra.mxu0 0.0
  %7581 = vmatprep.subr.mxu0 0.0
  %7582 = vmatpush1.msra.mxu0 0.0
  %7583 = vmatprep.subr.mxu0 0.0
  %7584 = vmatpush1.msra.mxu0 0.0
  %7585 = vmatprep.subr.mxu0 0.0
  %7586 = vmatpush1.msra.mxu0 0.0
  %7587 = vmatprep.subr.mxu0 0.0
  %7588 = vmatpush1.msra.mxu0 0.0
  %7589 = vmatprep.subr.mxu0 0.0
  %7590 = vmatpush1.msra.mxu0 0.0
  %7591 = vmatprep.subr.mxu0 0.0
  %7592 = vmatpush1.msra.mxu0 0.0
  %7593 = vmatprep.subr.mxu0 0.0
  %7594 = vmatpush1.msra.mxu0 0.0
  %7595 = vmatprep.subr.mxu0 0.0
  %7596 = vmatpush1.msra.mxu0 0.0
  %7597 = vmatprep.subr.mxu0 0.0
  %7598 = vmatpush1.msra.mxu0 0.0
  %7599 = vmatprep.subr.mxu0 0.0
  %7600 = vmatpush1.msra.mxu0 0.0
  %7601 = vmatprep.subr.mxu0 0.0
  %7602 = vmatpush1.msra.mxu0 0.0
  %7603 = vmatprep.subr.mxu0 0.0
  %7604 = vmatpush1.msra.mxu0 0.0
  %7605 = vmatprep.subr.mxu0 0.0
  %7606 = vmatpush1.msra.mxu0 0.0
  %7607 = vmatprep.mubr.f32.mxu0 0.0
  %7608 = vmatmul.mubr.f32.gmra.mrb[0].mxu0 %v1974
  %v7609 = vpop.f32.mrb[0].mxu0
  %v7610 = vadd.f32 0.0, %v7609
  %v7611 = vpop.f32.mrb[0].mxu0
  %7612 = vmatprep.mubr.f32.mxu0 0.0
  %7613 = vmatmul.mubr.f32.gmra.mrb[0].mxu0 %v1977
  %v7614 = vpop.f32.mrb[0].mxu0
  %v7615 = vadd.f32 0.0, %v7614
  %v7616 = vpop.f32.mrb[0].mxu0
  %7617 = vmatprep.mubr.f32.mxu0 0.0
  %7618 = vmatmul.mubr.f32.gmra.mrb[0].mxu0 %v1980
  %v7619 = vpop.f32.mrb[0].mxu0
  %v7620 = vadd.f32 0.0, %v7619
  %v7621 = vpop.f32.mrb[0].mxu0
  %7622 = vmatprep.mubr.f32.mxu0 0.0
  %7623 = vmatmul.mubr.f32.gmra.mrb[0].mxu0 %v1983
  %v7624 = vpop.f32.mrb[0].mxu0
  %v7625 = vadd.f32 0.0, %v7624
  %v7626 = vpop.f32.mrb[0].mxu0
  %7627 = vmatprep.mubr.f32.mxu0 0.0
  %7628 = vmatmul.mubr.f32.gmra.mrb[0].mxu0 %v1986
  %v7629 = vpop.f32.mrb[0].mxu0
  %v7630 = vadd.f32 0.0, %v7629
  %v7631 = vpop.f32.mrb[0].mxu0
  %7632 = vmatprep.mubr.f32.mxu0 0.0
  %7633 = vmatmul.mubr.f32.gmra.mrb[0].mxu0 %v1989
  %v7634 = vpop.f32.mrb[0].mxu0
  %v7635 = vadd.f32 0.0, %v7634
  %v7636 = vpop.f32.mrb[0].mxu0
  %7637 = vmatprep.mubr.f32.mxu0 0.0
  %7638 = vmatmul.mubr.f32.gmra.mrb[0].mxu0 %v1992
  %v7639 = vpop.f32.mrb[0].mxu0
  %v7640 = vadd.f32 0.0, %v7639
  %v7641 = vpop.f32.mrb[0].mxu0
  %7642 = vmatprep.mubr.f32.mxu0 0.0
  %7643 = vmatmul.mubr.f32.gmra.mrb[0].mxu0 %v1995
  %v7644 = vpop.f32.mrb[0].mxu0
  %v7645 = vadd.f32 0.0, %v7644
  %v7646 = vpop.f32.mrb[0].mxu0
  %7647 = vmatprep.mubr.f32.mxu0 0.0
  %7648 = vmatmul.mubr.f32.gmra.mrb[0].mxu0 %v1998
  %v7649 = vpop.f32.mrb[0].mxu0
  %v7650 = vadd.f32 0.0, %v7649
  %v7651 = vpop.f32.mrb[0].mxu0
  %7652 = vmatprep.mubr.f32.mxu0 0.0
  %7653 = vmatmul.mubr.f32.gmra.mrb[0].mxu0 %v2001
  %v7654 = vpop.f32.mrb[0].mxu0
  %v7655 = vadd.f32 0.0, %v7654
  %v7656 = vpop.f32.mrb[0].mxu0
  %7657 = vmatprep.mubr.f32.mxu0 0.0
  %7658 = vmatmul.mubr.f32.gmra.mrb[0].mxu0 %v2004
  %v7659 = vpop.f32.mrb[0].mxu0
  %v7660 = vadd.f32 0.0, %v7659
  %v7661 = vpop.f32.mrb[0].mxu0
  %7662 = vmatprep.mubr.f32.mxu0 0.0
  %7663 = vmatmul.mubr.f32.gmra.mrb[0].mxu0 %v2007
  %v7664 = vpop.f32.mrb[0].mxu0
  %v7665 = vadd.f32 0.0, %v7664
  %v7666 = vpop.f32.mrb[0].mxu0
  %7667 = vmatprep.mubr.f32.mxu0 0.0
  %7668 = vmatmul.mubr.f32.gmra.mrb[0].mxu0 %v2010
  %v7669 = vpop.f32.mrb[0].mxu0
  %v7670 = vadd.f32 0.0, %v7669
  %v7671 = vpop.f32.mrb[0].mxu0
  %7672 = vdwg.mxu0
  %v7673 = vadd.f32 %v7447, %v7610
  %v7674 = vadd.f32 %v7450, %v7615
  %v7675 = vadd.f32 %v7455, %v7620
  %v7676 = vadd.f32 %v7458, %v7625
  %v7677 = vadd.f32 %v7463, %v7630
  %v7678 = vadd.f32 %v7466, %v7635
  %v7679 = vadd.f32 %v7471, %v7640
  %v7680 = vadd.f32 %v7474, %v7645
  %v7681 = vadd.f32 %v7479, %v7650
  %v7682 = vadd.f32 %v7482, %v7655
  %v7683 = vadd.f32 %v7487, %v7660
  %v7684 = vadd.f32 %v7490, %v7665
  %v7685 = vadd.f32 %v7495, %v7670
  %v7686 = vtanh.pop %v7673
  %v7687 = vtanh.pop %v7674
  %v7688 = vtanh.pop %v7675
  %v7689 = vtanh.pop %v7676
  %v7690 = vtanh.pop %v7677
  %v7691 = vtanh.pop %v7678
  %v7692 = vtanh.pop %v7679
  %v7693 = vtanh.pop %v7680
  %v7694 = vtanh.pop %v7681
  %v7695 = vtanh.pop %v7682
  %v7696 = vtanh.pop %v7683
  %v7697 = vtanh.pop %v7684
  %v7698 = vtanh.pop %v7685
  %v7700 = vsel %vm2642, %v7686, 0
  %v7703 = vsel %vm2642, %v7687, 0
  %v7706 = vsel %vm2642, %v7688, 0
  %v7709 = vsel %vm2642, %v7689, 0
  %v7712 = vsel %vm2642, %v7690, 0
  %v7715 = vsel %vm2642, %v7691, 0
  %v7718 = vsel %vm2642, %v7692, 0
  %v7721 = vsel %vm2642, %v7693, 0
  %v7724 = vsel %vm2642, %v7694, 0
  %v7727 = vsel %vm2642, %v7695, 0
  %v7730 = vsel %vm2642, %v7696, 0
  %v7733 = vsel %vm2642, %v7697, 0
  %v7736 = vsel %vm2642, %v7698, 0
  %7738 = vmatprep.subr.mxu0 0.0
  %7739 = vmatpush1.msra.mxu0 %v256
  %7740 = vmatprep.subr.mxu0 0.0
  %7741 = vmatpush1.msra.mxu0 %v257
  %7742 = vmatprep.subr.mxu0 0.0
  %7743 = vmatpush1.msra.mxu0 %v258
  %7744 = vmatprep.subr.mxu0 0.0
  %7745 = vmatpush1.msra.mxu0 %v259
  %7746 = vmatprep.subr.mxu0 0.0
  %7747 = vmatpush1.msra.mxu0 %v260
  %7748 = vmatprep.subr.mxu0 0.0
  %7749 = vmatpush1.msra.mxu0 %v261
  %7750 = vmatprep.subr.mxu0 0.0
  %7751 = vmatpush1.msra.mxu0 %v262
  %7752 = vmatprep.subr.mxu0 0.0
  %7753 = vmatpush1.msra.mxu0 %v263
  %7754 = vmatprep.subr.mxu0 0.0
  %7755 = vmatpush1.msra.mxu0 0.0
  %7756 = vmatprep.subr.mxu0 0.0
  %7757 = vmatpush1.msra.mxu0 0.0
  %7758 = vmatprep.subr.mxu0 0.0
  %7759 = vmatpush1.msra.mxu0 0.0
  %7760 = vmatprep.subr.mxu0 0.0
  %7761 = vmatpush1.msra.mxu0 0.0
  %7762 = vmatprep.subr.mxu0 0.0
  %7763 = vmatpush1.msra.mxu0 0.0
  %7764 = vmatprep.subr.mxu0 0.0
  %7765 = vmatpush1.msra.mxu0 0.0
  %7766 = vmatprep.subr.mxu0 0.0
  %7767 = vmatpush1.msra.mxu0 0.0
  %7768 = vmatprep.subr.mxu0 0.0
  %7769 = vmatpush1.msra.mxu0 0.0
  %7770 = vmatprep.subr.mxu0 0.0
  %7771 = vmatpush1.msra.mxu0 0.0
  %7772 = vmatprep.subr.mxu0 0.0
  %7773 = vmatpush1.msra.mxu0 0.0
  %7774 = vmatprep.subr.mxu0 0.0
  %7775 = vmatpush1.msra.mxu0 0.0
  %7776 = vmatprep.subr.mxu0 0.0
  %7777 = vmatpush1.msra.mxu0 0.0
  %7778 = vmatprep.subr.mxu0 0.0
  %7779 = vmatpush1.msra.mxu0 0.0
  %7780 = vmatprep.subr.mxu0 0.0
  %7781 = vmatpush1.msra.mxu0 0.0
  %7782 = vmatprep.subr.mxu0 0.0
  %7783 = vmatpush1.msra.mxu0 0.0
  %7784 = vmatprep.subr.mxu0 0.0
  %7785 = vmatpush1.msra.mxu0 0.0
  %7786 = vmatprep.subr.mxu0 0.0
  %7787 = vmatpush1.msra.mxu0 0.0
  %7788 = vmatprep.subr.mxu0 0.0
  %7789 = vmatpush1.msra.mxu0 0.0
  %7790 = vmatprep.subr.mxu0 0.0
  %7791 = vmatpush1.msra.mxu0 0.0
  %7792 = vmatprep.subr.mxu0 0.0
  %7793 = vmatpush1.msra.mxu0 0.0
  %7794 = vmatprep.subr.mxu0 0.0
  %7795 = vmatpush1.msra.mxu0 0.0
  %7796 = vmatprep.subr.mxu0 0.0
  %7797 = vmatpush1.msra.mxu0 0.0
  %7798 = vmatprep.subr.mxu0 0.0
  %7799 = vmatpush1.msra.mxu0 0.0
  %7800 = vmatprep.subr.mxu0 0.0
  %7801 = vmatpush1.msra.mxu0 0.0
  %7802 = vmatprep.mubr.f32.mxu0 0.0
  %7803 = vmatmul.mubr.f32.gmra.mrb[0].mxu0 %v7700
  %v7804 = vpop.f32.mrb[0].mxu0
  %v7805 = vadd.f32 %v2640, %v7804
  %v7806 = vpop.f32.mrb[0].mxu0
  %7807 = vmatprep.mubr.f32.mxu0 0.0
  %7808 = vmatmul.mubr.f32.gmra.mrb[0].mxu0 %v7703
  %v7809 = vpop.f32.mrb[0].mxu0
  %v7810 = vadd.f32 %v2640, %v7809
  %v7811 = vpop.f32.mrb[0].mxu0
  %7812 = vmatprep.mubr.f32.mxu0 0.0
  %7813 = vmatmul.mubr.f32.gmra.mrb[0].mxu0 %v7706
  %v7814 = vpop.f32.mrb[0].mxu0
  %v7815 = vadd.f32 %v2640, %v7814
  %v7816 = vpop.f32.mrb[0].mxu0
  %7817 = vmatprep.mubr.f32.mxu0 0.0
  %7818 = vmatmul.mubr.f32.gmra.mrb[0].mxu0 %v7709
  %v7819 = vpop.f32.mrb[0].mxu0
  %v7820 = vadd.f32 %v2640, %v7819
  %v7821 = vpop.f32.mrb[0].mxu0
  %7822 = vmatprep.mubr.f32.mxu0 0.0
  %7823 = vmatmul.mubr.f32.gmra.mrb[0].mxu0 %v7712
  %v7824 = vpop.f32.mrb[0].mxu0
  %v7825 = vadd.f32 %v2640, %v7824
  %v7826 = vpop.f32.mrb[0].mxu0
  %7827 = vmatprep.mubr.f32.mxu0 0.0
  %7828 = vmatmul.mubr.f32.gmra.mrb[0].mxu0 %v7715
  %v7829 = vpop.f32.mrb[0].mxu0
  %v7830 = vadd.f32 %v2640, %v7829
  %v7831 = vpop.f32.mrb[0].mxu0
  %7832 = vmatprep.mubr.f32.mxu0 0.0
  %7833 = vmatmul.mubr.f32.gmra.mrb[0].mxu0 %v7718
  %v7834 = vpop.f32.mrb[0].mxu0
  %v7835 = vadd.f32 %v2640, %v7834
  %v7836 = vpop.f32.mrb[0].mxu0
  %7837 = vmatprep.mubr.f32.mxu0 0.0
  %7838 = vmatmul.mubr.f32.gmra.mrb[0].mxu0 %v7721
  %v7839 = vpop.f32.mrb[0].mxu0
  %v7840 = vadd.f32 %v2640, %v7839
  %v7841 = vpop.f32.mrb[0].mxu0
  %7842 = vmatprep.mubr.f32.mxu0 0.0
  %7843 = vmatmul.mubr.f32.gmra.mrb[0].mxu0 %v7724
  %v7844 = vpop.f32.mrb[0].mxu0
  %v7845 = vadd.f32 %v2640, %v7844
  %v7846 = vpop.f32.mrb[0].mxu0
  %7847 = vmatprep.mubr.f32.mxu0 0.0
  %7848 = vmatmul.mubr.f32.gmra.mrb[0].mxu0 %v7727
  %v7849 = vpop.f32.mrb[0].mxu0
  %v7850 = vadd.f32 %v2640, %v7849
  %v7851 = vpop.f32.mrb[0].mxu0
  %7852 = vmatprep.mubr.f32.mxu0 0.0
  %7853 = vmatmul.mubr.f32.gmra.mrb[0].mxu0 %v7730
  %v7854 = vpop.f32.mrb[0].mxu0
  %v7855 = vadd.f32 %v2640, %v7854
  %v7856 = vpop.f32.mrb[0].mxu0
  %7857 = vmatprep.mubr.f32.mxu0 0.0
  %7858 = vmatmul.mubr.f32.gmra.mrb[0].mxu0 %v7733
  %v7859 = vpop.f32.mrb[0].mxu0
  %v7860 = vadd.f32 %v2640, %v7859
  %v7861 = vpop.f32.mrb[0].mxu0
  %7862 = vmatprep.mubr.f32.mxu0 0.0
  %7863 = vmatmul.mubr.f32.gmra.mrb[0].mxu0 %v7736
  %v7864 = vpop.f32.mrb[0].mxu0
  %v7865 = vadd.f32 %v2640, %v7864
  %v7866 = vpop.f32.mrb[0].mxu0
  %7867 = vdwg.mxu0
  %v7868 = vsel %vm2812, %v7805, -inf
  %v7869 = vsel %vm2812, %v7810, -inf
  %v7870 = vsel %vm2812, %v7815, -inf
  %v7871 = vsel %vm2812, %v7820, -inf
  %v7872 = vsel %vm2812, %v7825, -inf
  %v7873 = vmax.f32 %v7868, %v7872
  %v7874 = vsel %vm2812, %v7830, -inf
  %v7875 = vmax.f32 %v7869, %v7874
  %v7876 = vsel %vm2812, %v7835, -inf
  %v7877 = vmax.f32 %v7870, %v7876
  %v7878 = vsel %vm2812, %v7840, -inf
  %v7879 = vmax.f32 %v7871, %v7878
  %v7880 = vsel %vm2812, %v7845, -inf
  %v7881 = vmax.f32 %v7873, %v7880
  %v7882 = vsel %vm2812, %v7850, -inf
  %v7883 = vmax.f32 %v7875, %v7882
  %v7884 = vsel %vm2812, %v7855, -inf
  %v7885 = vmax.f32 %v7877, %v7884
  %v7886 = vsel %vm2812, %v7860, -inf
  %v7887 = vmax.f32 %v7879, %v7886
  %v7888 = vsel %vm2833, %v7865, -inf
  %v7889 = vmax.f32 %v7881, %v7888
  %v7890 = vmax.f32 %v7889, %v7883
  %v7891 = vmax.f32 %v7885, %v7887
  %v7892 = vmax.f32 %v7890, %v7891
  %v7893 = vrot.slane %v7892, 4
  %v7894 = vmax.f32 %v7892, %v7893
  %v7895 = vrot.slane %v7894, 2
  %v7896 = vmax.f32 %v7894, %v7895
  %v7897 = vrot.slane %v7896, 1
  %v7898 = vmax.f32 %v7896, %v7897
  %v7899 = vsub.f32 %v7805, %v7898
  %v7900 = vsub.f32 %v7810, %v7898
  %v7901 = vsub.f32 %v7815, %v7898
  %v7902 = vsub.f32 %v7820, %v7898
  %v7903 = vsub.f32 %v7825, %v7898
  %v7904 = vsub.f32 %v7830, %v7898
  %v7905 = vsub.f32 %v7835, %v7898
  %v7906 = vsub.f32 %v7840, %v7898
  %v7907 = vsub.f32 %v7845, %v7898
  %v7908 = vsub.f32 %v7850, %v7898
  %v7909 = vsub.f32 %v7855, %v7898
  %v7910 = vsub.f32 %v7860, %v7898
  %v7911 = vsub.f32 %v7865, %v7898
  %v7912 = vmul.f32 %v7899, 1.442695
  %v7913 = vpow.pop %v7912
  %v7914 = vmul.f32 %v7900, 1.442695
  %v7915 = vpow.pop %v7914
  %v7916 = vmul.f32 %v7901, 1.442695
  %v7917 = vpow.pop %v7916
  %v7918 = vmul.f32 %v7902, 1.442695
  %v7919 = vpow.pop %v7918
  %v7920 = vmul.f32 %v7903, 1.442695
  %v7921 = vpow.pop %v7920
  %v7922 = vmul.f32 %v7904, 1.442695
  %v7923 = vpow.pop %v7922
  %v7924 = vmul.f32 %v7905, 1.442695
  %v7925 = vpow.pop %v7924
  %v7926 = vmul.f32 %v7906, 1.442695
  %v7927 = vpow.pop %v7926
  %v7928 = vmul.f32 %v7907, 1.442695
  %v7929 = vpow.pop %v7928
  %v7930 = vmul.f32 %v7908, 1.442695
  %v7931 = vpow.pop %v7930
  %v7932 = vmul.f32 %v7909, 1.442695
  %v7933 = vpow.pop %v7932
  %v7934 = vmul.f32 %v7910, 1.442695
  %v7935 = vpow.pop %v7934
  %v7936 = vmul.f32 %v7911, 1.442695
  %v7937 = vpow.pop %v7936
  %v7939 = vsel %vm1312, %v7937, 0
  %7941 = vmatprep.subr.mxu0 0.0
  %7942 = vmatpush1.msra.mxu0 %v7913
  %7943 = vmatprep.subr.mxu0 0.0
  %7944 = vmatpush1.msra.mxu0 %v7915
  %7945 = vmatprep.subr.mxu0 0.0
  %7946 = vmatpush1.msra.mxu0 %v7917
  %7947 = vmatprep.subr.mxu0 0.0
  %7948 = vmatpush1.msra.mxu0 %v7919
  %7949 = vmatprep.subr.mxu0 0.0
  %7950 = vmatpush1.msra.mxu0 %v7921
  %7951 = vmatprep.subr.mxu0 0.0
  %7952 = vmatpush1.msra.mxu0 %v7923
  %7953 = vmatprep.subr.mxu0 0.0
  %7954 = vmatpush1.msra.mxu0 %v7925
  %7955 = vmatprep.subr.mxu0 0.0
  %7956 = vmatpush1.msra.mxu0 %v7927
  %7957 = vmatprep.subr.mxu0 0.0
  %7958 = vmatpush1.msra.mxu0 %v7929
  %7959 = vmatprep.subr.mxu0 0.0
  %7960 = vmatpush1.msra.mxu0 %v7931
  %7961 = vmatprep.subr.mxu0 0.0
  %7962 = vmatpush1.msra.mxu0 %v7933
  %7963 = vmatprep.subr.mxu0 0.0
  %7964 = vmatpush1.msra.mxu0 %v7935
  %7965 = vmatprep.subr.mxu0 0.0
  %7966 = vmatpush1.msra.mxu0 %v7939
  %7967 = vmatprep.subr.mxu0 0.0
  %7968 = vmatpush1.msra.mxu0 0.0
  %7969 = vmatprep.subr.mxu0 0.0
  %7970 = vmatpush1.msra.mxu0 0.0
  %7971 = vmatprep.subr.mxu0 0.0
  %7972 = vmatpush1.msra.mxu0 0.0
  %7973 = vmatprep.subr.mxu0 0.0
  %7974 = vmatpush1.msra.mxu0 0.0
  %7975 = vmatprep.subr.mxu0 0.0
  %7976 = vmatpush1.msra.mxu0 0.0
  %7977 = vmatprep.subr.mxu0 0.0
  %7978 = vmatpush1.msra.mxu0 0.0
  %7979 = vmatprep.subr.mxu0 0.0
  %7980 = vmatpush1.msra.mxu0 0.0
  %7981 = vmatprep.subr.mxu0 0.0
  %7982 = vmatpush1.msra.mxu0 0.0
  %7983 = vmatprep.subr.mxu0 0.0
  %7984 = vmatpush1.msra.mxu0 0.0
  %7985 = vmatprep.subr.mxu0 0.0
  %7986 = vmatpush1.msra.mxu0 0.0
  %7987 = vmatprep.subr.mxu0 0.0
  %7988 = vmatpush1.msra.mxu0 0.0
  %7989 = vmatprep.subr.mxu0 0.0
  %7990 = vmatpush1.msra.mxu0 0.0
  %7991 = vmatprep.subr.mxu0 0.0
  %7992 = vmatpush1.msra.mxu0 0.0
  %7993 = vmatprep.subr.mxu0 0.0
  %7994 = vmatpush1.msra.mxu0 0.0
  %7995 = vmatprep.subr.mxu0 0.0
  %7996 = vmatpush1.msra.mxu0 0.0
  %7997 = vmatprep.subr.mxu0 0.0
  %7998 = vmatpush1.msra.mxu0 0.0
  %7999 = vmatprep.subr.mxu0 0.0
  %8000 = vmatpush1.msra.mxu0 0.0
  %8001 = vmatprep.subr.mxu0 0.0
  %8002 = vmatpush1.msra.mxu0 0.0
  %8003 = vmatprep.subr.mxu0 0.0
  %8004 = vmatpush1.msra.mxu0 0.0
  %8005 = vmatprep.mubr.f32.mxu0 0.0
  %8006 = vmatmul.mubr.f32.gmra.mrb[0].mxu0 %v1310
  %v8007 = vpop.f32.mrb[0].mxu0
  %v8008 = vadd.f32 0.0, %v8007
  %v8009 = vpop.f32.mrb[0].mxu0
  %8010 = vdwg.mxu0
  %v8011 = vrcp.pop %v8008
  %v8013 = vsel %vm1312, %v8011, 0
  %8015 = vmatprep.subr.mxu0 0.0
  %8016 = vmatpush1.msra.mxu0 %v8013
  %8017 = vmatprep.subr.mxu0 0.0
  %8018 = vmatpush1.msra.mxu0 0.0
  %8019 = vmatprep.subr.mxu0 0.0
  %8020 = vmatpush1.msra.mxu0 0.0
  %8021 = vmatprep.subr.mxu0 0.0
  %8022 = vmatpush1.msra.mxu0 0.0
  %8023 = vmatprep.subr.mxu0 0.0
  %8024 = vmatpush1.msra.mxu0 0.0
  %8025 = vmatprep.subr.mxu0 0.0
  %8026 = vmatpush1.msra.mxu0 0.0
  %8027 = vmatprep.subr.mxu0 0.0
  %8028 = vmatpush1.msra.mxu0 0.0
  %8029 = vmatprep.subr.mxu0 0.0
  %8030 = vmatpush1.msra.mxu0 0.0
  %8031 = vmatprep.subr.mxu0 0.0
  %8032 = vmatpush1.msra.mxu0 0.0
  %8033 = vmatprep.subr.mxu0 0.0
  %8034 = vmatpush1.msra.mxu0 0.0
  %8035 = vmatprep.subr.mxu0 0.0
  %8036 = vmatpush1.msra.mxu0 0.0
  %8037 = vmatprep.subr.mxu0 0.0
  %8038 = vmatpush1.msra.mxu0 0.0
  %8039 = vmatprep.subr.mxu0 0.0
  %8040 = vmatpush1.msra.mxu0 0.0
  %8041 = vmatprep.subr.mxu0 0.0
  %8042 = vmatpush1.msra.mxu0 0.0
  %8043 = vmatprep.subr.mxu0 0.0
  %8044 = vmatpush1.msra.mxu0 0.0
  %8045 = vmatprep.subr.mxu0 0.0
  %8046 = vmatpush1.msra.mxu0 0.0
  %8047 = vmatprep.subr.mxu0 0.0
  %8048 = vmatpush1.msra.mxu0 0.0
  %8049 = vmatprep.subr.mxu0 0.0
  %8050 = vmatpush1.msra.mxu0 0.0
  %8051 = vmatprep.subr.mxu0 0.0
  %8052 = vmatpush1.msra.mxu0 0.0
  %8053 = vmatprep.subr.mxu0 0.0
  %8054 = vmatpush1.msra.mxu0 0.0
  %8055 = vmatprep.subr.mxu0 0.0
  %8056 = vmatpush1.msra.mxu0 0.0
  %8057 = vmatprep.subr.mxu0 0.0
  %8058 = vmatpush1.msra.mxu0 0.0
  %8059 = vmatprep.subr.mxu0 0.0
  %8060 = vmatpush1.msra.mxu0 0.0
  %8061 = vmatprep.subr.mxu0 0.0
  %8062 = vmatpush1.msra.mxu0 0.0
  %8063 = vmatprep.subr.mxu0 0.0
  %8064 = vmatpush1.msra.mxu0 0.0
  %8065 = vmatprep.subr.mxu0 0.0
  %8066 = vmatpush1.msra.mxu0 0.0
  %8067 = vmatprep.subr.mxu0 0.0
  %8068 = vmatpush1.msra.mxu0 0.0
  %8069 = vmatprep.subr.mxu0 0.0
  %8070 = vmatpush1.msra.mxu0 0.0
  %8071 = vmatprep.subr.mxu0 0.0
  %8072 = vmatpush1.msra.mxu0 0.0
  %8073 = vmatprep.subr.mxu0 0.0
  %8074 = vmatpush1.msra.mxu0 0.0
  %8075 = vmatprep.subr.mxu0 0.0
  %8076 = vmatpush1.msra.mxu0 0.0
  %8077 = vmatprep.subr.mxu0 0.0
  %8078 = vmatpush1.msra.mxu0 0.0
  %8079 = vmatprep.mubr.f32.mxu0 0.0
  %8080 = vmatmul.mubr.f32.gmra.mrb[0].mxu0 %v1974
  %v8081 = vpop.f32.mrb[0].mxu0
  %v8082 = vadd.f32 0.0, %v8081
  %v8083 = vpop.f32.mrb[0].mxu0
  %8084 = vmatprep.mubr.f32.mxu0 0.0
  %8085 = vmatmul.mubr.f32.gmra.mrb[0].mxu0 %v1977
  %v8086 = vpop.f32.mrb[0].mxu0
  %v8087 = vadd.f32 0.0, %v8086
  %v8088 = vpop.f32.mrb[0].mxu0
  %8089 = vmatprep.mubr.f32.mxu0 0.0
  %8090 = vmatmul.mubr.f32.gmra.mrb[0].mxu0 %v1980
  %v8091 = vpop.f32.mrb[0].mxu0
  %v8092 = vadd.f32 0.0, %v8091
  %v8093 = vpop.f32.mrb[0].mxu0
  %8094 = vmatprep.mubr.f32.mxu0 0.0
  %8095 = vmatmul.mubr.f32.gmra.mrb[0].mxu0 %v1983
  %v8096 = vpop.f32.mrb[0].mxu0
  %v8097 = vadd.f32 0.0, %v8096
  %v8098 = vpop.f32.mrb[0].mxu0
  %8099 = vmatprep.mubr.f32.mxu0 0.0
  %8100 = vmatmul.mubr.f32.gmra.mrb[0].mxu0 %v1986
  %v8101 = vpop.f32.mrb[0].mxu0
  %v8102 = vadd.f32 0.0, %v8101
  %v8103 = vpop.f32.mrb[0].mxu0
  %8104 = vmatprep.mubr.f32.mxu0 0.0
  %8105 = vmatmul.mubr.f32.gmra.mrb[0].mxu0 %v1989
  %v8106 = vpop.f32.mrb[0].mxu0
  %v8107 = vadd.f32 0.0, %v8106
  %v8108 = vpop.f32.mrb[0].mxu0
  %8109 = vmatprep.mubr.f32.mxu0 0.0
  %8110 = vmatmul.mubr.f32.gmra.mrb[0].mxu0 %v1992
  %v8111 = vpop.f32.mrb[0].mxu0
  %v8112 = vadd.f32 0.0, %v8111
  %v8113 = vpop.f32.mrb[0].mxu0
  %8114 = vmatprep.mubr.f32.mxu0 0.0
  %8115 = vmatmul.mubr.f32.gmra.mrb[0].mxu0 %v1995
  %v8116 = vpop.f32.mrb[0].mxu0
  %v8117 = vadd.f32 0.0, %v8116
  %v8118 = vpop.f32.mrb[0].mxu0
  %8119 = vmatprep.mubr.f32.mxu0 0.0
  %8120 = vmatmul.mubr.f32.gmra.mrb[0].mxu0 %v1998
  %v8121 = vpop.f32.mrb[0].mxu0
  %v8122 = vadd.f32 0.0, %v8121
  %v8123 = vpop.f32.mrb[0].mxu0
  %8124 = vmatprep.mubr.f32.mxu0 0.0
  %8125 = vmatmul.mubr.f32.gmra.mrb[0].mxu0 %v2001
  %v8126 = vpop.f32.mrb[0].mxu0
  %v8127 = vadd.f32 0.0, %v8126
  %v8128 = vpop.f32.mrb[0].mxu0
  %8129 = vmatprep.mubr.f32.mxu0 0.0
  %8130 = vmatmul.mubr.f32.gmra.mrb[0].mxu0 %v2004
  %v8131 = vpop.f32.mrb[0].mxu0
  %v8132 = vadd.f32 0.0, %v8131
  %v8133 = vpop.f32.mrb[0].mxu0
  %8134 = vmatprep.mubr.f32.mxu0 0.0
  %8135 = vmatmul.mubr.f32.gmra.mrb[0].mxu0 %v2007
  %v8136 = vpop.f32.mrb[0].mxu0
  %v8137 = vadd.f32 0.0, %v8136
  %v8138 = vpop.f32.mrb[0].mxu0
  %8139 = vmatprep.mubr.f32.mxu0 0.0
  %8140 = vmatmul.mubr.f32.gmra.mrb[0].mxu0 %v2010
  %v8141 = vpop.f32.mrb[0].mxu0
  %v8142 = vadd.f32 0.0, %v8141
  %v8143 = vpop.f32.mrb[0].mxu0
  %8144 = vdwg.mxu0
  %v8145 = vmul.f32 %v7913, %v8082
  %v8146 = vmul.f32 %v7915, %v8087
  %v8147 = vmul.f32 %v7917, %v8092
  %v8148 = vmul.f32 %v7919, %v8097
  %v8149 = vmul.f32 %v7921, %v8102
  %v8150 = vmul.f32 %v7923, %v8107
  %v8151 = vmul.f32 %v7925, %v8112
  %v8152 = vmul.f32 %v7927, %v8117
  %v8153 = vmul.f32 %v7929, %v8122
  %v8154 = vmul.f32 %v7931, %v8127
  %v8155 = vmul.f32 %v7933, %v8132
  %v8156 = vmul.f32 %v7935, %v8137
  %v8157 = vmul.f32 %v7937, %v8142
  %8159 = vset.pattern.permute.xlu0 0
  %8160 = vperm.xlu0 %8159, %v8145
  %v8161 = vpop.permute.xlu0 %8160
  %8164 = vset.pattern.permute.xlu0 0
  %8165 = vperm.xlu0 %8164, %v8146
  %v8166 = vpop.permute.xlu0 %8165
  %8169 = vset.pattern.permute.xlu0 0
  %8170 = vperm.xlu0 %8169, %v8147
  %v8171 = vpop.permute.xlu0 %8170
  %8174 = vset.pattern.permute.xlu0 0
  %8175 = vperm.xlu0 %8174, %v8148
  %v8176 = vpop.permute.xlu0 %8175
  %8179 = vset.pattern.permute.xlu0 0
  %8180 = vperm.xlu0 %8179, %v8149
  %v8181 = vpop.permute.xlu0 %8180
  %8184 = vset.pattern.permute.xlu0 0
  %8185 = vperm.xlu0 %8184, %v8150
  %v8186 = vpop.permute.xlu0 %8185
  %8189 = vset.pattern.permute.xlu0 0
  %8190 = vperm.xlu0 %8189, %v8151
  %v8191 = vpop.permute.xlu0 %8190
  %8194 = vset.pattern.permute.xlu0 0
  %8195 = vperm.xlu0 %8194, %v8152
  %v8196 = vpop.permute.xlu0 %8195
  %8199 = vset.pattern.permute.xlu0 0
  %8200 = vperm.xlu0 %8199, %v8153
  %v8201 = vpop.permute.xlu0 %8200
  %8204 = vset.pattern.permute.xlu0 0
  %8205 = vperm.xlu0 %8204, %v8154
  %v8206 = vpop.permute.xlu0 %8205
  %8209 = vset.pattern.permute.xlu0 0
  %8210 = vperm.xlu0 %8209, %v8155
  %v8211 = vpop.permute.xlu0 %8210
  %8214 = vset.pattern.permute.xlu0 0
  %8215 = vperm.xlu0 %8214, %v8156
  %v8216 = vpop.permute.xlu0 %8215
  %8219 = vset.pattern.permute.xlu0 0
  %8220 = vperm.xlu0 %8219, %v8157
  %v8221 = vpop.permute.xlu0 %8220
  %v8223 = vmul.f32 %v7372, %v8161
  %v8224 = vmul.f32 %v7373, %v8161
  %v8225 = vmul.f32 %v7374, %v8166
  %v8226 = vmul.f32 %v7375, %v8166
  %v8227 = vmul.f32 %v7376, %v8171
  %v8228 = vmul.f32 %v7377, %v8171
  %v8229 = vmul.f32 %v7378, %v8176
  %v8230 = vmul.f32 %v7379, %v8176
  %v8231 = vmul.f32 %v7380, %v8181
  %v8232 = vmul.f32 %v7381, %v8181
  %v8233 = vmul.f32 %v7382, %v8186
  %v8234 = vmul.f32 %v7383, %v8186
  %v8235 = vmul.f32 %v7384, %v8191
  %v8236 = vmul.f32 %v7385, %v8191
  %v8237 = vmul.f32 %v7386, %v8196
  %v8238 = vmul.f32 %v7387, %v8196
  %v8239 = vmul.f32 %v7388, %v8201
  %v8240 = vmul.f32 %v7389, %v8201
  %v8241 = vmul.f32 %v7390, %v8206
  %v8242 = vmul.f32 %v7391, %v8206
  %v8243 = vmul.f32 %v7392, %v8211
  %v8244 = vmul.f32 %v7393, %v8211
  %v8245 = vmul.f32 %v7394, %v8216
  %v8246 = vmul.f32 %v7395, %v8216
  %v8247 = vmul.f32 %v7396, %v8221
  %v8248 = vmul.f32 %v7397, %v8221
  %v8250 = vsel %vm1312, %v8247, 0
  %v8253 = vsel %vm1312, %v8248, 0
  %8255 = vmatprep.subr.mxu0 %v8224
  %8256 = vmatpush1.msra.mxu0 %v8223
  %8257 = vmatprep.subr.mxu0 %v8226
  %8258 = vmatpush1.msra.mxu0 %v8225
  %8259 = vmatprep.subr.mxu0 %v8228
  %8260 = vmatpush1.msra.mxu0 %v8227
  %8261 = vmatprep.subr.mxu0 %v8230
  %8262 = vmatpush1.msra.mxu0 %v8229
  %8263 = vmatprep.subr.mxu0 %v8232
  %8264 = vmatpush1.msra.mxu0 %v8231
  %8265 = vmatprep.subr.mxu0 %v8234
  %8266 = vmatpush1.msra.mxu0 %v8233
  %8267 = vmatprep.subr.mxu0 %v8236
  %8268 = vmatpush1.msra.mxu0 %v8235
  %8269 = vmatprep.subr.mxu0 %v8238
  %8270 = vmatpush1.msra.mxu0 %v8237
  %8271 = vmatprep.subr.mxu0 %v8240
  %8272 = vmatpush1.msra.mxu0 %v8239
  %8273 = vmatprep.subr.mxu0 %v8242
  %8274 = vmatpush1.msra.mxu0 %v8241
  %8275 = vmatprep.subr.mxu0 %v8244
  %8276 = vmatpush1.msra.mxu0 %v8243
  %8277 = vmatprep.subr.mxu0 %v8246
  %8278 = vmatpush1.msra.mxu0 %v8245
  %8279 = vmatprep.subr.mxu0 %v8253
  %8280 = vmatpush1.msra.mxu0 %v8250
  %8281 = vmatprep.subr.mxu0 0.0
  %8282 = vmatpush1.msra.mxu0 0.0
  %8283 = vmatprep.subr.mxu0 0.0
  %8284 = vmatpush1.msra.mxu0 0.0
  %8285 = vmatprep.subr.mxu0 0.0
  %8286 = vmatpush1.msra.mxu0 0.0
  %8287 = vmatprep.subr.mxu0 0.0
  %8288 = vmatpush1.msra.mxu0 0.0
  %8289 = vmatprep.subr.mxu0 0.0
  %8290 = vmatpush1.msra.mxu0 0.0
  %8291 = vmatprep.subr.mxu0 0.0
  %8292 = vmatpush1.msra.mxu0 0.0
  %8293 = vmatprep.subr.mxu0 0.0
  %8294 = vmatpush1.msra.mxu0 0.0
  %8295 = vmatprep.subr.mxu0 0.0
  %8296 = vmatpush1.msra.mxu0 0.0
  %8297 = vmatprep.subr.mxu0 0.0
  %8298 = vmatpush1.msra.mxu0 0.0
  %8299 = vmatprep.subr.mxu0 0.0
  %8300 = vmatpush1.msra.mxu0 0.0
  %8301 = vmatprep.subr.mxu0 0.0
  %8302 = vmatpush1.msra.mxu0 0.0
  %8303 = vmatprep.subr.mxu0 0.0
  %8304 = vmatpush1.msra.mxu0 0.0
  %8305 = vmatprep.subr.mxu0 0.0
  %8306 = vmatpush1.msra.mxu0 0.0
  %8307 = vmatprep.subr.mxu0 0.0
  %8308 = vmatpush1.msra.mxu0 0.0
  %8309 = vmatprep.subr.mxu0 0.0
  %8310 = vmatpush1.msra.mxu0 0.0
  %8311 = vmatprep.subr.mxu0 0.0
  %8312 = vmatpush1.msra.mxu0 0.0
  %8313 = vmatprep.subr.mxu0 0.0
  %8314 = vmatpush1.msra.mxu0 0.0
  %8315 = vmatprep.subr.mxu0 0.0
  %8316 = vmatpush1.msra.mxu0 0.0
  %8317 = vmatprep.subr.mxu0 0.0
  %8318 = vmatpush1.msra.mxu0 0.0
  %8319 = vmatprep.mubr.f32.mxu0 0.0
  %8320 = vmatmul.mubr.f32.gmra.mrb[0].mxu0 %v1310
  %v8321 = vpop.f32.mrb[0].mxu0
  %v8322 = vadd.f32 0.0, %v8321
  %v8323 = vpop.f32.mrb[0].mxu0
  %v8324 = vadd.f32 0.0, %v8323
  %8325 = vdwg.mxu0
  %v8326 = vpack.c.bf16 %v8322, %v8322
  %v8327 = vpack.c.bf16 %v8324, %v8324
  %8328 = vmatprep.subr.bf16.mxu0 %v3451
  %8329 = vmatpush1.bf16.msra.mxu0 %v3450
  %8330 = vmatprep.subr.bf16.mxu0 %v3454
  %8331 = vmatpush1.bf16.msra.mxu0 %v3453
  %8332 = vmatprep.subr.bf16.mxu0 %v3457
  %8333 = vmatpush1.bf16.msra.mxu0 %v3456
  %8334 = vmatprep.subr.bf16.mxu0 %v3460
  %8335 = vmatpush1.bf16.msra.mxu0 %v3459
  %8336 = vmatprep.subr.bf16.mxu0 %v3463
  %8337 = vmatpush1.bf16.msra.mxu0 %v3462
  %8338 = vmatprep.subr.bf16.mxu0 %v3466
  %8339 = vmatpush1.bf16.msra.mxu0 %v3465
  %8340 = vmatprep.subr.bf16.mxu0 %v3469
  %8341 = vmatpush1.bf16.msra.mxu0 %v3468
  %8342 = vmatprep.subr.bf16.mxu0 %v3472
  %8343 = vmatpush1.bf16.msra.mxu0 %v3471
  %8344 = vmatprep.subr.bf16.mxu0 %v3475
  %8345 = vmatpush1.bf16.msra.mxu0 %v3474
  %8346 = vmatprep.subr.bf16.mxu0 %v3478
  %8347 = vmatpush1.bf16.msra.mxu0 %v3477
  %8348 = vmatprep.subr.bf16.mxu0 %v3481
  %8349 = vmatpush1.bf16.msra.mxu0 %v3480
  %8350 = vmatprep.subr.bf16.mxu0 %v3484
  %8351 = vmatpush1.bf16.msra.mxu0 %v3483
  %8352 = vmatprep.subr.bf16.mxu0 %v3487
  %8353 = vmatpush1.bf16.msra.mxu0 %v3486
  %8354 = vmatprep.subr.bf16.mxu0 %v3490
  %8355 = vmatpush1.bf16.msra.mxu0 %v3489
  %8356 = vmatprep.subr.bf16.mxu0 %v3493
  %8357 = vmatpush1.bf16.msra.mxu0 %v3492
  %8358 = vmatprep.subr.bf16.mxu0 %v3496
  %8359 = vmatpush1.bf16.msra.mxu0 %v3495
  %8360 = vmatprep.mubr.bf16.mxu0 %v8327
  %8361 = vmatmul.mubr.bf16.gmra.mrb[0].mxu0 %v8326
  %v8362 = vpop.f32.mrb[0].mxu0
  %v8363 = vadd.f32 %v3278, %v8362
  %v8364 = vpop.f32.mrb[0].mxu0
  %v8365 = vadd.f32 %v3282, %v8364
  %v8366 = vpop.f32.mrb[0].mxu0
  %v8367 = vpop.f32.mrb[0].mxu0
  %8368 = vdwg.mxu0
  %8369 = vmatprep.subr.bf16.mxu0 0
  %8370 = vmatpush1.bf16.msra.mxu0 %v3452
  %8371 = vmatprep.subr.bf16.mxu0 0
  %8372 = vmatpush1.bf16.msra.mxu0 %v3455
  %8373 = vmatprep.subr.bf16.mxu0 0
  %8374 = vmatpush1.bf16.msra.mxu0 %v3458
  %8375 = vmatprep.subr.bf16.mxu0 0
  %8376 = vmatpush1.bf16.msra.mxu0 %v3461
  %8377 = vmatprep.subr.bf16.mxu0 0
  %8378 = vmatpush1.bf16.msra.mxu0 %v3464
  %8379 = vmatprep.subr.bf16.mxu0 0
  %8380 = vmatpush1.bf16.msra.mxu0 %v3467
  %8381 = vmatprep.subr.bf16.mxu0 0
  %8382 = vmatpush1.bf16.msra.mxu0 %v3470
  %8383 = vmatprep.subr.bf16.mxu0 0
  %8384 = vmatpush1.bf16.msra.mxu0 %v3473
  %8385 = vmatprep.subr.bf16.mxu0 0
  %8386 = vmatpush1.bf16.msra.mxu0 %v3476
  %8387 = vmatprep.subr.bf16.mxu0 0
  %8388 = vmatpush1.bf16.msra.mxu0 %v3479
  %8389 = vmatprep.subr.bf16.mxu0 0
  %8390 = vmatpush1.bf16.msra.mxu0 %v3482
  %8391 = vmatprep.subr.bf16.mxu0 0
  %8392 = vmatpush1.bf16.msra.mxu0 %v3485
  %8393 = vmatprep.subr.bf16.mxu0 0
  %8394 = vmatpush1.bf16.msra.mxu0 %v3488
  %8395 = vmatprep.subr.bf16.mxu0 0
  %8396 = vmatpush1.bf16.msra.mxu0 %v3491
  %8397 = vmatprep.subr.bf16.mxu0 0
  %8398 = vmatpush1.bf16.msra.mxu0 %v3494
  %8399 = vmatprep.subr.bf16.mxu0 0
  %8400 = vmatpush1.bf16.msra.mxu0 %v3497
  %8401 = vmatprep.mubr.bf16.mxu0 %v8327
  %8402 = vmatmul.mubr.bf16.gmra.mrb[0].mxu0 %v8326
  %v8403 = vpop.f32.mrb[0].mxu0
  %v8404 = vadd.f32 %v3286, %v8403
  %v8405 = vpop.f32.mrb[0].mxu0
  %v8406 = vpop.f32.mrb[0].mxu0
  %v8407 = vpop.f32.mrb[0].mxu0
  %8408 = vdwg.mxu0
  %8409 = vmatprep.subr.bf16.mxu0 %v3724
  %8410 = vmatpush1.bf16.msra.mxu0 %v3723
  %8411 = vmatprep.subr.bf16.mxu0 %v3727
  %8412 = vmatpush1.bf16.msra.mxu0 %v3726
  %8413 = vmatprep.subr.bf16.mxu0 %v3730
  %8414 = vmatpush1.bf16.msra.mxu0 %v3729
  %8415 = vmatprep.subr.bf16.mxu0 %v3733
  %8416 = vmatpush1.bf16.msra.mxu0 %v3732
  %8417 = vmatprep.subr.bf16.mxu0 %v3736
  %8418 = vmatpush1.bf16.msra.mxu0 %v3735
  %8419 = vmatprep.subr.bf16.mxu0 %v3739
  %8420 = vmatpush1.bf16.msra.mxu0 %v3738
  %8421 = vmatprep.subr.bf16.mxu0 %v3742
  %8422 = vmatpush1.bf16.msra.mxu0 %v3741
  %8423 = vmatprep.subr.bf16.mxu0 %v3745
  %8424 = vmatpush1.bf16.msra.mxu0 %v3744
  %8425 = vmatprep.subr.bf16.mxu0 0
  %8426 = vmatpush1.bf16.msra.mxu0 0
  %8427 = vmatprep.subr.bf16.mxu0 0
  %8428 = vmatpush1.bf16.msra.mxu0 0
  %8429 = vmatprep.subr.bf16.mxu0 0
  %8430 = vmatpush1.bf16.msra.mxu0 0
  %8431 = vmatprep.subr.bf16.mxu0 0
  %8432 = vmatpush1.bf16.msra.mxu0 0
  %8433 = vmatprep.subr.bf16.mxu0 0
  %8434 = vmatpush1.bf16.msra.mxu0 0
  %8435 = vmatprep.subr.bf16.mxu0 0
  %8436 = vmatpush1.bf16.msra.mxu0 0
  %8437 = vmatprep.subr.bf16.mxu0 0
  %8438 = vmatpush1.bf16.msra.mxu0 0
  %8439 = vmatprep.subr.bf16.mxu0 0
  %8440 = vmatpush1.bf16.msra.mxu0 0
  %8441 = vmatprep.mubr.bf16.mxu0 0
  %8442 = vmatmul.mubr.bf16.gmra.mrb[0].mxu0 %v6823
  %v8443 = vpop.f32.mrb[0].mxu0
  %v8444 = vadd.f32 %v3631, %v8443
  %v8445 = vpop.f32.mrb[0].mxu0
  %v8446 = vadd.f32 %v3635, %v8445
  %v8447 = vpop.f32.mrb[0].mxu0
  %v8448 = vpop.f32.mrb[0].mxu0
  %8449 = vdwg.mxu0
  %8450 = vmatprep.subr.bf16.mxu0 0
  %8451 = vmatpush1.bf16.msra.mxu0 %v3725
  %8452 = vmatprep.subr.bf16.mxu0 0
  %8453 = vmatpush1.bf16.msra.mxu0 %v3728
  %8454 = vmatprep.subr.bf16.mxu0 0
  %8455 = vmatpush1.bf16.msra.mxu0 %v3731
  %8456 = vmatprep.subr.bf16.mxu0 0
  %8457 = vmatpush1.bf16.msra.mxu0 %v3734
  %8458 = vmatprep.subr.bf16.mxu0 0
  %8459 = vmatpush1.bf16.msra.mxu0 %v3737
  %8460 = vmatprep.subr.bf16.mxu0 0
  %8461 = vmatpush1.bf16.msra.mxu0 %v3740
  %8462 = vmatprep.subr.bf16.mxu0 0
  %8463 = vmatpush1.bf16.msra.mxu0 %v3743
  %8464 = vmatprep.subr.bf16.mxu0 0
  %8465 = vmatpush1.bf16.msra.mxu0 %v3746
  %8466 = vmatprep.subr.bf16.mxu0 0
  %8467 = vmatpush1.bf16.msra.mxu0 0
  %8468 = vmatprep.subr.bf16.mxu0 0
  %8469 = vmatpush1.bf16.msra.mxu0 0
  %8470 = vmatprep.subr.bf16.mxu0 0
  %8471 = vmatpush1.bf16.msra.mxu0 0
  %8472 = vmatprep.subr.bf16.mxu0 0
  %8473 = vmatpush1.bf16.msra.mxu0 0
  %8474 = vmatprep.subr.bf16.mxu0 0
  %8475 = vmatpush1.bf16.msra.mxu0 0
  %8476 = vmatprep.subr.bf16.mxu0 0
  %8477 = vmatpush1.bf16.msra.mxu0 0
  %8478 = vmatprep.subr.bf16.mxu0 0
  %8479 = vmatpush1.bf16.msra.mxu0 0
  %8480 = vmatprep.subr.bf16.mxu0 0
  %8481 = vmatpush1.bf16.msra.mxu0 0
  %8482 = vmatprep.mubr.bf16.mxu0 0
  %8483 = vmatmul.mubr.bf16.gmra.mrb[0].mxu0 %v6823
  %v8484 = vpop.f32.mrb[0].mxu0
  %v8485 = vadd.f32 %v3639, %v8484
  %v8486 = vpop.f32.mrb[0].mxu0
  %v8487 = vpop.f32.mrb[0].mxu0
  %v8488 = vpop.f32.mrb[0].mxu0
  %8489 = vdwg.mxu0
  %v8490 = vadd.f32 %v8363, %v8444
  %v8491 = vxor.u32 %v8490, 2147483648
  %v8492 = vmul.f32 %v8491, 1.442695
  %v8493 = vpow.pop %v8492
  %v8494 = vadd.f32 %v8493, 1.0
  %v8495 = vrcp.pop %v8494
  %v8496 = vmul.f32 1.0, %v8495
  %v8497 = vadd.f32 %v8365, %v8446
  %v8498 = vxor.u32 %v8497, 2147483648
  %v8499 = vmul.f32 %v8498, 1.442695
  %v8500 = vpow.pop %v8499
  %v8501 = vadd.f32 %v8500, 1.0
  %v8502 = vrcp.pop %v8501
  %v8503 = vmul.f32 1.0, %v8502
  %v8504 = vmul.f32 %v8496, %v8485
  %v8505 = vadd.f32 %v8404, %v8504
  %v8506 = vtanh.pop %v8505
  %v8507 = vsub.f32 1.0, %v8503
  %v8508 = vmul.f32 %v8507, %v8506
  %v8509 = vmul.f32 %v8503, %v6191
  %v8510 = vadd.f32 %v8508, %v8509
  %8511 = vst.msk [vmem:[%s22] sm:$0xff] %vm2812, %v3091
  %8512 = vst.msk [vmem:[%s22 + $0x8] sm:$0xff] %vm2812, %v3092
  %8513 = vst.msk [vmem:[%s22 + $0x10] sm:$0xff] %vm2812, %v3093
  %8514 = vst.msk [vmem:[%s22 + $0x18] sm:$0xff] %vm2812, %v3094
  %8515 = vst.msk [vmem:[%s22 + $0x20] sm:$0xff] %vm2812, %v3095
  %8516 = vst.msk [vmem:[%s22 + $0x28] sm:$0xff] %vm2812, %v3096
  %8517 = vst.msk [vmem:[%s22 + $0x30] sm:$0xff] %vm2812, %v3097
  %8518 = vst.msk [vmem:[%s22 + $0x38] sm:$0xff] %vm2812, %v3098
  %8519 = vst.msk [vmem:[%s22 + $0x40] sm:$0xff] %vm2812, %v3099
  %8520 = vst.msk [vmem:[%s22 + $0x48] sm:$0xff] %vm2812, %v3100
  %8521 = vst.msk [vmem:[%s22 + $0x50] sm:$0xff] %vm2812, %v3101
  %8522 = vst.msk [vmem:[%s22 + $0x58] sm:$0xff] %vm2812, %v3102
  %8523 = vst.msk [vmem:[%s22 + $0x60] sm:$0x3] %vm2833, %v3103
  %8524 = vst.msk [vmem:[%s22 + $0x68] sm:$0xff] %vm2812, %v5826
  %8525 = vst.msk [vmem:[%s22 + $0x70] sm:$0xff] %vm2812, %v5827
  %8526 = vst.msk [vmem:[%s22 + $0x78] sm:$0xff] %vm2812, %v5828
  %8527 = vst.msk [vmem:[%s22 + $0x80] sm:$0xff] %vm2812, %v5829
  %8528 = vst.msk [vmem:[%s22 + $0x88] sm:$0xff] %vm2812, %v5830
  %8529 = vst.msk [vmem:[%s22 + $0x90] sm:$0xff] %vm2812, %v5831
  %8530 = vst.msk [vmem:[%s22 + $0x98] sm:$0xff] %vm2812, %v5832
  %8531 = vst.msk [vmem:[%s22 + $0xa0] sm:$0xff] %vm2812, %v5833
  %8532 = vst.msk [vmem:[%s22 + $0xa8] sm:$0xff] %vm2812, %v5834
  %8533 = vst.msk [vmem:[%s22 + $0xb0] sm:$0xff] %vm2812, %v5835
  %8534 = vst.msk [vmem:[%s22 + $0xb8] sm:$0xff] %vm2812, %v5836
  %8535 = vst.msk [vmem:[%s22 + $0xc0] sm:$0xff] %vm2812, %v5837
  %8536 = vst.msk [vmem:[%s22 + $0xc8] sm:$0x3] %vm2833, %v5838
  %8537 = vst.msk [vmem:[%s22 + $0xd0] sm:$0xff] %vm2812, %v8145
  %8538 = vst.msk [vmem:[%s22 + $0xd8] sm:$0xff] %vm2812, %v8146
  %8539 = vst.msk [vmem:[%s22 + $0xe0] sm:$0xff] %vm2812, %v8147
  %8540 = vst.msk [vmem:[%s22 + $0xe8] sm:$0xff] %vm2812, %v8148
  %8541 = vst.msk [vmem:[%s22 + $0xf0] sm:$0xff] %vm2812, %v8149
  %8542 = vst.msk [vmem:[%s22 + $0xf8] sm:$0xff] %vm2812, %v8150
  %8543 = vst.msk [vmem:[%s22 + $0x100] sm:$0xff] %vm2812, %v8151
  %8544 = vst.msk [vmem:[%s22 + $0x108] sm:$0xff] %vm2812, %v8152
  %8545 = vst.msk [vmem:[%s22 + $0x110] sm:$0xff] %vm2812, %v8153
  %8546 = vst.msk [vmem:[%s22 + $0x118] sm:$0xff] %vm2812, %v8154
  %8547 = vst.msk [vmem:[%s22 + $0x120] sm:$0xff] %vm2812, %v8155
  %8548 = vst.msk [vmem:[%s22 + $0x128] sm:$0xff] %vm2812, %v8156
  %8549 = vst.msk [vmem:[%s22 + $0x130] sm:$0x3] %vm2833, %v8157
  %8550 = vst [vmem:[%s23] sm:$0x3] %v8510
  // Predicated region
  $region90: #{sca_att_forward.1} parent=0 // pred_check
    _
  $region91: #{sca_att_forward.1} parent=0 // pred_check_branch
    %8552 = sbr.rel (0) target = $region93
  $region92: #{sca_att_forward.1} parent=0 // pred_region
    _
  $region93: #{sca_att_forward.1} parent=0 // pred_fallthru
    _
  // Predicated region
  $region94: #{sca_att_forward.1} parent=0 // pred_check
    _
  $region95: #{sca_att_forward.1} parent=0 // pred_check_branch
    %8554 = sbr.rel (0) target = $region97
  $region96: #{sca_att_forward.1} parent=0 // pred_region
    _
  $region97: #{sca_att_forward.1} parent=0 // pred_fallthru
    _
  // Predicated region
  $region98: #{sca_att_forward.1} parent=0 // pred_check
    _
  $region99: #{sca_att_forward.1} parent=0 // pred_check_branch
    %8556 = sbr.rel (0) target = $region101
  $region100: #{sca_att_forward.1} parent=0 // pred_region
    _
  $region101: #{sca_att_forward.1} parent=0 // pred_fallthru
    _
  // Predicated region
  $region102: #{sca_att_forward.1} parent=0 // pred_check
    _
  $region103: #{sca_att_forward.1} parent=0 // pred_check_branch
    %8558 = sbr.rel (0) target = $region105
  $region104: #{sca_att_forward.1} parent=0 // pred_region
    _
  $region105: #{sca_att_forward.1} parent=0 // pred_fallthru
    _

</llo_original>
